<compile_context>
chip_gen: v7x
topology: tpu7x:2x2x1
jax: 0.10.0
libtpu: 0.0.40
codegen_flags: <defaults>
</compile_context>

<pallas_src>
import jax
import jax.numpy as jnp
from jax.experimental import pallas as pl
from jax.experimental.pallas import tpu as pltpu


def _asu_kernel(x_ref, o_ref):
    # Elementwise hot path: mul on the VPU, sin on the EUP.
    x = x_ref[...]
    o_ref[...] = x * jnp.sin(x)


_LANES = 1024                        # lane-dense last dim (multiple of 128)
_PER_BUFFER_BYTES = 4 * 1024 * 1024  # ~4 MiB/buffer; 2 in + 2 out bufs ~ 16 MiB
_SMALL_INPUT_ELEMS = 16 * 1024       # below this, plain XLA fusion is faster


def _sublane_multiple(dtype) -> int:
    # Minimum sublane tiling by dtype width: f32 -> 8, bf16/f16 -> 16, int8 -> 32.
    itemsize = jnp.dtype(dtype).itemsize
    return max(8, 32 // max(itemsize, 1))


def asu_forward(x):
    """x * sin(x), elementwise. Accepts any shape (e.g. NCHW) and float dtype."""
    orig_shape = x.shape
    dtype = x.dtype

    total = 1
    for d in orig_shape:
        total *= d

    # Tiny tensors: skip pallas_call entirely (launch + pipeline prologue dominate).
    if total < _SMALL_INPUT_ELEMS:
        return x * jnp.sin(x)

    sub_mult = _sublane_multiple(dtype)
    tile_elems = sub_mult * _LANES

    padded_total = ((total + tile_elems - 1) // tile_elems) * tile_elems
    x_flat = jnp.ravel(x)
    needs_pad = padded_total != total
    if needs_pad:
        # Ragged tail: pad up to the (sublane, lane) tile granularity.
        x_flat = jnp.pad(x_flat, (0, padded_total - total))

    rows = padded_total // _LANES
    x2d = x_flat.reshape(rows, _LANES)

    # Row-tile from the per-buffer VMEM budget; always a multiple of sub_mult.
    itemsize = jnp.dtype(dtype).itemsize
    max_block_rows = max(
        sub_mult,
        (_PER_BUFFER_BYTES // (_LANES * itemsize)) // sub_mult * sub_mult,
    )
    block_rows = min(rows, max_block_rows)
    # Partial last block (rows not a multiple of block_rows) is handled by
    # Pallas via padded reads + masked writes.
    grid = (pl.cdiv(rows, block_rows),)

    out2d = pl.pallas_call(
        _asu_kernel,
        out_shape=jax.ShapeDtypeStruct((rows, _LANES), dtype),
        grid_spec=pltpu.PrefetchScalarGridSpec(
            num_scalar_prefetch=0,
            grid=grid,
            in_specs=[pl.BlockSpec((block_rows, _LANES), lambda i: (i, 0))],
            out_specs=pl.BlockSpec((block_rows, _LANES), lambda i: (i, 0)),
        ),
        compiler_params=pltpu.CompilerParams(
            dimension_semantics=("parallel",),
            vmem_limit_bytes=32 * 1024 * 1024,
        ),
    )(x2d)

    out_flat = out2d.reshape(padded_total)
    if needs_pad:
        out_flat = out_flat[:total]
    return out_flat.reshape(orig_shape)


if __name__ == "__main__":
    key = jax.random.PRNGKey(0)
    k1, k2 = jax.random.split(key)

    # Small NCHW input (typical module usage) -> fast path (plain XLA).
    x_small = jax.random.normal(k1, (2, 4, 16, 16), dtype=jnp.float32)
    out_small = jax.block_until_ready(asu_forward(x_small))
    ref_small = x_small * jnp.sin(x_small)
    assert out_small.shape == x_small.shape
    assert out_small.dtype == x_small.dtype
    assert jnp.allclose(out_small, ref_small, atol=1e-5, rtol=1e-5)

    # Larger NCHW input that exercises the Pallas kernel path.
    x_big = jax.random.normal(k2, (2, 8, 64, 64), dtype=jnp.float32)
    out_big = jax.block_until_ready(asu_forward(x_big))
    ref_big = x_big * jnp.sin(x_big)
    assert out_big.shape == x_big.shape
    assert out_big.dtype == x_big.dtype
    assert jnp.allclose(out_big, ref_big, atol=1e-5, rtol=1e-5)

    print("KERNEL_OK")
</pallas_src>

<mosaic_0001>
module attributes {stable_mosaic.version = 11 : i64} {
  func.func @_asu_kernel(%arg0: i32, %arg1: memref<64x1024xf32, #tpu.memory_space<vmem>>, %arg2: memref<64x1024xf32, #tpu.memory_space<vmem>>) attributes {dimension_semantics = [#tpu.dimension_semantics<parallel>], iteration_bounds = array<i64: 1>, scalar_prefetch = 0 : i64, scratch_operands = 0 : i64, tpu.core_type = #tpu.core_type<tc>, window_params = [{transform_indices = @transform_0, window_bounds = array<i64: 64, 1024>}, {transform_indices = @transform_1, window_bounds = array<i64: 64, 1024>}]} {
    %c0 = arith.constant 0 : index
    %c0_0 = arith.constant 0 : index
    %0 = vector.load %arg1[%c0, %c0_0] : memref<64x1024xf32, #tpu.memory_space<vmem>>, vector<64x1024xf32>
    %1 = math.sin %0 : vector<64x1024xf32>
    %2 = arith.mulf %0, %1 : vector<64x1024xf32>
    %c0_1 = arith.constant 0 : index
    %c0_2 = arith.constant 0 : index
    %3 = vector.load %arg2[%c0_1, %c0_2] : memref<64x1024xf32, #tpu.memory_space<vmem>>, vector<64x1024xf32>
    tpu.vector_store %arg2[%c0_1, %c0_2], %2 {strides = array<i32>} : memref<64x1024xf32, #tpu.memory_space<vmem>>, vector<64x1024xf32>,
    return
  }
  func.func @transform_0(%arg0: i32) -> (i32, i32) {
    %c0_i32 = arith.constant 0 : i32
    %c0_i32_0 = arith.constant 0 : i32
    return %arg0, %c0_i32 : i32, i32
  }
  func.func @transform_1(%arg0: i32) -> (i32, i32) {
    %c0_i32 = arith.constant 0 : i32
    %c0_i32_0 = arith.constant 0 : i32
    return %arg0, %c0_i32 : i32, i32
  }
}

</mosaic_0001>

<llo_original>
// kernel: tpu_custom_call.1
$region0: #{tpu_custom_call.1}
  #allocation0 [shape = 'u32[]', space=smem, size = 0x4, offset = 0x4, fixed_abs, tag = 'smem constant byte address 0x4 - core index']
  #allocation1 [shape = 'u32[144,128]{1,0:T(1,128)}', space=vmem, size = 0x12000, scoped, tag = 'internal scratch']
  %s0 = inlined_call_operand.hbm [shape: f32[64,1024], index: 0, kind: input, shape index: {}]
  %s1 = inlined_call_operand.hbm [shape: f32[64,1024], index: 1, kind: output, shape index: {}]
  %s2 = sld [smem:[#allocation0]]
  $region18: #{tpu_custom_call.1} parent=0
    _
  %s4 = ssub.s32 1, %s2
  %s5 = scalar_select 0, %s4, %s2
  $region1: #{tpu_custom_call.1} parent=0
    #allocation2 [shape = 'u8[262144]{0}', space=vmem, size = 0x40000, scoped, tag = 'input window, operand 0, single buffered']
    #allocation3 [shape = 's32[1]{0}', space=sflag, size = 0x4, scoped, tag = 'scoped memory for tpu_custom_call.1']
    #allocation4 [shape = 's32[1]{0}', space=sflag, size = 0x4, scoped, tag = 'scoped memory for tpu_custom_call.1']
    #allocation5 [shape = 'u8[262144]{0}', space=vmem, size = 0x40000, scoped, tag = 'output window, operand 0, single buffered']
    %6 = vsyncpa [#allocation3], 0
    %7 = vsyncpa [#allocation4], 0
    // Predicated region
    $region2: #{tpu_custom_call.1} parent=1 // pred_check
      _
    $region3: #{tpu_custom_call.1} parent=1 // pred_check_branch
      %9 = sbr.rel (0) target = $region5
    $region4: #{tpu_custom_call.1} parent=1 // pred_region
      %s11 = ssub.s32 8192, 8192
      %12 = vsyncadd [#allocation3], %s11
      %s13 = sshll.u32 [#allocation2], 4
      %s14 = int_to_ptr.vmem [resolvable:$true] %s13
      %19 = dma.hbm_to_vmem [thread:$0]  %s0, 8192, %s14, [#allocation3], 1024, 1024, 64
    $region5: #{tpu_custom_call.1} parent=1 // pred_fallthru
      _
    // Predicated region
    $region6: #{tpu_custom_call.1} parent=1 // pred_check
      _
    $region7: #{tpu_custom_call.1} parent=1 // pred_check_branch
      %21 = sbr.rel (0) target = $region9
    $region8: #{tpu_custom_call.1} parent=1 // pred_region
      %22 = dma.done [#allocation3], 8192
    $region9: #{tpu_custom_call.1} parent=1 // pred_fallthru
      _
    %v23 = vld [vmem:[#allocation2] sm:$0xff]
    %v24 = vld [vmem:[#allocation2 + $0x8] sm:$0xff]
    %v25 = vld [vmem:[#allocation2 + $0x10] sm:$0xff]
    %v26 = vld [vmem:[#allocation2 + $0x18] sm:$0xff]
    %v27 = vld [vmem:[#allocation2 + $0x20] sm:$0xff]
    %v28 = vld [vmem:[#allocation2 + $0x28] sm:$0xff]
    %v29 = vld [vmem:[#allocation2 + $0x30] sm:$0xff]
    %v30 = vld [vmem:[#allocation2 + $0x38] sm:$0xff]
    %v31 = vld [vmem:[#allocation2 + $0x40] sm:$0xff]
    %v32 = vld [vmem:[#allocation2 + $0x48] sm:$0xff]
    %v33 = vld [vmem:[#allocation2 + $0x50] sm:$0xff]
    %v34 = vld [vmem:[#allocation2 + $0x58] sm:$0xff]
    %v35 = vld [vmem:[#allocation2 + $0x60] sm:$0xff]
    %v36 = vld [vmem:[#allocation2 + $0x68] sm:$0xff]
    %v37 = vld [vmem:[#allocation2 + $0x70] sm:$0xff]
    %v38 = vld [vmem:[#allocation2 + $0x78] sm:$0xff]
    %v39 = vld [vmem:[#allocation2 + $0x80] sm:$0xff]
    %v40 = vld [vmem:[#allocation2 + $0x88] sm:$0xff]
    %v41 = vld [vmem:[#allocation2 + $0x90] sm:$0xff]
    %v42 = vld [vmem:[#allocation2 + $0x98] sm:$0xff]
    %v43 = vld [vmem:[#allocation2 + $0xa0] sm:$0xff]
    %v44 = vld [vmem:[#allocation2 + $0xa8] sm:$0xff]
    %v45 = vld [vmem:[#allocation2 + $0xb0] sm:$0xff]
    %v46 = vld [vmem:[#allocation2 + $0xb8] sm:$0xff]
    %v47 = vld [vmem:[#allocation2 + $0xc0] sm:$0xff]
    %v48 = vld [vmem:[#allocation2 + $0xc8] sm:$0xff]
    %v49 = vld [vmem:[#allocation2 + $0xd0] sm:$0xff]
    %v50 = vld [vmem:[#allocation2 + $0xd8] sm:$0xff]
    %v51 = vld [vmem:[#allocation2 + $0xe0] sm:$0xff]
    %v52 = vld [vmem:[#allocation2 + $0xe8] sm:$0xff]
    %v53 = vld [vmem:[#allocation2 + $0xf0] sm:$0xff]
    %v54 = vld [vmem:[#allocation2 + $0xf8] sm:$0xff]
    %v55 = vld [vmem:[#allocation2 + $0x100] sm:$0xff]
    %v56 = vld [vmem:[#allocation2 + $0x108] sm:$0xff]
    %v57 = vld [vmem:[#allocation2 + $0x110] sm:$0xff]
    %v58 = vld [vmem:[#allocation2 + $0x118] sm:$0xff]
    %v59 = vld [vmem:[#allocation2 + $0x120] sm:$0xff]
    %v60 = vld [vmem:[#allocation2 + $0x128] sm:$0xff]
    %v61 = vld [vmem:[#allocation2 + $0x130] sm:$0xff]
    %v62 = vld [vmem:[#allocation2 + $0x138] sm:$0xff]
    %v63 = vld [vmem:[#allocation2 + $0x140] sm:$0xff]
    %v64 = vld [vmem:[#allocation2 + $0x148] sm:$0xff]
    %v65 = vld [vmem:[#allocation2 + $0x150] sm:$0xff]
    %v66 = vld [vmem:[#allocation2 + $0x158] sm:$0xff]
    %v67 = vld [vmem:[#allocation2 + $0x160] sm:$0xff]
    %v68 = vld [vmem:[#allocation2 + $0x168] sm:$0xff]
    %v69 = vld [vmem:[#allocation2 + $0x170] sm:$0xff]
    %v70 = vld [vmem:[#allocation2 + $0x178] sm:$0xff]
    %v71 = vld [vmem:[#allocation2 + $0x180] sm:$0xff]
    %v72 = vld [vmem:[#allocation2 + $0x188] sm:$0xff]
    %v73 = vld [vmem:[#allocation2 + $0x190] sm:$0xff]
    %v74 = vld [vmem:[#allocation2 + $0x198] sm:$0xff]
    %v75 = vld [vmem:[#allocation2 + $0x1a0] sm:$0xff]
    %v76 = vld [vmem:[#allocation2 + $0x1a8] sm:$0xff]
    %v77 = vld [vmem:[#allocation2 + $0x1b0] sm:$0xff]
    %v78 = vld [vmem:[#allocation2 + $0x1b8] sm:$0xff]
    %v79 = vld [vmem:[#allocation2 + $0x1c0] sm:$0xff]
    %v80 = vld [vmem:[#allocation2 + $0x1c8] sm:$0xff]
    %v81 = vld [vmem:[#allocation2 + $0x1d0] sm:$0xff]
    %v82 = vld [vmem:[#allocation2 + $0x1d8] sm:$0xff]
    %v83 = vld [vmem:[#allocation2 + $0x1e0] sm:$0xff]
    %v84 = vld [vmem:[#allocation2 + $0x1e8] sm:$0xff]
    %v85 = vld [vmem:[#allocation2 + $0x1f0] sm:$0xff]
    %v86 = vld [vmem:[#allocation2 + $0x1f8] sm:$0xff]
    %v87 = vand.u32 2147483647, %v23
    %vm88 = vcmp.le.f32.partialorder %v87, 0.7853982
    %vm89 = vcmp.lt.s32.totalorder %v23, 0
    %v90 = vand.u32 %v23, 2139095040
    %v91 = vshrl.u32 %v90, 23
    %v92 = vsub.s32 %v91, 127
    %v93 = vand.u32 2147483647, %v23
    %v94 = vand.u32 %v93, 8388607
    %v95 = vor.u32 %v94, 8388608
    %v96 = vsub.s32 0, %v95
    %v97 = vadd.s32 %v92, 1
    %vm98 = vcmp.gt.s32.totalorder %v97, 0
    %v99 = vsel %vm98, %v97, 0
    %v100 = vshrl.u32 %v99, 5
    %v101 = vand.u32 %v99, 31
    %v102 = vsub.s32 32, %v101
    %v103 = vshrl.u32 683565275, %v102
    %v104 = vshll.u32 683565275, %v101
    %v105 = vshrl.u32 2475754826, %v102
    %v106 = vor.u32 %v104, %v105
    %v107 = vshll.u32 2475754826, %v101
    %v108 = vshrl.u32 2131351028, %v102
    %v109 = vor.u32 %v107, %v108
    %v110 = vshll.u32 2131351028, %v101
    %v111 = vshrl.u32 2102212464, %v102
    %v112 = vor.u32 %v110, %v111
    %v113 = vshll.u32 2102212464, %v101
    %v114 = vshrl.u32 920167782, %v102
    %v115 = vor.u32 %v113, %v114
    %v116 = vshll.u32 920167782, %v101
    %v117 = vshrl.u32 1326507024, %v102
    %v118 = vor.u32 %v116, %v117
    %vm119 = vcmp.lt.s32.totalorder %v100, 1
    %vm120 = vcmp.lt.s32.totalorder %v100, 2
    %vm121 = vcmp.lt.s32.totalorder %v100, 3
    %vm122 = vcmp.lt.s32.totalorder %v100, 4
    %v123 = vsel %vm119, %v103, %v106
    %v124 = vsel %vm122, %v112, 2102212464
    %v125 = vsel %vm121, %v109, %v124
    %v126 = vsel %vm120, %v123, %v125
    %v127 = vsel %vm119, %v106, %v109
    %v128 = vsel %vm122, %v115, 920167782
    %v129 = vsel %vm121, %v112, %v128
    %v130 = vsel %vm120, %v127, %v129
    %v131 = vsel %vm119, %v109, %v112
    %v132 = vsel %vm122, %v118, 1326507024
    %v133 = vsel %vm121, %v115, %v132
    %v134 = vsel %vm120, %v131, %v133
    %v135 = vshll.u32 %v95, 8
    %v136 = vmul.u32.u64.compose %v135, %v134
    %v137 = vextract.low.u32 %v136
    %v138 = vextract.high.u32 %v136
    %v139 = vmul.u32.u64.compose %v135, %v130
    %v140 = vextract.low.u32 %v139
    %v141 = vextract.high.u32 %v139
    %v142 = vmul.u32 %v135, %v126
    %v143 = vadd.s32 %v138, %v140
    %vm144 = vc.u32 %v138, %v140
    %v145 = vadd.s32 %v141, 1
    %v146 = vsel %vm144, %v145, %v141
    %v147 = vadd.s32 %v142, %v146
    %v148 = vadd.s32 %v147, 536870912
    %v149 = vshrl.u32 %v148, 30
    %v150 = vshll.u32 %v149, 30
    %v151 = vsub.s32 %v147, %v150
    %vm152 = vcmp.lt.s32.totalorder %v151, 0
    %v153 = vsub.s32 0, %v151
    %v154 = vsel %vm152, %v153, %v151
    %v155 = vclz %v154
    %v156 = vsub.s32 %v155, 2
    %vm157 = vcmp.gt.s32.totalorder 0, %v156
    %v158 = vsel %vm157, 0, %v156
    %v159 = vsub.s32 32, %v158
    %v160 = vshll.u32 %v151, %v158
    %v161 = vshrl.u32 %v143, %v159
    %v162 = vor.u32 %v160, %v161
    %v163 = vsub.s32 4294967266, %v158
    %v164 = vadd.s32 %v163, 127
    %v165 = vshll.u32 %v164, 23
    %v166 = vor.u32 4788187, %v165
    %v167 = vand.u32 2147483647, %v166
    %v169 = vcvt.s32.f32 %v162
    %v170 = vmul.f32 %v169, %v167
    %v171 = vxor.u32 %v170, 2147483648
    %v172 = vsel %vm89, %v171, %v170
    %v173 = vsub.s32 4, %v149
    %v174 = vsel %vm89, %v173, %v149
    %v175 = vsel %vm88, %v23, %v172
    %v176 = vsel %vm88, 0, %v174
    %v177 = vcosq.f32.pop %v175
    %v178 = vsinq.f32.pop %v175
    %vm179 = vweird.f32 %v23
    %v180 = vadd.s32 %v176, 3
    %v181 = vand.u32 %v180, 3
    %vm182 = vcmp.lt.s32.totalorder %v181, 2
    %vm183 = vcmp.eq.s32.totalorder %v181, 0
    %v184 = vxor.u32 %v178, 2147483648
    %v185 = vsel %vm183, %v177, %v184
    %vm186 = vcmp.eq.s32.totalorder %v181, 2
    %v187 = vxor.u32 %v177, 2147483648
    %v188 = vsel %vm186, %v187, %v178
    %v189 = vsel %vm182, %v185, %v188
    %v190 = vsel %vm179, nan, %v189
    %v191 = vand.u32 2147483647, %v24
    %vm192 = vcmp.le.f32.partialorder %v191, 0.7853982
    %vm193 = vcmp.lt.s32.totalorder %v24, 0
    %v194 = vand.u32 %v24, 2139095040
    %v195 = vshrl.u32 %v194, 23
    %v196 = vsub.s32 %v195, 127
    %v197 = vand.u32 2147483647, %v24
    %v198 = vand.u32 %v197, 8388607
    %v199 = vor.u32 %v198, 8388608
    %v200 = vsub.s32 0, %v199
    %v201 = vadd.s32 %v196, 1
    %vm202 = vcmp.gt.s32.totalorder %v201, 0
    %v203 = vsel %vm202, %v201, 0
    %v204 = vshrl.u32 %v203, 5
    %v205 = vand.u32 %v203, 31
    %v206 = vsub.s32 32, %v205
    %v207 = vshrl.u32 683565275, %v206
    %v208 = vshll.u32 683565275, %v205
    %v209 = vshrl.u32 2475754826, %v206
    %v210 = vor.u32 %v208, %v209
    %v211 = vshll.u32 2475754826, %v205
    %v212 = vshrl.u32 2131351028, %v206
    %v213 = vor.u32 %v211, %v212
    %v214 = vshll.u32 2131351028, %v205
    %v215 = vshrl.u32 2102212464, %v206
    %v216 = vor.u32 %v214, %v215
    %v217 = vshll.u32 2102212464, %v205
    %v218 = vshrl.u32 920167782, %v206
    %v219 = vor.u32 %v217, %v218
    %v220 = vshll.u32 920167782, %v205
    %v221 = vshrl.u32 1326507024, %v206
    %v222 = vor.u32 %v220, %v221
    %vm223 = vcmp.lt.s32.totalorder %v204, 1
    %vm224 = vcmp.lt.s32.totalorder %v204, 2
    %vm225 = vcmp.lt.s32.totalorder %v204, 3
    %vm226 = vcmp.lt.s32.totalorder %v204, 4
    %v227 = vsel %vm223, %v207, %v210
    %v228 = vsel %vm226, %v216, 2102212464
    %v229 = vsel %vm225, %v213, %v228
    %v230 = vsel %vm224, %v227, %v229
    %v231 = vsel %vm223, %v210, %v213
    %v232 = vsel %vm226, %v219, 920167782
    %v233 = vsel %vm225, %v216, %v232
    %v234 = vsel %vm224, %v231, %v233
    %v235 = vsel %vm223, %v213, %v216
    %v236 = vsel %vm226, %v222, 1326507024
    %v237 = vsel %vm225, %v219, %v236
    %v238 = vsel %vm224, %v235, %v237
    %v239 = vshll.u32 %v199, 8
    %v240 = vmul.u32.u64.compose %v239, %v238
    %v241 = vextract.low.u32 %v240
    %v242 = vextract.high.u32 %v240
    %v243 = vmul.u32.u64.compose %v239, %v234
    %v244 = vextract.low.u32 %v243
    %v245 = vextract.high.u32 %v243
    %v246 = vmul.u32 %v239, %v230
    %v247 = vadd.s32 %v242, %v244
    %vm248 = vc.u32 %v242, %v244
    %v249 = vadd.s32 %v245, 1
    %v250 = vsel %vm248, %v249, %v245
    %v251 = vadd.s32 %v246, %v250
    %v252 = vadd.s32 %v251, 536870912
    %v253 = vshrl.u32 %v252, 30
    %v254 = vshll.u32 %v253, 30
    %v255 = vsub.s32 %v251, %v254
    %vm256 = vcmp.lt.s32.totalorder %v255, 0
    %v257 = vsub.s32 0, %v255
    %v258 = vsel %vm256, %v257, %v255
    %v259 = vclz %v258
    %v260 = vsub.s32 %v259, 2
    %vm261 = vcmp.gt.s32.totalorder 0, %v260
    %v262 = vsel %vm261, 0, %v260
    %v263 = vsub.s32 32, %v262
    %v264 = vshll.u32 %v255, %v262
    %v265 = vshrl.u32 %v247, %v263
    %v266 = vor.u32 %v264, %v265
    %v267 = vsub.s32 4294967266, %v262
    %v268 = vadd.s32 %v267, 127
    %v269 = vshll.u32 %v268, 23
    %v270 = vor.u32 4788187, %v269
    %v271 = vand.u32 2147483647, %v270
    %v273 = vcvt.s32.f32 %v266
    %v274 = vmul.f32 %v273, %v271
    %v275 = vxor.u32 %v274, 2147483648
    %v276 = vsel %vm193, %v275, %v274
    %v277 = vsub.s32 4, %v253
    %v278 = vsel %vm193, %v277, %v253
    %v279 = vsel %vm192, %v24, %v276
    %v280 = vsel %vm192, 0, %v278
    %v281 = vcosq.f32.pop %v279
    %v282 = vsinq.f32.pop %v279
    %vm283 = vweird.f32 %v24
    %v284 = vadd.s32 %v280, 3
    %v285 = vand.u32 %v284, 3
    %vm286 = vcmp.lt.s32.totalorder %v285, 2
    %vm287 = vcmp.eq.s32.totalorder %v285, 0
    %v288 = vxor.u32 %v282, 2147483648
    %v289 = vsel %vm287, %v281, %v288
    %vm290 = vcmp.eq.s32.totalorder %v285, 2
    %v291 = vxor.u32 %v281, 2147483648
    %v292 = vsel %vm290, %v291, %v282
    %v293 = vsel %vm286, %v289, %v292
    %v294 = vsel %vm283, nan, %v293
    %v295 = vand.u32 2147483647, %v25
    %vm296 = vcmp.le.f32.partialorder %v295, 0.7853982
    %vm297 = vcmp.lt.s32.totalorder %v25, 0
    %v298 = vand.u32 %v25, 2139095040
    %v299 = vshrl.u32 %v298, 23
    %v300 = vsub.s32 %v299, 127
    %v301 = vand.u32 2147483647, %v25
    %v302 = vand.u32 %v301, 8388607
    %v303 = vor.u32 %v302, 8388608
    %v304 = vsub.s32 0, %v303
    %v305 = vadd.s32 %v300, 1
    %vm306 = vcmp.gt.s32.totalorder %v305, 0
    %v307 = vsel %vm306, %v305, 0
    %v308 = vshrl.u32 %v307, 5
    %v309 = vand.u32 %v307, 31
    %v310 = vsub.s32 32, %v309
    %v311 = vshrl.u32 683565275, %v310
    %v312 = vshll.u32 683565275, %v309
    %v313 = vshrl.u32 2475754826, %v310
    %v314 = vor.u32 %v312, %v313
    %v315 = vshll.u32 2475754826, %v309
    %v316 = vshrl.u32 2131351028, %v310
    %v317 = vor.u32 %v315, %v316
    %v318 = vshll.u32 2131351028, %v309
    %v319 = vshrl.u32 2102212464, %v310
    %v320 = vor.u32 %v318, %v319
    %v321 = vshll.u32 2102212464, %v309
    %v322 = vshrl.u32 920167782, %v310
    %v323 = vor.u32 %v321, %v322
    %v324 = vshll.u32 920167782, %v309
    %v325 = vshrl.u32 1326507024, %v310
    %v326 = vor.u32 %v324, %v325
    %vm327 = vcmp.lt.s32.totalorder %v308, 1
    %vm328 = vcmp.lt.s32.totalorder %v308, 2
    %vm329 = vcmp.lt.s32.totalorder %v308, 3
    %vm330 = vcmp.lt.s32.totalorder %v308, 4
    %v331 = vsel %vm327, %v311, %v314
    %v332 = vsel %vm330, %v320, 2102212464
    %v333 = vsel %vm329, %v317, %v332
    %v334 = vsel %vm328, %v331, %v333
    %v335 = vsel %vm327, %v314, %v317
    %v336 = vsel %vm330, %v323, 920167782
    %v337 = vsel %vm329, %v320, %v336
    %v338 = vsel %vm328, %v335, %v337
    %v339 = vsel %vm327, %v317, %v320
    %v340 = vsel %vm330, %v326, 1326507024
    %v341 = vsel %vm329, %v323, %v340
    %v342 = vsel %vm328, %v339, %v341
    %v343 = vshll.u32 %v303, 8
    %v344 = vmul.u32.u64.compose %v343, %v342
    %v345 = vextract.low.u32 %v344
    %v346 = vextract.high.u32 %v344
    %v347 = vmul.u32.u64.compose %v343, %v338
    %v348 = vextract.low.u32 %v347
    %v349 = vextract.high.u32 %v347
    %v350 = vmul.u32 %v343, %v334
    %v351 = vadd.s32 %v346, %v348
    %vm352 = vc.u32 %v346, %v348
    %v353 = vadd.s32 %v349, 1
    %v354 = vsel %vm352, %v353, %v349
    %v355 = vadd.s32 %v350, %v354
    %v356 = vadd.s32 %v355, 536870912
    %v357 = vshrl.u32 %v356, 30
    %v358 = vshll.u32 %v357, 30
    %v359 = vsub.s32 %v355, %v358
    %vm360 = vcmp.lt.s32.totalorder %v359, 0
    %v361 = vsub.s32 0, %v359
    %v362 = vsel %vm360, %v361, %v359
    %v363 = vclz %v362
    %v364 = vsub.s32 %v363, 2
    %vm365 = vcmp.gt.s32.totalorder 0, %v364
    %v366 = vsel %vm365, 0, %v364
    %v367 = vsub.s32 32, %v366
    %v368 = vshll.u32 %v359, %v366
    %v369 = vshrl.u32 %v351, %v367
    %v370 = vor.u32 %v368, %v369
    %v371 = vsub.s32 4294967266, %v366
    %v372 = vadd.s32 %v371, 127
    %v373 = vshll.u32 %v372, 23
    %v374 = vor.u32 4788187, %v373
    %v375 = vand.u32 2147483647, %v374
    %v377 = vcvt.s32.f32 %v370
    %v378 = vmul.f32 %v377, %v375
    %v379 = vxor.u32 %v378, 2147483648
    %v380 = vsel %vm297, %v379, %v378
    %v381 = vsub.s32 4, %v357
    %v382 = vsel %vm297, %v381, %v357
    %v383 = vsel %vm296, %v25, %v380
    %v384 = vsel %vm296, 0, %v382
    %v385 = vcosq.f32.pop %v383
    %v386 = vsinq.f32.pop %v383
    %vm387 = vweird.f32 %v25
    %v388 = vadd.s32 %v384, 3
    %v389 = vand.u32 %v388, 3
    %vm390 = vcmp.lt.s32.totalorder %v389, 2
    %vm391 = vcmp.eq.s32.totalorder %v389, 0
    %v392 = vxor.u32 %v386, 2147483648
    %v393 = vsel %vm391, %v385, %v392
    %vm394 = vcmp.eq.s32.totalorder %v389, 2
    %v395 = vxor.u32 %v385, 2147483648
    %v396 = vsel %vm394, %v395, %v386
    %v397 = vsel %vm390, %v393, %v396
    %v398 = vsel %vm387, nan, %v397
    %v399 = vand.u32 2147483647, %v26
    %vm400 = vcmp.le.f32.partialorder %v399, 0.7853982
    %vm401 = vcmp.lt.s32.totalorder %v26, 0
    %v402 = vand.u32 %v26, 2139095040
    %v403 = vshrl.u32 %v402, 23
    %v404 = vsub.s32 %v403, 127
    %v405 = vand.u32 2147483647, %v26
    %v406 = vand.u32 %v405, 8388607
    %v407 = vor.u32 %v406, 8388608
    %v408 = vsub.s32 0, %v407
    %v409 = vadd.s32 %v404, 1
    %vm410 = vcmp.gt.s32.totalorder %v409, 0
    %v411 = vsel %vm410, %v409, 0
    %v412 = vshrl.u32 %v411, 5
    %v413 = vand.u32 %v411, 31
    %v414 = vsub.s32 32, %v413
    %v415 = vshrl.u32 683565275, %v414
    %v416 = vshll.u32 683565275, %v413
    %v417 = vshrl.u32 2475754826, %v414
    %v418 = vor.u32 %v416, %v417
    %v419 = vshll.u32 2475754826, %v413
    %v420 = vshrl.u32 2131351028, %v414
    %v421 = vor.u32 %v419, %v420
    %v422 = vshll.u32 2131351028, %v413
    %v423 = vshrl.u32 2102212464, %v414
    %v424 = vor.u32 %v422, %v423
    %v425 = vshll.u32 2102212464, %v413
    %v426 = vshrl.u32 920167782, %v414
    %v427 = vor.u32 %v425, %v426
    %v428 = vshll.u32 920167782, %v413
    %v429 = vshrl.u32 1326507024, %v414
    %v430 = vor.u32 %v428, %v429
    %vm431 = vcmp.lt.s32.totalorder %v412, 1
    %vm432 = vcmp.lt.s32.totalorder %v412, 2
    %vm433 = vcmp.lt.s32.totalorder %v412, 3
    %vm434 = vcmp.lt.s32.totalorder %v412, 4
    %v435 = vsel %vm431, %v415, %v418
    %v436 = vsel %vm434, %v424, 2102212464
    %v437 = vsel %vm433, %v421, %v436
    %v438 = vsel %vm432, %v435, %v437
    %v439 = vsel %vm431, %v418, %v421
    %v440 = vsel %vm434, %v427, 920167782
    %v441 = vsel %vm433, %v424, %v440
    %v442 = vsel %vm432, %v439, %v441
    %v443 = vsel %vm431, %v421, %v424
    %v444 = vsel %vm434, %v430, 1326507024
    %v445 = vsel %vm433, %v427, %v444
    %v446 = vsel %vm432, %v443, %v445
    %v447 = vshll.u32 %v407, 8
    %v448 = vmul.u32.u64.compose %v447, %v446
    %v449 = vextract.low.u32 %v448
    %v450 = vextract.high.u32 %v448
    %v451 = vmul.u32.u64.compose %v447, %v442
    %v452 = vextract.low.u32 %v451
    %v453 = vextract.high.u32 %v451
    %v454 = vmul.u32 %v447, %v438
    %v455 = vadd.s32 %v450, %v452
    %vm456 = vc.u32 %v450, %v452
    %v457 = vadd.s32 %v453, 1
    %v458 = vsel %vm456, %v457, %v453
    %v459 = vadd.s32 %v454, %v458
    %v460 = vadd.s32 %v459, 536870912
    %v461 = vshrl.u32 %v460, 30
    %v462 = vshll.u32 %v461, 30
    %v463 = vsub.s32 %v459, %v462
    %vm464 = vcmp.lt.s32.totalorder %v463, 0
    %v465 = vsub.s32 0, %v463
    %v466 = vsel %vm464, %v465, %v463
    %v467 = vclz %v466
    %v468 = vsub.s32 %v467, 2
    %vm469 = vcmp.gt.s32.totalorder 0, %v468
    %v470 = vsel %vm469, 0, %v468
    %v471 = vsub.s32 32, %v470
    %v472 = vshll.u32 %v463, %v470
    %v473 = vshrl.u32 %v455, %v471
    %v474 = vor.u32 %v472, %v473
    %v475 = vsub.s32 4294967266, %v470
    %v476 = vadd.s32 %v475, 127
    %v477 = vshll.u32 %v476, 23
    %v478 = vor.u32 4788187, %v477
    %v479 = vand.u32 2147483647, %v478
    %v481 = vcvt.s32.f32 %v474
    %v482 = vmul.f32 %v481, %v479
    %v483 = vxor.u32 %v482, 2147483648
    %v484 = vsel %vm401, %v483, %v482
    %v485 = vsub.s32 4, %v461
    %v486 = vsel %vm401, %v485, %v461
    %v487 = vsel %vm400, %v26, %v484
    %v488 = vsel %vm400, 0, %v486
    %v489 = vcosq.f32.pop %v487
    %v490 = vsinq.f32.pop %v487
    %vm491 = vweird.f32 %v26
    %v492 = vadd.s32 %v488, 3
    %v493 = vand.u32 %v492, 3
    %vm494 = vcmp.lt.s32.totalorder %v493, 2
    %vm495 = vcmp.eq.s32.totalorder %v493, 0
    %v496 = vxor.u32 %v490, 2147483648
    %v497 = vsel %vm495, %v489, %v496
    %vm498 = vcmp.eq.s32.totalorder %v493, 2
    %v499 = vxor.u32 %v489, 2147483648
    %v500 = vsel %vm498, %v499, %v490
    %v501 = vsel %vm494, %v497, %v500
    %v502 = vsel %vm491, nan, %v501
    %v503 = vand.u32 2147483647, %v27
    %vm504 = vcmp.le.f32.partialorder %v503, 0.7853982
    %vm505 = vcmp.lt.s32.totalorder %v27, 0
    %v506 = vand.u32 %v27, 2139095040
    %v507 = vshrl.u32 %v506, 23
    %v508 = vsub.s32 %v507, 127
    %v509 = vand.u32 2147483647, %v27
    %v510 = vand.u32 %v509, 8388607
    %v511 = vor.u32 %v510, 8388608
    %v512 = vsub.s32 0, %v511
    %v513 = vadd.s32 %v508, 1
    %vm514 = vcmp.gt.s32.totalorder %v513, 0
    %v515 = vsel %vm514, %v513, 0
    %v516 = vshrl.u32 %v515, 5
    %v517 = vand.u32 %v515, 31
    %v518 = vsub.s32 32, %v517
    %v519 = vshrl.u32 683565275, %v518
    %v520 = vshll.u32 683565275, %v517
    %v521 = vshrl.u32 2475754826, %v518
    %v522 = vor.u32 %v520, %v521
    %v523 = vshll.u32 2475754826, %v517
    %v524 = vshrl.u32 2131351028, %v518
    %v525 = vor.u32 %v523, %v524
    %v526 = vshll.u32 2131351028, %v517
    %v527 = vshrl.u32 2102212464, %v518
    %v528 = vor.u32 %v526, %v527
    %v529 = vshll.u32 2102212464, %v517
    %v530 = vshrl.u32 920167782, %v518
    %v531 = vor.u32 %v529, %v530
    %v532 = vshll.u32 920167782, %v517
    %v533 = vshrl.u32 1326507024, %v518
    %v534 = vor.u32 %v532, %v533
    %vm535 = vcmp.lt.s32.totalorder %v516, 1
    %vm536 = vcmp.lt.s32.totalorder %v516, 2
    %vm537 = vcmp.lt.s32.totalorder %v516, 3
    %vm538 = vcmp.lt.s32.totalorder %v516, 4
    %v539 = vsel %vm535, %v519, %v522
    %v540 = vsel %vm538, %v528, 2102212464
    %v541 = vsel %vm537, %v525, %v540
    %v542 = vsel %vm536, %v539, %v541
    %v543 = vsel %vm535, %v522, %v525
    %v544 = vsel %vm538, %v531, 920167782
    %v545 = vsel %vm537, %v528, %v544
    %v546 = vsel %vm536, %v543, %v545
    %v547 = vsel %vm535, %v525, %v528
    %v548 = vsel %vm538, %v534, 1326507024
    %v549 = vsel %vm537, %v531, %v548
    %v550 = vsel %vm536, %v547, %v549
    %v551 = vshll.u32 %v511, 8
    %v552 = vmul.u32.u64.compose %v551, %v550
    %v553 = vextract.low.u32 %v552
    %v554 = vextract.high.u32 %v552
    %v555 = vmul.u32.u64.compose %v551, %v546
    %v556 = vextract.low.u32 %v555
    %v557 = vextract.high.u32 %v555
    %v558 = vmul.u32 %v551, %v542
    %v559 = vadd.s32 %v554, %v556
    %vm560 = vc.u32 %v554, %v556
    %v561 = vadd.s32 %v557, 1
    %v562 = vsel %vm560, %v561, %v557
    %v563 = vadd.s32 %v558, %v562
    %v564 = vadd.s32 %v563, 536870912
    %v565 = vshrl.u32 %v564, 30
    %v566 = vshll.u32 %v565, 30
    %v567 = vsub.s32 %v563, %v566
    %vm568 = vcmp.lt.s32.totalorder %v567, 0
    %v569 = vsub.s32 0, %v567
    %v570 = vsel %vm568, %v569, %v567
    %v571 = vclz %v570
    %v572 = vsub.s32 %v571, 2
    %vm573 = vcmp.gt.s32.totalorder 0, %v572
    %v574 = vsel %vm573, 0, %v572
    %v575 = vsub.s32 32, %v574
    %v576 = vshll.u32 %v567, %v574
    %v577 = vshrl.u32 %v559, %v575
    %v578 = vor.u32 %v576, %v577
    %v579 = vsub.s32 4294967266, %v574
    %v580 = vadd.s32 %v579, 127
    %v581 = vshll.u32 %v580, 23
    %v582 = vor.u32 4788187, %v581
    %v583 = vand.u32 2147483647, %v582
    %v585 = vcvt.s32.f32 %v578
    %v586 = vmul.f32 %v585, %v583
    %v587 = vxor.u32 %v586, 2147483648
    %v588 = vsel %vm505, %v587, %v586
    %v589 = vsub.s32 4, %v565
    %v590 = vsel %vm505, %v589, %v565
    %v591 = vsel %vm504, %v27, %v588
    %v592 = vsel %vm504, 0, %v590
    %v593 = vcosq.f32.pop %v591
    %v594 = vsinq.f32.pop %v591
    %vm595 = vweird.f32 %v27
    %v596 = vadd.s32 %v592, 3
    %v597 = vand.u32 %v596, 3
    %vm598 = vcmp.lt.s32.totalorder %v597, 2
    %vm599 = vcmp.eq.s32.totalorder %v597, 0
    %v600 = vxor.u32 %v594, 2147483648
    %v601 = vsel %vm599, %v593, %v600
    %vm602 = vcmp.eq.s32.totalorder %v597, 2
    %v603 = vxor.u32 %v593, 2147483648
    %v604 = vsel %vm602, %v603, %v594
    %v605 = vsel %vm598, %v601, %v604
    %v606 = vsel %vm595, nan, %v605
    %v607 = vand.u32 2147483647, %v28
    %vm608 = vcmp.le.f32.partialorder %v607, 0.7853982
    %vm609 = vcmp.lt.s32.totalorder %v28, 0
    %v610 = vand.u32 %v28, 2139095040
    %v611 = vshrl.u32 %v610, 23
    %v612 = vsub.s32 %v611, 127
    %v613 = vand.u32 2147483647, %v28
    %v614 = vand.u32 %v613, 8388607
    %v615 = vor.u32 %v614, 8388608
    %v616 = vsub.s32 0, %v615
    %v617 = vadd.s32 %v612, 1
    %vm618 = vcmp.gt.s32.totalorder %v617, 0
    %v619 = vsel %vm618, %v617, 0
    %v620 = vshrl.u32 %v619, 5
    %v621 = vand.u32 %v619, 31
    %v622 = vsub.s32 32, %v621
    %v623 = vshrl.u32 683565275, %v622
    %v624 = vshll.u32 683565275, %v621
    %v625 = vshrl.u32 2475754826, %v622
    %v626 = vor.u32 %v624, %v625
    %v627 = vshll.u32 2475754826, %v621
    %v628 = vshrl.u32 2131351028, %v622
    %v629 = vor.u32 %v627, %v628
    %v630 = vshll.u32 2131351028, %v621
    %v631 = vshrl.u32 2102212464, %v622
    %v632 = vor.u32 %v630, %v631
    %v633 = vshll.u32 2102212464, %v621
    %v634 = vshrl.u32 920167782, %v622
    %v635 = vor.u32 %v633, %v634
    %v636 = vshll.u32 920167782, %v621
    %v637 = vshrl.u32 1326507024, %v622
    %v638 = vor.u32 %v636, %v637
    %vm639 = vcmp.lt.s32.totalorder %v620, 1
    %vm640 = vcmp.lt.s32.totalorder %v620, 2
    %vm641 = vcmp.lt.s32.totalorder %v620, 3
    %vm642 = vcmp.lt.s32.totalorder %v620, 4
    %v643 = vsel %vm639, %v623, %v626
    %v644 = vsel %vm642, %v632, 2102212464
    %v645 = vsel %vm641, %v629, %v644
    %v646 = vsel %vm640, %v643, %v645
    %v647 = vsel %vm639, %v626, %v629
    %v648 = vsel %vm642, %v635, 920167782
    %v649 = vsel %vm641, %v632, %v648
    %v650 = vsel %vm640, %v647, %v649
    %v651 = vsel %vm639, %v629, %v632
    %v652 = vsel %vm642, %v638, 1326507024
    %v653 = vsel %vm641, %v635, %v652
    %v654 = vsel %vm640, %v651, %v653
    %v655 = vshll.u32 %v615, 8
    %v656 = vmul.u32.u64.compose %v655, %v654
    %v657 = vextract.low.u32 %v656
    %v658 = vextract.high.u32 %v656
    %v659 = vmul.u32.u64.compose %v655, %v650
    %v660 = vextract.low.u32 %v659
    %v661 = vextract.high.u32 %v659
    %v662 = vmul.u32 %v655, %v646
    %v663 = vadd.s32 %v658, %v660
    %vm664 = vc.u32 %v658, %v660
    %v665 = vadd.s32 %v661, 1
    %v666 = vsel %vm664, %v665, %v661
    %v667 = vadd.s32 %v662, %v666
    %v668 = vadd.s32 %v667, 536870912
    %v669 = vshrl.u32 %v668, 30
    %v670 = vshll.u32 %v669, 30
    %v671 = vsub.s32 %v667, %v670
    %vm672 = vcmp.lt.s32.totalorder %v671, 0
    %v673 = vsub.s32 0, %v671
    %v674 = vsel %vm672, %v673, %v671
    %v675 = vclz %v674
    %v676 = vsub.s32 %v675, 2
    %vm677 = vcmp.gt.s32.totalorder 0, %v676
    %v678 = vsel %vm677, 0, %v676
    %v679 = vsub.s32 32, %v678
    %v680 = vshll.u32 %v671, %v678
    %v681 = vshrl.u32 %v663, %v679
    %v682 = vor.u32 %v680, %v681
    %v683 = vsub.s32 4294967266, %v678
    %v684 = vadd.s32 %v683, 127
    %v685 = vshll.u32 %v684, 23
    %v686 = vor.u32 4788187, %v685
    %v687 = vand.u32 2147483647, %v686
    %v689 = vcvt.s32.f32 %v682
    %v690 = vmul.f32 %v689, %v687
    %v691 = vxor.u32 %v690, 2147483648
    %v692 = vsel %vm609, %v691, %v690
    %v693 = vsub.s32 4, %v669
    %v694 = vsel %vm609, %v693, %v669
    %v695 = vsel %vm608, %v28, %v692
    %v696 = vsel %vm608, 0, %v694
    %v697 = vcosq.f32.pop %v695
    %v698 = vsinq.f32.pop %v695
    %vm699 = vweird.f32 %v28
    %v700 = vadd.s32 %v696, 3
    %v701 = vand.u32 %v700, 3
    %vm702 = vcmp.lt.s32.totalorder %v701, 2
    %vm703 = vcmp.eq.s32.totalorder %v701, 0
    %v704 = vxor.u32 %v698, 2147483648
    %v705 = vsel %vm703, %v697, %v704
    %vm706 = vcmp.eq.s32.totalorder %v701, 2
    %v707 = vxor.u32 %v697, 2147483648
    %v708 = vsel %vm706, %v707, %v698
    %v709 = vsel %vm702, %v705, %v708
    %v710 = vsel %vm699, nan, %v709
    %v711 = vand.u32 2147483647, %v29
    %vm712 = vcmp.le.f32.partialorder %v711, 0.7853982
    %vm713 = vcmp.lt.s32.totalorder %v29, 0
    %v714 = vand.u32 %v29, 2139095040
    %v715 = vshrl.u32 %v714, 23
    %v716 = vsub.s32 %v715, 127
    %v717 = vand.u32 2147483647, %v29
    %v718 = vand.u32 %v717, 8388607
    %v719 = vor.u32 %v718, 8388608
    %v720 = vsub.s32 0, %v719
    %v721 = vadd.s32 %v716, 1
    %vm722 = vcmp.gt.s32.totalorder %v721, 0
    %v723 = vsel %vm722, %v721, 0
    %v724 = vshrl.u32 %v723, 5
    %v725 = vand.u32 %v723, 31
    %v726 = vsub.s32 32, %v725
    %v727 = vshrl.u32 683565275, %v726
    %v728 = vshll.u32 683565275, %v725
    %v729 = vshrl.u32 2475754826, %v726
    %v730 = vor.u32 %v728, %v729
    %v731 = vshll.u32 2475754826, %v725
    %v732 = vshrl.u32 2131351028, %v726
    %v733 = vor.u32 %v731, %v732
    %v734 = vshll.u32 2131351028, %v725
    %v735 = vshrl.u32 2102212464, %v726
    %v736 = vor.u32 %v734, %v735
    %v737 = vshll.u32 2102212464, %v725
    %v738 = vshrl.u32 920167782, %v726
    %v739 = vor.u32 %v737, %v738
    %v740 = vshll.u32 920167782, %v725
    %v741 = vshrl.u32 1326507024, %v726
    %v742 = vor.u32 %v740, %v741
    %vm743 = vcmp.lt.s32.totalorder %v724, 1
    %vm744 = vcmp.lt.s32.totalorder %v724, 2
    %vm745 = vcmp.lt.s32.totalorder %v724, 3
    %vm746 = vcmp.lt.s32.totalorder %v724, 4
    %v747 = vsel %vm743, %v727, %v730
    %v748 = vsel %vm746, %v736, 2102212464
    %v749 = vsel %vm745, %v733, %v748
    %v750 = vsel %vm744, %v747, %v749
    %v751 = vsel %vm743, %v730, %v733
    %v752 = vsel %vm746, %v739, 920167782
    %v753 = vsel %vm745, %v736, %v752
    %v754 = vsel %vm744, %v751, %v753
    %v755 = vsel %vm743, %v733, %v736
    %v756 = vsel %vm746, %v742, 1326507024
    %v757 = vsel %vm745, %v739, %v756
    %v758 = vsel %vm744, %v755, %v757
    %v759 = vshll.u32 %v719, 8
    %v760 = vmul.u32.u64.compose %v759, %v758
    %v761 = vextract.low.u32 %v760
    %v762 = vextract.high.u32 %v760
    %v763 = vmul.u32.u64.compose %v759, %v754
    %v764 = vextract.low.u32 %v763
    %v765 = vextract.high.u32 %v763
    %v766 = vmul.u32 %v759, %v750
    %v767 = vadd.s32 %v762, %v764
    %vm768 = vc.u32 %v762, %v764
    %v769 = vadd.s32 %v765, 1
    %v770 = vsel %vm768, %v769, %v765
    %v771 = vadd.s32 %v766, %v770
    %v772 = vadd.s32 %v771, 536870912
    %v773 = vshrl.u32 %v772, 30
    %v774 = vshll.u32 %v773, 30
    %v775 = vsub.s32 %v771, %v774
    %vm776 = vcmp.lt.s32.totalorder %v775, 0
    %v777 = vsub.s32 0, %v775
    %v778 = vsel %vm776, %v777, %v775
    %v779 = vclz %v778
    %v780 = vsub.s32 %v779, 2
    %vm781 = vcmp.gt.s32.totalorder 0, %v780
    %v782 = vsel %vm781, 0, %v780
    %v783 = vsub.s32 32, %v782
    %v784 = vshll.u32 %v775, %v782
    %v785 = vshrl.u32 %v767, %v783
    %v786 = vor.u32 %v784, %v785
    %v787 = vsub.s32 4294967266, %v782
    %v788 = vadd.s32 %v787, 127
    %v789 = vshll.u32 %v788, 23
    %v790 = vor.u32 4788187, %v789
    %v791 = vand.u32 2147483647, %v790
    %v793 = vcvt.s32.f32 %v786
    %v794 = vmul.f32 %v793, %v791
    %v795 = vxor.u32 %v794, 2147483648
    %v796 = vsel %vm713, %v795, %v794
    %v797 = vsub.s32 4, %v773
    %v798 = vsel %vm713, %v797, %v773
    %v799 = vsel %vm712, %v29, %v796
    %v800 = vsel %vm712, 0, %v798
    %v801 = vcosq.f32.pop %v799
    %v802 = vsinq.f32.pop %v799
    %vm803 = vweird.f32 %v29
    %v804 = vadd.s32 %v800, 3
    %v805 = vand.u32 %v804, 3
    %vm806 = vcmp.lt.s32.totalorder %v805, 2
    %vm807 = vcmp.eq.s32.totalorder %v805, 0
    %v808 = vxor.u32 %v802, 2147483648
    %v809 = vsel %vm807, %v801, %v808
    %vm810 = vcmp.eq.s32.totalorder %v805, 2
    %v811 = vxor.u32 %v801, 2147483648
    %v812 = vsel %vm810, %v811, %v802
    %v813 = vsel %vm806, %v809, %v812
    %v814 = vsel %vm803, nan, %v813
    %v815 = vand.u32 2147483647, %v30
    %vm816 = vcmp.le.f32.partialorder %v815, 0.7853982
    %vm817 = vcmp.lt.s32.totalorder %v30, 0
    %v818 = vand.u32 %v30, 2139095040
    %v819 = vshrl.u32 %v818, 23
    %v820 = vsub.s32 %v819, 127
    %v821 = vand.u32 2147483647, %v30
    %v822 = vand.u32 %v821, 8388607
    %v823 = vor.u32 %v822, 8388608
    %v824 = vsub.s32 0, %v823
    %v825 = vadd.s32 %v820, 1
    %vm826 = vcmp.gt.s32.totalorder %v825, 0
    %v827 = vsel %vm826, %v825, 0
    %v828 = vshrl.u32 %v827, 5
    %v829 = vand.u32 %v827, 31
    %v830 = vsub.s32 32, %v829
    %v831 = vshrl.u32 683565275, %v830
    %v832 = vshll.u32 683565275, %v829
    %v833 = vshrl.u32 2475754826, %v830
    %v834 = vor.u32 %v832, %v833
    %v835 = vshll.u32 2475754826, %v829
    %v836 = vshrl.u32 2131351028, %v830
    %v837 = vor.u32 %v835, %v836
    %v838 = vshll.u32 2131351028, %v829
    %v839 = vshrl.u32 2102212464, %v830
    %v840 = vor.u32 %v838, %v839
    %v841 = vshll.u32 2102212464, %v829
    %v842 = vshrl.u32 920167782, %v830
    %v843 = vor.u32 %v841, %v842
    %v844 = vshll.u32 920167782, %v829
    %v845 = vshrl.u32 1326507024, %v830
    %v846 = vor.u32 %v844, %v845
    %vm847 = vcmp.lt.s32.totalorder %v828, 1
    %vm848 = vcmp.lt.s32.totalorder %v828, 2
    %vm849 = vcmp.lt.s32.totalorder %v828, 3
    %vm850 = vcmp.lt.s32.totalorder %v828, 4
    %v851 = vsel %vm847, %v831, %v834
    %v852 = vsel %vm850, %v840, 2102212464
    %v853 = vsel %vm849, %v837, %v852
    %v854 = vsel %vm848, %v851, %v853
    %v855 = vsel %vm847, %v834, %v837
    %v856 = vsel %vm850, %v843, 920167782
    %v857 = vsel %vm849, %v840, %v856
    %v858 = vsel %vm848, %v855, %v857
    %v859 = vsel %vm847, %v837, %v840
    %v860 = vsel %vm850, %v846, 1326507024
    %v861 = vsel %vm849, %v843, %v860
    %v862 = vsel %vm848, %v859, %v861
    %v863 = vshll.u32 %v823, 8
    %v864 = vmul.u32.u64.compose %v863, %v862
    %v865 = vextract.low.u32 %v864
    %v866 = vextract.high.u32 %v864
    %v867 = vmul.u32.u64.compose %v863, %v858
    %v868 = vextract.low.u32 %v867
    %v869 = vextract.high.u32 %v867
    %v870 = vmul.u32 %v863, %v854
    %v871 = vadd.s32 %v866, %v868
    %vm872 = vc.u32 %v866, %v868
    %v873 = vadd.s32 %v869, 1
    %v874 = vsel %vm872, %v873, %v869
    %v875 = vadd.s32 %v870, %v874
    %v876 = vadd.s32 %v875, 536870912
    %v877 = vshrl.u32 %v876, 30
    %v878 = vshll.u32 %v877, 30
    %v879 = vsub.s32 %v875, %v878
    %vm880 = vcmp.lt.s32.totalorder %v879, 0
    %v881 = vsub.s32 0, %v879
    %v882 = vsel %vm880, %v881, %v879
    %v883 = vclz %v882
    %v884 = vsub.s32 %v883, 2
    %vm885 = vcmp.gt.s32.totalorder 0, %v884
    %v886 = vsel %vm885, 0, %v884
    %v887 = vsub.s32 32, %v886
    %v888 = vshll.u32 %v879, %v886
    %v889 = vshrl.u32 %v871, %v887
    %v890 = vor.u32 %v888, %v889
    %v891 = vsub.s32 4294967266, %v886
    %v892 = vadd.s32 %v891, 127
    %v893 = vshll.u32 %v892, 23
    %v894 = vor.u32 4788187, %v893
    %v895 = vand.u32 2147483647, %v894
    %v897 = vcvt.s32.f32 %v890
    %v898 = vmul.f32 %v897, %v895
    %v899 = vxor.u32 %v898, 2147483648
    %v900 = vsel %vm817, %v899, %v898
    %v901 = vsub.s32 4, %v877
    %v902 = vsel %vm817, %v901, %v877
    %v903 = vsel %vm816, %v30, %v900
    %v904 = vsel %vm816, 0, %v902
    %v905 = vcosq.f32.pop %v903
    %v906 = vsinq.f32.pop %v903
    %vm907 = vweird.f32 %v30
    %v908 = vadd.s32 %v904, 3
    %v909 = vand.u32 %v908, 3
    %vm910 = vcmp.lt.s32.totalorder %v909, 2
    %vm911 = vcmp.eq.s32.totalorder %v909, 0
    %v912 = vxor.u32 %v906, 2147483648
    %v913 = vsel %vm911, %v905, %v912
    %vm914 = vcmp.eq.s32.totalorder %v909, 2
    %v915 = vxor.u32 %v905, 2147483648
    %v916 = vsel %vm914, %v915, %v906
    %v917 = vsel %vm910, %v913, %v916
    %v918 = vsel %vm907, nan, %v917
    %v919 = vand.u32 2147483647, %v31
    %vm920 = vcmp.le.f32.partialorder %v919, 0.7853982
    %vm921 = vcmp.lt.s32.totalorder %v31, 0
    %v922 = vand.u32 %v31, 2139095040
    %v923 = vshrl.u32 %v922, 23
    %v924 = vsub.s32 %v923, 127
    %v925 = vand.u32 2147483647, %v31
    %v926 = vand.u32 %v925, 8388607
    %v927 = vor.u32 %v926, 8388608
    %v928 = vsub.s32 0, %v927
    %v929 = vadd.s32 %v924, 1
    %vm930 = vcmp.gt.s32.totalorder %v929, 0
    %v931 = vsel %vm930, %v929, 0
    %v932 = vshrl.u32 %v931, 5
    %v933 = vand.u32 %v931, 31
    %v934 = vsub.s32 32, %v933
    %v935 = vshrl.u32 683565275, %v934
    %v936 = vshll.u32 683565275, %v933
    %v937 = vshrl.u32 2475754826, %v934
    %v938 = vor.u32 %v936, %v937
    %v939 = vshll.u32 2475754826, %v933
    %v940 = vshrl.u32 2131351028, %v934
    %v941 = vor.u32 %v939, %v940
    %v942 = vshll.u32 2131351028, %v933
    %v943 = vshrl.u32 2102212464, %v934
    %v944 = vor.u32 %v942, %v943
    %v945 = vshll.u32 2102212464, %v933
    %v946 = vshrl.u32 920167782, %v934
    %v947 = vor.u32 %v945, %v946
    %v948 = vshll.u32 920167782, %v933
    %v949 = vshrl.u32 1326507024, %v934
    %v950 = vor.u32 %v948, %v949
    %vm951 = vcmp.lt.s32.totalorder %v932, 1
    %vm952 = vcmp.lt.s32.totalorder %v932, 2
    %vm953 = vcmp.lt.s32.totalorder %v932, 3
    %vm954 = vcmp.lt.s32.totalorder %v932, 4
    %v955 = vsel %vm951, %v935, %v938
    %v956 = vsel %vm954, %v944, 2102212464
    %v957 = vsel %vm953, %v941, %v956
    %v958 = vsel %vm952, %v955, %v957
    %v959 = vsel %vm951, %v938, %v941
    %v960 = vsel %vm954, %v947, 920167782
    %v961 = vsel %vm953, %v944, %v960
    %v962 = vsel %vm952, %v959, %v961
    %v963 = vsel %vm951, %v941, %v944
    %v964 = vsel %vm954, %v950, 1326507024
    %v965 = vsel %vm953, %v947, %v964
    %v966 = vsel %vm952, %v963, %v965
    %v967 = vshll.u32 %v927, 8
    %v968 = vmul.u32.u64.compose %v967, %v966
    %v969 = vextract.low.u32 %v968
    %v970 = vextract.high.u32 %v968
    %v971 = vmul.u32.u64.compose %v967, %v962
    %v972 = vextract.low.u32 %v971
    %v973 = vextract.high.u32 %v971
    %v974 = vmul.u32 %v967, %v958
    %v975 = vadd.s32 %v970, %v972
    %vm976 = vc.u32 %v970, %v972
    %v977 = vadd.s32 %v973, 1
    %v978 = vsel %vm976, %v977, %v973
    %v979 = vadd.s32 %v974, %v978
    %v980 = vadd.s32 %v979, 536870912
    %v981 = vshrl.u32 %v980, 30
    %v982 = vshll.u32 %v981, 30
    %v983 = vsub.s32 %v979, %v982
    %vm984 = vcmp.lt.s32.totalorder %v983, 0
    %v985 = vsub.s32 0, %v983
    %v986 = vsel %vm984, %v985, %v983
    %v987 = vclz %v986
    %v988 = vsub.s32 %v987, 2
    %vm989 = vcmp.gt.s32.totalorder 0, %v988
    %v990 = vsel %vm989, 0, %v988
    %v991 = vsub.s32 32, %v990
    %v992 = vshll.u32 %v983, %v990
    %v993 = vshrl.u32 %v975, %v991
    %v994 = vor.u32 %v992, %v993
    %v995 = vsub.s32 4294967266, %v990
    %v996 = vadd.s32 %v995, 127
    %v997 = vshll.u32 %v996, 23
    %v998 = vor.u32 4788187, %v997
    %v999 = vand.u32 2147483647, %v998
    %v1001 = vcvt.s32.f32 %v994
    %v1002 = vmul.f32 %v1001, %v999
    %v1003 = vxor.u32 %v1002, 2147483648
    %v1004 = vsel %vm921, %v1003, %v1002
    %v1005 = vsub.s32 4, %v981
    %v1006 = vsel %vm921, %v1005, %v981
    %v1007 = vsel %vm920, %v31, %v1004
    %v1008 = vsel %vm920, 0, %v1006
    %v1009 = vcosq.f32.pop %v1007
    %v1010 = vsinq.f32.pop %v1007
    %vm1011 = vweird.f32 %v31
    %v1012 = vadd.s32 %v1008, 3
    %v1013 = vand.u32 %v1012, 3
    %vm1014 = vcmp.lt.s32.totalorder %v1013, 2
    %vm1015 = vcmp.eq.s32.totalorder %v1013, 0
    %v1016 = vxor.u32 %v1010, 2147483648
    %v1017 = vsel %vm1015, %v1009, %v1016
    %vm1018 = vcmp.eq.s32.totalorder %v1013, 2
    %v1019 = vxor.u32 %v1009, 2147483648
    %v1020 = vsel %vm1018, %v1019, %v1010
    %v1021 = vsel %vm1014, %v1017, %v1020
    %v1022 = vsel %vm1011, nan, %v1021
    %v1023 = vand.u32 2147483647, %v32
    %vm1024 = vcmp.le.f32.partialorder %v1023, 0.7853982
    %vm1025 = vcmp.lt.s32.totalorder %v32, 0
    %v1026 = vand.u32 %v32, 2139095040
    %v1027 = vshrl.u32 %v1026, 23
    %v1028 = vsub.s32 %v1027, 127
    %v1029 = vand.u32 2147483647, %v32
    %v1030 = vand.u32 %v1029, 8388607
    %v1031 = vor.u32 %v1030, 8388608
    %v1032 = vsub.s32 0, %v1031
    %v1033 = vadd.s32 %v1028, 1
    %vm1034 = vcmp.gt.s32.totalorder %v1033, 0
    %v1035 = vsel %vm1034, %v1033, 0
    %v1036 = vshrl.u32 %v1035, 5
    %v1037 = vand.u32 %v1035, 31
    %v1038 = vsub.s32 32, %v1037
    %v1039 = vshrl.u32 683565275, %v1038
    %v1040 = vshll.u32 683565275, %v1037
    %v1041 = vshrl.u32 2475754826, %v1038
    %v1042 = vor.u32 %v1040, %v1041
    %v1043 = vshll.u32 2475754826, %v1037
    %v1044 = vshrl.u32 2131351028, %v1038
    %v1045 = vor.u32 %v1043, %v1044
    %v1046 = vshll.u32 2131351028, %v1037
    %v1047 = vshrl.u32 2102212464, %v1038
    %v1048 = vor.u32 %v1046, %v1047
    %v1049 = vshll.u32 2102212464, %v1037
    %v1050 = vshrl.u32 920167782, %v1038
    %v1051 = vor.u32 %v1049, %v1050
    %v1052 = vshll.u32 920167782, %v1037
    %v1053 = vshrl.u32 1326507024, %v1038
    %v1054 = vor.u32 %v1052, %v1053
    %vm1055 = vcmp.lt.s32.totalorder %v1036, 1
    %vm1056 = vcmp.lt.s32.totalorder %v1036, 2
    %vm1057 = vcmp.lt.s32.totalorder %v1036, 3
    %vm1058 = vcmp.lt.s32.totalorder %v1036, 4
    %v1059 = vsel %vm1055, %v1039, %v1042
    %v1060 = vsel %vm1058, %v1048, 2102212464
    %v1061 = vsel %vm1057, %v1045, %v1060
    %v1062 = vsel %vm1056, %v1059, %v1061
    %v1063 = vsel %vm1055, %v1042, %v1045
    %v1064 = vsel %vm1058, %v1051, 920167782
    %v1065 = vsel %vm1057, %v1048, %v1064
    %v1066 = vsel %vm1056, %v1063, %v1065
    %v1067 = vsel %vm1055, %v1045, %v1048
    %v1068 = vsel %vm1058, %v1054, 1326507024
    %v1069 = vsel %vm1057, %v1051, %v1068
    %v1070 = vsel %vm1056, %v1067, %v1069
    %v1071 = vshll.u32 %v1031, 8
    %v1072 = vmul.u32.u64.compose %v1071, %v1070
    %v1073 = vextract.low.u32 %v1072
    %v1074 = vextract.high.u32 %v1072
    %v1075 = vmul.u32.u64.compose %v1071, %v1066
    %v1076 = vextract.low.u32 %v1075
    %v1077 = vextract.high.u32 %v1075
    %v1078 = vmul.u32 %v1071, %v1062
    %v1079 = vadd.s32 %v1074, %v1076
    %vm1080 = vc.u32 %v1074, %v1076
    %v1081 = vadd.s32 %v1077, 1
    %v1082 = vsel %vm1080, %v1081, %v1077
    %v1083 = vadd.s32 %v1078, %v1082
    %v1084 = vadd.s32 %v1083, 536870912
    %v1085 = vshrl.u32 %v1084, 30
    %v1086 = vshll.u32 %v1085, 30
    %v1087 = vsub.s32 %v1083, %v1086
    %vm1088 = vcmp.lt.s32.totalorder %v1087, 0
    %v1089 = vsub.s32 0, %v1087
    %v1090 = vsel %vm1088, %v1089, %v1087
    %v1091 = vclz %v1090
    %v1092 = vsub.s32 %v1091, 2
    %vm1093 = vcmp.gt.s32.totalorder 0, %v1092
    %v1094 = vsel %vm1093, 0, %v1092
    %v1095 = vsub.s32 32, %v1094
    %v1096 = vshll.u32 %v1087, %v1094
    %v1097 = vshrl.u32 %v1079, %v1095
    %v1098 = vor.u32 %v1096, %v1097
    %v1099 = vsub.s32 4294967266, %v1094
    %v1100 = vadd.s32 %v1099, 127
    %v1101 = vshll.u32 %v1100, 23
    %v1102 = vor.u32 4788187, %v1101
    %v1103 = vand.u32 2147483647, %v1102
    %v1105 = vcvt.s32.f32 %v1098
    %v1106 = vmul.f32 %v1105, %v1103
    %v1107 = vxor.u32 %v1106, 2147483648
    %v1108 = vsel %vm1025, %v1107, %v1106
    %v1109 = vsub.s32 4, %v1085
    %v1110 = vsel %vm1025, %v1109, %v1085
    %v1111 = vsel %vm1024, %v32, %v1108
    %v1112 = vsel %vm1024, 0, %v1110
    %v1113 = vcosq.f32.pop %v1111
    %v1114 = vsinq.f32.pop %v1111
    %vm1115 = vweird.f32 %v32
    %v1116 = vadd.s32 %v1112, 3
    %v1117 = vand.u32 %v1116, 3
    %vm1118 = vcmp.lt.s32.totalorder %v1117, 2
    %vm1119 = vcmp.eq.s32.totalorder %v1117, 0
    %v1120 = vxor.u32 %v1114, 2147483648
    %v1121 = vsel %vm1119, %v1113, %v1120
    %vm1122 = vcmp.eq.s32.totalorder %v1117, 2
    %v1123 = vxor.u32 %v1113, 2147483648
    %v1124 = vsel %vm1122, %v1123, %v1114
    %v1125 = vsel %vm1118, %v1121, %v1124
    %v1126 = vsel %vm1115, nan, %v1125
    %v1127 = vand.u32 2147483647, %v33
    %vm1128 = vcmp.le.f32.partialorder %v1127, 0.7853982
    %vm1129 = vcmp.lt.s32.totalorder %v33, 0
    %v1130 = vand.u32 %v33, 2139095040
    %v1131 = vshrl.u32 %v1130, 23
    %v1132 = vsub.s32 %v1131, 127
    %v1133 = vand.u32 2147483647, %v33
    %v1134 = vand.u32 %v1133, 8388607
    %v1135 = vor.u32 %v1134, 8388608
    %v1136 = vsub.s32 0, %v1135
    %v1137 = vadd.s32 %v1132, 1
    %vm1138 = vcmp.gt.s32.totalorder %v1137, 0
    %v1139 = vsel %vm1138, %v1137, 0
    %v1140 = vshrl.u32 %v1139, 5
    %v1141 = vand.u32 %v1139, 31
    %v1142 = vsub.s32 32, %v1141
    %v1143 = vshrl.u32 683565275, %v1142
    %v1144 = vshll.u32 683565275, %v1141
    %v1145 = vshrl.u32 2475754826, %v1142
    %v1146 = vor.u32 %v1144, %v1145
    %v1147 = vshll.u32 2475754826, %v1141
    %v1148 = vshrl.u32 2131351028, %v1142
    %v1149 = vor.u32 %v1147, %v1148
    %v1150 = vshll.u32 2131351028, %v1141
    %v1151 = vshrl.u32 2102212464, %v1142
    %v1152 = vor.u32 %v1150, %v1151
    %v1153 = vshll.u32 2102212464, %v1141
    %v1154 = vshrl.u32 920167782, %v1142
    %v1155 = vor.u32 %v1153, %v1154
    %v1156 = vshll.u32 920167782, %v1141
    %v1157 = vshrl.u32 1326507024, %v1142
    %v1158 = vor.u32 %v1156, %v1157
    %vm1159 = vcmp.lt.s32.totalorder %v1140, 1
    %vm1160 = vcmp.lt.s32.totalorder %v1140, 2
    %vm1161 = vcmp.lt.s32.totalorder %v1140, 3
    %vm1162 = vcmp.lt.s32.totalorder %v1140, 4
    %v1163 = vsel %vm1159, %v1143, %v1146
    %v1164 = vsel %vm1162, %v1152, 2102212464
    %v1165 = vsel %vm1161, %v1149, %v1164
    %v1166 = vsel %vm1160, %v1163, %v1165
    %v1167 = vsel %vm1159, %v1146, %v1149
    %v1168 = vsel %vm1162, %v1155, 920167782
    %v1169 = vsel %vm1161, %v1152, %v1168
    %v1170 = vsel %vm1160, %v1167, %v1169
    %v1171 = vsel %vm1159, %v1149, %v1152
    %v1172 = vsel %vm1162, %v1158, 1326507024
    %v1173 = vsel %vm1161, %v1155, %v1172
    %v1174 = vsel %vm1160, %v1171, %v1173
    %v1175 = vshll.u32 %v1135, 8
    %v1176 = vmul.u32.u64.compose %v1175, %v1174
    %v1177 = vextract.low.u32 %v1176
    %v1178 = vextract.high.u32 %v1176
    %v1179 = vmul.u32.u64.compose %v1175, %v1170
    %v1180 = vextract.low.u32 %v1179
    %v1181 = vextract.high.u32 %v1179
    %v1182 = vmul.u32 %v1175, %v1166
    %v1183 = vadd.s32 %v1178, %v1180
    %vm1184 = vc.u32 %v1178, %v1180
    %v1185 = vadd.s32 %v1181, 1
    %v1186 = vsel %vm1184, %v1185, %v1181
    %v1187 = vadd.s32 %v1182, %v1186
    %v1188 = vadd.s32 %v1187, 536870912
    %v1189 = vshrl.u32 %v1188, 30
    %v1190 = vshll.u32 %v1189, 30
    %v1191 = vsub.s32 %v1187, %v1190
    %vm1192 = vcmp.lt.s32.totalorder %v1191, 0
    %v1193 = vsub.s32 0, %v1191
    %v1194 = vsel %vm1192, %v1193, %v1191
    %v1195 = vclz %v1194
    %v1196 = vsub.s32 %v1195, 2
    %vm1197 = vcmp.gt.s32.totalorder 0, %v1196
    %v1198 = vsel %vm1197, 0, %v1196
    %v1199 = vsub.s32 32, %v1198
    %v1200 = vshll.u32 %v1191, %v1198
    %v1201 = vshrl.u32 %v1183, %v1199
    %v1202 = vor.u32 %v1200, %v1201
    %v1203 = vsub.s32 4294967266, %v1198
    %v1204 = vadd.s32 %v1203, 127
    %v1205 = vshll.u32 %v1204, 23
    %v1206 = vor.u32 4788187, %v1205
    %v1207 = vand.u32 2147483647, %v1206
    %v1209 = vcvt.s32.f32 %v1202
    %v1210 = vmul.f32 %v1209, %v1207
    %v1211 = vxor.u32 %v1210, 2147483648
    %v1212 = vsel %vm1129, %v1211, %v1210
    %v1213 = vsub.s32 4, %v1189
    %v1214 = vsel %vm1129, %v1213, %v1189
    %v1215 = vsel %vm1128, %v33, %v1212
    %v1216 = vsel %vm1128, 0, %v1214
    %v1217 = vcosq.f32.pop %v1215
    %v1218 = vsinq.f32.pop %v1215
    %vm1219 = vweird.f32 %v33
    %v1220 = vadd.s32 %v1216, 3
    %v1221 = vand.u32 %v1220, 3
    %vm1222 = vcmp.lt.s32.totalorder %v1221, 2
    %vm1223 = vcmp.eq.s32.totalorder %v1221, 0
    %v1224 = vxor.u32 %v1218, 2147483648
    %v1225 = vsel %vm1223, %v1217, %v1224
    %vm1226 = vcmp.eq.s32.totalorder %v1221, 2
    %v1227 = vxor.u32 %v1217, 2147483648
    %v1228 = vsel %vm1226, %v1227, %v1218
    %v1229 = vsel %vm1222, %v1225, %v1228
    %v1230 = vsel %vm1219, nan, %v1229
    %v1231 = vand.u32 2147483647, %v34
    %vm1232 = vcmp.le.f32.partialorder %v1231, 0.7853982
    %vm1233 = vcmp.lt.s32.totalorder %v34, 0
    %v1234 = vand.u32 %v34, 2139095040
    %v1235 = vshrl.u32 %v1234, 23
    %v1236 = vsub.s32 %v1235, 127
    %v1237 = vand.u32 2147483647, %v34
    %v1238 = vand.u32 %v1237, 8388607
    %v1239 = vor.u32 %v1238, 8388608
    %v1240 = vsub.s32 0, %v1239
    %v1241 = vadd.s32 %v1236, 1
    %vm1242 = vcmp.gt.s32.totalorder %v1241, 0
    %v1243 = vsel %vm1242, %v1241, 0
    %v1244 = vshrl.u32 %v1243, 5
    %v1245 = vand.u32 %v1243, 31
    %v1246 = vsub.s32 32, %v1245
    %v1247 = vshrl.u32 683565275, %v1246
    %v1248 = vshll.u32 683565275, %v1245
    %v1249 = vshrl.u32 2475754826, %v1246
    %v1250 = vor.u32 %v1248, %v1249
    %v1251 = vshll.u32 2475754826, %v1245
    %v1252 = vshrl.u32 2131351028, %v1246
    %v1253 = vor.u32 %v1251, %v1252
    %v1254 = vshll.u32 2131351028, %v1245
    %v1255 = vshrl.u32 2102212464, %v1246
    %v1256 = vor.u32 %v1254, %v1255
    %v1257 = vshll.u32 2102212464, %v1245
    %v1258 = vshrl.u32 920167782, %v1246
    %v1259 = vor.u32 %v1257, %v1258
    %v1260 = vshll.u32 920167782, %v1245
    %v1261 = vshrl.u32 1326507024, %v1246
    %v1262 = vor.u32 %v1260, %v1261
    %vm1263 = vcmp.lt.s32.totalorder %v1244, 1
    %vm1264 = vcmp.lt.s32.totalorder %v1244, 2
    %vm1265 = vcmp.lt.s32.totalorder %v1244, 3
    %vm1266 = vcmp.lt.s32.totalorder %v1244, 4
    %v1267 = vsel %vm1263, %v1247, %v1250
    %v1268 = vsel %vm1266, %v1256, 2102212464
    %v1269 = vsel %vm1265, %v1253, %v1268
    %v1270 = vsel %vm1264, %v1267, %v1269
    %v1271 = vsel %vm1263, %v1250, %v1253
    %v1272 = vsel %vm1266, %v1259, 920167782
    %v1273 = vsel %vm1265, %v1256, %v1272
    %v1274 = vsel %vm1264, %v1271, %v1273
    %v1275 = vsel %vm1263, %v1253, %v1256
    %v1276 = vsel %vm1266, %v1262, 1326507024
    %v1277 = vsel %vm1265, %v1259, %v1276
    %v1278 = vsel %vm1264, %v1275, %v1277
    %v1279 = vshll.u32 %v1239, 8
    %v1280 = vmul.u32.u64.compose %v1279, %v1278
    %v1281 = vextract.low.u32 %v1280
    %v1282 = vextract.high.u32 %v1280
    %v1283 = vmul.u32.u64.compose %v1279, %v1274
    %v1284 = vextract.low.u32 %v1283
    %v1285 = vextract.high.u32 %v1283
    %v1286 = vmul.u32 %v1279, %v1270
    %v1287 = vadd.s32 %v1282, %v1284
    %vm1288 = vc.u32 %v1282, %v1284
    %v1289 = vadd.s32 %v1285, 1
    %v1290 = vsel %vm1288, %v1289, %v1285
    %v1291 = vadd.s32 %v1286, %v1290
    %v1292 = vadd.s32 %v1291, 536870912
    %v1293 = vshrl.u32 %v1292, 30
    %v1294 = vshll.u32 %v1293, 30
    %v1295 = vsub.s32 %v1291, %v1294
    %vm1296 = vcmp.lt.s32.totalorder %v1295, 0
    %v1297 = vsub.s32 0, %v1295
    %v1298 = vsel %vm1296, %v1297, %v1295
    %v1299 = vclz %v1298
    %v1300 = vsub.s32 %v1299, 2
    %vm1301 = vcmp.gt.s32.totalorder 0, %v1300
    %v1302 = vsel %vm1301, 0, %v1300
    %v1303 = vsub.s32 32, %v1302
    %v1304 = vshll.u32 %v1295, %v1302
    %v1305 = vshrl.u32 %v1287, %v1303
    %v1306 = vor.u32 %v1304, %v1305
    %v1307 = vsub.s32 4294967266, %v1302
    %v1308 = vadd.s32 %v1307, 127
    %v1309 = vshll.u32 %v1308, 23
    %v1310 = vor.u32 4788187, %v1309
    %v1311 = vand.u32 2147483647, %v1310
    %v1313 = vcvt.s32.f32 %v1306
    %v1314 = vmul.f32 %v1313, %v1311
    %v1315 = vxor.u32 %v1314, 2147483648
    %v1316 = vsel %vm1233, %v1315, %v1314
    %v1317 = vsub.s32 4, %v1293
    %v1318 = vsel %vm1233, %v1317, %v1293
    %v1319 = vsel %vm1232, %v34, %v1316
    %v1320 = vsel %vm1232, 0, %v1318
    %v1321 = vcosq.f32.pop %v1319
    %v1322 = vsinq.f32.pop %v1319
    %vm1323 = vweird.f32 %v34
    %v1324 = vadd.s32 %v1320, 3
    %v1325 = vand.u32 %v1324, 3
    %vm1326 = vcmp.lt.s32.totalorder %v1325, 2
    %vm1327 = vcmp.eq.s32.totalorder %v1325, 0
    %v1328 = vxor.u32 %v1322, 2147483648
    %v1329 = vsel %vm1327, %v1321, %v1328
    %vm1330 = vcmp.eq.s32.totalorder %v1325, 2
    %v1331 = vxor.u32 %v1321, 2147483648
    %v1332 = vsel %vm1330, %v1331, %v1322
    %v1333 = vsel %vm1326, %v1329, %v1332
    %v1334 = vsel %vm1323, nan, %v1333
    %v1335 = vand.u32 2147483647, %v35
    %vm1336 = vcmp.le.f32.partialorder %v1335, 0.7853982
    %vm1337 = vcmp.lt.s32.totalorder %v35, 0
    %v1338 = vand.u32 %v35, 2139095040
    %v1339 = vshrl.u32 %v1338, 23
    %v1340 = vsub.s32 %v1339, 127
    %v1341 = vand.u32 2147483647, %v35
    %v1342 = vand.u32 %v1341, 8388607
    %v1343 = vor.u32 %v1342, 8388608
    %v1344 = vsub.s32 0, %v1343
    %v1345 = vadd.s32 %v1340, 1
    %vm1346 = vcmp.gt.s32.totalorder %v1345, 0
    %v1347 = vsel %vm1346, %v1345, 0
    %v1348 = vshrl.u32 %v1347, 5
    %v1349 = vand.u32 %v1347, 31
    %v1350 = vsub.s32 32, %v1349
    %v1351 = vshrl.u32 683565275, %v1350
    %v1352 = vshll.u32 683565275, %v1349
    %v1353 = vshrl.u32 2475754826, %v1350
    %v1354 = vor.u32 %v1352, %v1353
    %v1355 = vshll.u32 2475754826, %v1349
    %v1356 = vshrl.u32 2131351028, %v1350
    %v1357 = vor.u32 %v1355, %v1356
    %v1358 = vshll.u32 2131351028, %v1349
    %v1359 = vshrl.u32 2102212464, %v1350
    %v1360 = vor.u32 %v1358, %v1359
    %v1361 = vshll.u32 2102212464, %v1349
    %v1362 = vshrl.u32 920167782, %v1350
    %v1363 = vor.u32 %v1361, %v1362
    %v1364 = vshll.u32 920167782, %v1349
    %v1365 = vshrl.u32 1326507024, %v1350
    %v1366 = vor.u32 %v1364, %v1365
    %vm1367 = vcmp.lt.s32.totalorder %v1348, 1
    %vm1368 = vcmp.lt.s32.totalorder %v1348, 2
    %vm1369 = vcmp.lt.s32.totalorder %v1348, 3
    %vm1370 = vcmp.lt.s32.totalorder %v1348, 4
    %v1371 = vsel %vm1367, %v1351, %v1354
    %v1372 = vsel %vm1370, %v1360, 2102212464
    %v1373 = vsel %vm1369, %v1357, %v1372
    %v1374 = vsel %vm1368, %v1371, %v1373
    %v1375 = vsel %vm1367, %v1354, %v1357
    %v1376 = vsel %vm1370, %v1363, 920167782
    %v1377 = vsel %vm1369, %v1360, %v1376
    %v1378 = vsel %vm1368, %v1375, %v1377
    %v1379 = vsel %vm1367, %v1357, %v1360
    %v1380 = vsel %vm1370, %v1366, 1326507024
    %v1381 = vsel %vm1369, %v1363, %v1380
    %v1382 = vsel %vm1368, %v1379, %v1381
    %v1383 = vshll.u32 %v1343, 8
    %v1384 = vmul.u32.u64.compose %v1383, %v1382
    %v1385 = vextract.low.u32 %v1384
    %v1386 = vextract.high.u32 %v1384
    %v1387 = vmul.u32.u64.compose %v1383, %v1378
    %v1388 = vextract.low.u32 %v1387
    %v1389 = vextract.high.u32 %v1387
    %v1390 = vmul.u32 %v1383, %v1374
    %v1391 = vadd.s32 %v1386, %v1388
    %vm1392 = vc.u32 %v1386, %v1388
    %v1393 = vadd.s32 %v1389, 1
    %v1394 = vsel %vm1392, %v1393, %v1389
    %v1395 = vadd.s32 %v1390, %v1394
    %v1396 = vadd.s32 %v1395, 536870912
    %v1397 = vshrl.u32 %v1396, 30
    %v1398 = vshll.u32 %v1397, 30
    %v1399 = vsub.s32 %v1395, %v1398
    %vm1400 = vcmp.lt.s32.totalorder %v1399, 0
    %v1401 = vsub.s32 0, %v1399
    %v1402 = vsel %vm1400, %v1401, %v1399
    %v1403 = vclz %v1402
    %v1404 = vsub.s32 %v1403, 2
    %vm1405 = vcmp.gt.s32.totalorder 0, %v1404
    %v1406 = vsel %vm1405, 0, %v1404
    %v1407 = vsub.s32 32, %v1406
    %v1408 = vshll.u32 %v1399, %v1406
    %v1409 = vshrl.u32 %v1391, %v1407
    %v1410 = vor.u32 %v1408, %v1409
    %v1411 = vsub.s32 4294967266, %v1406
    %v1412 = vadd.s32 %v1411, 127
    %v1413 = vshll.u32 %v1412, 23
    %v1414 = vor.u32 4788187, %v1413
    %v1415 = vand.u32 2147483647, %v1414
    %v1417 = vcvt.s32.f32 %v1410
    %v1418 = vmul.f32 %v1417, %v1415
    %v1419 = vxor.u32 %v1418, 2147483648
    %v1420 = vsel %vm1337, %v1419, %v1418
    %v1421 = vsub.s32 4, %v1397
    %v1422 = vsel %vm1337, %v1421, %v1397
    %v1423 = vsel %vm1336, %v35, %v1420
    %v1424 = vsel %vm1336, 0, %v1422
    %v1425 = vcosq.f32.pop %v1423
    %v1426 = vsinq.f32.pop %v1423
    %vm1427 = vweird.f32 %v35
    %v1428 = vadd.s32 %v1424, 3
    %v1429 = vand.u32 %v1428, 3
    %vm1430 = vcmp.lt.s32.totalorder %v1429, 2
    %vm1431 = vcmp.eq.s32.totalorder %v1429, 0
    %v1432 = vxor.u32 %v1426, 2147483648
    %v1433 = vsel %vm1431, %v1425, %v1432
    %vm1434 = vcmp.eq.s32.totalorder %v1429, 2
    %v1435 = vxor.u32 %v1425, 2147483648
    %v1436 = vsel %vm1434, %v1435, %v1426
    %v1437 = vsel %vm1430, %v1433, %v1436
    %v1438 = vsel %vm1427, nan, %v1437
    %v1439 = vand.u32 2147483647, %v36
    %vm1440 = vcmp.le.f32.partialorder %v1439, 0.7853982
    %vm1441 = vcmp.lt.s32.totalorder %v36, 0
    %v1442 = vand.u32 %v36, 2139095040
    %v1443 = vshrl.u32 %v1442, 23
    %v1444 = vsub.s32 %v1443, 127
    %v1445 = vand.u32 2147483647, %v36
    %v1446 = vand.u32 %v1445, 8388607
    %v1447 = vor.u32 %v1446, 8388608
    %v1448 = vsub.s32 0, %v1447
    %v1449 = vadd.s32 %v1444, 1
    %vm1450 = vcmp.gt.s32.totalorder %v1449, 0
    %v1451 = vsel %vm1450, %v1449, 0
    %v1452 = vshrl.u32 %v1451, 5
    %v1453 = vand.u32 %v1451, 31
    %v1454 = vsub.s32 32, %v1453
    %v1455 = vshrl.u32 683565275, %v1454
    %v1456 = vshll.u32 683565275, %v1453
    %v1457 = vshrl.u32 2475754826, %v1454
    %v1458 = vor.u32 %v1456, %v1457
    %v1459 = vshll.u32 2475754826, %v1453
    %v1460 = vshrl.u32 2131351028, %v1454
    %v1461 = vor.u32 %v1459, %v1460
    %v1462 = vshll.u32 2131351028, %v1453
    %v1463 = vshrl.u32 2102212464, %v1454
    %v1464 = vor.u32 %v1462, %v1463
    %v1465 = vshll.u32 2102212464, %v1453
    %v1466 = vshrl.u32 920167782, %v1454
    %v1467 = vor.u32 %v1465, %v1466
    %v1468 = vshll.u32 920167782, %v1453
    %v1469 = vshrl.u32 1326507024, %v1454
    %v1470 = vor.u32 %v1468, %v1469
    %vm1471 = vcmp.lt.s32.totalorder %v1452, 1
    %vm1472 = vcmp.lt.s32.totalorder %v1452, 2
    %vm1473 = vcmp.lt.s32.totalorder %v1452, 3
    %vm1474 = vcmp.lt.s32.totalorder %v1452, 4
    %v1475 = vsel %vm1471, %v1455, %v1458
    %v1476 = vsel %vm1474, %v1464, 2102212464
    %v1477 = vsel %vm1473, %v1461, %v1476
    %v1478 = vsel %vm1472, %v1475, %v1477
    %v1479 = vsel %vm1471, %v1458, %v1461
    %v1480 = vsel %vm1474, %v1467, 920167782
    %v1481 = vsel %vm1473, %v1464, %v1480
    %v1482 = vsel %vm1472, %v1479, %v1481
    %v1483 = vsel %vm1471, %v1461, %v1464
    %v1484 = vsel %vm1474, %v1470, 1326507024
    %v1485 = vsel %vm1473, %v1467, %v1484
    %v1486 = vsel %vm1472, %v1483, %v1485
    %v1487 = vshll.u32 %v1447, 8
    %v1488 = vmul.u32.u64.compose %v1487, %v1486
    %v1489 = vextract.low.u32 %v1488
    %v1490 = vextract.high.u32 %v1488
    %v1491 = vmul.u32.u64.compose %v1487, %v1482
    %v1492 = vextract.low.u32 %v1491
    %v1493 = vextract.high.u32 %v1491
    %v1494 = vmul.u32 %v1487, %v1478
    %v1495 = vadd.s32 %v1490, %v1492
    %vm1496 = vc.u32 %v1490, %v1492
    %v1497 = vadd.s32 %v1493, 1
    %v1498 = vsel %vm1496, %v1497, %v1493
    %v1499 = vadd.s32 %v1494, %v1498
    %v1500 = vadd.s32 %v1499, 536870912
    %v1501 = vshrl.u32 %v1500, 30
    %v1502 = vshll.u32 %v1501, 30
    %v1503 = vsub.s32 %v1499, %v1502
    %vm1504 = vcmp.lt.s32.totalorder %v1503, 0
    %v1505 = vsub.s32 0, %v1503
    %v1506 = vsel %vm1504, %v1505, %v1503
    %v1507 = vclz %v1506
    %v1508 = vsub.s32 %v1507, 2
    %vm1509 = vcmp.gt.s32.totalorder 0, %v1508
    %v1510 = vsel %vm1509, 0, %v1508
    %v1511 = vsub.s32 32, %v1510
    %v1512 = vshll.u32 %v1503, %v1510
    %v1513 = vshrl.u32 %v1495, %v1511
    %v1514 = vor.u32 %v1512, %v1513
    %v1515 = vsub.s32 4294967266, %v1510
    %v1516 = vadd.s32 %v1515, 127
    %v1517 = vshll.u32 %v1516, 23
    %v1518 = vor.u32 4788187, %v1517
    %v1519 = vand.u32 2147483647, %v1518
    %v1521 = vcvt.s32.f32 %v1514
    %v1522 = vmul.f32 %v1521, %v1519
    %v1523 = vxor.u32 %v1522, 2147483648
    %v1524 = vsel %vm1441, %v1523, %v1522
    %v1525 = vsub.s32 4, %v1501
    %v1526 = vsel %vm1441, %v1525, %v1501
    %v1527 = vsel %vm1440, %v36, %v1524
    %v1528 = vsel %vm1440, 0, %v1526
    %v1529 = vcosq.f32.pop %v1527
    %v1530 = vsinq.f32.pop %v1527
    %vm1531 = vweird.f32 %v36
    %v1532 = vadd.s32 %v1528, 3
    %v1533 = vand.u32 %v1532, 3
    %vm1534 = vcmp.lt.s32.totalorder %v1533, 2
    %vm1535 = vcmp.eq.s32.totalorder %v1533, 0
    %v1536 = vxor.u32 %v1530, 2147483648
    %v1537 = vsel %vm1535, %v1529, %v1536
    %vm1538 = vcmp.eq.s32.totalorder %v1533, 2
    %v1539 = vxor.u32 %v1529, 2147483648
    %v1540 = vsel %vm1538, %v1539, %v1530
    %v1541 = vsel %vm1534, %v1537, %v1540
    %v1542 = vsel %vm1531, nan, %v1541
    %v1543 = vand.u32 2147483647, %v37
    %vm1544 = vcmp.le.f32.partialorder %v1543, 0.7853982
    %vm1545 = vcmp.lt.s32.totalorder %v37, 0
    %v1546 = vand.u32 %v37, 2139095040
    %v1547 = vshrl.u32 %v1546, 23
    %v1548 = vsub.s32 %v1547, 127
    %v1549 = vand.u32 2147483647, %v37
    %v1550 = vand.u32 %v1549, 8388607
    %v1551 = vor.u32 %v1550, 8388608
    %v1552 = vsub.s32 0, %v1551
    %v1553 = vadd.s32 %v1548, 1
    %vm1554 = vcmp.gt.s32.totalorder %v1553, 0
    %v1555 = vsel %vm1554, %v1553, 0
    %v1556 = vshrl.u32 %v1555, 5
    %v1557 = vand.u32 %v1555, 31
    %v1558 = vsub.s32 32, %v1557
    %v1559 = vshrl.u32 683565275, %v1558
    %v1560 = vshll.u32 683565275, %v1557
    %v1561 = vshrl.u32 2475754826, %v1558
    %v1562 = vor.u32 %v1560, %v1561
    %v1563 = vshll.u32 2475754826, %v1557
    %v1564 = vshrl.u32 2131351028, %v1558
    %v1565 = vor.u32 %v1563, %v1564
    %v1566 = vshll.u32 2131351028, %v1557
    %v1567 = vshrl.u32 2102212464, %v1558
    %v1568 = vor.u32 %v1566, %v1567
    %v1569 = vshll.u32 2102212464, %v1557
    %v1570 = vshrl.u32 920167782, %v1558
    %v1571 = vor.u32 %v1569, %v1570
    %v1572 = vshll.u32 920167782, %v1557
    %v1573 = vshrl.u32 1326507024, %v1558
    %v1574 = vor.u32 %v1572, %v1573
    %vm1575 = vcmp.lt.s32.totalorder %v1556, 1
    %vm1576 = vcmp.lt.s32.totalorder %v1556, 2
    %vm1577 = vcmp.lt.s32.totalorder %v1556, 3
    %vm1578 = vcmp.lt.s32.totalorder %v1556, 4
    %v1579 = vsel %vm1575, %v1559, %v1562
    %v1580 = vsel %vm1578, %v1568, 2102212464
    %v1581 = vsel %vm1577, %v1565, %v1580
    %v1582 = vsel %vm1576, %v1579, %v1581
    %v1583 = vsel %vm1575, %v1562, %v1565
    %v1584 = vsel %vm1578, %v1571, 920167782
    %v1585 = vsel %vm1577, %v1568, %v1584
    %v1586 = vsel %vm1576, %v1583, %v1585
    %v1587 = vsel %vm1575, %v1565, %v1568
    %v1588 = vsel %vm1578, %v1574, 1326507024
    %v1589 = vsel %vm1577, %v1571, %v1588
    %v1590 = vsel %vm1576, %v1587, %v1589
    %v1591 = vshll.u32 %v1551, 8
    %v1592 = vmul.u32.u64.compose %v1591, %v1590
    %v1593 = vextract.low.u32 %v1592
    %v1594 = vextract.high.u32 %v1592
    %v1595 = vmul.u32.u64.compose %v1591, %v1586
    %v1596 = vextract.low.u32 %v1595
    %v1597 = vextract.high.u32 %v1595
    %v1598 = vmul.u32 %v1591, %v1582
    %v1599 = vadd.s32 %v1594, %v1596
    %vm1600 = vc.u32 %v1594, %v1596
    %v1601 = vadd.s32 %v1597, 1
    %v1602 = vsel %vm1600, %v1601, %v1597
    %v1603 = vadd.s32 %v1598, %v1602
    %v1604 = vadd.s32 %v1603, 536870912
    %v1605 = vshrl.u32 %v1604, 30
    %v1606 = vshll.u32 %v1605, 30
    %v1607 = vsub.s32 %v1603, %v1606
    %vm1608 = vcmp.lt.s32.totalorder %v1607, 0
    %v1609 = vsub.s32 0, %v1607
    %v1610 = vsel %vm1608, %v1609, %v1607
    %v1611 = vclz %v1610
    %v1612 = vsub.s32 %v1611, 2
    %vm1613 = vcmp.gt.s32.totalorder 0, %v1612
    %v1614 = vsel %vm1613, 0, %v1612
    %v1615 = vsub.s32 32, %v1614
    %v1616 = vshll.u32 %v1607, %v1614
    %v1617 = vshrl.u32 %v1599, %v1615
    %v1618 = vor.u32 %v1616, %v1617
    %v1619 = vsub.s32 4294967266, %v1614
    %v1620 = vadd.s32 %v1619, 127
    %v1621 = vshll.u32 %v1620, 23
    %v1622 = vor.u32 4788187, %v1621
    %v1623 = vand.u32 2147483647, %v1622
    %v1625 = vcvt.s32.f32 %v1618
    %v1626 = vmul.f32 %v1625, %v1623
    %v1627 = vxor.u32 %v1626, 2147483648
    %v1628 = vsel %vm1545, %v1627, %v1626
    %v1629 = vsub.s32 4, %v1605
    %v1630 = vsel %vm1545, %v1629, %v1605
    %v1631 = vsel %vm1544, %v37, %v1628
    %v1632 = vsel %vm1544, 0, %v1630
    %v1633 = vcosq.f32.pop %v1631
    %v1634 = vsinq.f32.pop %v1631
    %vm1635 = vweird.f32 %v37
    %v1636 = vadd.s32 %v1632, 3
    %v1637 = vand.u32 %v1636, 3
    %vm1638 = vcmp.lt.s32.totalorder %v1637, 2
    %vm1639 = vcmp.eq.s32.totalorder %v1637, 0
    %v1640 = vxor.u32 %v1634, 2147483648
    %v1641 = vsel %vm1639, %v1633, %v1640
    %vm1642 = vcmp.eq.s32.totalorder %v1637, 2
    %v1643 = vxor.u32 %v1633, 2147483648
    %v1644 = vsel %vm1642, %v1643, %v1634
    %v1645 = vsel %vm1638, %v1641, %v1644
    %v1646 = vsel %vm1635, nan, %v1645
    %v1647 = vand.u32 2147483647, %v38
    %vm1648 = vcmp.le.f32.partialorder %v1647, 0.7853982
    %vm1649 = vcmp.lt.s32.totalorder %v38, 0
    %v1650 = vand.u32 %v38, 2139095040
    %v1651 = vshrl.u32 %v1650, 23
    %v1652 = vsub.s32 %v1651, 127
    %v1653 = vand.u32 2147483647, %v38
    %v1654 = vand.u32 %v1653, 8388607
    %v1655 = vor.u32 %v1654, 8388608
    %v1656 = vsub.s32 0, %v1655
    %v1657 = vadd.s32 %v1652, 1
    %vm1658 = vcmp.gt.s32.totalorder %v1657, 0
    %v1659 = vsel %vm1658, %v1657, 0
    %v1660 = vshrl.u32 %v1659, 5
    %v1661 = vand.u32 %v1659, 31
    %v1662 = vsub.s32 32, %v1661
    %v1663 = vshrl.u32 683565275, %v1662
    %v1664 = vshll.u32 683565275, %v1661
    %v1665 = vshrl.u32 2475754826, %v1662
    %v1666 = vor.u32 %v1664, %v1665
    %v1667 = vshll.u32 2475754826, %v1661
    %v1668 = vshrl.u32 2131351028, %v1662
    %v1669 = vor.u32 %v1667, %v1668
    %v1670 = vshll.u32 2131351028, %v1661
    %v1671 = vshrl.u32 2102212464, %v1662
    %v1672 = vor.u32 %v1670, %v1671
    %v1673 = vshll.u32 2102212464, %v1661
    %v1674 = vshrl.u32 920167782, %v1662
    %v1675 = vor.u32 %v1673, %v1674
    %v1676 = vshll.u32 920167782, %v1661
    %v1677 = vshrl.u32 1326507024, %v1662
    %v1678 = vor.u32 %v1676, %v1677
    %vm1679 = vcmp.lt.s32.totalorder %v1660, 1
    %vm1680 = vcmp.lt.s32.totalorder %v1660, 2
    %vm1681 = vcmp.lt.s32.totalorder %v1660, 3
    %vm1682 = vcmp.lt.s32.totalorder %v1660, 4
    %v1683 = vsel %vm1679, %v1663, %v1666
    %v1684 = vsel %vm1682, %v1672, 2102212464
    %v1685 = vsel %vm1681, %v1669, %v1684
    %v1686 = vsel %vm1680, %v1683, %v1685
    %v1687 = vsel %vm1679, %v1666, %v1669
    %v1688 = vsel %vm1682, %v1675, 920167782
    %v1689 = vsel %vm1681, %v1672, %v1688
    %v1690 = vsel %vm1680, %v1687, %v1689
    %v1691 = vsel %vm1679, %v1669, %v1672
    %v1692 = vsel %vm1682, %v1678, 1326507024
    %v1693 = vsel %vm1681, %v1675, %v1692
    %v1694 = vsel %vm1680, %v1691, %v1693
    %v1695 = vshll.u32 %v1655, 8
    %v1696 = vmul.u32.u64.compose %v1695, %v1694
    %v1697 = vextract.low.u32 %v1696
    %v1698 = vextract.high.u32 %v1696
    %v1699 = vmul.u32.u64.compose %v1695, %v1690
    %v1700 = vextract.low.u32 %v1699
    %v1701 = vextract.high.u32 %v1699
    %v1702 = vmul.u32 %v1695, %v1686
    %v1703 = vadd.s32 %v1698, %v1700
    %vm1704 = vc.u32 %v1698, %v1700
    %v1705 = vadd.s32 %v1701, 1
    %v1706 = vsel %vm1704, %v1705, %v1701
    %v1707 = vadd.s32 %v1702, %v1706
    %v1708 = vadd.s32 %v1707, 536870912
    %v1709 = vshrl.u32 %v1708, 30
    %v1710 = vshll.u32 %v1709, 30
    %v1711 = vsub.s32 %v1707, %v1710
    %vm1712 = vcmp.lt.s32.totalorder %v1711, 0
    %v1713 = vsub.s32 0, %v1711
    %v1714 = vsel %vm1712, %v1713, %v1711
    %v1715 = vclz %v1714
    %v1716 = vsub.s32 %v1715, 2
    %vm1717 = vcmp.gt.s32.totalorder 0, %v1716
    %v1718 = vsel %vm1717, 0, %v1716
    %v1719 = vsub.s32 32, %v1718
    %v1720 = vshll.u32 %v1711, %v1718
    %v1721 = vshrl.u32 %v1703, %v1719
    %v1722 = vor.u32 %v1720, %v1721
    %v1723 = vsub.s32 4294967266, %v1718
    %v1724 = vadd.s32 %v1723, 127
    %v1725 = vshll.u32 %v1724, 23
    %v1726 = vor.u32 4788187, %v1725
    %v1727 = vand.u32 2147483647, %v1726
    %v1729 = vcvt.s32.f32 %v1722
    %v1730 = vmul.f32 %v1729, %v1727
    %v1731 = vxor.u32 %v1730, 2147483648
    %v1732 = vsel %vm1649, %v1731, %v1730
    %v1733 = vsub.s32 4, %v1709
    %v1734 = vsel %vm1649, %v1733, %v1709
    %v1735 = vsel %vm1648, %v38, %v1732
    %v1736 = vsel %vm1648, 0, %v1734
    %v1737 = vcosq.f32.pop %v1735
    %v1738 = vsinq.f32.pop %v1735
    %vm1739 = vweird.f32 %v38
    %v1740 = vadd.s32 %v1736, 3
    %v1741 = vand.u32 %v1740, 3
    %vm1742 = vcmp.lt.s32.totalorder %v1741, 2
    %vm1743 = vcmp.eq.s32.totalorder %v1741, 0
    %v1744 = vxor.u32 %v1738, 2147483648
    %v1745 = vsel %vm1743, %v1737, %v1744
    %vm1746 = vcmp.eq.s32.totalorder %v1741, 2
    %v1747 = vxor.u32 %v1737, 2147483648
    %v1748 = vsel %vm1746, %v1747, %v1738
    %v1749 = vsel %vm1742, %v1745, %v1748
    %v1750 = vsel %vm1739, nan, %v1749
    %v1751 = vand.u32 2147483647, %v39
    %vm1752 = vcmp.le.f32.partialorder %v1751, 0.7853982
    %vm1753 = vcmp.lt.s32.totalorder %v39, 0
    %v1754 = vand.u32 %v39, 2139095040
    %v1755 = vshrl.u32 %v1754, 23
    %v1756 = vsub.s32 %v1755, 127
    %v1757 = vand.u32 2147483647, %v39
    %v1758 = vand.u32 %v1757, 8388607
    %v1759 = vor.u32 %v1758, 8388608
    %v1760 = vsub.s32 0, %v1759
    %v1761 = vadd.s32 %v1756, 1
    %vm1762 = vcmp.gt.s32.totalorder %v1761, 0
    %v1763 = vsel %vm1762, %v1761, 0
    %v1764 = vshrl.u32 %v1763, 5
    %v1765 = vand.u32 %v1763, 31
    %v1766 = vsub.s32 32, %v1765
    %v1767 = vshrl.u32 683565275, %v1766
    %v1768 = vshll.u32 683565275, %v1765
    %v1769 = vshrl.u32 2475754826, %v1766
    %v1770 = vor.u32 %v1768, %v1769
    %v1771 = vshll.u32 2475754826, %v1765
    %v1772 = vshrl.u32 2131351028, %v1766
    %v1773 = vor.u32 %v1771, %v1772
    %v1774 = vshll.u32 2131351028, %v1765
    %v1775 = vshrl.u32 2102212464, %v1766
    %v1776 = vor.u32 %v1774, %v1775
    %v1777 = vshll.u32 2102212464, %v1765
    %v1778 = vshrl.u32 920167782, %v1766
    %v1779 = vor.u32 %v1777, %v1778
    %v1780 = vshll.u32 920167782, %v1765
    %v1781 = vshrl.u32 1326507024, %v1766
    %v1782 = vor.u32 %v1780, %v1781
    %vm1783 = vcmp.lt.s32.totalorder %v1764, 1
    %vm1784 = vcmp.lt.s32.totalorder %v1764, 2
    %vm1785 = vcmp.lt.s32.totalorder %v1764, 3
    %vm1786 = vcmp.lt.s32.totalorder %v1764, 4
    %v1787 = vsel %vm1783, %v1767, %v1770
    %v1788 = vsel %vm1786, %v1776, 2102212464
    %v1789 = vsel %vm1785, %v1773, %v1788
    %v1790 = vsel %vm1784, %v1787, %v1789
    %v1791 = vsel %vm1783, %v1770, %v1773
    %v1792 = vsel %vm1786, %v1779, 920167782
    %v1793 = vsel %vm1785, %v1776, %v1792
    %v1794 = vsel %vm1784, %v1791, %v1793
    %v1795 = vsel %vm1783, %v1773, %v1776
    %v1796 = vsel %vm1786, %v1782, 1326507024
    %v1797 = vsel %vm1785, %v1779, %v1796
    %v1798 = vsel %vm1784, %v1795, %v1797
    %v1799 = vshll.u32 %v1759, 8
    %v1800 = vmul.u32.u64.compose %v1799, %v1798
    %v1801 = vextract.low.u32 %v1800
    %v1802 = vextract.high.u32 %v1800
    %v1803 = vmul.u32.u64.compose %v1799, %v1794
    %v1804 = vextract.low.u32 %v1803
    %v1805 = vextract.high.u32 %v1803
    %v1806 = vmul.u32 %v1799, %v1790
    %v1807 = vadd.s32 %v1802, %v1804
    %vm1808 = vc.u32 %v1802, %v1804
    %v1809 = vadd.s32 %v1805, 1
    %v1810 = vsel %vm1808, %v1809, %v1805
    %v1811 = vadd.s32 %v1806, %v1810
    %v1812 = vadd.s32 %v1811, 536870912
    %v1813 = vshrl.u32 %v1812, 30
    %v1814 = vshll.u32 %v1813, 30
    %v1815 = vsub.s32 %v1811, %v1814
    %vm1816 = vcmp.lt.s32.totalorder %v1815, 0
    %v1817 = vsub.s32 0, %v1815
    %v1818 = vsel %vm1816, %v1817, %v1815
    %v1819 = vclz %v1818
    %v1820 = vsub.s32 %v1819, 2
    %vm1821 = vcmp.gt.s32.totalorder 0, %v1820
    %v1822 = vsel %vm1821, 0, %v1820
    %v1823 = vsub.s32 32, %v1822
    %v1824 = vshll.u32 %v1815, %v1822
    %v1825 = vshrl.u32 %v1807, %v1823
    %v1826 = vor.u32 %v1824, %v1825
    %v1827 = vsub.s32 4294967266, %v1822
    %v1828 = vadd.s32 %v1827, 127
    %v1829 = vshll.u32 %v1828, 23
    %v1830 = vor.u32 4788187, %v1829
    %v1831 = vand.u32 2147483647, %v1830
    %v1833 = vcvt.s32.f32 %v1826
    %v1834 = vmul.f32 %v1833, %v1831
    %v1835 = vxor.u32 %v1834, 2147483648
    %v1836 = vsel %vm1753, %v1835, %v1834
    %v1837 = vsub.s32 4, %v1813
    %v1838 = vsel %vm1753, %v1837, %v1813
    %v1839 = vsel %vm1752, %v39, %v1836
    %v1840 = vsel %vm1752, 0, %v1838
    %v1841 = vcosq.f32.pop %v1839
    %v1842 = vsinq.f32.pop %v1839
    %vm1843 = vweird.f32 %v39
    %v1844 = vadd.s32 %v1840, 3
    %v1845 = vand.u32 %v1844, 3
    %vm1846 = vcmp.lt.s32.totalorder %v1845, 2
    %vm1847 = vcmp.eq.s32.totalorder %v1845, 0
    %v1848 = vxor.u32 %v1842, 2147483648
    %v1849 = vsel %vm1847, %v1841, %v1848
    %vm1850 = vcmp.eq.s32.totalorder %v1845, 2
    %v1851 = vxor.u32 %v1841, 2147483648
    %v1852 = vsel %vm1850, %v1851, %v1842
    %v1853 = vsel %vm1846, %v1849, %v1852
    %v1854 = vsel %vm1843, nan, %v1853
    %v1855 = vand.u32 2147483647, %v40
    %vm1856 = vcmp.le.f32.partialorder %v1855, 0.7853982
    %vm1857 = vcmp.lt.s32.totalorder %v40, 0
    %v1858 = vand.u32 %v40, 2139095040
    %v1859 = vshrl.u32 %v1858, 23
    %v1860 = vsub.s32 %v1859, 127
    %v1861 = vand.u32 2147483647, %v40
    %v1862 = vand.u32 %v1861, 8388607
    %v1863 = vor.u32 %v1862, 8388608
    %v1864 = vsub.s32 0, %v1863
    %v1865 = vadd.s32 %v1860, 1
    %vm1866 = vcmp.gt.s32.totalorder %v1865, 0
    %v1867 = vsel %vm1866, %v1865, 0
    %v1868 = vshrl.u32 %v1867, 5
    %v1869 = vand.u32 %v1867, 31
    %v1870 = vsub.s32 32, %v1869
    %v1871 = vshrl.u32 683565275, %v1870
    %v1872 = vshll.u32 683565275, %v1869
    %v1873 = vshrl.u32 2475754826, %v1870
    %v1874 = vor.u32 %v1872, %v1873
    %v1875 = vshll.u32 2475754826, %v1869
    %v1876 = vshrl.u32 2131351028, %v1870
    %v1877 = vor.u32 %v1875, %v1876
    %v1878 = vshll.u32 2131351028, %v1869
    %v1879 = vshrl.u32 2102212464, %v1870
    %v1880 = vor.u32 %v1878, %v1879
    %v1881 = vshll.u32 2102212464, %v1869
    %v1882 = vshrl.u32 920167782, %v1870
    %v1883 = vor.u32 %v1881, %v1882
    %v1884 = vshll.u32 920167782, %v1869
    %v1885 = vshrl.u32 1326507024, %v1870
    %v1886 = vor.u32 %v1884, %v1885
    %vm1887 = vcmp.lt.s32.totalorder %v1868, 1
    %vm1888 = vcmp.lt.s32.totalorder %v1868, 2
    %vm1889 = vcmp.lt.s32.totalorder %v1868, 3
    %vm1890 = vcmp.lt.s32.totalorder %v1868, 4
    %v1891 = vsel %vm1887, %v1871, %v1874
    %v1892 = vsel %vm1890, %v1880, 2102212464
    %v1893 = vsel %vm1889, %v1877, %v1892
    %v1894 = vsel %vm1888, %v1891, %v1893
    %v1895 = vsel %vm1887, %v1874, %v1877
    %v1896 = vsel %vm1890, %v1883, 920167782
    %v1897 = vsel %vm1889, %v1880, %v1896
    %v1898 = vsel %vm1888, %v1895, %v1897
    %v1899 = vsel %vm1887, %v1877, %v1880
    %v1900 = vsel %vm1890, %v1886, 1326507024
    %v1901 = vsel %vm1889, %v1883, %v1900
    %v1902 = vsel %vm1888, %v1899, %v1901
    %v1903 = vshll.u32 %v1863, 8
    %v1904 = vmul.u32.u64.compose %v1903, %v1902
    %v1905 = vextract.low.u32 %v1904
    %v1906 = vextract.high.u32 %v1904
    %v1907 = vmul.u32.u64.compose %v1903, %v1898
    %v1908 = vextract.low.u32 %v1907
    %v1909 = vextract.high.u32 %v1907
    %v1910 = vmul.u32 %v1903, %v1894
    %v1911 = vadd.s32 %v1906, %v1908
    %vm1912 = vc.u32 %v1906, %v1908
    %v1913 = vadd.s32 %v1909, 1
    %v1914 = vsel %vm1912, %v1913, %v1909
    %v1915 = vadd.s32 %v1910, %v1914
    %v1916 = vadd.s32 %v1915, 536870912
    %v1917 = vshrl.u32 %v1916, 30
    %v1918 = vshll.u32 %v1917, 30
    %v1919 = vsub.s32 %v1915, %v1918
    %vm1920 = vcmp.lt.s32.totalorder %v1919, 0
    %v1921 = vsub.s32 0, %v1919
    %v1922 = vsel %vm1920, %v1921, %v1919
    %v1923 = vclz %v1922
    %v1924 = vsub.s32 %v1923, 2
    %vm1925 = vcmp.gt.s32.totalorder 0, %v1924
    %v1926 = vsel %vm1925, 0, %v1924
    %v1927 = vsub.s32 32, %v1926
    %v1928 = vshll.u32 %v1919, %v1926
    %v1929 = vshrl.u32 %v1911, %v1927
    %v1930 = vor.u32 %v1928, %v1929
    %v1931 = vsub.s32 4294967266, %v1926
    %v1932 = vadd.s32 %v1931, 127
    %v1933 = vshll.u32 %v1932, 23
    %v1934 = vor.u32 4788187, %v1933
    %v1935 = vand.u32 2147483647, %v1934
    %v1937 = vcvt.s32.f32 %v1930
    %v1938 = vmul.f32 %v1937, %v1935
    %v1939 = vxor.u32 %v1938, 2147483648
    %v1940 = vsel %vm1857, %v1939, %v1938
    %v1941 = vsub.s32 4, %v1917
    %v1942 = vsel %vm1857, %v1941, %v1917
    %v1943 = vsel %vm1856, %v40, %v1940
    %v1944 = vsel %vm1856, 0, %v1942
    %v1945 = vcosq.f32.pop %v1943
    %v1946 = vsinq.f32.pop %v1943
    %vm1947 = vweird.f32 %v40
    %v1948 = vadd.s32 %v1944, 3
    %v1949 = vand.u32 %v1948, 3
    %vm1950 = vcmp.lt.s32.totalorder %v1949, 2
    %vm1951 = vcmp.eq.s32.totalorder %v1949, 0
    %v1952 = vxor.u32 %v1946, 2147483648
    %v1953 = vsel %vm1951, %v1945, %v1952
    %vm1954 = vcmp.eq.s32.totalorder %v1949, 2
    %v1955 = vxor.u32 %v1945, 2147483648
    %v1956 = vsel %vm1954, %v1955, %v1946
    %v1957 = vsel %vm1950, %v1953, %v1956
    %v1958 = vsel %vm1947, nan, %v1957
    %v1959 = vand.u32 2147483647, %v41
    %vm1960 = vcmp.le.f32.partialorder %v1959, 0.7853982
    %vm1961 = vcmp.lt.s32.totalorder %v41, 0
    %v1962 = vand.u32 %v41, 2139095040
    %v1963 = vshrl.u32 %v1962, 23
    %v1964 = vsub.s32 %v1963, 127
    %v1965 = vand.u32 2147483647, %v41
    %v1966 = vand.u32 %v1965, 8388607
    %v1967 = vor.u32 %v1966, 8388608
    %v1968 = vsub.s32 0, %v1967
    %v1969 = vadd.s32 %v1964, 1
    %vm1970 = vcmp.gt.s32.totalorder %v1969, 0
    %v1971 = vsel %vm1970, %v1969, 0
    %v1972 = vshrl.u32 %v1971, 5
    %v1973 = vand.u32 %v1971, 31
    %v1974 = vsub.s32 32, %v1973
    %v1975 = vshrl.u32 683565275, %v1974
    %v1976 = vshll.u32 683565275, %v1973
    %v1977 = vshrl.u32 2475754826, %v1974
    %v1978 = vor.u32 %v1976, %v1977
    %v1979 = vshll.u32 2475754826, %v1973
    %v1980 = vshrl.u32 2131351028, %v1974
    %v1981 = vor.u32 %v1979, %v1980
    %v1982 = vshll.u32 2131351028, %v1973
    %v1983 = vshrl.u32 2102212464, %v1974
    %v1984 = vor.u32 %v1982, %v1983
    %v1985 = vshll.u32 2102212464, %v1973
    %v1986 = vshrl.u32 920167782, %v1974
    %v1987 = vor.u32 %v1985, %v1986
    %v1988 = vshll.u32 920167782, %v1973
    %v1989 = vshrl.u32 1326507024, %v1974
    %v1990 = vor.u32 %v1988, %v1989
    %vm1991 = vcmp.lt.s32.totalorder %v1972, 1
    %vm1992 = vcmp.lt.s32.totalorder %v1972, 2
    %vm1993 = vcmp.lt.s32.totalorder %v1972, 3
    %vm1994 = vcmp.lt.s32.totalorder %v1972, 4
    %v1995 = vsel %vm1991, %v1975, %v1978
    %v1996 = vsel %vm1994, %v1984, 2102212464
    %v1997 = vsel %vm1993, %v1981, %v1996
    %v1998 = vsel %vm1992, %v1995, %v1997
    %v1999 = vsel %vm1991, %v1978, %v1981
    %v2000 = vsel %vm1994, %v1987, 920167782
    %v2001 = vsel %vm1993, %v1984, %v2000
    %v2002 = vsel %vm1992, %v1999, %v2001
    %v2003 = vsel %vm1991, %v1981, %v1984
    %v2004 = vsel %vm1994, %v1990, 1326507024
    %v2005 = vsel %vm1993, %v1987, %v2004
    %v2006 = vsel %vm1992, %v2003, %v2005
    %v2007 = vshll.u32 %v1967, 8
    %v2008 = vmul.u32.u64.compose %v2007, %v2006
    %v2009 = vextract.low.u32 %v2008
    %v2010 = vextract.high.u32 %v2008
    %v2011 = vmul.u32.u64.compose %v2007, %v2002
    %v2012 = vextract.low.u32 %v2011
    %v2013 = vextract.high.u32 %v2011
    %v2014 = vmul.u32 %v2007, %v1998
    %v2015 = vadd.s32 %v2010, %v2012
    %vm2016 = vc.u32 %v2010, %v2012
    %v2017 = vadd.s32 %v2013, 1
    %v2018 = vsel %vm2016, %v2017, %v2013
    %v2019 = vadd.s32 %v2014, %v2018
    %v2020 = vadd.s32 %v2019, 536870912
    %v2021 = vshrl.u32 %v2020, 30
    %v2022 = vshll.u32 %v2021, 30
    %v2023 = vsub.s32 %v2019, %v2022
    %vm2024 = vcmp.lt.s32.totalorder %v2023, 0
    %v2025 = vsub.s32 0, %v2023
    %v2026 = vsel %vm2024, %v2025, %v2023
    %v2027 = vclz %v2026
    %v2028 = vsub.s32 %v2027, 2
    %vm2029 = vcmp.gt.s32.totalorder 0, %v2028
    %v2030 = vsel %vm2029, 0, %v2028
    %v2031 = vsub.s32 32, %v2030
    %v2032 = vshll.u32 %v2023, %v2030
    %v2033 = vshrl.u32 %v2015, %v2031
    %v2034 = vor.u32 %v2032, %v2033
    %v2035 = vsub.s32 4294967266, %v2030
    %v2036 = vadd.s32 %v2035, 127
    %v2037 = vshll.u32 %v2036, 23
    %v2038 = vor.u32 4788187, %v2037
    %v2039 = vand.u32 2147483647, %v2038
    %v2041 = vcvt.s32.f32 %v2034
    %v2042 = vmul.f32 %v2041, %v2039
    %v2043 = vxor.u32 %v2042, 2147483648
    %v2044 = vsel %vm1961, %v2043, %v2042
    %v2045 = vsub.s32 4, %v2021
    %v2046 = vsel %vm1961, %v2045, %v2021
    %v2047 = vsel %vm1960, %v41, %v2044
    %v2048 = vsel %vm1960, 0, %v2046
    %v2049 = vcosq.f32.pop %v2047
    %v2050 = vsinq.f32.pop %v2047
    %vm2051 = vweird.f32 %v41
    %v2052 = vadd.s32 %v2048, 3
    %v2053 = vand.u32 %v2052, 3
    %vm2054 = vcmp.lt.s32.totalorder %v2053, 2
    %vm2055 = vcmp.eq.s32.totalorder %v2053, 0
    %v2056 = vxor.u32 %v2050, 2147483648
    %v2057 = vsel %vm2055, %v2049, %v2056
    %vm2058 = vcmp.eq.s32.totalorder %v2053, 2
    %v2059 = vxor.u32 %v2049, 2147483648
    %v2060 = vsel %vm2058, %v2059, %v2050
    %v2061 = vsel %vm2054, %v2057, %v2060
    %v2062 = vsel %vm2051, nan, %v2061
    %v2063 = vand.u32 2147483647, %v42
    %vm2064 = vcmp.le.f32.partialorder %v2063, 0.7853982
    %vm2065 = vcmp.lt.s32.totalorder %v42, 0
    %v2066 = vand.u32 %v42, 2139095040
    %v2067 = vshrl.u32 %v2066, 23
    %v2068 = vsub.s32 %v2067, 127
    %v2069 = vand.u32 2147483647, %v42
    %v2070 = vand.u32 %v2069, 8388607
    %v2071 = vor.u32 %v2070, 8388608
    %v2072 = vsub.s32 0, %v2071
    %v2073 = vadd.s32 %v2068, 1
    %vm2074 = vcmp.gt.s32.totalorder %v2073, 0
    %v2075 = vsel %vm2074, %v2073, 0
    %v2076 = vshrl.u32 %v2075, 5
    %v2077 = vand.u32 %v2075, 31
    %v2078 = vsub.s32 32, %v2077
    %v2079 = vshrl.u32 683565275, %v2078
    %v2080 = vshll.u32 683565275, %v2077
    %v2081 = vshrl.u32 2475754826, %v2078
    %v2082 = vor.u32 %v2080, %v2081
    %v2083 = vshll.u32 2475754826, %v2077
    %v2084 = vshrl.u32 2131351028, %v2078
    %v2085 = vor.u32 %v2083, %v2084
    %v2086 = vshll.u32 2131351028, %v2077
    %v2087 = vshrl.u32 2102212464, %v2078
    %v2088 = vor.u32 %v2086, %v2087
    %v2089 = vshll.u32 2102212464, %v2077
    %v2090 = vshrl.u32 920167782, %v2078
    %v2091 = vor.u32 %v2089, %v2090
    %v2092 = vshll.u32 920167782, %v2077
    %v2093 = vshrl.u32 1326507024, %v2078
    %v2094 = vor.u32 %v2092, %v2093
    %vm2095 = vcmp.lt.s32.totalorder %v2076, 1
    %vm2096 = vcmp.lt.s32.totalorder %v2076, 2
    %vm2097 = vcmp.lt.s32.totalorder %v2076, 3
    %vm2098 = vcmp.lt.s32.totalorder %v2076, 4
    %v2099 = vsel %vm2095, %v2079, %v2082
    %v2100 = vsel %vm2098, %v2088, 2102212464
    %v2101 = vsel %vm2097, %v2085, %v2100
    %v2102 = vsel %vm2096, %v2099, %v2101
    %v2103 = vsel %vm2095, %v2082, %v2085
    %v2104 = vsel %vm2098, %v2091, 920167782
    %v2105 = vsel %vm2097, %v2088, %v2104
    %v2106 = vsel %vm2096, %v2103, %v2105
    %v2107 = vsel %vm2095, %v2085, %v2088
    %v2108 = vsel %vm2098, %v2094, 1326507024
    %v2109 = vsel %vm2097, %v2091, %v2108
    %v2110 = vsel %vm2096, %v2107, %v2109
    %v2111 = vshll.u32 %v2071, 8
    %v2112 = vmul.u32.u64.compose %v2111, %v2110
    %v2113 = vextract.low.u32 %v2112
    %v2114 = vextract.high.u32 %v2112
    %v2115 = vmul.u32.u64.compose %v2111, %v2106
    %v2116 = vextract.low.u32 %v2115
    %v2117 = vextract.high.u32 %v2115
    %v2118 = vmul.u32 %v2111, %v2102
    %v2119 = vadd.s32 %v2114, %v2116
    %vm2120 = vc.u32 %v2114, %v2116
    %v2121 = vadd.s32 %v2117, 1
    %v2122 = vsel %vm2120, %v2121, %v2117
    %v2123 = vadd.s32 %v2118, %v2122
    %v2124 = vadd.s32 %v2123, 536870912
    %v2125 = vshrl.u32 %v2124, 30
    %v2126 = vshll.u32 %v2125, 30
    %v2127 = vsub.s32 %v2123, %v2126
    %vm2128 = vcmp.lt.s32.totalorder %v2127, 0
    %v2129 = vsub.s32 0, %v2127
    %v2130 = vsel %vm2128, %v2129, %v2127
    %v2131 = vclz %v2130
    %v2132 = vsub.s32 %v2131, 2
    %vm2133 = vcmp.gt.s32.totalorder 0, %v2132
    %v2134 = vsel %vm2133, 0, %v2132
    %v2135 = vsub.s32 32, %v2134
    %v2136 = vshll.u32 %v2127, %v2134
    %v2137 = vshrl.u32 %v2119, %v2135
    %v2138 = vor.u32 %v2136, %v2137
    %v2139 = vsub.s32 4294967266, %v2134
    %v2140 = vadd.s32 %v2139, 127
    %v2141 = vshll.u32 %v2140, 23
    %v2142 = vor.u32 4788187, %v2141
    %v2143 = vand.u32 2147483647, %v2142
    %v2145 = vcvt.s32.f32 %v2138
    %v2146 = vmul.f32 %v2145, %v2143
    %v2147 = vxor.u32 %v2146, 2147483648
    %v2148 = vsel %vm2065, %v2147, %v2146
    %v2149 = vsub.s32 4, %v2125
    %v2150 = vsel %vm2065, %v2149, %v2125
    %v2151 = vsel %vm2064, %v42, %v2148
    %v2152 = vsel %vm2064, 0, %v2150
    %v2153 = vcosq.f32.pop %v2151
    %v2154 = vsinq.f32.pop %v2151
    %vm2155 = vweird.f32 %v42
    %v2156 = vadd.s32 %v2152, 3
    %v2157 = vand.u32 %v2156, 3
    %vm2158 = vcmp.lt.s32.totalorder %v2157, 2
    %vm2159 = vcmp.eq.s32.totalorder %v2157, 0
    %v2160 = vxor.u32 %v2154, 2147483648
    %v2161 = vsel %vm2159, %v2153, %v2160
    %vm2162 = vcmp.eq.s32.totalorder %v2157, 2
    %v2163 = vxor.u32 %v2153, 2147483648
    %v2164 = vsel %vm2162, %v2163, %v2154
    %v2165 = vsel %vm2158, %v2161, %v2164
    %v2166 = vsel %vm2155, nan, %v2165
    %v2167 = vand.u32 2147483647, %v43
    %vm2168 = vcmp.le.f32.partialorder %v2167, 0.7853982
    %vm2169 = vcmp.lt.s32.totalorder %v43, 0
    %v2170 = vand.u32 %v43, 2139095040
    %v2171 = vshrl.u32 %v2170, 23
    %v2172 = vsub.s32 %v2171, 127
    %v2173 = vand.u32 2147483647, %v43
    %v2174 = vand.u32 %v2173, 8388607
    %v2175 = vor.u32 %v2174, 8388608
    %v2176 = vsub.s32 0, %v2175
    %v2177 = vadd.s32 %v2172, 1
    %vm2178 = vcmp.gt.s32.totalorder %v2177, 0
    %v2179 = vsel %vm2178, %v2177, 0
    %v2180 = vshrl.u32 %v2179, 5
    %v2181 = vand.u32 %v2179, 31
    %v2182 = vsub.s32 32, %v2181
    %v2183 = vshrl.u32 683565275, %v2182
    %v2184 = vshll.u32 683565275, %v2181
    %v2185 = vshrl.u32 2475754826, %v2182
    %v2186 = vor.u32 %v2184, %v2185
    %v2187 = vshll.u32 2475754826, %v2181
    %v2188 = vshrl.u32 2131351028, %v2182
    %v2189 = vor.u32 %v2187, %v2188
    %v2190 = vshll.u32 2131351028, %v2181
    %v2191 = vshrl.u32 2102212464, %v2182
    %v2192 = vor.u32 %v2190, %v2191
    %v2193 = vshll.u32 2102212464, %v2181
    %v2194 = vshrl.u32 920167782, %v2182
    %v2195 = vor.u32 %v2193, %v2194
    %v2196 = vshll.u32 920167782, %v2181
    %v2197 = vshrl.u32 1326507024, %v2182
    %v2198 = vor.u32 %v2196, %v2197
    %vm2199 = vcmp.lt.s32.totalorder %v2180, 1
    %vm2200 = vcmp.lt.s32.totalorder %v2180, 2
    %vm2201 = vcmp.lt.s32.totalorder %v2180, 3
    %vm2202 = vcmp.lt.s32.totalorder %v2180, 4
    %v2203 = vsel %vm2199, %v2183, %v2186
    %v2204 = vsel %vm2202, %v2192, 2102212464
    %v2205 = vsel %vm2201, %v2189, %v2204
    %v2206 = vsel %vm2200, %v2203, %v2205
    %v2207 = vsel %vm2199, %v2186, %v2189
    %v2208 = vsel %vm2202, %v2195, 920167782
    %v2209 = vsel %vm2201, %v2192, %v2208
    %v2210 = vsel %vm2200, %v2207, %v2209
    %v2211 = vsel %vm2199, %v2189, %v2192
    %v2212 = vsel %vm2202, %v2198, 1326507024
    %v2213 = vsel %vm2201, %v2195, %v2212
    %v2214 = vsel %vm2200, %v2211, %v2213
    %v2215 = vshll.u32 %v2175, 8
    %v2216 = vmul.u32.u64.compose %v2215, %v2214
    %v2217 = vextract.low.u32 %v2216
    %v2218 = vextract.high.u32 %v2216
    %v2219 = vmul.u32.u64.compose %v2215, %v2210
    %v2220 = vextract.low.u32 %v2219
    %v2221 = vextract.high.u32 %v2219
    %v2222 = vmul.u32 %v2215, %v2206
    %v2223 = vadd.s32 %v2218, %v2220
    %vm2224 = vc.u32 %v2218, %v2220
    %v2225 = vadd.s32 %v2221, 1
    %v2226 = vsel %vm2224, %v2225, %v2221
    %v2227 = vadd.s32 %v2222, %v2226
    %v2228 = vadd.s32 %v2227, 536870912
    %v2229 = vshrl.u32 %v2228, 30
    %v2230 = vshll.u32 %v2229, 30
    %v2231 = vsub.s32 %v2227, %v2230
    %vm2232 = vcmp.lt.s32.totalorder %v2231, 0
    %v2233 = vsub.s32 0, %v2231
    %v2234 = vsel %vm2232, %v2233, %v2231
    %v2235 = vclz %v2234
    %v2236 = vsub.s32 %v2235, 2
    %vm2237 = vcmp.gt.s32.totalorder 0, %v2236
    %v2238 = vsel %vm2237, 0, %v2236
    %v2239 = vsub.s32 32, %v2238
    %v2240 = vshll.u32 %v2231, %v2238
    %v2241 = vshrl.u32 %v2223, %v2239
    %v2242 = vor.u32 %v2240, %v2241
    %v2243 = vsub.s32 4294967266, %v2238
    %v2244 = vadd.s32 %v2243, 127
    %v2245 = vshll.u32 %v2244, 23
    %v2246 = vor.u32 4788187, %v2245
    %v2247 = vand.u32 2147483647, %v2246
    %v2249 = vcvt.s32.f32 %v2242
    %v2250 = vmul.f32 %v2249, %v2247
    %v2251 = vxor.u32 %v2250, 2147483648
    %v2252 = vsel %vm2169, %v2251, %v2250
    %v2253 = vsub.s32 4, %v2229
    %v2254 = vsel %vm2169, %v2253, %v2229
    %v2255 = vsel %vm2168, %v43, %v2252
    %v2256 = vsel %vm2168, 0, %v2254
    %v2257 = vcosq.f32.pop %v2255
    %v2258 = vsinq.f32.pop %v2255
    %vm2259 = vweird.f32 %v43
    %v2260 = vadd.s32 %v2256, 3
    %v2261 = vand.u32 %v2260, 3
    %vm2262 = vcmp.lt.s32.totalorder %v2261, 2
    %vm2263 = vcmp.eq.s32.totalorder %v2261, 0
    %v2264 = vxor.u32 %v2258, 2147483648
    %v2265 = vsel %vm2263, %v2257, %v2264
    %vm2266 = vcmp.eq.s32.totalorder %v2261, 2
    %v2267 = vxor.u32 %v2257, 2147483648
    %v2268 = vsel %vm2266, %v2267, %v2258
    %v2269 = vsel %vm2262, %v2265, %v2268
    %v2270 = vsel %vm2259, nan, %v2269
    %v2271 = vand.u32 2147483647, %v44
    %vm2272 = vcmp.le.f32.partialorder %v2271, 0.7853982
    %vm2273 = vcmp.lt.s32.totalorder %v44, 0
    %v2274 = vand.u32 %v44, 2139095040
    %v2275 = vshrl.u32 %v2274, 23
    %v2276 = vsub.s32 %v2275, 127
    %v2277 = vand.u32 2147483647, %v44
    %v2278 = vand.u32 %v2277, 8388607
    %v2279 = vor.u32 %v2278, 8388608
    %v2280 = vsub.s32 0, %v2279
    %v2281 = vadd.s32 %v2276, 1
    %vm2282 = vcmp.gt.s32.totalorder %v2281, 0
    %v2283 = vsel %vm2282, %v2281, 0
    %v2284 = vshrl.u32 %v2283, 5
    %v2285 = vand.u32 %v2283, 31
    %v2286 = vsub.s32 32, %v2285
    %v2287 = vshrl.u32 683565275, %v2286
    %v2288 = vshll.u32 683565275, %v2285
    %v2289 = vshrl.u32 2475754826, %v2286
    %v2290 = vor.u32 %v2288, %v2289
    %v2291 = vshll.u32 2475754826, %v2285
    %v2292 = vshrl.u32 2131351028, %v2286
    %v2293 = vor.u32 %v2291, %v2292
    %v2294 = vshll.u32 2131351028, %v2285
    %v2295 = vshrl.u32 2102212464, %v2286
    %v2296 = vor.u32 %v2294, %v2295
    %v2297 = vshll.u32 2102212464, %v2285
    %v2298 = vshrl.u32 920167782, %v2286
    %v2299 = vor.u32 %v2297, %v2298
    %v2300 = vshll.u32 920167782, %v2285
    %v2301 = vshrl.u32 1326507024, %v2286
    %v2302 = vor.u32 %v2300, %v2301
    %vm2303 = vcmp.lt.s32.totalorder %v2284, 1
    %vm2304 = vcmp.lt.s32.totalorder %v2284, 2
    %vm2305 = vcmp.lt.s32.totalorder %v2284, 3
    %vm2306 = vcmp.lt.s32.totalorder %v2284, 4
    %v2307 = vsel %vm2303, %v2287, %v2290
    %v2308 = vsel %vm2306, %v2296, 2102212464
    %v2309 = vsel %vm2305, %v2293, %v2308
    %v2310 = vsel %vm2304, %v2307, %v2309
    %v2311 = vsel %vm2303, %v2290, %v2293
    %v2312 = vsel %vm2306, %v2299, 920167782
    %v2313 = vsel %vm2305, %v2296, %v2312
    %v2314 = vsel %vm2304, %v2311, %v2313
    %v2315 = vsel %vm2303, %v2293, %v2296
    %v2316 = vsel %vm2306, %v2302, 1326507024
    %v2317 = vsel %vm2305, %v2299, %v2316
    %v2318 = vsel %vm2304, %v2315, %v2317
    %v2319 = vshll.u32 %v2279, 8
    %v2320 = vmul.u32.u64.compose %v2319, %v2318
    %v2321 = vextract.low.u32 %v2320
    %v2322 = vextract.high.u32 %v2320
    %v2323 = vmul.u32.u64.compose %v2319, %v2314
    %v2324 = vextract.low.u32 %v2323
    %v2325 = vextract.high.u32 %v2323
    %v2326 = vmul.u32 %v2319, %v2310
    %v2327 = vadd.s32 %v2322, %v2324
    %vm2328 = vc.u32 %v2322, %v2324
    %v2329 = vadd.s32 %v2325, 1
    %v2330 = vsel %vm2328, %v2329, %v2325
    %v2331 = vadd.s32 %v2326, %v2330
    %v2332 = vadd.s32 %v2331, 536870912
    %v2333 = vshrl.u32 %v2332, 30
    %v2334 = vshll.u32 %v2333, 30
    %v2335 = vsub.s32 %v2331, %v2334
    %vm2336 = vcmp.lt.s32.totalorder %v2335, 0
    %v2337 = vsub.s32 0, %v2335
    %v2338 = vsel %vm2336, %v2337, %v2335
    %v2339 = vclz %v2338
    %v2340 = vsub.s32 %v2339, 2
    %vm2341 = vcmp.gt.s32.totalorder 0, %v2340
    %v2342 = vsel %vm2341, 0, %v2340
    %v2343 = vsub.s32 32, %v2342
    %v2344 = vshll.u32 %v2335, %v2342
    %v2345 = vshrl.u32 %v2327, %v2343
    %v2346 = vor.u32 %v2344, %v2345
    %v2347 = vsub.s32 4294967266, %v2342
    %v2348 = vadd.s32 %v2347, 127
    %v2349 = vshll.u32 %v2348, 23
    %v2350 = vor.u32 4788187, %v2349
    %v2351 = vand.u32 2147483647, %v2350
    %v2353 = vcvt.s32.f32 %v2346
    %v2354 = vmul.f32 %v2353, %v2351
    %v2355 = vxor.u32 %v2354, 2147483648
    %v2356 = vsel %vm2273, %v2355, %v2354
    %v2357 = vsub.s32 4, %v2333
    %v2358 = vsel %vm2273, %v2357, %v2333
    %v2359 = vsel %vm2272, %v44, %v2356
    %v2360 = vsel %vm2272, 0, %v2358
    %v2361 = vcosq.f32.pop %v2359
    %v2362 = vsinq.f32.pop %v2359
    %vm2363 = vweird.f32 %v44
    %v2364 = vadd.s32 %v2360, 3
    %v2365 = vand.u32 %v2364, 3
    %vm2366 = vcmp.lt.s32.totalorder %v2365, 2
    %vm2367 = vcmp.eq.s32.totalorder %v2365, 0
    %v2368 = vxor.u32 %v2362, 2147483648
    %v2369 = vsel %vm2367, %v2361, %v2368
    %vm2370 = vcmp.eq.s32.totalorder %v2365, 2
    %v2371 = vxor.u32 %v2361, 2147483648
    %v2372 = vsel %vm2370, %v2371, %v2362
    %v2373 = vsel %vm2366, %v2369, %v2372
    %v2374 = vsel %vm2363, nan, %v2373
    %v2375 = vand.u32 2147483647, %v45
    %vm2376 = vcmp.le.f32.partialorder %v2375, 0.7853982
    %vm2377 = vcmp.lt.s32.totalorder %v45, 0
    %v2378 = vand.u32 %v45, 2139095040
    %v2379 = vshrl.u32 %v2378, 23
    %v2380 = vsub.s32 %v2379, 127
    %v2381 = vand.u32 2147483647, %v45
    %v2382 = vand.u32 %v2381, 8388607
    %v2383 = vor.u32 %v2382, 8388608
    %v2384 = vsub.s32 0, %v2383
    %v2385 = vadd.s32 %v2380, 1
    %vm2386 = vcmp.gt.s32.totalorder %v2385, 0
    %v2387 = vsel %vm2386, %v2385, 0
    %v2388 = vshrl.u32 %v2387, 5
    %v2389 = vand.u32 %v2387, 31
    %v2390 = vsub.s32 32, %v2389
    %v2391 = vshrl.u32 683565275, %v2390
    %v2392 = vshll.u32 683565275, %v2389
    %v2393 = vshrl.u32 2475754826, %v2390
    %v2394 = vor.u32 %v2392, %v2393
    %v2395 = vshll.u32 2475754826, %v2389
    %v2396 = vshrl.u32 2131351028, %v2390
    %v2397 = vor.u32 %v2395, %v2396
    %v2398 = vshll.u32 2131351028, %v2389
    %v2399 = vshrl.u32 2102212464, %v2390
    %v2400 = vor.u32 %v2398, %v2399
    %v2401 = vshll.u32 2102212464, %v2389
    %v2402 = vshrl.u32 920167782, %v2390
    %v2403 = vor.u32 %v2401, %v2402
    %v2404 = vshll.u32 920167782, %v2389
    %v2405 = vshrl.u32 1326507024, %v2390
    %v2406 = vor.u32 %v2404, %v2405
    %vm2407 = vcmp.lt.s32.totalorder %v2388, 1
    %vm2408 = vcmp.lt.s32.totalorder %v2388, 2
    %vm2409 = vcmp.lt.s32.totalorder %v2388, 3
    %vm2410 = vcmp.lt.s32.totalorder %v2388, 4
    %v2411 = vsel %vm2407, %v2391, %v2394
    %v2412 = vsel %vm2410, %v2400, 2102212464
    %v2413 = vsel %vm2409, %v2397, %v2412
    %v2414 = vsel %vm2408, %v2411, %v2413
    %v2415 = vsel %vm2407, %v2394, %v2397
    %v2416 = vsel %vm2410, %v2403, 920167782
    %v2417 = vsel %vm2409, %v2400, %v2416
    %v2418 = vsel %vm2408, %v2415, %v2417
    %v2419 = vsel %vm2407, %v2397, %v2400
    %v2420 = vsel %vm2410, %v2406, 1326507024
    %v2421 = vsel %vm2409, %v2403, %v2420
    %v2422 = vsel %vm2408, %v2419, %v2421
    %v2423 = vshll.u32 %v2383, 8
    %v2424 = vmul.u32.u64.compose %v2423, %v2422
    %v2425 = vextract.low.u32 %v2424
    %v2426 = vextract.high.u32 %v2424
    %v2427 = vmul.u32.u64.compose %v2423, %v2418
    %v2428 = vextract.low.u32 %v2427
    %v2429 = vextract.high.u32 %v2427
    %v2430 = vmul.u32 %v2423, %v2414
    %v2431 = vadd.s32 %v2426, %v2428
    %vm2432 = vc.u32 %v2426, %v2428
    %v2433 = vadd.s32 %v2429, 1
    %v2434 = vsel %vm2432, %v2433, %v2429
    %v2435 = vadd.s32 %v2430, %v2434
    %v2436 = vadd.s32 %v2435, 536870912
    %v2437 = vshrl.u32 %v2436, 30
    %v2438 = vshll.u32 %v2437, 30
    %v2439 = vsub.s32 %v2435, %v2438
    %vm2440 = vcmp.lt.s32.totalorder %v2439, 0
    %v2441 = vsub.s32 0, %v2439
    %v2442 = vsel %vm2440, %v2441, %v2439
    %v2443 = vclz %v2442
    %v2444 = vsub.s32 %v2443, 2
    %vm2445 = vcmp.gt.s32.totalorder 0, %v2444
    %v2446 = vsel %vm2445, 0, %v2444
    %v2447 = vsub.s32 32, %v2446
    %v2448 = vshll.u32 %v2439, %v2446
    %v2449 = vshrl.u32 %v2431, %v2447
    %v2450 = vor.u32 %v2448, %v2449
    %v2451 = vsub.s32 4294967266, %v2446
    %v2452 = vadd.s32 %v2451, 127
    %v2453 = vshll.u32 %v2452, 23
    %v2454 = vor.u32 4788187, %v2453
    %v2455 = vand.u32 2147483647, %v2454
    %v2457 = vcvt.s32.f32 %v2450
    %v2458 = vmul.f32 %v2457, %v2455
    %v2459 = vxor.u32 %v2458, 2147483648
    %v2460 = vsel %vm2377, %v2459, %v2458
    %v2461 = vsub.s32 4, %v2437
    %v2462 = vsel %vm2377, %v2461, %v2437
    %v2463 = vsel %vm2376, %v45, %v2460
    %v2464 = vsel %vm2376, 0, %v2462
    %v2465 = vcosq.f32.pop %v2463
    %v2466 = vsinq.f32.pop %v2463
    %vm2467 = vweird.f32 %v45
    %v2468 = vadd.s32 %v2464, 3
    %v2469 = vand.u32 %v2468, 3
    %vm2470 = vcmp.lt.s32.totalorder %v2469, 2
    %vm2471 = vcmp.eq.s32.totalorder %v2469, 0
    %v2472 = vxor.u32 %v2466, 2147483648
    %v2473 = vsel %vm2471, %v2465, %v2472
    %vm2474 = vcmp.eq.s32.totalorder %v2469, 2
    %v2475 = vxor.u32 %v2465, 2147483648
    %v2476 = vsel %vm2474, %v2475, %v2466
    %v2477 = vsel %vm2470, %v2473, %v2476
    %v2478 = vsel %vm2467, nan, %v2477
    %v2479 = vand.u32 2147483647, %v46
    %vm2480 = vcmp.le.f32.partialorder %v2479, 0.7853982
    %vm2481 = vcmp.lt.s32.totalorder %v46, 0
    %v2482 = vand.u32 %v46, 2139095040
    %v2483 = vshrl.u32 %v2482, 23
    %v2484 = vsub.s32 %v2483, 127
    %v2485 = vand.u32 2147483647, %v46
    %v2486 = vand.u32 %v2485, 8388607
    %v2487 = vor.u32 %v2486, 8388608
    %v2488 = vsub.s32 0, %v2487
    %v2489 = vadd.s32 %v2484, 1
    %vm2490 = vcmp.gt.s32.totalorder %v2489, 0
    %v2491 = vsel %vm2490, %v2489, 0
    %v2492 = vshrl.u32 %v2491, 5
    %v2493 = vand.u32 %v2491, 31
    %v2494 = vsub.s32 32, %v2493
    %v2495 = vshrl.u32 683565275, %v2494
    %v2496 = vshll.u32 683565275, %v2493
    %v2497 = vshrl.u32 2475754826, %v2494
    %v2498 = vor.u32 %v2496, %v2497
    %v2499 = vshll.u32 2475754826, %v2493
    %v2500 = vshrl.u32 2131351028, %v2494
    %v2501 = vor.u32 %v2499, %v2500
    %v2502 = vshll.u32 2131351028, %v2493
    %v2503 = vshrl.u32 2102212464, %v2494
    %v2504 = vor.u32 %v2502, %v2503
    %v2505 = vshll.u32 2102212464, %v2493
    %v2506 = vshrl.u32 920167782, %v2494
    %v2507 = vor.u32 %v2505, %v2506
    %v2508 = vshll.u32 920167782, %v2493
    %v2509 = vshrl.u32 1326507024, %v2494
    %v2510 = vor.u32 %v2508, %v2509
    %vm2511 = vcmp.lt.s32.totalorder %v2492, 1
    %vm2512 = vcmp.lt.s32.totalorder %v2492, 2
    %vm2513 = vcmp.lt.s32.totalorder %v2492, 3
    %vm2514 = vcmp.lt.s32.totalorder %v2492, 4
    %v2515 = vsel %vm2511, %v2495, %v2498
    %v2516 = vsel %vm2514, %v2504, 2102212464
    %v2517 = vsel %vm2513, %v2501, %v2516
    %v2518 = vsel %vm2512, %v2515, %v2517
    %v2519 = vsel %vm2511, %v2498, %v2501
    %v2520 = vsel %vm2514, %v2507, 920167782
    %v2521 = vsel %vm2513, %v2504, %v2520
    %v2522 = vsel %vm2512, %v2519, %v2521
    %v2523 = vsel %vm2511, %v2501, %v2504
    %v2524 = vsel %vm2514, %v2510, 1326507024
    %v2525 = vsel %vm2513, %v2507, %v2524
    %v2526 = vsel %vm2512, %v2523, %v2525
    %v2527 = vshll.u32 %v2487, 8
    %v2528 = vmul.u32.u64.compose %v2527, %v2526
    %v2529 = vextract.low.u32 %v2528
    %v2530 = vextract.high.u32 %v2528
    %v2531 = vmul.u32.u64.compose %v2527, %v2522
    %v2532 = vextract.low.u32 %v2531
    %v2533 = vextract.high.u32 %v2531
    %v2534 = vmul.u32 %v2527, %v2518
    %v2535 = vadd.s32 %v2530, %v2532
    %vm2536 = vc.u32 %v2530, %v2532
    %v2537 = vadd.s32 %v2533, 1
    %v2538 = vsel %vm2536, %v2537, %v2533
    %v2539 = vadd.s32 %v2534, %v2538
    %v2540 = vadd.s32 %v2539, 536870912
    %v2541 = vshrl.u32 %v2540, 30
    %v2542 = vshll.u32 %v2541, 30
    %v2543 = vsub.s32 %v2539, %v2542
    %vm2544 = vcmp.lt.s32.totalorder %v2543, 0
    %v2545 = vsub.s32 0, %v2543
    %v2546 = vsel %vm2544, %v2545, %v2543
    %v2547 = vclz %v2546
    %v2548 = vsub.s32 %v2547, 2
    %vm2549 = vcmp.gt.s32.totalorder 0, %v2548
    %v2550 = vsel %vm2549, 0, %v2548
    %v2551 = vsub.s32 32, %v2550
    %v2552 = vshll.u32 %v2543, %v2550
    %v2553 = vshrl.u32 %v2535, %v2551
    %v2554 = vor.u32 %v2552, %v2553
    %v2555 = vsub.s32 4294967266, %v2550
    %v2556 = vadd.s32 %v2555, 127
    %v2557 = vshll.u32 %v2556, 23
    %v2558 = vor.u32 4788187, %v2557
    %v2559 = vand.u32 2147483647, %v2558
    %v2561 = vcvt.s32.f32 %v2554
    %v2562 = vmul.f32 %v2561, %v2559
    %v2563 = vxor.u32 %v2562, 2147483648
    %v2564 = vsel %vm2481, %v2563, %v2562
    %v2565 = vsub.s32 4, %v2541
    %v2566 = vsel %vm2481, %v2565, %v2541
    %v2567 = vsel %vm2480, %v46, %v2564
    %v2568 = vsel %vm2480, 0, %v2566
    %v2569 = vcosq.f32.pop %v2567
    %v2570 = vsinq.f32.pop %v2567
    %vm2571 = vweird.f32 %v46
    %v2572 = vadd.s32 %v2568, 3
    %v2573 = vand.u32 %v2572, 3
    %vm2574 = vcmp.lt.s32.totalorder %v2573, 2
    %vm2575 = vcmp.eq.s32.totalorder %v2573, 0
    %v2576 = vxor.u32 %v2570, 2147483648
    %v2577 = vsel %vm2575, %v2569, %v2576
    %vm2578 = vcmp.eq.s32.totalorder %v2573, 2
    %v2579 = vxor.u32 %v2569, 2147483648
    %v2580 = vsel %vm2578, %v2579, %v2570
    %v2581 = vsel %vm2574, %v2577, %v2580
    %v2582 = vsel %vm2571, nan, %v2581
    %v2583 = vand.u32 2147483647, %v47
    %vm2584 = vcmp.le.f32.partialorder %v2583, 0.7853982
    %vm2585 = vcmp.lt.s32.totalorder %v47, 0
    %v2586 = vand.u32 %v47, 2139095040
    %v2587 = vshrl.u32 %v2586, 23
    %v2588 = vsub.s32 %v2587, 127
    %v2589 = vand.u32 2147483647, %v47
    %v2590 = vand.u32 %v2589, 8388607
    %v2591 = vor.u32 %v2590, 8388608
    %v2592 = vsub.s32 0, %v2591
    %v2593 = vadd.s32 %v2588, 1
    %vm2594 = vcmp.gt.s32.totalorder %v2593, 0
    %v2595 = vsel %vm2594, %v2593, 0
    %v2596 = vshrl.u32 %v2595, 5
    %v2597 = vand.u32 %v2595, 31
    %v2598 = vsub.s32 32, %v2597
    %v2599 = vshrl.u32 683565275, %v2598
    %v2600 = vshll.u32 683565275, %v2597
    %v2601 = vshrl.u32 2475754826, %v2598
    %v2602 = vor.u32 %v2600, %v2601
    %v2603 = vshll.u32 2475754826, %v2597
    %v2604 = vshrl.u32 2131351028, %v2598
    %v2605 = vor.u32 %v2603, %v2604
    %v2606 = vshll.u32 2131351028, %v2597
    %v2607 = vshrl.u32 2102212464, %v2598
    %v2608 = vor.u32 %v2606, %v2607
    %v2609 = vshll.u32 2102212464, %v2597
    %v2610 = vshrl.u32 920167782, %v2598
    %v2611 = vor.u32 %v2609, %v2610
    %v2612 = vshll.u32 920167782, %v2597
    %v2613 = vshrl.u32 1326507024, %v2598
    %v2614 = vor.u32 %v2612, %v2613
    %vm2615 = vcmp.lt.s32.totalorder %v2596, 1
    %vm2616 = vcmp.lt.s32.totalorder %v2596, 2
    %vm2617 = vcmp.lt.s32.totalorder %v2596, 3
    %vm2618 = vcmp.lt.s32.totalorder %v2596, 4
    %v2619 = vsel %vm2615, %v2599, %v2602
    %v2620 = vsel %vm2618, %v2608, 2102212464
    %v2621 = vsel %vm2617, %v2605, %v2620
    %v2622 = vsel %vm2616, %v2619, %v2621
    %v2623 = vsel %vm2615, %v2602, %v2605
    %v2624 = vsel %vm2618, %v2611, 920167782
    %v2625 = vsel %vm2617, %v2608, %v2624
    %v2626 = vsel %vm2616, %v2623, %v2625
    %v2627 = vsel %vm2615, %v2605, %v2608
    %v2628 = vsel %vm2618, %v2614, 1326507024
    %v2629 = vsel %vm2617, %v2611, %v2628
    %v2630 = vsel %vm2616, %v2627, %v2629
    %v2631 = vshll.u32 %v2591, 8
    %v2632 = vmul.u32.u64.compose %v2631, %v2630
    %v2633 = vextract.low.u32 %v2632
    %v2634 = vextract.high.u32 %v2632
    %v2635 = vmul.u32.u64.compose %v2631, %v2626
    %v2636 = vextract.low.u32 %v2635
    %v2637 = vextract.high.u32 %v2635
    %v2638 = vmul.u32 %v2631, %v2622
    %v2639 = vadd.s32 %v2634, %v2636
    %vm2640 = vc.u32 %v2634, %v2636
    %v2641 = vadd.s32 %v2637, 1
    %v2642 = vsel %vm2640, %v2641, %v2637
    %v2643 = vadd.s32 %v2638, %v2642
    %v2644 = vadd.s32 %v2643, 536870912
    %v2645 = vshrl.u32 %v2644, 30
    %v2646 = vshll.u32 %v2645, 30
    %v2647 = vsub.s32 %v2643, %v2646
    %vm2648 = vcmp.lt.s32.totalorder %v2647, 0
    %v2649 = vsub.s32 0, %v2647
    %v2650 = vsel %vm2648, %v2649, %v2647
    %v2651 = vclz %v2650
    %v2652 = vsub.s32 %v2651, 2
    %vm2653 = vcmp.gt.s32.totalorder 0, %v2652
    %v2654 = vsel %vm2653, 0, %v2652
    %v2655 = vsub.s32 32, %v2654
    %v2656 = vshll.u32 %v2647, %v2654
    %v2657 = vshrl.u32 %v2639, %v2655
    %v2658 = vor.u32 %v2656, %v2657
    %v2659 = vsub.s32 4294967266, %v2654
    %v2660 = vadd.s32 %v2659, 127
    %v2661 = vshll.u32 %v2660, 23
    %v2662 = vor.u32 4788187, %v2661
    %v2663 = vand.u32 2147483647, %v2662
    %v2665 = vcvt.s32.f32 %v2658
    %v2666 = vmul.f32 %v2665, %v2663
    %v2667 = vxor.u32 %v2666, 2147483648
    %v2668 = vsel %vm2585, %v2667, %v2666
    %v2669 = vsub.s32 4, %v2645
    %v2670 = vsel %vm2585, %v2669, %v2645
    %v2671 = vsel %vm2584, %v47, %v2668
    %v2672 = vsel %vm2584, 0, %v2670
    %v2673 = vcosq.f32.pop %v2671
    %v2674 = vsinq.f32.pop %v2671
    %vm2675 = vweird.f32 %v47
    %v2676 = vadd.s32 %v2672, 3
    %v2677 = vand.u32 %v2676, 3
    %vm2678 = vcmp.lt.s32.totalorder %v2677, 2
    %vm2679 = vcmp.eq.s32.totalorder %v2677, 0
    %v2680 = vxor.u32 %v2674, 2147483648
    %v2681 = vsel %vm2679, %v2673, %v2680
    %vm2682 = vcmp.eq.s32.totalorder %v2677, 2
    %v2683 = vxor.u32 %v2673, 2147483648
    %v2684 = vsel %vm2682, %v2683, %v2674
    %v2685 = vsel %vm2678, %v2681, %v2684
    %v2686 = vsel %vm2675, nan, %v2685
    %v2687 = vand.u32 2147483647, %v48
    %vm2688 = vcmp.le.f32.partialorder %v2687, 0.7853982
    %vm2689 = vcmp.lt.s32.totalorder %v48, 0
    %v2690 = vand.u32 %v48, 2139095040
    %v2691 = vshrl.u32 %v2690, 23
    %v2692 = vsub.s32 %v2691, 127
    %v2693 = vand.u32 2147483647, %v48
    %v2694 = vand.u32 %v2693, 8388607
    %v2695 = vor.u32 %v2694, 8388608
    %v2696 = vsub.s32 0, %v2695
    %v2697 = vadd.s32 %v2692, 1
    %vm2698 = vcmp.gt.s32.totalorder %v2697, 0
    %v2699 = vsel %vm2698, %v2697, 0
    %v2700 = vshrl.u32 %v2699, 5
    %v2701 = vand.u32 %v2699, 31
    %v2702 = vsub.s32 32, %v2701
    %v2703 = vshrl.u32 683565275, %v2702
    %v2704 = vshll.u32 683565275, %v2701
    %v2705 = vshrl.u32 2475754826, %v2702
    %v2706 = vor.u32 %v2704, %v2705
    %v2707 = vshll.u32 2475754826, %v2701
    %v2708 = vshrl.u32 2131351028, %v2702
    %v2709 = vor.u32 %v2707, %v2708
    %v2710 = vshll.u32 2131351028, %v2701
    %v2711 = vshrl.u32 2102212464, %v2702
    %v2712 = vor.u32 %v2710, %v2711
    %v2713 = vshll.u32 2102212464, %v2701
    %v2714 = vshrl.u32 920167782, %v2702
    %v2715 = vor.u32 %v2713, %v2714
    %v2716 = vshll.u32 920167782, %v2701
    %v2717 = vshrl.u32 1326507024, %v2702
    %v2718 = vor.u32 %v2716, %v2717
    %vm2719 = vcmp.lt.s32.totalorder %v2700, 1
    %vm2720 = vcmp.lt.s32.totalorder %v2700, 2
    %vm2721 = vcmp.lt.s32.totalorder %v2700, 3
    %vm2722 = vcmp.lt.s32.totalorder %v2700, 4
    %v2723 = vsel %vm2719, %v2703, %v2706
    %v2724 = vsel %vm2722, %v2712, 2102212464
    %v2725 = vsel %vm2721, %v2709, %v2724
    %v2726 = vsel %vm2720, %v2723, %v2725
    %v2727 = vsel %vm2719, %v2706, %v2709
    %v2728 = vsel %vm2722, %v2715, 920167782
    %v2729 = vsel %vm2721, %v2712, %v2728
    %v2730 = vsel %vm2720, %v2727, %v2729
    %v2731 = vsel %vm2719, %v2709, %v2712
    %v2732 = vsel %vm2722, %v2718, 1326507024
    %v2733 = vsel %vm2721, %v2715, %v2732
    %v2734 = vsel %vm2720, %v2731, %v2733
    %v2735 = vshll.u32 %v2695, 8
    %v2736 = vmul.u32.u64.compose %v2735, %v2734
    %v2737 = vextract.low.u32 %v2736
    %v2738 = vextract.high.u32 %v2736
    %v2739 = vmul.u32.u64.compose %v2735, %v2730
    %v2740 = vextract.low.u32 %v2739
    %v2741 = vextract.high.u32 %v2739
    %v2742 = vmul.u32 %v2735, %v2726
    %v2743 = vadd.s32 %v2738, %v2740
    %vm2744 = vc.u32 %v2738, %v2740
    %v2745 = vadd.s32 %v2741, 1
    %v2746 = vsel %vm2744, %v2745, %v2741
    %v2747 = vadd.s32 %v2742, %v2746
    %v2748 = vadd.s32 %v2747, 536870912
    %v2749 = vshrl.u32 %v2748, 30
    %v2750 = vshll.u32 %v2749, 30
    %v2751 = vsub.s32 %v2747, %v2750
    %vm2752 = vcmp.lt.s32.totalorder %v2751, 0
    %v2753 = vsub.s32 0, %v2751
    %v2754 = vsel %vm2752, %v2753, %v2751
    %v2755 = vclz %v2754
    %v2756 = vsub.s32 %v2755, 2
    %vm2757 = vcmp.gt.s32.totalorder 0, %v2756
    %v2758 = vsel %vm2757, 0, %v2756
    %v2759 = vsub.s32 32, %v2758
    %v2760 = vshll.u32 %v2751, %v2758
    %v2761 = vshrl.u32 %v2743, %v2759
    %v2762 = vor.u32 %v2760, %v2761
    %v2763 = vsub.s32 4294967266, %v2758
    %v2764 = vadd.s32 %v2763, 127
    %v2765 = vshll.u32 %v2764, 23
    %v2766 = vor.u32 4788187, %v2765
    %v2767 = vand.u32 2147483647, %v2766
    %v2769 = vcvt.s32.f32 %v2762
    %v2770 = vmul.f32 %v2769, %v2767
    %v2771 = vxor.u32 %v2770, 2147483648
    %v2772 = vsel %vm2689, %v2771, %v2770
    %v2773 = vsub.s32 4, %v2749
    %v2774 = vsel %vm2689, %v2773, %v2749
    %v2775 = vsel %vm2688, %v48, %v2772
    %v2776 = vsel %vm2688, 0, %v2774
    %v2777 = vcosq.f32.pop %v2775
    %v2778 = vsinq.f32.pop %v2775
    %vm2779 = vweird.f32 %v48
    %v2780 = vadd.s32 %v2776, 3
    %v2781 = vand.u32 %v2780, 3
    %vm2782 = vcmp.lt.s32.totalorder %v2781, 2
    %vm2783 = vcmp.eq.s32.totalorder %v2781, 0
    %v2784 = vxor.u32 %v2778, 2147483648
    %v2785 = vsel %vm2783, %v2777, %v2784
    %vm2786 = vcmp.eq.s32.totalorder %v2781, 2
    %v2787 = vxor.u32 %v2777, 2147483648
    %v2788 = vsel %vm2786, %v2787, %v2778
    %v2789 = vsel %vm2782, %v2785, %v2788
    %v2790 = vsel %vm2779, nan, %v2789
    %v2791 = vand.u32 2147483647, %v49
    %vm2792 = vcmp.le.f32.partialorder %v2791, 0.7853982
    %vm2793 = vcmp.lt.s32.totalorder %v49, 0
    %v2794 = vand.u32 %v49, 2139095040
    %v2795 = vshrl.u32 %v2794, 23
    %v2796 = vsub.s32 %v2795, 127
    %v2797 = vand.u32 2147483647, %v49
    %v2798 = vand.u32 %v2797, 8388607
    %v2799 = vor.u32 %v2798, 8388608
    %v2800 = vsub.s32 0, %v2799
    %v2801 = vadd.s32 %v2796, 1
    %vm2802 = vcmp.gt.s32.totalorder %v2801, 0
    %v2803 = vsel %vm2802, %v2801, 0
    %v2804 = vshrl.u32 %v2803, 5
    %v2805 = vand.u32 %v2803, 31
    %v2806 = vsub.s32 32, %v2805
    %v2807 = vshrl.u32 683565275, %v2806
    %v2808 = vshll.u32 683565275, %v2805
    %v2809 = vshrl.u32 2475754826, %v2806
    %v2810 = vor.u32 %v2808, %v2809
    %v2811 = vshll.u32 2475754826, %v2805
    %v2812 = vshrl.u32 2131351028, %v2806
    %v2813 = vor.u32 %v2811, %v2812
    %v2814 = vshll.u32 2131351028, %v2805
    %v2815 = vshrl.u32 2102212464, %v2806
    %v2816 = vor.u32 %v2814, %v2815
    %v2817 = vshll.u32 2102212464, %v2805
    %v2818 = vshrl.u32 920167782, %v2806
    %v2819 = vor.u32 %v2817, %v2818
    %v2820 = vshll.u32 920167782, %v2805
    %v2821 = vshrl.u32 1326507024, %v2806
    %v2822 = vor.u32 %v2820, %v2821
    %vm2823 = vcmp.lt.s32.totalorder %v2804, 1
    %vm2824 = vcmp.lt.s32.totalorder %v2804, 2
    %vm2825 = vcmp.lt.s32.totalorder %v2804, 3
    %vm2826 = vcmp.lt.s32.totalorder %v2804, 4
    %v2827 = vsel %vm2823, %v2807, %v2810
    %v2828 = vsel %vm2826, %v2816, 2102212464
    %v2829 = vsel %vm2825, %v2813, %v2828
    %v2830 = vsel %vm2824, %v2827, %v2829
    %v2831 = vsel %vm2823, %v2810, %v2813
    %v2832 = vsel %vm2826, %v2819, 920167782
    %v2833 = vsel %vm2825, %v2816, %v2832
    %v2834 = vsel %vm2824, %v2831, %v2833
    %v2835 = vsel %vm2823, %v2813, %v2816
    %v2836 = vsel %vm2826, %v2822, 1326507024
    %v2837 = vsel %vm2825, %v2819, %v2836
    %v2838 = vsel %vm2824, %v2835, %v2837
    %v2839 = vshll.u32 %v2799, 8
    %v2840 = vmul.u32.u64.compose %v2839, %v2838
    %v2841 = vextract.low.u32 %v2840
    %v2842 = vextract.high.u32 %v2840
    %v2843 = vmul.u32.u64.compose %v2839, %v2834
    %v2844 = vextract.low.u32 %v2843
    %v2845 = vextract.high.u32 %v2843
    %v2846 = vmul.u32 %v2839, %v2830
    %v2847 = vadd.s32 %v2842, %v2844
    %vm2848 = vc.u32 %v2842, %v2844
    %v2849 = vadd.s32 %v2845, 1
    %v2850 = vsel %vm2848, %v2849, %v2845
    %v2851 = vadd.s32 %v2846, %v2850
    %v2852 = vadd.s32 %v2851, 536870912
    %v2853 = vshrl.u32 %v2852, 30
    %v2854 = vshll.u32 %v2853, 30
    %v2855 = vsub.s32 %v2851, %v2854
    %vm2856 = vcmp.lt.s32.totalorder %v2855, 0
    %v2857 = vsub.s32 0, %v2855
    %v2858 = vsel %vm2856, %v2857, %v2855
    %v2859 = vclz %v2858
    %v2860 = vsub.s32 %v2859, 2
    %vm2861 = vcmp.gt.s32.totalorder 0, %v2860
    %v2862 = vsel %vm2861, 0, %v2860
    %v2863 = vsub.s32 32, %v2862
    %v2864 = vshll.u32 %v2855, %v2862
    %v2865 = vshrl.u32 %v2847, %v2863
    %v2866 = vor.u32 %v2864, %v2865
    %v2867 = vsub.s32 4294967266, %v2862
    %v2868 = vadd.s32 %v2867, 127
    %v2869 = vshll.u32 %v2868, 23
    %v2870 = vor.u32 4788187, %v2869
    %v2871 = vand.u32 2147483647, %v2870
    %v2873 = vcvt.s32.f32 %v2866
    %v2874 = vmul.f32 %v2873, %v2871
    %v2875 = vxor.u32 %v2874, 2147483648
    %v2876 = vsel %vm2793, %v2875, %v2874
    %v2877 = vsub.s32 4, %v2853
    %v2878 = vsel %vm2793, %v2877, %v2853
    %v2879 = vsel %vm2792, %v49, %v2876
    %v2880 = vsel %vm2792, 0, %v2878
    %v2881 = vcosq.f32.pop %v2879
    %v2882 = vsinq.f32.pop %v2879
    %vm2883 = vweird.f32 %v49
    %v2884 = vadd.s32 %v2880, 3
    %v2885 = vand.u32 %v2884, 3
    %vm2886 = vcmp.lt.s32.totalorder %v2885, 2
    %vm2887 = vcmp.eq.s32.totalorder %v2885, 0
    %v2888 = vxor.u32 %v2882, 2147483648
    %v2889 = vsel %vm2887, %v2881, %v2888
    %vm2890 = vcmp.eq.s32.totalorder %v2885, 2
    %v2891 = vxor.u32 %v2881, 2147483648
    %v2892 = vsel %vm2890, %v2891, %v2882
    %v2893 = vsel %vm2886, %v2889, %v2892
    %v2894 = vsel %vm2883, nan, %v2893
    %v2895 = vand.u32 2147483647, %v50
    %vm2896 = vcmp.le.f32.partialorder %v2895, 0.7853982
    %vm2897 = vcmp.lt.s32.totalorder %v50, 0
    %v2898 = vand.u32 %v50, 2139095040
    %v2899 = vshrl.u32 %v2898, 23
    %v2900 = vsub.s32 %v2899, 127
    %v2901 = vand.u32 2147483647, %v50
    %v2902 = vand.u32 %v2901, 8388607
    %v2903 = vor.u32 %v2902, 8388608
    %v2904 = vsub.s32 0, %v2903
    %v2905 = vadd.s32 %v2900, 1
    %vm2906 = vcmp.gt.s32.totalorder %v2905, 0
    %v2907 = vsel %vm2906, %v2905, 0
    %v2908 = vshrl.u32 %v2907, 5
    %v2909 = vand.u32 %v2907, 31
    %v2910 = vsub.s32 32, %v2909
    %v2911 = vshrl.u32 683565275, %v2910
    %v2912 = vshll.u32 683565275, %v2909
    %v2913 = vshrl.u32 2475754826, %v2910
    %v2914 = vor.u32 %v2912, %v2913
    %v2915 = vshll.u32 2475754826, %v2909
    %v2916 = vshrl.u32 2131351028, %v2910
    %v2917 = vor.u32 %v2915, %v2916
    %v2918 = vshll.u32 2131351028, %v2909
    %v2919 = vshrl.u32 2102212464, %v2910
    %v2920 = vor.u32 %v2918, %v2919
    %v2921 = vshll.u32 2102212464, %v2909
    %v2922 = vshrl.u32 920167782, %v2910
    %v2923 = vor.u32 %v2921, %v2922
    %v2924 = vshll.u32 920167782, %v2909
    %v2925 = vshrl.u32 1326507024, %v2910
    %v2926 = vor.u32 %v2924, %v2925
    %vm2927 = vcmp.lt.s32.totalorder %v2908, 1
    %vm2928 = vcmp.lt.s32.totalorder %v2908, 2
    %vm2929 = vcmp.lt.s32.totalorder %v2908, 3
    %vm2930 = vcmp.lt.s32.totalorder %v2908, 4
    %v2931 = vsel %vm2927, %v2911, %v2914
    %v2932 = vsel %vm2930, %v2920, 2102212464
    %v2933 = vsel %vm2929, %v2917, %v2932
    %v2934 = vsel %vm2928, %v2931, %v2933
    %v2935 = vsel %vm2927, %v2914, %v2917
    %v2936 = vsel %vm2930, %v2923, 920167782
    %v2937 = vsel %vm2929, %v2920, %v2936
    %v2938 = vsel %vm2928, %v2935, %v2937
    %v2939 = vsel %vm2927, %v2917, %v2920
    %v2940 = vsel %vm2930, %v2926, 1326507024
    %v2941 = vsel %vm2929, %v2923, %v2940
    %v2942 = vsel %vm2928, %v2939, %v2941
    %v2943 = vshll.u32 %v2903, 8
    %v2944 = vmul.u32.u64.compose %v2943, %v2942
    %v2945 = vextract.low.u32 %v2944
    %v2946 = vextract.high.u32 %v2944
    %v2947 = vmul.u32.u64.compose %v2943, %v2938
    %v2948 = vextract.low.u32 %v2947
    %v2949 = vextract.high.u32 %v2947
    %v2950 = vmul.u32 %v2943, %v2934
    %v2951 = vadd.s32 %v2946, %v2948
    %vm2952 = vc.u32 %v2946, %v2948
    %v2953 = vadd.s32 %v2949, 1
    %v2954 = vsel %vm2952, %v2953, %v2949
    %v2955 = vadd.s32 %v2950, %v2954
    %v2956 = vadd.s32 %v2955, 536870912
    %v2957 = vshrl.u32 %v2956, 30
    %v2958 = vshll.u32 %v2957, 30
    %v2959 = vsub.s32 %v2955, %v2958
    %vm2960 = vcmp.lt.s32.totalorder %v2959, 0
    %v2961 = vsub.s32 0, %v2959
    %v2962 = vsel %vm2960, %v2961, %v2959
    %v2963 = vclz %v2962
    %v2964 = vsub.s32 %v2963, 2
    %vm2965 = vcmp.gt.s32.totalorder 0, %v2964
    %v2966 = vsel %vm2965, 0, %v2964
    %v2967 = vsub.s32 32, %v2966
    %v2968 = vshll.u32 %v2959, %v2966
    %v2969 = vshrl.u32 %v2951, %v2967
    %v2970 = vor.u32 %v2968, %v2969
    %v2971 = vsub.s32 4294967266, %v2966
    %v2972 = vadd.s32 %v2971, 127
    %v2973 = vshll.u32 %v2972, 23
    %v2974 = vor.u32 4788187, %v2973
    %v2975 = vand.u32 2147483647, %v2974
    %v2977 = vcvt.s32.f32 %v2970
    %v2978 = vmul.f32 %v2977, %v2975
    %v2979 = vxor.u32 %v2978, 2147483648
    %v2980 = vsel %vm2897, %v2979, %v2978
    %v2981 = vsub.s32 4, %v2957
    %v2982 = vsel %vm2897, %v2981, %v2957
    %v2983 = vsel %vm2896, %v50, %v2980
    %v2984 = vsel %vm2896, 0, %v2982
    %v2985 = vcosq.f32.pop %v2983
    %v2986 = vsinq.f32.pop %v2983
    %vm2987 = vweird.f32 %v50
    %v2988 = vadd.s32 %v2984, 3
    %v2989 = vand.u32 %v2988, 3
    %vm2990 = vcmp.lt.s32.totalorder %v2989, 2
    %vm2991 = vcmp.eq.s32.totalorder %v2989, 0
    %v2992 = vxor.u32 %v2986, 2147483648
    %v2993 = vsel %vm2991, %v2985, %v2992
    %vm2994 = vcmp.eq.s32.totalorder %v2989, 2
    %v2995 = vxor.u32 %v2985, 2147483648
    %v2996 = vsel %vm2994, %v2995, %v2986
    %v2997 = vsel %vm2990, %v2993, %v2996
    %v2998 = vsel %vm2987, nan, %v2997
    %v2999 = vand.u32 2147483647, %v51
    %vm3000 = vcmp.le.f32.partialorder %v2999, 0.7853982
    %vm3001 = vcmp.lt.s32.totalorder %v51, 0
    %v3002 = vand.u32 %v51, 2139095040
    %v3003 = vshrl.u32 %v3002, 23
    %v3004 = vsub.s32 %v3003, 127
    %v3005 = vand.u32 2147483647, %v51
    %v3006 = vand.u32 %v3005, 8388607
    %v3007 = vor.u32 %v3006, 8388608
    %v3008 = vsub.s32 0, %v3007
    %v3009 = vadd.s32 %v3004, 1
    %vm3010 = vcmp.gt.s32.totalorder %v3009, 0
    %v3011 = vsel %vm3010, %v3009, 0
    %v3012 = vshrl.u32 %v3011, 5
    %v3013 = vand.u32 %v3011, 31
    %v3014 = vsub.s32 32, %v3013
    %v3015 = vshrl.u32 683565275, %v3014
    %v3016 = vshll.u32 683565275, %v3013
    %v3017 = vshrl.u32 2475754826, %v3014
    %v3018 = vor.u32 %v3016, %v3017
    %v3019 = vshll.u32 2475754826, %v3013
    %v3020 = vshrl.u32 2131351028, %v3014
    %v3021 = vor.u32 %v3019, %v3020
    %v3022 = vshll.u32 2131351028, %v3013
    %v3023 = vshrl.u32 2102212464, %v3014
    %v3024 = vor.u32 %v3022, %v3023
    %v3025 = vshll.u32 2102212464, %v3013
    %v3026 = vshrl.u32 920167782, %v3014
    %v3027 = vor.u32 %v3025, %v3026
    %v3028 = vshll.u32 920167782, %v3013
    %v3029 = vshrl.u32 1326507024, %v3014
    %v3030 = vor.u32 %v3028, %v3029
    %vm3031 = vcmp.lt.s32.totalorder %v3012, 1
    %vm3032 = vcmp.lt.s32.totalorder %v3012, 2
    %vm3033 = vcmp.lt.s32.totalorder %v3012, 3
    %vm3034 = vcmp.lt.s32.totalorder %v3012, 4
    %v3035 = vsel %vm3031, %v3015, %v3018
    %v3036 = vsel %vm3034, %v3024, 2102212464
    %v3037 = vsel %vm3033, %v3021, %v3036
    %v3038 = vsel %vm3032, %v3035, %v3037
    %v3039 = vsel %vm3031, %v3018, %v3021
    %v3040 = vsel %vm3034, %v3027, 920167782
    %v3041 = vsel %vm3033, %v3024, %v3040
    %v3042 = vsel %vm3032, %v3039, %v3041
    %v3043 = vsel %vm3031, %v3021, %v3024
    %v3044 = vsel %vm3034, %v3030, 1326507024
    %v3045 = vsel %vm3033, %v3027, %v3044
    %v3046 = vsel %vm3032, %v3043, %v3045
    %v3047 = vshll.u32 %v3007, 8
    %v3048 = vmul.u32.u64.compose %v3047, %v3046
    %v3049 = vextract.low.u32 %v3048
    %v3050 = vextract.high.u32 %v3048
    %v3051 = vmul.u32.u64.compose %v3047, %v3042
    %v3052 = vextract.low.u32 %v3051
    %v3053 = vextract.high.u32 %v3051
    %v3054 = vmul.u32 %v3047, %v3038
    %v3055 = vadd.s32 %v3050, %v3052
    %vm3056 = vc.u32 %v3050, %v3052
    %v3057 = vadd.s32 %v3053, 1
    %v3058 = vsel %vm3056, %v3057, %v3053
    %v3059 = vadd.s32 %v3054, %v3058
    %v3060 = vadd.s32 %v3059, 536870912
    %v3061 = vshrl.u32 %v3060, 30
    %v3062 = vshll.u32 %v3061, 30
    %v3063 = vsub.s32 %v3059, %v3062
    %vm3064 = vcmp.lt.s32.totalorder %v3063, 0
    %v3065 = vsub.s32 0, %v3063
    %v3066 = vsel %vm3064, %v3065, %v3063
    %v3067 = vclz %v3066
    %v3068 = vsub.s32 %v3067, 2
    %vm3069 = vcmp.gt.s32.totalorder 0, %v3068
    %v3070 = vsel %vm3069, 0, %v3068
    %v3071 = vsub.s32 32, %v3070
    %v3072 = vshll.u32 %v3063, %v3070
    %v3073 = vshrl.u32 %v3055, %v3071
    %v3074 = vor.u32 %v3072, %v3073
    %v3075 = vsub.s32 4294967266, %v3070
    %v3076 = vadd.s32 %v3075, 127
    %v3077 = vshll.u32 %v3076, 23
    %v3078 = vor.u32 4788187, %v3077
    %v3079 = vand.u32 2147483647, %v3078
    %v3081 = vcvt.s32.f32 %v3074
    %v3082 = vmul.f32 %v3081, %v3079
    %v3083 = vxor.u32 %v3082, 2147483648
    %v3084 = vsel %vm3001, %v3083, %v3082
    %v3085 = vsub.s32 4, %v3061
    %v3086 = vsel %vm3001, %v3085, %v3061
    %v3087 = vsel %vm3000, %v51, %v3084
    %v3088 = vsel %vm3000, 0, %v3086
    %v3089 = vcosq.f32.pop %v3087
    %v3090 = vsinq.f32.pop %v3087
    %vm3091 = vweird.f32 %v51
    %v3092 = vadd.s32 %v3088, 3
    %v3093 = vand.u32 %v3092, 3
    %vm3094 = vcmp.lt.s32.totalorder %v3093, 2
    %vm3095 = vcmp.eq.s32.totalorder %v3093, 0
    %v3096 = vxor.u32 %v3090, 2147483648
    %v3097 = vsel %vm3095, %v3089, %v3096
    %vm3098 = vcmp.eq.s32.totalorder %v3093, 2
    %v3099 = vxor.u32 %v3089, 2147483648
    %v3100 = vsel %vm3098, %v3099, %v3090
    %v3101 = vsel %vm3094, %v3097, %v3100
    %v3102 = vsel %vm3091, nan, %v3101
    %v3103 = vand.u32 2147483647, %v52
    %vm3104 = vcmp.le.f32.partialorder %v3103, 0.7853982
    %vm3105 = vcmp.lt.s32.totalorder %v52, 0
    %v3106 = vand.u32 %v52, 2139095040
    %v3107 = vshrl.u32 %v3106, 23
    %v3108 = vsub.s32 %v3107, 127
    %v3109 = vand.u32 2147483647, %v52
    %v3110 = vand.u32 %v3109, 8388607
    %v3111 = vor.u32 %v3110, 8388608
    %v3112 = vsub.s32 0, %v3111
    %v3113 = vadd.s32 %v3108, 1
    %vm3114 = vcmp.gt.s32.totalorder %v3113, 0
    %v3115 = vsel %vm3114, %v3113, 0
    %v3116 = vshrl.u32 %v3115, 5
    %v3117 = vand.u32 %v3115, 31
    %v3118 = vsub.s32 32, %v3117
    %v3119 = vshrl.u32 683565275, %v3118
    %v3120 = vshll.u32 683565275, %v3117
    %v3121 = vshrl.u32 2475754826, %v3118
    %v3122 = vor.u32 %v3120, %v3121
    %v3123 = vshll.u32 2475754826, %v3117
    %v3124 = vshrl.u32 2131351028, %v3118
    %v3125 = vor.u32 %v3123, %v3124
    %v3126 = vshll.u32 2131351028, %v3117
    %v3127 = vshrl.u32 2102212464, %v3118
    %v3128 = vor.u32 %v3126, %v3127
    %v3129 = vshll.u32 2102212464, %v3117
    %v3130 = vshrl.u32 920167782, %v3118
    %v3131 = vor.u32 %v3129, %v3130
    %v3132 = vshll.u32 920167782, %v3117
    %v3133 = vshrl.u32 1326507024, %v3118
    %v3134 = vor.u32 %v3132, %v3133
    %vm3135 = vcmp.lt.s32.totalorder %v3116, 1
    %vm3136 = vcmp.lt.s32.totalorder %v3116, 2
    %vm3137 = vcmp.lt.s32.totalorder %v3116, 3
    %vm3138 = vcmp.lt.s32.totalorder %v3116, 4
    %v3139 = vsel %vm3135, %v3119, %v3122
    %v3140 = vsel %vm3138, %v3128, 2102212464
    %v3141 = vsel %vm3137, %v3125, %v3140
    %v3142 = vsel %vm3136, %v3139, %v3141
    %v3143 = vsel %vm3135, %v3122, %v3125
    %v3144 = vsel %vm3138, %v3131, 920167782
    %v3145 = vsel %vm3137, %v3128, %v3144
    %v3146 = vsel %vm3136, %v3143, %v3145
    %v3147 = vsel %vm3135, %v3125, %v3128
    %v3148 = vsel %vm3138, %v3134, 1326507024
    %v3149 = vsel %vm3137, %v3131, %v3148
    %v3150 = vsel %vm3136, %v3147, %v3149
    %v3151 = vshll.u32 %v3111, 8
    %v3152 = vmul.u32.u64.compose %v3151, %v3150
    %v3153 = vextract.low.u32 %v3152
    %v3154 = vextract.high.u32 %v3152
    %v3155 = vmul.u32.u64.compose %v3151, %v3146
    %v3156 = vextract.low.u32 %v3155
    %v3157 = vextract.high.u32 %v3155
    %v3158 = vmul.u32 %v3151, %v3142
    %v3159 = vadd.s32 %v3154, %v3156
    %vm3160 = vc.u32 %v3154, %v3156
    %v3161 = vadd.s32 %v3157, 1
    %v3162 = vsel %vm3160, %v3161, %v3157
    %v3163 = vadd.s32 %v3158, %v3162
    %v3164 = vadd.s32 %v3163, 536870912
    %v3165 = vshrl.u32 %v3164, 30
    %v3166 = vshll.u32 %v3165, 30
    %v3167 = vsub.s32 %v3163, %v3166
    %vm3168 = vcmp.lt.s32.totalorder %v3167, 0
    %v3169 = vsub.s32 0, %v3167
    %v3170 = vsel %vm3168, %v3169, %v3167
    %v3171 = vclz %v3170
    %v3172 = vsub.s32 %v3171, 2
    %vm3173 = vcmp.gt.s32.totalorder 0, %v3172
    %v3174 = vsel %vm3173, 0, %v3172
    %v3175 = vsub.s32 32, %v3174
    %v3176 = vshll.u32 %v3167, %v3174
    %v3177 = vshrl.u32 %v3159, %v3175
    %v3178 = vor.u32 %v3176, %v3177
    %v3179 = vsub.s32 4294967266, %v3174
    %v3180 = vadd.s32 %v3179, 127
    %v3181 = vshll.u32 %v3180, 23
    %v3182 = vor.u32 4788187, %v3181
    %v3183 = vand.u32 2147483647, %v3182
    %v3185 = vcvt.s32.f32 %v3178
    %v3186 = vmul.f32 %v3185, %v3183
    %v3187 = vxor.u32 %v3186, 2147483648
    %v3188 = vsel %vm3105, %v3187, %v3186
    %v3189 = vsub.s32 4, %v3165
    %v3190 = vsel %vm3105, %v3189, %v3165
    %v3191 = vsel %vm3104, %v52, %v3188
    %v3192 = vsel %vm3104, 0, %v3190
    %v3193 = vcosq.f32.pop %v3191
    %v3194 = vsinq.f32.pop %v3191
    %vm3195 = vweird.f32 %v52
    %v3196 = vadd.s32 %v3192, 3
    %v3197 = vand.u32 %v3196, 3
    %vm3198 = vcmp.lt.s32.totalorder %v3197, 2
    %vm3199 = vcmp.eq.s32.totalorder %v3197, 0
    %v3200 = vxor.u32 %v3194, 2147483648
    %v3201 = vsel %vm3199, %v3193, %v3200
    %vm3202 = vcmp.eq.s32.totalorder %v3197, 2
    %v3203 = vxor.u32 %v3193, 2147483648
    %v3204 = vsel %vm3202, %v3203, %v3194
    %v3205 = vsel %vm3198, %v3201, %v3204
    %v3206 = vsel %vm3195, nan, %v3205
    %v3207 = vand.u32 2147483647, %v53
    %vm3208 = vcmp.le.f32.partialorder %v3207, 0.7853982
    %vm3209 = vcmp.lt.s32.totalorder %v53, 0
    %v3210 = vand.u32 %v53, 2139095040
    %v3211 = vshrl.u32 %v3210, 23
    %v3212 = vsub.s32 %v3211, 127
    %v3213 = vand.u32 2147483647, %v53
    %v3214 = vand.u32 %v3213, 8388607
    %v3215 = vor.u32 %v3214, 8388608
    %v3216 = vsub.s32 0, %v3215
    %v3217 = vadd.s32 %v3212, 1
    %vm3218 = vcmp.gt.s32.totalorder %v3217, 0
    %v3219 = vsel %vm3218, %v3217, 0
    %v3220 = vshrl.u32 %v3219, 5
    %v3221 = vand.u32 %v3219, 31
    %v3222 = vsub.s32 32, %v3221
    %v3223 = vshrl.u32 683565275, %v3222
    %v3224 = vshll.u32 683565275, %v3221
    %v3225 = vshrl.u32 2475754826, %v3222
    %v3226 = vor.u32 %v3224, %v3225
    %v3227 = vshll.u32 2475754826, %v3221
    %v3228 = vshrl.u32 2131351028, %v3222
    %v3229 = vor.u32 %v3227, %v3228
    %v3230 = vshll.u32 2131351028, %v3221
    %v3231 = vshrl.u32 2102212464, %v3222
    %v3232 = vor.u32 %v3230, %v3231
    %v3233 = vshll.u32 2102212464, %v3221
    %v3234 = vshrl.u32 920167782, %v3222
    %v3235 = vor.u32 %v3233, %v3234
    %v3236 = vshll.u32 920167782, %v3221
    %v3237 = vshrl.u32 1326507024, %v3222
    %v3238 = vor.u32 %v3236, %v3237
    %vm3239 = vcmp.lt.s32.totalorder %v3220, 1
    %vm3240 = vcmp.lt.s32.totalorder %v3220, 2
    %vm3241 = vcmp.lt.s32.totalorder %v3220, 3
    %vm3242 = vcmp.lt.s32.totalorder %v3220, 4
    %v3243 = vsel %vm3239, %v3223, %v3226
    %v3244 = vsel %vm3242, %v3232, 2102212464
    %v3245 = vsel %vm3241, %v3229, %v3244
    %v3246 = vsel %vm3240, %v3243, %v3245
    %v3247 = vsel %vm3239, %v3226, %v3229
    %v3248 = vsel %vm3242, %v3235, 920167782
    %v3249 = vsel %vm3241, %v3232, %v3248
    %v3250 = vsel %vm3240, %v3247, %v3249
    %v3251 = vsel %vm3239, %v3229, %v3232
    %v3252 = vsel %vm3242, %v3238, 1326507024
    %v3253 = vsel %vm3241, %v3235, %v3252
    %v3254 = vsel %vm3240, %v3251, %v3253
    %v3255 = vshll.u32 %v3215, 8
    %v3256 = vmul.u32.u64.compose %v3255, %v3254
    %v3257 = vextract.low.u32 %v3256
    %v3258 = vextract.high.u32 %v3256
    %v3259 = vmul.u32.u64.compose %v3255, %v3250
    %v3260 = vextract.low.u32 %v3259
    %v3261 = vextract.high.u32 %v3259
    %v3262 = vmul.u32 %v3255, %v3246
    %v3263 = vadd.s32 %v3258, %v3260
    %vm3264 = vc.u32 %v3258, %v3260
    %v3265 = vadd.s32 %v3261, 1
    %v3266 = vsel %vm3264, %v3265, %v3261
    %v3267 = vadd.s32 %v3262, %v3266
    %v3268 = vadd.s32 %v3267, 536870912
    %v3269 = vshrl.u32 %v3268, 30
    %v3270 = vshll.u32 %v3269, 30
    %v3271 = vsub.s32 %v3267, %v3270
    %vm3272 = vcmp.lt.s32.totalorder %v3271, 0
    %v3273 = vsub.s32 0, %v3271
    %v3274 = vsel %vm3272, %v3273, %v3271
    %v3275 = vclz %v3274
    %v3276 = vsub.s32 %v3275, 2
    %vm3277 = vcmp.gt.s32.totalorder 0, %v3276
    %v3278 = vsel %vm3277, 0, %v3276
    %v3279 = vsub.s32 32, %v3278
    %v3280 = vshll.u32 %v3271, %v3278
    %v3281 = vshrl.u32 %v3263, %v3279
    %v3282 = vor.u32 %v3280, %v3281
    %v3283 = vsub.s32 4294967266, %v3278
    %v3284 = vadd.s32 %v3283, 127
    %v3285 = vshll.u32 %v3284, 23
    %v3286 = vor.u32 4788187, %v3285
    %v3287 = vand.u32 2147483647, %v3286
    %v3289 = vcvt.s32.f32 %v3282
    %v3290 = vmul.f32 %v3289, %v3287
    %v3291 = vxor.u32 %v3290, 2147483648
    %v3292 = vsel %vm3209, %v3291, %v3290
    %v3293 = vsub.s32 4, %v3269
    %v3294 = vsel %vm3209, %v3293, %v3269
    %v3295 = vsel %vm3208, %v53, %v3292
    %v3296 = vsel %vm3208, 0, %v3294
    %v3297 = vcosq.f32.pop %v3295
    %v3298 = vsinq.f32.pop %v3295
    %vm3299 = vweird.f32 %v53
    %v3300 = vadd.s32 %v3296, 3
    %v3301 = vand.u32 %v3300, 3
    %vm3302 = vcmp.lt.s32.totalorder %v3301, 2
    %vm3303 = vcmp.eq.s32.totalorder %v3301, 0
    %v3304 = vxor.u32 %v3298, 2147483648
    %v3305 = vsel %vm3303, %v3297, %v3304
    %vm3306 = vcmp.eq.s32.totalorder %v3301, 2
    %v3307 = vxor.u32 %v3297, 2147483648
    %v3308 = vsel %vm3306, %v3307, %v3298
    %v3309 = vsel %vm3302, %v3305, %v3308
    %v3310 = vsel %vm3299, nan, %v3309
    %v3311 = vand.u32 2147483647, %v54
    %vm3312 = vcmp.le.f32.partialorder %v3311, 0.7853982
    %vm3313 = vcmp.lt.s32.totalorder %v54, 0
    %v3314 = vand.u32 %v54, 2139095040
    %v3315 = vshrl.u32 %v3314, 23
    %v3316 = vsub.s32 %v3315, 127
    %v3317 = vand.u32 2147483647, %v54
    %v3318 = vand.u32 %v3317, 8388607
    %v3319 = vor.u32 %v3318, 8388608
    %v3320 = vsub.s32 0, %v3319
    %v3321 = vadd.s32 %v3316, 1
    %vm3322 = vcmp.gt.s32.totalorder %v3321, 0
    %v3323 = vsel %vm3322, %v3321, 0
    %v3324 = vshrl.u32 %v3323, 5
    %v3325 = vand.u32 %v3323, 31
    %v3326 = vsub.s32 32, %v3325
    %v3327 = vshrl.u32 683565275, %v3326
    %v3328 = vshll.u32 683565275, %v3325
    %v3329 = vshrl.u32 2475754826, %v3326
    %v3330 = vor.u32 %v3328, %v3329
    %v3331 = vshll.u32 2475754826, %v3325
    %v3332 = vshrl.u32 2131351028, %v3326
    %v3333 = vor.u32 %v3331, %v3332
    %v3334 = vshll.u32 2131351028, %v3325
    %v3335 = vshrl.u32 2102212464, %v3326
    %v3336 = vor.u32 %v3334, %v3335
    %v3337 = vshll.u32 2102212464, %v3325
    %v3338 = vshrl.u32 920167782, %v3326
    %v3339 = vor.u32 %v3337, %v3338
    %v3340 = vshll.u32 920167782, %v3325
    %v3341 = vshrl.u32 1326507024, %v3326
    %v3342 = vor.u32 %v3340, %v3341
    %vm3343 = vcmp.lt.s32.totalorder %v3324, 1
    %vm3344 = vcmp.lt.s32.totalorder %v3324, 2
    %vm3345 = vcmp.lt.s32.totalorder %v3324, 3
    %vm3346 = vcmp.lt.s32.totalorder %v3324, 4
    %v3347 = vsel %vm3343, %v3327, %v3330
    %v3348 = vsel %vm3346, %v3336, 2102212464
    %v3349 = vsel %vm3345, %v3333, %v3348
    %v3350 = vsel %vm3344, %v3347, %v3349
    %v3351 = vsel %vm3343, %v3330, %v3333
    %v3352 = vsel %vm3346, %v3339, 920167782
    %v3353 = vsel %vm3345, %v3336, %v3352
    %v3354 = vsel %vm3344, %v3351, %v3353
    %v3355 = vsel %vm3343, %v3333, %v3336
    %v3356 = vsel %vm3346, %v3342, 1326507024
    %v3357 = vsel %vm3345, %v3339, %v3356
    %v3358 = vsel %vm3344, %v3355, %v3357
    %v3359 = vshll.u32 %v3319, 8
    %v3360 = vmul.u32.u64.compose %v3359, %v3358
    %v3361 = vextract.low.u32 %v3360
    %v3362 = vextract.high.u32 %v3360
    %v3363 = vmul.u32.u64.compose %v3359, %v3354
    %v3364 = vextract.low.u32 %v3363
    %v3365 = vextract.high.u32 %v3363
    %v3366 = vmul.u32 %v3359, %v3350
    %v3367 = vadd.s32 %v3362, %v3364
    %vm3368 = vc.u32 %v3362, %v3364
    %v3369 = vadd.s32 %v3365, 1
    %v3370 = vsel %vm3368, %v3369, %v3365
    %v3371 = vadd.s32 %v3366, %v3370
    %v3372 = vadd.s32 %v3371, 536870912
    %v3373 = vshrl.u32 %v3372, 30
    %v3374 = vshll.u32 %v3373, 30
    %v3375 = vsub.s32 %v3371, %v3374
    %vm3376 = vcmp.lt.s32.totalorder %v3375, 0
    %v3377 = vsub.s32 0, %v3375
    %v3378 = vsel %vm3376, %v3377, %v3375
    %v3379 = vclz %v3378
    %v3380 = vsub.s32 %v3379, 2
    %vm3381 = vcmp.gt.s32.totalorder 0, %v3380
    %v3382 = vsel %vm3381, 0, %v3380
    %v3383 = vsub.s32 32, %v3382
    %v3384 = vshll.u32 %v3375, %v3382
    %v3385 = vshrl.u32 %v3367, %v3383
    %v3386 = vor.u32 %v3384, %v3385
    %v3387 = vsub.s32 4294967266, %v3382
    %v3388 = vadd.s32 %v3387, 127
    %v3389 = vshll.u32 %v3388, 23
    %v3390 = vor.u32 4788187, %v3389
    %v3391 = vand.u32 2147483647, %v3390
    %v3393 = vcvt.s32.f32 %v3386
    %v3394 = vmul.f32 %v3393, %v3391
    %v3395 = vxor.u32 %v3394, 2147483648
    %v3396 = vsel %vm3313, %v3395, %v3394
    %v3397 = vsub.s32 4, %v3373
    %v3398 = vsel %vm3313, %v3397, %v3373
    %v3399 = vsel %vm3312, %v54, %v3396
    %v3400 = vsel %vm3312, 0, %v3398
    %v3401 = vcosq.f32.pop %v3399
    %v3402 = vsinq.f32.pop %v3399
    %vm3403 = vweird.f32 %v54
    %v3404 = vadd.s32 %v3400, 3
    %v3405 = vand.u32 %v3404, 3
    %vm3406 = vcmp.lt.s32.totalorder %v3405, 2
    %vm3407 = vcmp.eq.s32.totalorder %v3405, 0
    %v3408 = vxor.u32 %v3402, 2147483648
    %v3409 = vsel %vm3407, %v3401, %v3408
    %vm3410 = vcmp.eq.s32.totalorder %v3405, 2
    %v3411 = vxor.u32 %v3401, 2147483648
    %v3412 = vsel %vm3410, %v3411, %v3402
    %v3413 = vsel %vm3406, %v3409, %v3412
    %v3414 = vsel %vm3403, nan, %v3413
    %v3415 = vand.u32 2147483647, %v55
    %vm3416 = vcmp.le.f32.partialorder %v3415, 0.7853982
    %vm3417 = vcmp.lt.s32.totalorder %v55, 0
    %v3418 = vand.u32 %v55, 2139095040
    %v3419 = vshrl.u32 %v3418, 23
    %v3420 = vsub.s32 %v3419, 127
    %v3421 = vand.u32 2147483647, %v55
    %v3422 = vand.u32 %v3421, 8388607
    %v3423 = vor.u32 %v3422, 8388608
    %v3424 = vsub.s32 0, %v3423
    %v3425 = vadd.s32 %v3420, 1
    %vm3426 = vcmp.gt.s32.totalorder %v3425, 0
    %v3427 = vsel %vm3426, %v3425, 0
    %v3428 = vshrl.u32 %v3427, 5
    %v3429 = vand.u32 %v3427, 31
    %v3430 = vsub.s32 32, %v3429
    %v3431 = vshrl.u32 683565275, %v3430
    %v3432 = vshll.u32 683565275, %v3429
    %v3433 = vshrl.u32 2475754826, %v3430
    %v3434 = vor.u32 %v3432, %v3433
    %v3435 = vshll.u32 2475754826, %v3429
    %v3436 = vshrl.u32 2131351028, %v3430
    %v3437 = vor.u32 %v3435, %v3436
    %v3438 = vshll.u32 2131351028, %v3429
    %v3439 = vshrl.u32 2102212464, %v3430
    %v3440 = vor.u32 %v3438, %v3439
    %v3441 = vshll.u32 2102212464, %v3429
    %v3442 = vshrl.u32 920167782, %v3430
    %v3443 = vor.u32 %v3441, %v3442
    %v3444 = vshll.u32 920167782, %v3429
    %v3445 = vshrl.u32 1326507024, %v3430
    %v3446 = vor.u32 %v3444, %v3445
    %vm3447 = vcmp.lt.s32.totalorder %v3428, 1
    %vm3448 = vcmp.lt.s32.totalorder %v3428, 2
    %vm3449 = vcmp.lt.s32.totalorder %v3428, 3
    %vm3450 = vcmp.lt.s32.totalorder %v3428, 4
    %v3451 = vsel %vm3447, %v3431, %v3434
    %v3452 = vsel %vm3450, %v3440, 2102212464
    %v3453 = vsel %vm3449, %v3437, %v3452
    %v3454 = vsel %vm3448, %v3451, %v3453
    %v3455 = vsel %vm3447, %v3434, %v3437
    %v3456 = vsel %vm3450, %v3443, 920167782
    %v3457 = vsel %vm3449, %v3440, %v3456
    %v3458 = vsel %vm3448, %v3455, %v3457
    %v3459 = vsel %vm3447, %v3437, %v3440
    %v3460 = vsel %vm3450, %v3446, 1326507024
    %v3461 = vsel %vm3449, %v3443, %v3460
    %v3462 = vsel %vm3448, %v3459, %v3461
    %v3463 = vshll.u32 %v3423, 8
    %v3464 = vmul.u32.u64.compose %v3463, %v3462
    %v3465 = vextract.low.u32 %v3464
    %v3466 = vextract.high.u32 %v3464
    %v3467 = vmul.u32.u64.compose %v3463, %v3458
    %v3468 = vextract.low.u32 %v3467
    %v3469 = vextract.high.u32 %v3467
    %v3470 = vmul.u32 %v3463, %v3454
    %v3471 = vadd.s32 %v3466, %v3468
    %vm3472 = vc.u32 %v3466, %v3468
    %v3473 = vadd.s32 %v3469, 1
    %v3474 = vsel %vm3472, %v3473, %v3469
    %v3475 = vadd.s32 %v3470, %v3474
    %v3476 = vadd.s32 %v3475, 536870912
    %v3477 = vshrl.u32 %v3476, 30
    %v3478 = vshll.u32 %v3477, 30
    %v3479 = vsub.s32 %v3475, %v3478
    %vm3480 = vcmp.lt.s32.totalorder %v3479, 0
    %v3481 = vsub.s32 0, %v3479
    %v3482 = vsel %vm3480, %v3481, %v3479
    %v3483 = vclz %v3482
    %v3484 = vsub.s32 %v3483, 2
    %vm3485 = vcmp.gt.s32.totalorder 0, %v3484
    %v3486 = vsel %vm3485, 0, %v3484
    %v3487 = vsub.s32 32, %v3486
    %v3488 = vshll.u32 %v3479, %v3486
    %v3489 = vshrl.u32 %v3471, %v3487
    %v3490 = vor.u32 %v3488, %v3489
    %v3491 = vsub.s32 4294967266, %v3486
    %v3492 = vadd.s32 %v3491, 127
    %v3493 = vshll.u32 %v3492, 23
    %v3494 = vor.u32 4788187, %v3493
    %v3495 = vand.u32 2147483647, %v3494
    %v3497 = vcvt.s32.f32 %v3490
    %v3498 = vmul.f32 %v3497, %v3495
    %v3499 = vxor.u32 %v3498, 2147483648
    %v3500 = vsel %vm3417, %v3499, %v3498
    %v3501 = vsub.s32 4, %v3477
    %v3502 = vsel %vm3417, %v3501, %v3477
    %v3503 = vsel %vm3416, %v55, %v3500
    %v3504 = vsel %vm3416, 0, %v3502
    %v3505 = vcosq.f32.pop %v3503
    %v3506 = vsinq.f32.pop %v3503
    %vm3507 = vweird.f32 %v55
    %v3508 = vadd.s32 %v3504, 3
    %v3509 = vand.u32 %v3508, 3
    %vm3510 = vcmp.lt.s32.totalorder %v3509, 2
    %vm3511 = vcmp.eq.s32.totalorder %v3509, 0
    %v3512 = vxor.u32 %v3506, 2147483648
    %v3513 = vsel %vm3511, %v3505, %v3512
    %vm3514 = vcmp.eq.s32.totalorder %v3509, 2
    %v3515 = vxor.u32 %v3505, 2147483648
    %v3516 = vsel %vm3514, %v3515, %v3506
    %v3517 = vsel %vm3510, %v3513, %v3516
    %v3518 = vsel %vm3507, nan, %v3517
    %v3519 = vand.u32 2147483647, %v56
    %vm3520 = vcmp.le.f32.partialorder %v3519, 0.7853982
    %vm3521 = vcmp.lt.s32.totalorder %v56, 0
    %v3522 = vand.u32 %v56, 2139095040
    %v3523 = vshrl.u32 %v3522, 23
    %v3524 = vsub.s32 %v3523, 127
    %v3525 = vand.u32 2147483647, %v56
    %v3526 = vand.u32 %v3525, 8388607
    %v3527 = vor.u32 %v3526, 8388608
    %v3528 = vsub.s32 0, %v3527
    %v3529 = vadd.s32 %v3524, 1
    %vm3530 = vcmp.gt.s32.totalorder %v3529, 0
    %v3531 = vsel %vm3530, %v3529, 0
    %v3532 = vshrl.u32 %v3531, 5
    %v3533 = vand.u32 %v3531, 31
    %v3534 = vsub.s32 32, %v3533
    %v3535 = vshrl.u32 683565275, %v3534
    %v3536 = vshll.u32 683565275, %v3533
    %v3537 = vshrl.u32 2475754826, %v3534
    %v3538 = vor.u32 %v3536, %v3537
    %v3539 = vshll.u32 2475754826, %v3533
    %v3540 = vshrl.u32 2131351028, %v3534
    %v3541 = vor.u32 %v3539, %v3540
    %v3542 = vshll.u32 2131351028, %v3533
    %v3543 = vshrl.u32 2102212464, %v3534
    %v3544 = vor.u32 %v3542, %v3543
    %v3545 = vshll.u32 2102212464, %v3533
    %v3546 = vshrl.u32 920167782, %v3534
    %v3547 = vor.u32 %v3545, %v3546
    %v3548 = vshll.u32 920167782, %v3533
    %v3549 = vshrl.u32 1326507024, %v3534
    %v3550 = vor.u32 %v3548, %v3549
    %vm3551 = vcmp.lt.s32.totalorder %v3532, 1
    %vm3552 = vcmp.lt.s32.totalorder %v3532, 2
    %vm3553 = vcmp.lt.s32.totalorder %v3532, 3
    %vm3554 = vcmp.lt.s32.totalorder %v3532, 4
    %v3555 = vsel %vm3551, %v3535, %v3538
    %v3556 = vsel %vm3554, %v3544, 2102212464
    %v3557 = vsel %vm3553, %v3541, %v3556
    %v3558 = vsel %vm3552, %v3555, %v3557
    %v3559 = vsel %vm3551, %v3538, %v3541
    %v3560 = vsel %vm3554, %v3547, 920167782
    %v3561 = vsel %vm3553, %v3544, %v3560
    %v3562 = vsel %vm3552, %v3559, %v3561
    %v3563 = vsel %vm3551, %v3541, %v3544
    %v3564 = vsel %vm3554, %v3550, 1326507024
    %v3565 = vsel %vm3553, %v3547, %v3564
    %v3566 = vsel %vm3552, %v3563, %v3565
    %v3567 = vshll.u32 %v3527, 8
    %v3568 = vmul.u32.u64.compose %v3567, %v3566
    %v3569 = vextract.low.u32 %v3568
    %v3570 = vextract.high.u32 %v3568
    %v3571 = vmul.u32.u64.compose %v3567, %v3562
    %v3572 = vextract.low.u32 %v3571
    %v3573 = vextract.high.u32 %v3571
    %v3574 = vmul.u32 %v3567, %v3558
    %v3575 = vadd.s32 %v3570, %v3572
    %vm3576 = vc.u32 %v3570, %v3572
    %v3577 = vadd.s32 %v3573, 1
    %v3578 = vsel %vm3576, %v3577, %v3573
    %v3579 = vadd.s32 %v3574, %v3578
    %v3580 = vadd.s32 %v3579, 536870912
    %v3581 = vshrl.u32 %v3580, 30
    %v3582 = vshll.u32 %v3581, 30
    %v3583 = vsub.s32 %v3579, %v3582
    %vm3584 = vcmp.lt.s32.totalorder %v3583, 0
    %v3585 = vsub.s32 0, %v3583
    %v3586 = vsel %vm3584, %v3585, %v3583
    %v3587 = vclz %v3586
    %v3588 = vsub.s32 %v3587, 2
    %vm3589 = vcmp.gt.s32.totalorder 0, %v3588
    %v3590 = vsel %vm3589, 0, %v3588
    %v3591 = vsub.s32 32, %v3590
    %v3592 = vshll.u32 %v3583, %v3590
    %v3593 = vshrl.u32 %v3575, %v3591
    %v3594 = vor.u32 %v3592, %v3593
    %v3595 = vsub.s32 4294967266, %v3590
    %v3596 = vadd.s32 %v3595, 127
    %v3597 = vshll.u32 %v3596, 23
    %v3598 = vor.u32 4788187, %v3597
    %v3599 = vand.u32 2147483647, %v3598
    %v3601 = vcvt.s32.f32 %v3594
    %v3602 = vmul.f32 %v3601, %v3599
    %v3603 = vxor.u32 %v3602, 2147483648
    %v3604 = vsel %vm3521, %v3603, %v3602
    %v3605 = vsub.s32 4, %v3581
    %v3606 = vsel %vm3521, %v3605, %v3581
    %v3607 = vsel %vm3520, %v56, %v3604
    %v3608 = vsel %vm3520, 0, %v3606
    %v3609 = vcosq.f32.pop %v3607
    %v3610 = vsinq.f32.pop %v3607
    %vm3611 = vweird.f32 %v56
    %v3612 = vadd.s32 %v3608, 3
    %v3613 = vand.u32 %v3612, 3
    %vm3614 = vcmp.lt.s32.totalorder %v3613, 2
    %vm3615 = vcmp.eq.s32.totalorder %v3613, 0
    %v3616 = vxor.u32 %v3610, 2147483648
    %v3617 = vsel %vm3615, %v3609, %v3616
    %vm3618 = vcmp.eq.s32.totalorder %v3613, 2
    %v3619 = vxor.u32 %v3609, 2147483648
    %v3620 = vsel %vm3618, %v3619, %v3610
    %v3621 = vsel %vm3614, %v3617, %v3620
    %v3622 = vsel %vm3611, nan, %v3621
    %v3623 = vand.u32 2147483647, %v57
    %vm3624 = vcmp.le.f32.partialorder %v3623, 0.7853982
    %vm3625 = vcmp.lt.s32.totalorder %v57, 0
    %v3626 = vand.u32 %v57, 2139095040
    %v3627 = vshrl.u32 %v3626, 23
    %v3628 = vsub.s32 %v3627, 127
    %v3629 = vand.u32 2147483647, %v57
    %v3630 = vand.u32 %v3629, 8388607
    %v3631 = vor.u32 %v3630, 8388608
    %v3632 = vsub.s32 0, %v3631
    %v3633 = vadd.s32 %v3628, 1
    %vm3634 = vcmp.gt.s32.totalorder %v3633, 0
    %v3635 = vsel %vm3634, %v3633, 0
    %v3636 = vshrl.u32 %v3635, 5
    %v3637 = vand.u32 %v3635, 31
    %v3638 = vsub.s32 32, %v3637
    %v3639 = vshrl.u32 683565275, %v3638
    %v3640 = vshll.u32 683565275, %v3637
    %v3641 = vshrl.u32 2475754826, %v3638
    %v3642 = vor.u32 %v3640, %v3641
    %v3643 = vshll.u32 2475754826, %v3637
    %v3644 = vshrl.u32 2131351028, %v3638
    %v3645 = vor.u32 %v3643, %v3644
    %v3646 = vshll.u32 2131351028, %v3637
    %v3647 = vshrl.u32 2102212464, %v3638
    %v3648 = vor.u32 %v3646, %v3647
    %v3649 = vshll.u32 2102212464, %v3637
    %v3650 = vshrl.u32 920167782, %v3638
    %v3651 = vor.u32 %v3649, %v3650
    %v3652 = vshll.u32 920167782, %v3637
    %v3653 = vshrl.u32 1326507024, %v3638
    %v3654 = vor.u32 %v3652, %v3653
    %vm3655 = vcmp.lt.s32.totalorder %v3636, 1
    %vm3656 = vcmp.lt.s32.totalorder %v3636, 2
    %vm3657 = vcmp.lt.s32.totalorder %v3636, 3
    %vm3658 = vcmp.lt.s32.totalorder %v3636, 4
    %v3659 = vsel %vm3655, %v3639, %v3642
    %v3660 = vsel %vm3658, %v3648, 2102212464
    %v3661 = vsel %vm3657, %v3645, %v3660
    %v3662 = vsel %vm3656, %v3659, %v3661
    %v3663 = vsel %vm3655, %v3642, %v3645
    %v3664 = vsel %vm3658, %v3651, 920167782
    %v3665 = vsel %vm3657, %v3648, %v3664
    %v3666 = vsel %vm3656, %v3663, %v3665
    %v3667 = vsel %vm3655, %v3645, %v3648
    %v3668 = vsel %vm3658, %v3654, 1326507024
    %v3669 = vsel %vm3657, %v3651, %v3668
    %v3670 = vsel %vm3656, %v3667, %v3669
    %v3671 = vshll.u32 %v3631, 8
    %v3672 = vmul.u32.u64.compose %v3671, %v3670
    %v3673 = vextract.low.u32 %v3672
    %v3674 = vextract.high.u32 %v3672
    %v3675 = vmul.u32.u64.compose %v3671, %v3666
    %v3676 = vextract.low.u32 %v3675
    %v3677 = vextract.high.u32 %v3675
    %v3678 = vmul.u32 %v3671, %v3662
    %v3679 = vadd.s32 %v3674, %v3676
    %vm3680 = vc.u32 %v3674, %v3676
    %v3681 = vadd.s32 %v3677, 1
    %v3682 = vsel %vm3680, %v3681, %v3677
    %v3683 = vadd.s32 %v3678, %v3682
    %v3684 = vadd.s32 %v3683, 536870912
    %v3685 = vshrl.u32 %v3684, 30
    %v3686 = vshll.u32 %v3685, 30
    %v3687 = vsub.s32 %v3683, %v3686
    %vm3688 = vcmp.lt.s32.totalorder %v3687, 0
    %v3689 = vsub.s32 0, %v3687
    %v3690 = vsel %vm3688, %v3689, %v3687
    %v3691 = vclz %v3690
    %v3692 = vsub.s32 %v3691, 2
    %vm3693 = vcmp.gt.s32.totalorder 0, %v3692
    %v3694 = vsel %vm3693, 0, %v3692
    %v3695 = vsub.s32 32, %v3694
    %v3696 = vshll.u32 %v3687, %v3694
    %v3697 = vshrl.u32 %v3679, %v3695
    %v3698 = vor.u32 %v3696, %v3697
    %v3699 = vsub.s32 4294967266, %v3694
    %v3700 = vadd.s32 %v3699, 127
    %v3701 = vshll.u32 %v3700, 23
    %v3702 = vor.u32 4788187, %v3701
    %v3703 = vand.u32 2147483647, %v3702
    %v3705 = vcvt.s32.f32 %v3698
    %v3706 = vmul.f32 %v3705, %v3703
    %v3707 = vxor.u32 %v3706, 2147483648
    %v3708 = vsel %vm3625, %v3707, %v3706
    %v3709 = vsub.s32 4, %v3685
    %v3710 = vsel %vm3625, %v3709, %v3685
    %v3711 = vsel %vm3624, %v57, %v3708
    %v3712 = vsel %vm3624, 0, %v3710
    %v3713 = vcosq.f32.pop %v3711
    %v3714 = vsinq.f32.pop %v3711
    %vm3715 = vweird.f32 %v57
    %v3716 = vadd.s32 %v3712, 3
    %v3717 = vand.u32 %v3716, 3
    %vm3718 = vcmp.lt.s32.totalorder %v3717, 2
    %vm3719 = vcmp.eq.s32.totalorder %v3717, 0
    %v3720 = vxor.u32 %v3714, 2147483648
    %v3721 = vsel %vm3719, %v3713, %v3720
    %vm3722 = vcmp.eq.s32.totalorder %v3717, 2
    %v3723 = vxor.u32 %v3713, 2147483648
    %v3724 = vsel %vm3722, %v3723, %v3714
    %v3725 = vsel %vm3718, %v3721, %v3724
    %v3726 = vsel %vm3715, nan, %v3725
    %v3727 = vand.u32 2147483647, %v58
    %vm3728 = vcmp.le.f32.partialorder %v3727, 0.7853982
    %vm3729 = vcmp.lt.s32.totalorder %v58, 0
    %v3730 = vand.u32 %v58, 2139095040
    %v3731 = vshrl.u32 %v3730, 23
    %v3732 = vsub.s32 %v3731, 127
    %v3733 = vand.u32 2147483647, %v58
    %v3734 = vand.u32 %v3733, 8388607
    %v3735 = vor.u32 %v3734, 8388608
    %v3736 = vsub.s32 0, %v3735
    %v3737 = vadd.s32 %v3732, 1
    %vm3738 = vcmp.gt.s32.totalorder %v3737, 0
    %v3739 = vsel %vm3738, %v3737, 0
    %v3740 = vshrl.u32 %v3739, 5
    %v3741 = vand.u32 %v3739, 31
    %v3742 = vsub.s32 32, %v3741
    %v3743 = vshrl.u32 683565275, %v3742
    %v3744 = vshll.u32 683565275, %v3741
    %v3745 = vshrl.u32 2475754826, %v3742
    %v3746 = vor.u32 %v3744, %v3745
    %v3747 = vshll.u32 2475754826, %v3741
    %v3748 = vshrl.u32 2131351028, %v3742
    %v3749 = vor.u32 %v3747, %v3748
    %v3750 = vshll.u32 2131351028, %v3741
    %v3751 = vshrl.u32 2102212464, %v3742
    %v3752 = vor.u32 %v3750, %v3751
    %v3753 = vshll.u32 2102212464, %v3741
    %v3754 = vshrl.u32 920167782, %v3742
    %v3755 = vor.u32 %v3753, %v3754
    %v3756 = vshll.u32 920167782, %v3741
    %v3757 = vshrl.u32 1326507024, %v3742
    %v3758 = vor.u32 %v3756, %v3757
    %vm3759 = vcmp.lt.s32.totalorder %v3740, 1
    %vm3760 = vcmp.lt.s32.totalorder %v3740, 2
    %vm3761 = vcmp.lt.s32.totalorder %v3740, 3
    %vm3762 = vcmp.lt.s32.totalorder %v3740, 4
    %v3763 = vsel %vm3759, %v3743, %v3746
    %v3764 = vsel %vm3762, %v3752, 2102212464
    %v3765 = vsel %vm3761, %v3749, %v3764
    %v3766 = vsel %vm3760, %v3763, %v3765
    %v3767 = vsel %vm3759, %v3746, %v3749
    %v3768 = vsel %vm3762, %v3755, 920167782
    %v3769 = vsel %vm3761, %v3752, %v3768
    %v3770 = vsel %vm3760, %v3767, %v3769
    %v3771 = vsel %vm3759, %v3749, %v3752
    %v3772 = vsel %vm3762, %v3758, 1326507024
    %v3773 = vsel %vm3761, %v3755, %v3772
    %v3774 = vsel %vm3760, %v3771, %v3773
    %v3775 = vshll.u32 %v3735, 8
    %v3776 = vmul.u32.u64.compose %v3775, %v3774
    %v3777 = vextract.low.u32 %v3776
    %v3778 = vextract.high.u32 %v3776
    %v3779 = vmul.u32.u64.compose %v3775, %v3770
    %v3780 = vextract.low.u32 %v3779
    %v3781 = vextract.high.u32 %v3779
    %v3782 = vmul.u32 %v3775, %v3766
    %v3783 = vadd.s32 %v3778, %v3780
    %vm3784 = vc.u32 %v3778, %v3780
    %v3785 = vadd.s32 %v3781, 1
    %v3786 = vsel %vm3784, %v3785, %v3781
    %v3787 = vadd.s32 %v3782, %v3786
    %v3788 = vadd.s32 %v3787, 536870912
    %v3789 = vshrl.u32 %v3788, 30
    %v3790 = vshll.u32 %v3789, 30
    %v3791 = vsub.s32 %v3787, %v3790
    %vm3792 = vcmp.lt.s32.totalorder %v3791, 0
    %v3793 = vsub.s32 0, %v3791
    %v3794 = vsel %vm3792, %v3793, %v3791
    %v3795 = vclz %v3794
    %v3796 = vsub.s32 %v3795, 2
    %vm3797 = vcmp.gt.s32.totalorder 0, %v3796
    %v3798 = vsel %vm3797, 0, %v3796
    %v3799 = vsub.s32 32, %v3798
    %v3800 = vshll.u32 %v3791, %v3798
    %v3801 = vshrl.u32 %v3783, %v3799
    %v3802 = vor.u32 %v3800, %v3801
    %v3803 = vsub.s32 4294967266, %v3798
    %v3804 = vadd.s32 %v3803, 127
    %v3805 = vshll.u32 %v3804, 23
    %v3806 = vor.u32 4788187, %v3805
    %v3807 = vand.u32 2147483647, %v3806
    %v3809 = vcvt.s32.f32 %v3802
    %v3810 = vmul.f32 %v3809, %v3807
    %v3811 = vxor.u32 %v3810, 2147483648
    %v3812 = vsel %vm3729, %v3811, %v3810
    %v3813 = vsub.s32 4, %v3789
    %v3814 = vsel %vm3729, %v3813, %v3789
    %v3815 = vsel %vm3728, %v58, %v3812
    %v3816 = vsel %vm3728, 0, %v3814
    %v3817 = vcosq.f32.pop %v3815
    %v3818 = vsinq.f32.pop %v3815
    %vm3819 = vweird.f32 %v58
    %v3820 = vadd.s32 %v3816, 3
    %v3821 = vand.u32 %v3820, 3
    %vm3822 = vcmp.lt.s32.totalorder %v3821, 2
    %vm3823 = vcmp.eq.s32.totalorder %v3821, 0
    %v3824 = vxor.u32 %v3818, 2147483648
    %v3825 = vsel %vm3823, %v3817, %v3824
    %vm3826 = vcmp.eq.s32.totalorder %v3821, 2
    %v3827 = vxor.u32 %v3817, 2147483648
    %v3828 = vsel %vm3826, %v3827, %v3818
    %v3829 = vsel %vm3822, %v3825, %v3828
    %v3830 = vsel %vm3819, nan, %v3829
    %v3831 = vand.u32 2147483647, %v59
    %vm3832 = vcmp.le.f32.partialorder %v3831, 0.7853982
    %vm3833 = vcmp.lt.s32.totalorder %v59, 0
    %v3834 = vand.u32 %v59, 2139095040
    %v3835 = vshrl.u32 %v3834, 23
    %v3836 = vsub.s32 %v3835, 127
    %v3837 = vand.u32 2147483647, %v59
    %v3838 = vand.u32 %v3837, 8388607
    %v3839 = vor.u32 %v3838, 8388608
    %v3840 = vsub.s32 0, %v3839
    %v3841 = vadd.s32 %v3836, 1
    %vm3842 = vcmp.gt.s32.totalorder %v3841, 0
    %v3843 = vsel %vm3842, %v3841, 0
    %v3844 = vshrl.u32 %v3843, 5
    %v3845 = vand.u32 %v3843, 31
    %v3846 = vsub.s32 32, %v3845
    %v3847 = vshrl.u32 683565275, %v3846
    %v3848 = vshll.u32 683565275, %v3845
    %v3849 = vshrl.u32 2475754826, %v3846
    %v3850 = vor.u32 %v3848, %v3849
    %v3851 = vshll.u32 2475754826, %v3845
    %v3852 = vshrl.u32 2131351028, %v3846
    %v3853 = vor.u32 %v3851, %v3852
    %v3854 = vshll.u32 2131351028, %v3845
    %v3855 = vshrl.u32 2102212464, %v3846
    %v3856 = vor.u32 %v3854, %v3855
    %v3857 = vshll.u32 2102212464, %v3845
    %v3858 = vshrl.u32 920167782, %v3846
    %v3859 = vor.u32 %v3857, %v3858
    %v3860 = vshll.u32 920167782, %v3845
    %v3861 = vshrl.u32 1326507024, %v3846
    %v3862 = vor.u32 %v3860, %v3861
    %vm3863 = vcmp.lt.s32.totalorder %v3844, 1
    %vm3864 = vcmp.lt.s32.totalorder %v3844, 2
    %vm3865 = vcmp.lt.s32.totalorder %v3844, 3
    %vm3866 = vcmp.lt.s32.totalorder %v3844, 4
    %v3867 = vsel %vm3863, %v3847, %v3850
    %v3868 = vsel %vm3866, %v3856, 2102212464
    %v3869 = vsel %vm3865, %v3853, %v3868
    %v3870 = vsel %vm3864, %v3867, %v3869
    %v3871 = vsel %vm3863, %v3850, %v3853
    %v3872 = vsel %vm3866, %v3859, 920167782
    %v3873 = vsel %vm3865, %v3856, %v3872
    %v3874 = vsel %vm3864, %v3871, %v3873
    %v3875 = vsel %vm3863, %v3853, %v3856
    %v3876 = vsel %vm3866, %v3862, 1326507024
    %v3877 = vsel %vm3865, %v3859, %v3876
    %v3878 = vsel %vm3864, %v3875, %v3877
    %v3879 = vshll.u32 %v3839, 8
    %v3880 = vmul.u32.u64.compose %v3879, %v3878
    %v3881 = vextract.low.u32 %v3880
    %v3882 = vextract.high.u32 %v3880
    %v3883 = vmul.u32.u64.compose %v3879, %v3874
    %v3884 = vextract.low.u32 %v3883
    %v3885 = vextract.high.u32 %v3883
    %v3886 = vmul.u32 %v3879, %v3870
    %v3887 = vadd.s32 %v3882, %v3884
    %vm3888 = vc.u32 %v3882, %v3884
    %v3889 = vadd.s32 %v3885, 1
    %v3890 = vsel %vm3888, %v3889, %v3885
    %v3891 = vadd.s32 %v3886, %v3890
    %v3892 = vadd.s32 %v3891, 536870912
    %v3893 = vshrl.u32 %v3892, 30
    %v3894 = vshll.u32 %v3893, 30
    %v3895 = vsub.s32 %v3891, %v3894
    %vm3896 = vcmp.lt.s32.totalorder %v3895, 0
    %v3897 = vsub.s32 0, %v3895
    %v3898 = vsel %vm3896, %v3897, %v3895
    %v3899 = vclz %v3898
    %v3900 = vsub.s32 %v3899, 2
    %vm3901 = vcmp.gt.s32.totalorder 0, %v3900
    %v3902 = vsel %vm3901, 0, %v3900
    %v3903 = vsub.s32 32, %v3902
    %v3904 = vshll.u32 %v3895, %v3902
    %v3905 = vshrl.u32 %v3887, %v3903
    %v3906 = vor.u32 %v3904, %v3905
    %v3907 = vsub.s32 4294967266, %v3902
    %v3908 = vadd.s32 %v3907, 127
    %v3909 = vshll.u32 %v3908, 23
    %v3910 = vor.u32 4788187, %v3909
    %v3911 = vand.u32 2147483647, %v3910
    %v3913 = vcvt.s32.f32 %v3906
    %v3914 = vmul.f32 %v3913, %v3911
    %v3915 = vxor.u32 %v3914, 2147483648
    %v3916 = vsel %vm3833, %v3915, %v3914
    %v3917 = vsub.s32 4, %v3893
    %v3918 = vsel %vm3833, %v3917, %v3893
    %v3919 = vsel %vm3832, %v59, %v3916
    %v3920 = vsel %vm3832, 0, %v3918
    %v3921 = vcosq.f32.pop %v3919
    %v3922 = vsinq.f32.pop %v3919
    %vm3923 = vweird.f32 %v59
    %v3924 = vadd.s32 %v3920, 3
    %v3925 = vand.u32 %v3924, 3
    %vm3926 = vcmp.lt.s32.totalorder %v3925, 2
    %vm3927 = vcmp.eq.s32.totalorder %v3925, 0
    %v3928 = vxor.u32 %v3922, 2147483648
    %v3929 = vsel %vm3927, %v3921, %v3928
    %vm3930 = vcmp.eq.s32.totalorder %v3925, 2
    %v3931 = vxor.u32 %v3921, 2147483648
    %v3932 = vsel %vm3930, %v3931, %v3922
    %v3933 = vsel %vm3926, %v3929, %v3932
    %v3934 = vsel %vm3923, nan, %v3933
    %v3935 = vand.u32 2147483647, %v60
    %vm3936 = vcmp.le.f32.partialorder %v3935, 0.7853982
    %vm3937 = vcmp.lt.s32.totalorder %v60, 0
    %v3938 = vand.u32 %v60, 2139095040
    %v3939 = vshrl.u32 %v3938, 23
    %v3940 = vsub.s32 %v3939, 127
    %v3941 = vand.u32 2147483647, %v60
    %v3942 = vand.u32 %v3941, 8388607
    %v3943 = vor.u32 %v3942, 8388608
    %v3944 = vsub.s32 0, %v3943
    %v3945 = vadd.s32 %v3940, 1
    %vm3946 = vcmp.gt.s32.totalorder %v3945, 0
    %v3947 = vsel %vm3946, %v3945, 0
    %v3948 = vshrl.u32 %v3947, 5
    %v3949 = vand.u32 %v3947, 31
    %v3950 = vsub.s32 32, %v3949
    %v3951 = vshrl.u32 683565275, %v3950
    %v3952 = vshll.u32 683565275, %v3949
    %v3953 = vshrl.u32 2475754826, %v3950
    %v3954 = vor.u32 %v3952, %v3953
    %v3955 = vshll.u32 2475754826, %v3949
    %v3956 = vshrl.u32 2131351028, %v3950
    %v3957 = vor.u32 %v3955, %v3956
    %v3958 = vshll.u32 2131351028, %v3949
    %v3959 = vshrl.u32 2102212464, %v3950
    %v3960 = vor.u32 %v3958, %v3959
    %v3961 = vshll.u32 2102212464, %v3949
    %v3962 = vshrl.u32 920167782, %v3950
    %v3963 = vor.u32 %v3961, %v3962
    %v3964 = vshll.u32 920167782, %v3949
    %v3965 = vshrl.u32 1326507024, %v3950
    %v3966 = vor.u32 %v3964, %v3965
    %vm3967 = vcmp.lt.s32.totalorder %v3948, 1
    %vm3968 = vcmp.lt.s32.totalorder %v3948, 2
    %vm3969 = vcmp.lt.s32.totalorder %v3948, 3
    %vm3970 = vcmp.lt.s32.totalorder %v3948, 4
    %v3971 = vsel %vm3967, %v3951, %v3954
    %v3972 = vsel %vm3970, %v3960, 2102212464
    %v3973 = vsel %vm3969, %v3957, %v3972
    %v3974 = vsel %vm3968, %v3971, %v3973
    %v3975 = vsel %vm3967, %v3954, %v3957
    %v3976 = vsel %vm3970, %v3963, 920167782
    %v3977 = vsel %vm3969, %v3960, %v3976
    %v3978 = vsel %vm3968, %v3975, %v3977
    %v3979 = vsel %vm3967, %v3957, %v3960
    %v3980 = vsel %vm3970, %v3966, 1326507024
    %v3981 = vsel %vm3969, %v3963, %v3980
    %v3982 = vsel %vm3968, %v3979, %v3981
    %v3983 = vshll.u32 %v3943, 8
    %v3984 = vmul.u32.u64.compose %v3983, %v3982
    %v3985 = vextract.low.u32 %v3984
    %v3986 = vextract.high.u32 %v3984
    %v3987 = vmul.u32.u64.compose %v3983, %v3978
    %v3988 = vextract.low.u32 %v3987
    %v3989 = vextract.high.u32 %v3987
    %v3990 = vmul.u32 %v3983, %v3974
    %v3991 = vadd.s32 %v3986, %v3988
    %vm3992 = vc.u32 %v3986, %v3988
    %v3993 = vadd.s32 %v3989, 1
    %v3994 = vsel %vm3992, %v3993, %v3989
    %v3995 = vadd.s32 %v3990, %v3994
    %v3996 = vadd.s32 %v3995, 536870912
    %v3997 = vshrl.u32 %v3996, 30
    %v3998 = vshll.u32 %v3997, 30
    %v3999 = vsub.s32 %v3995, %v3998
    %vm4000 = vcmp.lt.s32.totalorder %v3999, 0
    %v4001 = vsub.s32 0, %v3999
    %v4002 = vsel %vm4000, %v4001, %v3999
    %v4003 = vclz %v4002
    %v4004 = vsub.s32 %v4003, 2
    %vm4005 = vcmp.gt.s32.totalorder 0, %v4004
    %v4006 = vsel %vm4005, 0, %v4004
    %v4007 = vsub.s32 32, %v4006
    %v4008 = vshll.u32 %v3999, %v4006
    %v4009 = vshrl.u32 %v3991, %v4007
    %v4010 = vor.u32 %v4008, %v4009
    %v4011 = vsub.s32 4294967266, %v4006
    %v4012 = vadd.s32 %v4011, 127
    %v4013 = vshll.u32 %v4012, 23
    %v4014 = vor.u32 4788187, %v4013
    %v4015 = vand.u32 2147483647, %v4014
    %v4017 = vcvt.s32.f32 %v4010
    %v4018 = vmul.f32 %v4017, %v4015
    %v4019 = vxor.u32 %v4018, 2147483648
    %v4020 = vsel %vm3937, %v4019, %v4018
    %v4021 = vsub.s32 4, %v3997
    %v4022 = vsel %vm3937, %v4021, %v3997
    %v4023 = vsel %vm3936, %v60, %v4020
    %v4024 = vsel %vm3936, 0, %v4022
    %v4025 = vcosq.f32.pop %v4023
    %v4026 = vsinq.f32.pop %v4023
    %vm4027 = vweird.f32 %v60
    %v4028 = vadd.s32 %v4024, 3
    %v4029 = vand.u32 %v4028, 3
    %vm4030 = vcmp.lt.s32.totalorder %v4029, 2
    %vm4031 = vcmp.eq.s32.totalorder %v4029, 0
    %v4032 = vxor.u32 %v4026, 2147483648
    %v4033 = vsel %vm4031, %v4025, %v4032
    %vm4034 = vcmp.eq.s32.totalorder %v4029, 2
    %v4035 = vxor.u32 %v4025, 2147483648
    %v4036 = vsel %vm4034, %v4035, %v4026
    %v4037 = vsel %vm4030, %v4033, %v4036
    %v4038 = vsel %vm4027, nan, %v4037
    %v4039 = vand.u32 2147483647, %v61
    %vm4040 = vcmp.le.f32.partialorder %v4039, 0.7853982
    %vm4041 = vcmp.lt.s32.totalorder %v61, 0
    %v4042 = vand.u32 %v61, 2139095040
    %v4043 = vshrl.u32 %v4042, 23
    %v4044 = vsub.s32 %v4043, 127
    %v4045 = vand.u32 2147483647, %v61
    %v4046 = vand.u32 %v4045, 8388607
    %v4047 = vor.u32 %v4046, 8388608
    %v4048 = vsub.s32 0, %v4047
    %v4049 = vadd.s32 %v4044, 1
    %vm4050 = vcmp.gt.s32.totalorder %v4049, 0
    %v4051 = vsel %vm4050, %v4049, 0
    %v4052 = vshrl.u32 %v4051, 5
    %v4053 = vand.u32 %v4051, 31
    %v4054 = vsub.s32 32, %v4053
    %v4055 = vshrl.u32 683565275, %v4054
    %v4056 = vshll.u32 683565275, %v4053
    %v4057 = vshrl.u32 2475754826, %v4054
    %v4058 = vor.u32 %v4056, %v4057
    %v4059 = vshll.u32 2475754826, %v4053
    %v4060 = vshrl.u32 2131351028, %v4054
    %v4061 = vor.u32 %v4059, %v4060
    %v4062 = vshll.u32 2131351028, %v4053
    %v4063 = vshrl.u32 2102212464, %v4054
    %v4064 = vor.u32 %v4062, %v4063
    %v4065 = vshll.u32 2102212464, %v4053
    %v4066 = vshrl.u32 920167782, %v4054
    %v4067 = vor.u32 %v4065, %v4066
    %v4068 = vshll.u32 920167782, %v4053
    %v4069 = vshrl.u32 1326507024, %v4054
    %v4070 = vor.u32 %v4068, %v4069
    %vm4071 = vcmp.lt.s32.totalorder %v4052, 1
    %vm4072 = vcmp.lt.s32.totalorder %v4052, 2
    %vm4073 = vcmp.lt.s32.totalorder %v4052, 3
    %vm4074 = vcmp.lt.s32.totalorder %v4052, 4
    %v4075 = vsel %vm4071, %v4055, %v4058
    %v4076 = vsel %vm4074, %v4064, 2102212464
    %v4077 = vsel %vm4073, %v4061, %v4076
    %v4078 = vsel %vm4072, %v4075, %v4077
    %v4079 = vsel %vm4071, %v4058, %v4061
    %v4080 = vsel %vm4074, %v4067, 920167782
    %v4081 = vsel %vm4073, %v4064, %v4080
    %v4082 = vsel %vm4072, %v4079, %v4081
    %v4083 = vsel %vm4071, %v4061, %v4064
    %v4084 = vsel %vm4074, %v4070, 1326507024
    %v4085 = vsel %vm4073, %v4067, %v4084
    %v4086 = vsel %vm4072, %v4083, %v4085
    %v4087 = vshll.u32 %v4047, 8
    %v4088 = vmul.u32.u64.compose %v4087, %v4086
    %v4089 = vextract.low.u32 %v4088
    %v4090 = vextract.high.u32 %v4088
    %v4091 = vmul.u32.u64.compose %v4087, %v4082
    %v4092 = vextract.low.u32 %v4091
    %v4093 = vextract.high.u32 %v4091
    %v4094 = vmul.u32 %v4087, %v4078
    %v4095 = vadd.s32 %v4090, %v4092
    %vm4096 = vc.u32 %v4090, %v4092
    %v4097 = vadd.s32 %v4093, 1
    %v4098 = vsel %vm4096, %v4097, %v4093
    %v4099 = vadd.s32 %v4094, %v4098
    %v4100 = vadd.s32 %v4099, 536870912
    %v4101 = vshrl.u32 %v4100, 30
    %v4102 = vshll.u32 %v4101, 30
    %v4103 = vsub.s32 %v4099, %v4102
    %vm4104 = vcmp.lt.s32.totalorder %v4103, 0
    %v4105 = vsub.s32 0, %v4103
    %v4106 = vsel %vm4104, %v4105, %v4103
    %v4107 = vclz %v4106
    %v4108 = vsub.s32 %v4107, 2
    %vm4109 = vcmp.gt.s32.totalorder 0, %v4108
    %v4110 = vsel %vm4109, 0, %v4108
    %v4111 = vsub.s32 32, %v4110
    %v4112 = vshll.u32 %v4103, %v4110
    %v4113 = vshrl.u32 %v4095, %v4111
    %v4114 = vor.u32 %v4112, %v4113
    %v4115 = vsub.s32 4294967266, %v4110
    %v4116 = vadd.s32 %v4115, 127
    %v4117 = vshll.u32 %v4116, 23
    %v4118 = vor.u32 4788187, %v4117
    %v4119 = vand.u32 2147483647, %v4118
    %v4121 = vcvt.s32.f32 %v4114
    %v4122 = vmul.f32 %v4121, %v4119
    %v4123 = vxor.u32 %v4122, 2147483648
    %v4124 = vsel %vm4041, %v4123, %v4122
    %v4125 = vsub.s32 4, %v4101
    %v4126 = vsel %vm4041, %v4125, %v4101
    %v4127 = vsel %vm4040, %v61, %v4124
    %v4128 = vsel %vm4040, 0, %v4126
    %v4129 = vcosq.f32.pop %v4127
    %v4130 = vsinq.f32.pop %v4127
    %vm4131 = vweird.f32 %v61
    %v4132 = vadd.s32 %v4128, 3
    %v4133 = vand.u32 %v4132, 3
    %vm4134 = vcmp.lt.s32.totalorder %v4133, 2
    %vm4135 = vcmp.eq.s32.totalorder %v4133, 0
    %v4136 = vxor.u32 %v4130, 2147483648
    %v4137 = vsel %vm4135, %v4129, %v4136
    %vm4138 = vcmp.eq.s32.totalorder %v4133, 2
    %v4139 = vxor.u32 %v4129, 2147483648
    %v4140 = vsel %vm4138, %v4139, %v4130
    %v4141 = vsel %vm4134, %v4137, %v4140
    %v4142 = vsel %vm4131, nan, %v4141
    %v4143 = vand.u32 2147483647, %v62
    %vm4144 = vcmp.le.f32.partialorder %v4143, 0.7853982
    %vm4145 = vcmp.lt.s32.totalorder %v62, 0
    %v4146 = vand.u32 %v62, 2139095040
    %v4147 = vshrl.u32 %v4146, 23
    %v4148 = vsub.s32 %v4147, 127
    %v4149 = vand.u32 2147483647, %v62
    %v4150 = vand.u32 %v4149, 8388607
    %v4151 = vor.u32 %v4150, 8388608
    %v4152 = vsub.s32 0, %v4151
    %v4153 = vadd.s32 %v4148, 1
    %vm4154 = vcmp.gt.s32.totalorder %v4153, 0
    %v4155 = vsel %vm4154, %v4153, 0
    %v4156 = vshrl.u32 %v4155, 5
    %v4157 = vand.u32 %v4155, 31
    %v4158 = vsub.s32 32, %v4157
    %v4159 = vshrl.u32 683565275, %v4158
    %v4160 = vshll.u32 683565275, %v4157
    %v4161 = vshrl.u32 2475754826, %v4158
    %v4162 = vor.u32 %v4160, %v4161
    %v4163 = vshll.u32 2475754826, %v4157
    %v4164 = vshrl.u32 2131351028, %v4158
    %v4165 = vor.u32 %v4163, %v4164
    %v4166 = vshll.u32 2131351028, %v4157
    %v4167 = vshrl.u32 2102212464, %v4158
    %v4168 = vor.u32 %v4166, %v4167
    %v4169 = vshll.u32 2102212464, %v4157
    %v4170 = vshrl.u32 920167782, %v4158
    %v4171 = vor.u32 %v4169, %v4170
    %v4172 = vshll.u32 920167782, %v4157
    %v4173 = vshrl.u32 1326507024, %v4158
    %v4174 = vor.u32 %v4172, %v4173
    %vm4175 = vcmp.lt.s32.totalorder %v4156, 1
    %vm4176 = vcmp.lt.s32.totalorder %v4156, 2
    %vm4177 = vcmp.lt.s32.totalorder %v4156, 3
    %vm4178 = vcmp.lt.s32.totalorder %v4156, 4
    %v4179 = vsel %vm4175, %v4159, %v4162
    %v4180 = vsel %vm4178, %v4168, 2102212464
    %v4181 = vsel %vm4177, %v4165, %v4180
    %v4182 = vsel %vm4176, %v4179, %v4181
    %v4183 = vsel %vm4175, %v4162, %v4165
    %v4184 = vsel %vm4178, %v4171, 920167782
    %v4185 = vsel %vm4177, %v4168, %v4184
    %v4186 = vsel %vm4176, %v4183, %v4185
    %v4187 = vsel %vm4175, %v4165, %v4168
    %v4188 = vsel %vm4178, %v4174, 1326507024
    %v4189 = vsel %vm4177, %v4171, %v4188
    %v4190 = vsel %vm4176, %v4187, %v4189
    %v4191 = vshll.u32 %v4151, 8
    %v4192 = vmul.u32.u64.compose %v4191, %v4190
    %v4193 = vextract.low.u32 %v4192
    %v4194 = vextract.high.u32 %v4192
    %v4195 = vmul.u32.u64.compose %v4191, %v4186
    %v4196 = vextract.low.u32 %v4195
    %v4197 = vextract.high.u32 %v4195
    %v4198 = vmul.u32 %v4191, %v4182
    %v4199 = vadd.s32 %v4194, %v4196
    %vm4200 = vc.u32 %v4194, %v4196
    %v4201 = vadd.s32 %v4197, 1
    %v4202 = vsel %vm4200, %v4201, %v4197
    %v4203 = vadd.s32 %v4198, %v4202
    %v4204 = vadd.s32 %v4203, 536870912
    %v4205 = vshrl.u32 %v4204, 30
    %v4206 = vshll.u32 %v4205, 30
    %v4207 = vsub.s32 %v4203, %v4206
    %vm4208 = vcmp.lt.s32.totalorder %v4207, 0
    %v4209 = vsub.s32 0, %v4207
    %v4210 = vsel %vm4208, %v4209, %v4207
    %v4211 = vclz %v4210
    %v4212 = vsub.s32 %v4211, 2
    %vm4213 = vcmp.gt.s32.totalorder 0, %v4212
    %v4214 = vsel %vm4213, 0, %v4212
    %v4215 = vsub.s32 32, %v4214
    %v4216 = vshll.u32 %v4207, %v4214
    %v4217 = vshrl.u32 %v4199, %v4215
    %v4218 = vor.u32 %v4216, %v4217
    %v4219 = vsub.s32 4294967266, %v4214
    %v4220 = vadd.s32 %v4219, 127
    %v4221 = vshll.u32 %v4220, 23
    %v4222 = vor.u32 4788187, %v4221
    %v4223 = vand.u32 2147483647, %v4222
    %v4225 = vcvt.s32.f32 %v4218
    %v4226 = vmul.f32 %v4225, %v4223
    %v4227 = vxor.u32 %v4226, 2147483648
    %v4228 = vsel %vm4145, %v4227, %v4226
    %v4229 = vsub.s32 4, %v4205
    %v4230 = vsel %vm4145, %v4229, %v4205
    %v4231 = vsel %vm4144, %v62, %v4228
    %v4232 = vsel %vm4144, 0, %v4230
    %v4233 = vcosq.f32.pop %v4231
    %v4234 = vsinq.f32.pop %v4231
    %vm4235 = vweird.f32 %v62
    %v4236 = vadd.s32 %v4232, 3
    %v4237 = vand.u32 %v4236, 3
    %vm4238 = vcmp.lt.s32.totalorder %v4237, 2
    %vm4239 = vcmp.eq.s32.totalorder %v4237, 0
    %v4240 = vxor.u32 %v4234, 2147483648
    %v4241 = vsel %vm4239, %v4233, %v4240
    %vm4242 = vcmp.eq.s32.totalorder %v4237, 2
    %v4243 = vxor.u32 %v4233, 2147483648
    %v4244 = vsel %vm4242, %v4243, %v4234
    %v4245 = vsel %vm4238, %v4241, %v4244
    %v4246 = vsel %vm4235, nan, %v4245
    %v4247 = vand.u32 2147483647, %v63
    %vm4248 = vcmp.le.f32.partialorder %v4247, 0.7853982
    %vm4249 = vcmp.lt.s32.totalorder %v63, 0
    %v4250 = vand.u32 %v63, 2139095040
    %v4251 = vshrl.u32 %v4250, 23
    %v4252 = vsub.s32 %v4251, 127
    %v4253 = vand.u32 2147483647, %v63
    %v4254 = vand.u32 %v4253, 8388607
    %v4255 = vor.u32 %v4254, 8388608
    %v4256 = vsub.s32 0, %v4255
    %v4257 = vadd.s32 %v4252, 1
    %vm4258 = vcmp.gt.s32.totalorder %v4257, 0
    %v4259 = vsel %vm4258, %v4257, 0
    %v4260 = vshrl.u32 %v4259, 5
    %v4261 = vand.u32 %v4259, 31
    %v4262 = vsub.s32 32, %v4261
    %v4263 = vshrl.u32 683565275, %v4262
    %v4264 = vshll.u32 683565275, %v4261
    %v4265 = vshrl.u32 2475754826, %v4262
    %v4266 = vor.u32 %v4264, %v4265
    %v4267 = vshll.u32 2475754826, %v4261
    %v4268 = vshrl.u32 2131351028, %v4262
    %v4269 = vor.u32 %v4267, %v4268
    %v4270 = vshll.u32 2131351028, %v4261
    %v4271 = vshrl.u32 2102212464, %v4262
    %v4272 = vor.u32 %v4270, %v4271
    %v4273 = vshll.u32 2102212464, %v4261
    %v4274 = vshrl.u32 920167782, %v4262
    %v4275 = vor.u32 %v4273, %v4274
    %v4276 = vshll.u32 920167782, %v4261
    %v4277 = vshrl.u32 1326507024, %v4262
    %v4278 = vor.u32 %v4276, %v4277
    %vm4279 = vcmp.lt.s32.totalorder %v4260, 1
    %vm4280 = vcmp.lt.s32.totalorder %v4260, 2
    %vm4281 = vcmp.lt.s32.totalorder %v4260, 3
    %vm4282 = vcmp.lt.s32.totalorder %v4260, 4
    %v4283 = vsel %vm4279, %v4263, %v4266
    %v4284 = vsel %vm4282, %v4272, 2102212464
    %v4285 = vsel %vm4281, %v4269, %v4284
    %v4286 = vsel %vm4280, %v4283, %v4285
    %v4287 = vsel %vm4279, %v4266, %v4269
    %v4288 = vsel %vm4282, %v4275, 920167782
    %v4289 = vsel %vm4281, %v4272, %v4288
    %v4290 = vsel %vm4280, %v4287, %v4289
    %v4291 = vsel %vm4279, %v4269, %v4272
    %v4292 = vsel %vm4282, %v4278, 1326507024
    %v4293 = vsel %vm4281, %v4275, %v4292
    %v4294 = vsel %vm4280, %v4291, %v4293
    %v4295 = vshll.u32 %v4255, 8
    %v4296 = vmul.u32.u64.compose %v4295, %v4294
    %v4297 = vextract.low.u32 %v4296
    %v4298 = vextract.high.u32 %v4296
    %v4299 = vmul.u32.u64.compose %v4295, %v4290
    %v4300 = vextract.low.u32 %v4299
    %v4301 = vextract.high.u32 %v4299
    %v4302 = vmul.u32 %v4295, %v4286
    %v4303 = vadd.s32 %v4298, %v4300
    %vm4304 = vc.u32 %v4298, %v4300
    %v4305 = vadd.s32 %v4301, 1
    %v4306 = vsel %vm4304, %v4305, %v4301
    %v4307 = vadd.s32 %v4302, %v4306
    %v4308 = vadd.s32 %v4307, 536870912
    %v4309 = vshrl.u32 %v4308, 30
    %v4310 = vshll.u32 %v4309, 30
    %v4311 = vsub.s32 %v4307, %v4310
    %vm4312 = vcmp.lt.s32.totalorder %v4311, 0
    %v4313 = vsub.s32 0, %v4311
    %v4314 = vsel %vm4312, %v4313, %v4311
    %v4315 = vclz %v4314
    %v4316 = vsub.s32 %v4315, 2
    %vm4317 = vcmp.gt.s32.totalorder 0, %v4316
    %v4318 = vsel %vm4317, 0, %v4316
    %v4319 = vsub.s32 32, %v4318
    %v4320 = vshll.u32 %v4311, %v4318
    %v4321 = vshrl.u32 %v4303, %v4319
    %v4322 = vor.u32 %v4320, %v4321
    %v4323 = vsub.s32 4294967266, %v4318
    %v4324 = vadd.s32 %v4323, 127
    %v4325 = vshll.u32 %v4324, 23
    %v4326 = vor.u32 4788187, %v4325
    %v4327 = vand.u32 2147483647, %v4326
    %v4329 = vcvt.s32.f32 %v4322
    %v4330 = vmul.f32 %v4329, %v4327
    %v4331 = vxor.u32 %v4330, 2147483648
    %v4332 = vsel %vm4249, %v4331, %v4330
    %v4333 = vsub.s32 4, %v4309
    %v4334 = vsel %vm4249, %v4333, %v4309
    %v4335 = vsel %vm4248, %v63, %v4332
    %v4336 = vsel %vm4248, 0, %v4334
    %v4337 = vcosq.f32.pop %v4335
    %v4338 = vsinq.f32.pop %v4335
    %vm4339 = vweird.f32 %v63
    %v4340 = vadd.s32 %v4336, 3
    %v4341 = vand.u32 %v4340, 3
    %vm4342 = vcmp.lt.s32.totalorder %v4341, 2
    %vm4343 = vcmp.eq.s32.totalorder %v4341, 0
    %v4344 = vxor.u32 %v4338, 2147483648
    %v4345 = vsel %vm4343, %v4337, %v4344
    %vm4346 = vcmp.eq.s32.totalorder %v4341, 2
    %v4347 = vxor.u32 %v4337, 2147483648
    %v4348 = vsel %vm4346, %v4347, %v4338
    %v4349 = vsel %vm4342, %v4345, %v4348
    %v4350 = vsel %vm4339, nan, %v4349
    %v4351 = vand.u32 2147483647, %v64
    %vm4352 = vcmp.le.f32.partialorder %v4351, 0.7853982
    %vm4353 = vcmp.lt.s32.totalorder %v64, 0
    %v4354 = vand.u32 %v64, 2139095040
    %v4355 = vshrl.u32 %v4354, 23
    %v4356 = vsub.s32 %v4355, 127
    %v4357 = vand.u32 2147483647, %v64
    %v4358 = vand.u32 %v4357, 8388607
    %v4359 = vor.u32 %v4358, 8388608
    %v4360 = vsub.s32 0, %v4359
    %v4361 = vadd.s32 %v4356, 1
    %vm4362 = vcmp.gt.s32.totalorder %v4361, 0
    %v4363 = vsel %vm4362, %v4361, 0
    %v4364 = vshrl.u32 %v4363, 5
    %v4365 = vand.u32 %v4363, 31
    %v4366 = vsub.s32 32, %v4365
    %v4367 = vshrl.u32 683565275, %v4366
    %v4368 = vshll.u32 683565275, %v4365
    %v4369 = vshrl.u32 2475754826, %v4366
    %v4370 = vor.u32 %v4368, %v4369
    %v4371 = vshll.u32 2475754826, %v4365
    %v4372 = vshrl.u32 2131351028, %v4366
    %v4373 = vor.u32 %v4371, %v4372
    %v4374 = vshll.u32 2131351028, %v4365
    %v4375 = vshrl.u32 2102212464, %v4366
    %v4376 = vor.u32 %v4374, %v4375
    %v4377 = vshll.u32 2102212464, %v4365
    %v4378 = vshrl.u32 920167782, %v4366
    %v4379 = vor.u32 %v4377, %v4378
    %v4380 = vshll.u32 920167782, %v4365
    %v4381 = vshrl.u32 1326507024, %v4366
    %v4382 = vor.u32 %v4380, %v4381
    %vm4383 = vcmp.lt.s32.totalorder %v4364, 1
    %vm4384 = vcmp.lt.s32.totalorder %v4364, 2
    %vm4385 = vcmp.lt.s32.totalorder %v4364, 3
    %vm4386 = vcmp.lt.s32.totalorder %v4364, 4
    %v4387 = vsel %vm4383, %v4367, %v4370
    %v4388 = vsel %vm4386, %v4376, 2102212464
    %v4389 = vsel %vm4385, %v4373, %v4388
    %v4390 = vsel %vm4384, %v4387, %v4389
    %v4391 = vsel %vm4383, %v4370, %v4373
    %v4392 = vsel %vm4386, %v4379, 920167782
    %v4393 = vsel %vm4385, %v4376, %v4392
    %v4394 = vsel %vm4384, %v4391, %v4393
    %v4395 = vsel %vm4383, %v4373, %v4376
    %v4396 = vsel %vm4386, %v4382, 1326507024
    %v4397 = vsel %vm4385, %v4379, %v4396
    %v4398 = vsel %vm4384, %v4395, %v4397
    %v4399 = vshll.u32 %v4359, 8
    %v4400 = vmul.u32.u64.compose %v4399, %v4398
    %v4401 = vextract.low.u32 %v4400
    %v4402 = vextract.high.u32 %v4400
    %v4403 = vmul.u32.u64.compose %v4399, %v4394
    %v4404 = vextract.low.u32 %v4403
    %v4405 = vextract.high.u32 %v4403
    %v4406 = vmul.u32 %v4399, %v4390
    %v4407 = vadd.s32 %v4402, %v4404
    %vm4408 = vc.u32 %v4402, %v4404
    %v4409 = vadd.s32 %v4405, 1
    %v4410 = vsel %vm4408, %v4409, %v4405
    %v4411 = vadd.s32 %v4406, %v4410
    %v4412 = vadd.s32 %v4411, 536870912
    %v4413 = vshrl.u32 %v4412, 30
    %v4414 = vshll.u32 %v4413, 30
    %v4415 = vsub.s32 %v4411, %v4414
    %vm4416 = vcmp.lt.s32.totalorder %v4415, 0
    %v4417 = vsub.s32 0, %v4415
    %v4418 = vsel %vm4416, %v4417, %v4415
    %v4419 = vclz %v4418
    %v4420 = vsub.s32 %v4419, 2
    %vm4421 = vcmp.gt.s32.totalorder 0, %v4420
    %v4422 = vsel %vm4421, 0, %v4420
    %v4423 = vsub.s32 32, %v4422
    %v4424 = vshll.u32 %v4415, %v4422
    %v4425 = vshrl.u32 %v4407, %v4423
    %v4426 = vor.u32 %v4424, %v4425
    %v4427 = vsub.s32 4294967266, %v4422
    %v4428 = vadd.s32 %v4427, 127
    %v4429 = vshll.u32 %v4428, 23
    %v4430 = vor.u32 4788187, %v4429
    %v4431 = vand.u32 2147483647, %v4430
    %v4433 = vcvt.s32.f32 %v4426
    %v4434 = vmul.f32 %v4433, %v4431
    %v4435 = vxor.u32 %v4434, 2147483648
    %v4436 = vsel %vm4353, %v4435, %v4434
    %v4437 = vsub.s32 4, %v4413
    %v4438 = vsel %vm4353, %v4437, %v4413
    %v4439 = vsel %vm4352, %v64, %v4436
    %v4440 = vsel %vm4352, 0, %v4438
    %v4441 = vcosq.f32.pop %v4439
    %v4442 = vsinq.f32.pop %v4439
    %vm4443 = vweird.f32 %v64
    %v4444 = vadd.s32 %v4440, 3
    %v4445 = vand.u32 %v4444, 3
    %vm4446 = vcmp.lt.s32.totalorder %v4445, 2
    %vm4447 = vcmp.eq.s32.totalorder %v4445, 0
    %v4448 = vxor.u32 %v4442, 2147483648
    %v4449 = vsel %vm4447, %v4441, %v4448
    %vm4450 = vcmp.eq.s32.totalorder %v4445, 2
    %v4451 = vxor.u32 %v4441, 2147483648
    %v4452 = vsel %vm4450, %v4451, %v4442
    %v4453 = vsel %vm4446, %v4449, %v4452
    %v4454 = vsel %vm4443, nan, %v4453
    %v4455 = vand.u32 2147483647, %v65
    %vm4456 = vcmp.le.f32.partialorder %v4455, 0.7853982
    %vm4457 = vcmp.lt.s32.totalorder %v65, 0
    %v4458 = vand.u32 %v65, 2139095040
    %v4459 = vshrl.u32 %v4458, 23
    %v4460 = vsub.s32 %v4459, 127
    %v4461 = vand.u32 2147483647, %v65
    %v4462 = vand.u32 %v4461, 8388607
    %v4463 = vor.u32 %v4462, 8388608
    %v4464 = vsub.s32 0, %v4463
    %v4465 = vadd.s32 %v4460, 1
    %vm4466 = vcmp.gt.s32.totalorder %v4465, 0
    %v4467 = vsel %vm4466, %v4465, 0
    %v4468 = vshrl.u32 %v4467, 5
    %v4469 = vand.u32 %v4467, 31
    %v4470 = vsub.s32 32, %v4469
    %v4471 = vshrl.u32 683565275, %v4470
    %v4472 = vshll.u32 683565275, %v4469
    %v4473 = vshrl.u32 2475754826, %v4470
    %v4474 = vor.u32 %v4472, %v4473
    %v4475 = vshll.u32 2475754826, %v4469
    %v4476 = vshrl.u32 2131351028, %v4470
    %v4477 = vor.u32 %v4475, %v4476
    %v4478 = vshll.u32 2131351028, %v4469
    %v4479 = vshrl.u32 2102212464, %v4470
    %v4480 = vor.u32 %v4478, %v4479
    %v4481 = vshll.u32 2102212464, %v4469
    %v4482 = vshrl.u32 920167782, %v4470
    %v4483 = vor.u32 %v4481, %v4482
    %v4484 = vshll.u32 920167782, %v4469
    %v4485 = vshrl.u32 1326507024, %v4470
    %v4486 = vor.u32 %v4484, %v4485
    %vm4487 = vcmp.lt.s32.totalorder %v4468, 1
    %vm4488 = vcmp.lt.s32.totalorder %v4468, 2
    %vm4489 = vcmp.lt.s32.totalorder %v4468, 3
    %vm4490 = vcmp.lt.s32.totalorder %v4468, 4
    %v4491 = vsel %vm4487, %v4471, %v4474
    %v4492 = vsel %vm4490, %v4480, 2102212464
    %v4493 = vsel %vm4489, %v4477, %v4492
    %v4494 = vsel %vm4488, %v4491, %v4493
    %v4495 = vsel %vm4487, %v4474, %v4477
    %v4496 = vsel %vm4490, %v4483, 920167782
    %v4497 = vsel %vm4489, %v4480, %v4496
    %v4498 = vsel %vm4488, %v4495, %v4497
    %v4499 = vsel %vm4487, %v4477, %v4480
    %v4500 = vsel %vm4490, %v4486, 1326507024
    %v4501 = vsel %vm4489, %v4483, %v4500
    %v4502 = vsel %vm4488, %v4499, %v4501
    %v4503 = vshll.u32 %v4463, 8
    %v4504 = vmul.u32.u64.compose %v4503, %v4502
    %v4505 = vextract.low.u32 %v4504
    %v4506 = vextract.high.u32 %v4504
    %v4507 = vmul.u32.u64.compose %v4503, %v4498
    %v4508 = vextract.low.u32 %v4507
    %v4509 = vextract.high.u32 %v4507
    %v4510 = vmul.u32 %v4503, %v4494
    %v4511 = vadd.s32 %v4506, %v4508
    %vm4512 = vc.u32 %v4506, %v4508
    %v4513 = vadd.s32 %v4509, 1
    %v4514 = vsel %vm4512, %v4513, %v4509
    %v4515 = vadd.s32 %v4510, %v4514
    %v4516 = vadd.s32 %v4515, 536870912
    %v4517 = vshrl.u32 %v4516, 30
    %v4518 = vshll.u32 %v4517, 30
    %v4519 = vsub.s32 %v4515, %v4518
    %vm4520 = vcmp.lt.s32.totalorder %v4519, 0
    %v4521 = vsub.s32 0, %v4519
    %v4522 = vsel %vm4520, %v4521, %v4519
    %v4523 = vclz %v4522
    %v4524 = vsub.s32 %v4523, 2
    %vm4525 = vcmp.gt.s32.totalorder 0, %v4524
    %v4526 = vsel %vm4525, 0, %v4524
    %v4527 = vsub.s32 32, %v4526
    %v4528 = vshll.u32 %v4519, %v4526
    %v4529 = vshrl.u32 %v4511, %v4527
    %v4530 = vor.u32 %v4528, %v4529
    %v4531 = vsub.s32 4294967266, %v4526
    %v4532 = vadd.s32 %v4531, 127
    %v4533 = vshll.u32 %v4532, 23
    %v4534 = vor.u32 4788187, %v4533
    %v4535 = vand.u32 2147483647, %v4534
    %v4537 = vcvt.s32.f32 %v4530
    %v4538 = vmul.f32 %v4537, %v4535
    %v4539 = vxor.u32 %v4538, 2147483648
    %v4540 = vsel %vm4457, %v4539, %v4538
    %v4541 = vsub.s32 4, %v4517
    %v4542 = vsel %vm4457, %v4541, %v4517
    %v4543 = vsel %vm4456, %v65, %v4540
    %v4544 = vsel %vm4456, 0, %v4542
    %v4545 = vcosq.f32.pop %v4543
    %v4546 = vsinq.f32.pop %v4543
    %vm4547 = vweird.f32 %v65
    %v4548 = vadd.s32 %v4544, 3
    %v4549 = vand.u32 %v4548, 3
    %vm4550 = vcmp.lt.s32.totalorder %v4549, 2
    %vm4551 = vcmp.eq.s32.totalorder %v4549, 0
    %v4552 = vxor.u32 %v4546, 2147483648
    %v4553 = vsel %vm4551, %v4545, %v4552
    %vm4554 = vcmp.eq.s32.totalorder %v4549, 2
    %v4555 = vxor.u32 %v4545, 2147483648
    %v4556 = vsel %vm4554, %v4555, %v4546
    %v4557 = vsel %vm4550, %v4553, %v4556
    %v4558 = vsel %vm4547, nan, %v4557
    %v4559 = vand.u32 2147483647, %v66
    %vm4560 = vcmp.le.f32.partialorder %v4559, 0.7853982
    %vm4561 = vcmp.lt.s32.totalorder %v66, 0
    %v4562 = vand.u32 %v66, 2139095040
    %v4563 = vshrl.u32 %v4562, 23
    %v4564 = vsub.s32 %v4563, 127
    %v4565 = vand.u32 2147483647, %v66
    %v4566 = vand.u32 %v4565, 8388607
    %v4567 = vor.u32 %v4566, 8388608
    %v4568 = vsub.s32 0, %v4567
    %v4569 = vadd.s32 %v4564, 1
    %vm4570 = vcmp.gt.s32.totalorder %v4569, 0
    %v4571 = vsel %vm4570, %v4569, 0
    %v4572 = vshrl.u32 %v4571, 5
    %v4573 = vand.u32 %v4571, 31
    %v4574 = vsub.s32 32, %v4573
    %v4575 = vshrl.u32 683565275, %v4574
    %v4576 = vshll.u32 683565275, %v4573
    %v4577 = vshrl.u32 2475754826, %v4574
    %v4578 = vor.u32 %v4576, %v4577
    %v4579 = vshll.u32 2475754826, %v4573
    %v4580 = vshrl.u32 2131351028, %v4574
    %v4581 = vor.u32 %v4579, %v4580
    %v4582 = vshll.u32 2131351028, %v4573
    %v4583 = vshrl.u32 2102212464, %v4574
    %v4584 = vor.u32 %v4582, %v4583
    %v4585 = vshll.u32 2102212464, %v4573
    %v4586 = vshrl.u32 920167782, %v4574
    %v4587 = vor.u32 %v4585, %v4586
    %v4588 = vshll.u32 920167782, %v4573
    %v4589 = vshrl.u32 1326507024, %v4574
    %v4590 = vor.u32 %v4588, %v4589
    %vm4591 = vcmp.lt.s32.totalorder %v4572, 1
    %vm4592 = vcmp.lt.s32.totalorder %v4572, 2
    %vm4593 = vcmp.lt.s32.totalorder %v4572, 3
    %vm4594 = vcmp.lt.s32.totalorder %v4572, 4
    %v4595 = vsel %vm4591, %v4575, %v4578
    %v4596 = vsel %vm4594, %v4584, 2102212464
    %v4597 = vsel %vm4593, %v4581, %v4596
    %v4598 = vsel %vm4592, %v4595, %v4597
    %v4599 = vsel %vm4591, %v4578, %v4581
    %v4600 = vsel %vm4594, %v4587, 920167782
    %v4601 = vsel %vm4593, %v4584, %v4600
    %v4602 = vsel %vm4592, %v4599, %v4601
    %v4603 = vsel %vm4591, %v4581, %v4584
    %v4604 = vsel %vm4594, %v4590, 1326507024
    %v4605 = vsel %vm4593, %v4587, %v4604
    %v4606 = vsel %vm4592, %v4603, %v4605
    %v4607 = vshll.u32 %v4567, 8
    %v4608 = vmul.u32.u64.compose %v4607, %v4606
    %v4609 = vextract.low.u32 %v4608
    %v4610 = vextract.high.u32 %v4608
    %v4611 = vmul.u32.u64.compose %v4607, %v4602
    %v4612 = vextract.low.u32 %v4611
    %v4613 = vextract.high.u32 %v4611
    %v4614 = vmul.u32 %v4607, %v4598
    %v4615 = vadd.s32 %v4610, %v4612
    %vm4616 = vc.u32 %v4610, %v4612
    %v4617 = vadd.s32 %v4613, 1
    %v4618 = vsel %vm4616, %v4617, %v4613
    %v4619 = vadd.s32 %v4614, %v4618
    %v4620 = vadd.s32 %v4619, 536870912
    %v4621 = vshrl.u32 %v4620, 30
    %v4622 = vshll.u32 %v4621, 30
    %v4623 = vsub.s32 %v4619, %v4622
    %vm4624 = vcmp.lt.s32.totalorder %v4623, 0
    %v4625 = vsub.s32 0, %v4623
    %v4626 = vsel %vm4624, %v4625, %v4623
    %v4627 = vclz %v4626
    %v4628 = vsub.s32 %v4627, 2
    %vm4629 = vcmp.gt.s32.totalorder 0, %v4628
    %v4630 = vsel %vm4629, 0, %v4628
    %v4631 = vsub.s32 32, %v4630
    %v4632 = vshll.u32 %v4623, %v4630
    %v4633 = vshrl.u32 %v4615, %v4631
    %v4634 = vor.u32 %v4632, %v4633
    %v4635 = vsub.s32 4294967266, %v4630
    %v4636 = vadd.s32 %v4635, 127
    %v4637 = vshll.u32 %v4636, 23
    %v4638 = vor.u32 4788187, %v4637
    %v4639 = vand.u32 2147483647, %v4638
    %v4641 = vcvt.s32.f32 %v4634
    %v4642 = vmul.f32 %v4641, %v4639
    %v4643 = vxor.u32 %v4642, 2147483648
    %v4644 = vsel %vm4561, %v4643, %v4642
    %v4645 = vsub.s32 4, %v4621
    %v4646 = vsel %vm4561, %v4645, %v4621
    %v4647 = vsel %vm4560, %v66, %v4644
    %v4648 = vsel %vm4560, 0, %v4646
    %v4649 = vcosq.f32.pop %v4647
    %v4650 = vsinq.f32.pop %v4647
    %vm4651 = vweird.f32 %v66
    %v4652 = vadd.s32 %v4648, 3
    %v4653 = vand.u32 %v4652, 3
    %vm4654 = vcmp.lt.s32.totalorder %v4653, 2
    %vm4655 = vcmp.eq.s32.totalorder %v4653, 0
    %v4656 = vxor.u32 %v4650, 2147483648
    %v4657 = vsel %vm4655, %v4649, %v4656
    %vm4658 = vcmp.eq.s32.totalorder %v4653, 2
    %v4659 = vxor.u32 %v4649, 2147483648
    %v4660 = vsel %vm4658, %v4659, %v4650
    %v4661 = vsel %vm4654, %v4657, %v4660
    %v4662 = vsel %vm4651, nan, %v4661
    %v4663 = vand.u32 2147483647, %v67
    %vm4664 = vcmp.le.f32.partialorder %v4663, 0.7853982
    %vm4665 = vcmp.lt.s32.totalorder %v67, 0
    %v4666 = vand.u32 %v67, 2139095040
    %v4667 = vshrl.u32 %v4666, 23
    %v4668 = vsub.s32 %v4667, 127
    %v4669 = vand.u32 2147483647, %v67
    %v4670 = vand.u32 %v4669, 8388607
    %v4671 = vor.u32 %v4670, 8388608
    %v4672 = vsub.s32 0, %v4671
    %v4673 = vadd.s32 %v4668, 1
    %vm4674 = vcmp.gt.s32.totalorder %v4673, 0
    %v4675 = vsel %vm4674, %v4673, 0
    %v4676 = vshrl.u32 %v4675, 5
    %v4677 = vand.u32 %v4675, 31
    %v4678 = vsub.s32 32, %v4677
    %v4679 = vshrl.u32 683565275, %v4678
    %v4680 = vshll.u32 683565275, %v4677
    %v4681 = vshrl.u32 2475754826, %v4678
    %v4682 = vor.u32 %v4680, %v4681
    %v4683 = vshll.u32 2475754826, %v4677
    %v4684 = vshrl.u32 2131351028, %v4678
    %v4685 = vor.u32 %v4683, %v4684
    %v4686 = vshll.u32 2131351028, %v4677
    %v4687 = vshrl.u32 2102212464, %v4678
    %v4688 = vor.u32 %v4686, %v4687
    %v4689 = vshll.u32 2102212464, %v4677
    %v4690 = vshrl.u32 920167782, %v4678
    %v4691 = vor.u32 %v4689, %v4690
    %v4692 = vshll.u32 920167782, %v4677
    %v4693 = vshrl.u32 1326507024, %v4678
    %v4694 = vor.u32 %v4692, %v4693
    %vm4695 = vcmp.lt.s32.totalorder %v4676, 1
    %vm4696 = vcmp.lt.s32.totalorder %v4676, 2
    %vm4697 = vcmp.lt.s32.totalorder %v4676, 3
    %vm4698 = vcmp.lt.s32.totalorder %v4676, 4
    %v4699 = vsel %vm4695, %v4679, %v4682
    %v4700 = vsel %vm4698, %v4688, 2102212464
    %v4701 = vsel %vm4697, %v4685, %v4700
    %v4702 = vsel %vm4696, %v4699, %v4701
    %v4703 = vsel %vm4695, %v4682, %v4685
    %v4704 = vsel %vm4698, %v4691, 920167782
    %v4705 = vsel %vm4697, %v4688, %v4704
    %v4706 = vsel %vm4696, %v4703, %v4705
    %v4707 = vsel %vm4695, %v4685, %v4688
    %v4708 = vsel %vm4698, %v4694, 1326507024
    %v4709 = vsel %vm4697, %v4691, %v4708
    %v4710 = vsel %vm4696, %v4707, %v4709
    %v4711 = vshll.u32 %v4671, 8
    %v4712 = vmul.u32.u64.compose %v4711, %v4710
    %v4713 = vextract.low.u32 %v4712
    %v4714 = vextract.high.u32 %v4712
    %v4715 = vmul.u32.u64.compose %v4711, %v4706
    %v4716 = vextract.low.u32 %v4715
    %v4717 = vextract.high.u32 %v4715
    %v4718 = vmul.u32 %v4711, %v4702
    %v4719 = vadd.s32 %v4714, %v4716
    %vm4720 = vc.u32 %v4714, %v4716
    %v4721 = vadd.s32 %v4717, 1
    %v4722 = vsel %vm4720, %v4721, %v4717
    %v4723 = vadd.s32 %v4718, %v4722
    %v4724 = vadd.s32 %v4723, 536870912
    %v4725 = vshrl.u32 %v4724, 30
    %v4726 = vshll.u32 %v4725, 30
    %v4727 = vsub.s32 %v4723, %v4726
    %vm4728 = vcmp.lt.s32.totalorder %v4727, 0
    %v4729 = vsub.s32 0, %v4727
    %v4730 = vsel %vm4728, %v4729, %v4727
    %v4731 = vclz %v4730
    %v4732 = vsub.s32 %v4731, 2
    %vm4733 = vcmp.gt.s32.totalorder 0, %v4732
    %v4734 = vsel %vm4733, 0, %v4732
    %v4735 = vsub.s32 32, %v4734
    %v4736 = vshll.u32 %v4727, %v4734
    %v4737 = vshrl.u32 %v4719, %v4735
    %v4738 = vor.u32 %v4736, %v4737
    %v4739 = vsub.s32 4294967266, %v4734
    %v4740 = vadd.s32 %v4739, 127
    %v4741 = vshll.u32 %v4740, 23
    %v4742 = vor.u32 4788187, %v4741
    %v4743 = vand.u32 2147483647, %v4742
    %v4745 = vcvt.s32.f32 %v4738
    %v4746 = vmul.f32 %v4745, %v4743
    %v4747 = vxor.u32 %v4746, 2147483648
    %v4748 = vsel %vm4665, %v4747, %v4746
    %v4749 = vsub.s32 4, %v4725
    %v4750 = vsel %vm4665, %v4749, %v4725
    %v4751 = vsel %vm4664, %v67, %v4748
    %v4752 = vsel %vm4664, 0, %v4750
    %v4753 = vcosq.f32.pop %v4751
    %v4754 = vsinq.f32.pop %v4751
    %vm4755 = vweird.f32 %v67
    %v4756 = vadd.s32 %v4752, 3
    %v4757 = vand.u32 %v4756, 3
    %vm4758 = vcmp.lt.s32.totalorder %v4757, 2
    %vm4759 = vcmp.eq.s32.totalorder %v4757, 0
    %v4760 = vxor.u32 %v4754, 2147483648
    %v4761 = vsel %vm4759, %v4753, %v4760
    %vm4762 = vcmp.eq.s32.totalorder %v4757, 2
    %v4763 = vxor.u32 %v4753, 2147483648
    %v4764 = vsel %vm4762, %v4763, %v4754
    %v4765 = vsel %vm4758, %v4761, %v4764
    %v4766 = vsel %vm4755, nan, %v4765
    %v4767 = vand.u32 2147483647, %v68
    %vm4768 = vcmp.le.f32.partialorder %v4767, 0.7853982
    %vm4769 = vcmp.lt.s32.totalorder %v68, 0
    %v4770 = vand.u32 %v68, 2139095040
    %v4771 = vshrl.u32 %v4770, 23
    %v4772 = vsub.s32 %v4771, 127
    %v4773 = vand.u32 2147483647, %v68
    %v4774 = vand.u32 %v4773, 8388607
    %v4775 = vor.u32 %v4774, 8388608
    %v4776 = vsub.s32 0, %v4775
    %v4777 = vadd.s32 %v4772, 1
    %vm4778 = vcmp.gt.s32.totalorder %v4777, 0
    %v4779 = vsel %vm4778, %v4777, 0
    %v4780 = vshrl.u32 %v4779, 5
    %v4781 = vand.u32 %v4779, 31
    %v4782 = vsub.s32 32, %v4781
    %v4783 = vshrl.u32 683565275, %v4782
    %v4784 = vshll.u32 683565275, %v4781
    %v4785 = vshrl.u32 2475754826, %v4782
    %v4786 = vor.u32 %v4784, %v4785
    %v4787 = vshll.u32 2475754826, %v4781
    %v4788 = vshrl.u32 2131351028, %v4782
    %v4789 = vor.u32 %v4787, %v4788
    %v4790 = vshll.u32 2131351028, %v4781
    %v4791 = vshrl.u32 2102212464, %v4782
    %v4792 = vor.u32 %v4790, %v4791
    %v4793 = vshll.u32 2102212464, %v4781
    %v4794 = vshrl.u32 920167782, %v4782
    %v4795 = vor.u32 %v4793, %v4794
    %v4796 = vshll.u32 920167782, %v4781
    %v4797 = vshrl.u32 1326507024, %v4782
    %v4798 = vor.u32 %v4796, %v4797
    %vm4799 = vcmp.lt.s32.totalorder %v4780, 1
    %vm4800 = vcmp.lt.s32.totalorder %v4780, 2
    %vm4801 = vcmp.lt.s32.totalorder %v4780, 3
    %vm4802 = vcmp.lt.s32.totalorder %v4780, 4
    %v4803 = vsel %vm4799, %v4783, %v4786
    %v4804 = vsel %vm4802, %v4792, 2102212464
    %v4805 = vsel %vm4801, %v4789, %v4804
    %v4806 = vsel %vm4800, %v4803, %v4805
    %v4807 = vsel %vm4799, %v4786, %v4789
    %v4808 = vsel %vm4802, %v4795, 920167782
    %v4809 = vsel %vm4801, %v4792, %v4808
    %v4810 = vsel %vm4800, %v4807, %v4809
    %v4811 = vsel %vm4799, %v4789, %v4792
    %v4812 = vsel %vm4802, %v4798, 1326507024
    %v4813 = vsel %vm4801, %v4795, %v4812
    %v4814 = vsel %vm4800, %v4811, %v4813
    %v4815 = vshll.u32 %v4775, 8
    %v4816 = vmul.u32.u64.compose %v4815, %v4814
    %v4817 = vextract.low.u32 %v4816
    %v4818 = vextract.high.u32 %v4816
    %v4819 = vmul.u32.u64.compose %v4815, %v4810
    %v4820 = vextract.low.u32 %v4819
    %v4821 = vextract.high.u32 %v4819
    %v4822 = vmul.u32 %v4815, %v4806
    %v4823 = vadd.s32 %v4818, %v4820
    %vm4824 = vc.u32 %v4818, %v4820
    %v4825 = vadd.s32 %v4821, 1
    %v4826 = vsel %vm4824, %v4825, %v4821
    %v4827 = vadd.s32 %v4822, %v4826
    %v4828 = vadd.s32 %v4827, 536870912
    %v4829 = vshrl.u32 %v4828, 30
    %v4830 = vshll.u32 %v4829, 30
    %v4831 = vsub.s32 %v4827, %v4830
    %vm4832 = vcmp.lt.s32.totalorder %v4831, 0
    %v4833 = vsub.s32 0, %v4831
    %v4834 = vsel %vm4832, %v4833, %v4831
    %v4835 = vclz %v4834
    %v4836 = vsub.s32 %v4835, 2
    %vm4837 = vcmp.gt.s32.totalorder 0, %v4836
    %v4838 = vsel %vm4837, 0, %v4836
    %v4839 = vsub.s32 32, %v4838
    %v4840 = vshll.u32 %v4831, %v4838
    %v4841 = vshrl.u32 %v4823, %v4839
    %v4842 = vor.u32 %v4840, %v4841
    %v4843 = vsub.s32 4294967266, %v4838
    %v4844 = vadd.s32 %v4843, 127
    %v4845 = vshll.u32 %v4844, 23
    %v4846 = vor.u32 4788187, %v4845
    %v4847 = vand.u32 2147483647, %v4846
    %v4849 = vcvt.s32.f32 %v4842
    %v4850 = vmul.f32 %v4849, %v4847
    %v4851 = vxor.u32 %v4850, 2147483648
    %v4852 = vsel %vm4769, %v4851, %v4850
    %v4853 = vsub.s32 4, %v4829
    %v4854 = vsel %vm4769, %v4853, %v4829
    %v4855 = vsel %vm4768, %v68, %v4852
    %v4856 = vsel %vm4768, 0, %v4854
    %v4857 = vcosq.f32.pop %v4855
    %v4858 = vsinq.f32.pop %v4855
    %vm4859 = vweird.f32 %v68
    %v4860 = vadd.s32 %v4856, 3
    %v4861 = vand.u32 %v4860, 3
    %vm4862 = vcmp.lt.s32.totalorder %v4861, 2
    %vm4863 = vcmp.eq.s32.totalorder %v4861, 0
    %v4864 = vxor.u32 %v4858, 2147483648
    %v4865 = vsel %vm4863, %v4857, %v4864
    %vm4866 = vcmp.eq.s32.totalorder %v4861, 2
    %v4867 = vxor.u32 %v4857, 2147483648
    %v4868 = vsel %vm4866, %v4867, %v4858
    %v4869 = vsel %vm4862, %v4865, %v4868
    %v4870 = vsel %vm4859, nan, %v4869
    %v4871 = vand.u32 2147483647, %v69
    %vm4872 = vcmp.le.f32.partialorder %v4871, 0.7853982
    %vm4873 = vcmp.lt.s32.totalorder %v69, 0
    %v4874 = vand.u32 %v69, 2139095040
    %v4875 = vshrl.u32 %v4874, 23
    %v4876 = vsub.s32 %v4875, 127
    %v4877 = vand.u32 2147483647, %v69
    %v4878 = vand.u32 %v4877, 8388607
    %v4879 = vor.u32 %v4878, 8388608
    %v4880 = vsub.s32 0, %v4879
    %v4881 = vadd.s32 %v4876, 1
    %vm4882 = vcmp.gt.s32.totalorder %v4881, 0
    %v4883 = vsel %vm4882, %v4881, 0
    %v4884 = vshrl.u32 %v4883, 5
    %v4885 = vand.u32 %v4883, 31
    %v4886 = vsub.s32 32, %v4885
    %v4887 = vshrl.u32 683565275, %v4886
    %v4888 = vshll.u32 683565275, %v4885
    %v4889 = vshrl.u32 2475754826, %v4886
    %v4890 = vor.u32 %v4888, %v4889
    %v4891 = vshll.u32 2475754826, %v4885
    %v4892 = vshrl.u32 2131351028, %v4886
    %v4893 = vor.u32 %v4891, %v4892
    %v4894 = vshll.u32 2131351028, %v4885
    %v4895 = vshrl.u32 2102212464, %v4886
    %v4896 = vor.u32 %v4894, %v4895
    %v4897 = vshll.u32 2102212464, %v4885
    %v4898 = vshrl.u32 920167782, %v4886
    %v4899 = vor.u32 %v4897, %v4898
    %v4900 = vshll.u32 920167782, %v4885
    %v4901 = vshrl.u32 1326507024, %v4886
    %v4902 = vor.u32 %v4900, %v4901
    %vm4903 = vcmp.lt.s32.totalorder %v4884, 1
    %vm4904 = vcmp.lt.s32.totalorder %v4884, 2
    %vm4905 = vcmp.lt.s32.totalorder %v4884, 3
    %vm4906 = vcmp.lt.s32.totalorder %v4884, 4
    %v4907 = vsel %vm4903, %v4887, %v4890
    %v4908 = vsel %vm4906, %v4896, 2102212464
    %v4909 = vsel %vm4905, %v4893, %v4908
    %v4910 = vsel %vm4904, %v4907, %v4909
    %v4911 = vsel %vm4903, %v4890, %v4893
    %v4912 = vsel %vm4906, %v4899, 920167782
    %v4913 = vsel %vm4905, %v4896, %v4912
    %v4914 = vsel %vm4904, %v4911, %v4913
    %v4915 = vsel %vm4903, %v4893, %v4896
    %v4916 = vsel %vm4906, %v4902, 1326507024
    %v4917 = vsel %vm4905, %v4899, %v4916
    %v4918 = vsel %vm4904, %v4915, %v4917
    %v4919 = vshll.u32 %v4879, 8
    %v4920 = vmul.u32.u64.compose %v4919, %v4918
    %v4921 = vextract.low.u32 %v4920
    %v4922 = vextract.high.u32 %v4920
    %v4923 = vmul.u32.u64.compose %v4919, %v4914
    %v4924 = vextract.low.u32 %v4923
    %v4925 = vextract.high.u32 %v4923
    %v4926 = vmul.u32 %v4919, %v4910
    %v4927 = vadd.s32 %v4922, %v4924
    %vm4928 = vc.u32 %v4922, %v4924
    %v4929 = vadd.s32 %v4925, 1
    %v4930 = vsel %vm4928, %v4929, %v4925
    %v4931 = vadd.s32 %v4926, %v4930
    %v4932 = vadd.s32 %v4931, 536870912
    %v4933 = vshrl.u32 %v4932, 30
    %v4934 = vshll.u32 %v4933, 30
    %v4935 = vsub.s32 %v4931, %v4934
    %vm4936 = vcmp.lt.s32.totalorder %v4935, 0
    %v4937 = vsub.s32 0, %v4935
    %v4938 = vsel %vm4936, %v4937, %v4935
    %v4939 = vclz %v4938
    %v4940 = vsub.s32 %v4939, 2
    %vm4941 = vcmp.gt.s32.totalorder 0, %v4940
    %v4942 = vsel %vm4941, 0, %v4940
    %v4943 = vsub.s32 32, %v4942
    %v4944 = vshll.u32 %v4935, %v4942
    %v4945 = vshrl.u32 %v4927, %v4943
    %v4946 = vor.u32 %v4944, %v4945
    %v4947 = vsub.s32 4294967266, %v4942
    %v4948 = vadd.s32 %v4947, 127
    %v4949 = vshll.u32 %v4948, 23
    %v4950 = vor.u32 4788187, %v4949
    %v4951 = vand.u32 2147483647, %v4950
    %v4953 = vcvt.s32.f32 %v4946
    %v4954 = vmul.f32 %v4953, %v4951
    %v4955 = vxor.u32 %v4954, 2147483648
    %v4956 = vsel %vm4873, %v4955, %v4954
    %v4957 = vsub.s32 4, %v4933
    %v4958 = vsel %vm4873, %v4957, %v4933
    %v4959 = vsel %vm4872, %v69, %v4956
    %v4960 = vsel %vm4872, 0, %v4958
    %v4961 = vcosq.f32.pop %v4959
    %v4962 = vsinq.f32.pop %v4959
    %vm4963 = vweird.f32 %v69
    %v4964 = vadd.s32 %v4960, 3
    %v4965 = vand.u32 %v4964, 3
    %vm4966 = vcmp.lt.s32.totalorder %v4965, 2
    %vm4967 = vcmp.eq.s32.totalorder %v4965, 0
    %v4968 = vxor.u32 %v4962, 2147483648
    %v4969 = vsel %vm4967, %v4961, %v4968
    %vm4970 = vcmp.eq.s32.totalorder %v4965, 2
    %v4971 = vxor.u32 %v4961, 2147483648
    %v4972 = vsel %vm4970, %v4971, %v4962
    %v4973 = vsel %vm4966, %v4969, %v4972
    %v4974 = vsel %vm4963, nan, %v4973
    %v4975 = vand.u32 2147483647, %v70
    %vm4976 = vcmp.le.f32.partialorder %v4975, 0.7853982
    %vm4977 = vcmp.lt.s32.totalorder %v70, 0
    %v4978 = vand.u32 %v70, 2139095040
    %v4979 = vshrl.u32 %v4978, 23
    %v4980 = vsub.s32 %v4979, 127
    %v4981 = vand.u32 2147483647, %v70
    %v4982 = vand.u32 %v4981, 8388607
    %v4983 = vor.u32 %v4982, 8388608
    %v4984 = vsub.s32 0, %v4983
    %v4985 = vadd.s32 %v4980, 1
    %vm4986 = vcmp.gt.s32.totalorder %v4985, 0
    %v4987 = vsel %vm4986, %v4985, 0
    %v4988 = vshrl.u32 %v4987, 5
    %v4989 = vand.u32 %v4987, 31
    %v4990 = vsub.s32 32, %v4989
    %v4991 = vshrl.u32 683565275, %v4990
    %v4992 = vshll.u32 683565275, %v4989
    %v4993 = vshrl.u32 2475754826, %v4990
    %v4994 = vor.u32 %v4992, %v4993
    %v4995 = vshll.u32 2475754826, %v4989
    %v4996 = vshrl.u32 2131351028, %v4990
    %v4997 = vor.u32 %v4995, %v4996
    %v4998 = vshll.u32 2131351028, %v4989
    %v4999 = vshrl.u32 2102212464, %v4990
    %v5000 = vor.u32 %v4998, %v4999
    %v5001 = vshll.u32 2102212464, %v4989
    %v5002 = vshrl.u32 920167782, %v4990
    %v5003 = vor.u32 %v5001, %v5002
    %v5004 = vshll.u32 920167782, %v4989
    %v5005 = vshrl.u32 1326507024, %v4990
    %v5006 = vor.u32 %v5004, %v5005
    %vm5007 = vcmp.lt.s32.totalorder %v4988, 1
    %vm5008 = vcmp.lt.s32.totalorder %v4988, 2
    %vm5009 = vcmp.lt.s32.totalorder %v4988, 3
    %vm5010 = vcmp.lt.s32.totalorder %v4988, 4
    %v5011 = vsel %vm5007, %v4991, %v4994
    %v5012 = vsel %vm5010, %v5000, 2102212464
    %v5013 = vsel %vm5009, %v4997, %v5012
    %v5014 = vsel %vm5008, %v5011, %v5013
    %v5015 = vsel %vm5007, %v4994, %v4997
    %v5016 = vsel %vm5010, %v5003, 920167782
    %v5017 = vsel %vm5009, %v5000, %v5016
    %v5018 = vsel %vm5008, %v5015, %v5017
    %v5019 = vsel %vm5007, %v4997, %v5000
    %v5020 = vsel %vm5010, %v5006, 1326507024
    %v5021 = vsel %vm5009, %v5003, %v5020
    %v5022 = vsel %vm5008, %v5019, %v5021
    %v5023 = vshll.u32 %v4983, 8
    %v5024 = vmul.u32.u64.compose %v5023, %v5022
    %v5025 = vextract.low.u32 %v5024
    %v5026 = vextract.high.u32 %v5024
    %v5027 = vmul.u32.u64.compose %v5023, %v5018
    %v5028 = vextract.low.u32 %v5027
    %v5029 = vextract.high.u32 %v5027
    %v5030 = vmul.u32 %v5023, %v5014
    %v5031 = vadd.s32 %v5026, %v5028
    %vm5032 = vc.u32 %v5026, %v5028
    %v5033 = vadd.s32 %v5029, 1
    %v5034 = vsel %vm5032, %v5033, %v5029
    %v5035 = vadd.s32 %v5030, %v5034
    %v5036 = vadd.s32 %v5035, 536870912
    %v5037 = vshrl.u32 %v5036, 30
    %v5038 = vshll.u32 %v5037, 30
    %v5039 = vsub.s32 %v5035, %v5038
    %vm5040 = vcmp.lt.s32.totalorder %v5039, 0
    %v5041 = vsub.s32 0, %v5039
    %v5042 = vsel %vm5040, %v5041, %v5039
    %v5043 = vclz %v5042
    %v5044 = vsub.s32 %v5043, 2
    %vm5045 = vcmp.gt.s32.totalorder 0, %v5044
    %v5046 = vsel %vm5045, 0, %v5044
    %v5047 = vsub.s32 32, %v5046
    %v5048 = vshll.u32 %v5039, %v5046
    %v5049 = vshrl.u32 %v5031, %v5047
    %v5050 = vor.u32 %v5048, %v5049
    %v5051 = vsub.s32 4294967266, %v5046
    %v5052 = vadd.s32 %v5051, 127
    %v5053 = vshll.u32 %v5052, 23
    %v5054 = vor.u32 4788187, %v5053
    %v5055 = vand.u32 2147483647, %v5054
    %v5057 = vcvt.s32.f32 %v5050
    %v5058 = vmul.f32 %v5057, %v5055
    %v5059 = vxor.u32 %v5058, 2147483648
    %v5060 = vsel %vm4977, %v5059, %v5058
    %v5061 = vsub.s32 4, %v5037
    %v5062 = vsel %vm4977, %v5061, %v5037
    %v5063 = vsel %vm4976, %v70, %v5060
    %v5064 = vsel %vm4976, 0, %v5062
    %v5065 = vcosq.f32.pop %v5063
    %v5066 = vsinq.f32.pop %v5063
    %vm5067 = vweird.f32 %v70
    %v5068 = vadd.s32 %v5064, 3
    %v5069 = vand.u32 %v5068, 3
    %vm5070 = vcmp.lt.s32.totalorder %v5069, 2
    %vm5071 = vcmp.eq.s32.totalorder %v5069, 0
    %v5072 = vxor.u32 %v5066, 2147483648
    %v5073 = vsel %vm5071, %v5065, %v5072
    %vm5074 = vcmp.eq.s32.totalorder %v5069, 2
    %v5075 = vxor.u32 %v5065, 2147483648
    %v5076 = vsel %vm5074, %v5075, %v5066
    %v5077 = vsel %vm5070, %v5073, %v5076
    %v5078 = vsel %vm5067, nan, %v5077
    %v5079 = vand.u32 2147483647, %v71
    %vm5080 = vcmp.le.f32.partialorder %v5079, 0.7853982
    %vm5081 = vcmp.lt.s32.totalorder %v71, 0
    %v5082 = vand.u32 %v71, 2139095040
    %v5083 = vshrl.u32 %v5082, 23
    %v5084 = vsub.s32 %v5083, 127
    %v5085 = vand.u32 2147483647, %v71
    %v5086 = vand.u32 %v5085, 8388607
    %v5087 = vor.u32 %v5086, 8388608
    %v5088 = vsub.s32 0, %v5087
    %v5089 = vadd.s32 %v5084, 1
    %vm5090 = vcmp.gt.s32.totalorder %v5089, 0
    %v5091 = vsel %vm5090, %v5089, 0
    %v5092 = vshrl.u32 %v5091, 5
    %v5093 = vand.u32 %v5091, 31
    %v5094 = vsub.s32 32, %v5093
    %v5095 = vshrl.u32 683565275, %v5094
    %v5096 = vshll.u32 683565275, %v5093
    %v5097 = vshrl.u32 2475754826, %v5094
    %v5098 = vor.u32 %v5096, %v5097
    %v5099 = vshll.u32 2475754826, %v5093
    %v5100 = vshrl.u32 2131351028, %v5094
    %v5101 = vor.u32 %v5099, %v5100
    %v5102 = vshll.u32 2131351028, %v5093
    %v5103 = vshrl.u32 2102212464, %v5094
    %v5104 = vor.u32 %v5102, %v5103
    %v5105 = vshll.u32 2102212464, %v5093
    %v5106 = vshrl.u32 920167782, %v5094
    %v5107 = vor.u32 %v5105, %v5106
    %v5108 = vshll.u32 920167782, %v5093
    %v5109 = vshrl.u32 1326507024, %v5094
    %v5110 = vor.u32 %v5108, %v5109
    %vm5111 = vcmp.lt.s32.totalorder %v5092, 1
    %vm5112 = vcmp.lt.s32.totalorder %v5092, 2
    %vm5113 = vcmp.lt.s32.totalorder %v5092, 3
    %vm5114 = vcmp.lt.s32.totalorder %v5092, 4
    %v5115 = vsel %vm5111, %v5095, %v5098
    %v5116 = vsel %vm5114, %v5104, 2102212464
    %v5117 = vsel %vm5113, %v5101, %v5116
    %v5118 = vsel %vm5112, %v5115, %v5117
    %v5119 = vsel %vm5111, %v5098, %v5101
    %v5120 = vsel %vm5114, %v5107, 920167782
    %v5121 = vsel %vm5113, %v5104, %v5120
    %v5122 = vsel %vm5112, %v5119, %v5121
    %v5123 = vsel %vm5111, %v5101, %v5104
    %v5124 = vsel %vm5114, %v5110, 1326507024
    %v5125 = vsel %vm5113, %v5107, %v5124
    %v5126 = vsel %vm5112, %v5123, %v5125
    %v5127 = vshll.u32 %v5087, 8
    %v5128 = vmul.u32.u64.compose %v5127, %v5126
    %v5129 = vextract.low.u32 %v5128
    %v5130 = vextract.high.u32 %v5128
    %v5131 = vmul.u32.u64.compose %v5127, %v5122
    %v5132 = vextract.low.u32 %v5131
    %v5133 = vextract.high.u32 %v5131
    %v5134 = vmul.u32 %v5127, %v5118
    %v5135 = vadd.s32 %v5130, %v5132
    %vm5136 = vc.u32 %v5130, %v5132
    %v5137 = vadd.s32 %v5133, 1
    %v5138 = vsel %vm5136, %v5137, %v5133
    %v5139 = vadd.s32 %v5134, %v5138
    %v5140 = vadd.s32 %v5139, 536870912
    %v5141 = vshrl.u32 %v5140, 30
    %v5142 = vshll.u32 %v5141, 30
    %v5143 = vsub.s32 %v5139, %v5142
    %vm5144 = vcmp.lt.s32.totalorder %v5143, 0
    %v5145 = vsub.s32 0, %v5143
    %v5146 = vsel %vm5144, %v5145, %v5143
    %v5147 = vclz %v5146
    %v5148 = vsub.s32 %v5147, 2
    %vm5149 = vcmp.gt.s32.totalorder 0, %v5148
    %v5150 = vsel %vm5149, 0, %v5148
    %v5151 = vsub.s32 32, %v5150
    %v5152 = vshll.u32 %v5143, %v5150
    %v5153 = vshrl.u32 %v5135, %v5151
    %v5154 = vor.u32 %v5152, %v5153
    %v5155 = vsub.s32 4294967266, %v5150
    %v5156 = vadd.s32 %v5155, 127
    %v5157 = vshll.u32 %v5156, 23
    %v5158 = vor.u32 4788187, %v5157
    %v5159 = vand.u32 2147483647, %v5158
    %v5161 = vcvt.s32.f32 %v5154
    %v5162 = vmul.f32 %v5161, %v5159
    %v5163 = vxor.u32 %v5162, 2147483648
    %v5164 = vsel %vm5081, %v5163, %v5162
    %v5165 = vsub.s32 4, %v5141
    %v5166 = vsel %vm5081, %v5165, %v5141
    %v5167 = vsel %vm5080, %v71, %v5164
    %v5168 = vsel %vm5080, 0, %v5166
    %v5169 = vcosq.f32.pop %v5167
    %v5170 = vsinq.f32.pop %v5167
    %vm5171 = vweird.f32 %v71
    %v5172 = vadd.s32 %v5168, 3
    %v5173 = vand.u32 %v5172, 3
    %vm5174 = vcmp.lt.s32.totalorder %v5173, 2
    %vm5175 = vcmp.eq.s32.totalorder %v5173, 0
    %v5176 = vxor.u32 %v5170, 2147483648
    %v5177 = vsel %vm5175, %v5169, %v5176
    %vm5178 = vcmp.eq.s32.totalorder %v5173, 2
    %v5179 = vxor.u32 %v5169, 2147483648
    %v5180 = vsel %vm5178, %v5179, %v5170
    %v5181 = vsel %vm5174, %v5177, %v5180
    %v5182 = vsel %vm5171, nan, %v5181
    %v5183 = vand.u32 2147483647, %v72
    %vm5184 = vcmp.le.f32.partialorder %v5183, 0.7853982
    %vm5185 = vcmp.lt.s32.totalorder %v72, 0
    %v5186 = vand.u32 %v72, 2139095040
    %v5187 = vshrl.u32 %v5186, 23
    %v5188 = vsub.s32 %v5187, 127
    %v5189 = vand.u32 2147483647, %v72
    %v5190 = vand.u32 %v5189, 8388607
    %v5191 = vor.u32 %v5190, 8388608
    %v5192 = vsub.s32 0, %v5191
    %v5193 = vadd.s32 %v5188, 1
    %vm5194 = vcmp.gt.s32.totalorder %v5193, 0
    %v5195 = vsel %vm5194, %v5193, 0
    %v5196 = vshrl.u32 %v5195, 5
    %v5197 = vand.u32 %v5195, 31
    %v5198 = vsub.s32 32, %v5197
    %v5199 = vshrl.u32 683565275, %v5198
    %v5200 = vshll.u32 683565275, %v5197
    %v5201 = vshrl.u32 2475754826, %v5198
    %v5202 = vor.u32 %v5200, %v5201
    %v5203 = vshll.u32 2475754826, %v5197
    %v5204 = vshrl.u32 2131351028, %v5198
    %v5205 = vor.u32 %v5203, %v5204
    %v5206 = vshll.u32 2131351028, %v5197
    %v5207 = vshrl.u32 2102212464, %v5198
    %v5208 = vor.u32 %v5206, %v5207
    %v5209 = vshll.u32 2102212464, %v5197
    %v5210 = vshrl.u32 920167782, %v5198
    %v5211 = vor.u32 %v5209, %v5210
    %v5212 = vshll.u32 920167782, %v5197
    %v5213 = vshrl.u32 1326507024, %v5198
    %v5214 = vor.u32 %v5212, %v5213
    %vm5215 = vcmp.lt.s32.totalorder %v5196, 1
    %vm5216 = vcmp.lt.s32.totalorder %v5196, 2
    %vm5217 = vcmp.lt.s32.totalorder %v5196, 3
    %vm5218 = vcmp.lt.s32.totalorder %v5196, 4
    %v5219 = vsel %vm5215, %v5199, %v5202
    %v5220 = vsel %vm5218, %v5208, 2102212464
    %v5221 = vsel %vm5217, %v5205, %v5220
    %v5222 = vsel %vm5216, %v5219, %v5221
    %v5223 = vsel %vm5215, %v5202, %v5205
    %v5224 = vsel %vm5218, %v5211, 920167782
    %v5225 = vsel %vm5217, %v5208, %v5224
    %v5226 = vsel %vm5216, %v5223, %v5225
    %v5227 = vsel %vm5215, %v5205, %v5208
    %v5228 = vsel %vm5218, %v5214, 1326507024
    %v5229 = vsel %vm5217, %v5211, %v5228
    %v5230 = vsel %vm5216, %v5227, %v5229
    %v5231 = vshll.u32 %v5191, 8
    %v5232 = vmul.u32.u64.compose %v5231, %v5230
    %v5233 = vextract.low.u32 %v5232
    %v5234 = vextract.high.u32 %v5232
    %v5235 = vmul.u32.u64.compose %v5231, %v5226
    %v5236 = vextract.low.u32 %v5235
    %v5237 = vextract.high.u32 %v5235
    %v5238 = vmul.u32 %v5231, %v5222
    %v5239 = vadd.s32 %v5234, %v5236
    %vm5240 = vc.u32 %v5234, %v5236
    %v5241 = vadd.s32 %v5237, 1
    %v5242 = vsel %vm5240, %v5241, %v5237
    %v5243 = vadd.s32 %v5238, %v5242
    %v5244 = vadd.s32 %v5243, 536870912
    %v5245 = vshrl.u32 %v5244, 30
    %v5246 = vshll.u32 %v5245, 30
    %v5247 = vsub.s32 %v5243, %v5246
    %vm5248 = vcmp.lt.s32.totalorder %v5247, 0
    %v5249 = vsub.s32 0, %v5247
    %v5250 = vsel %vm5248, %v5249, %v5247
    %v5251 = vclz %v5250
    %v5252 = vsub.s32 %v5251, 2
    %vm5253 = vcmp.gt.s32.totalorder 0, %v5252
    %v5254 = vsel %vm5253, 0, %v5252
    %v5255 = vsub.s32 32, %v5254
    %v5256 = vshll.u32 %v5247, %v5254
    %v5257 = vshrl.u32 %v5239, %v5255
    %v5258 = vor.u32 %v5256, %v5257
    %v5259 = vsub.s32 4294967266, %v5254
    %v5260 = vadd.s32 %v5259, 127
    %v5261 = vshll.u32 %v5260, 23
    %v5262 = vor.u32 4788187, %v5261
    %v5263 = vand.u32 2147483647, %v5262
    %v5265 = vcvt.s32.f32 %v5258
    %v5266 = vmul.f32 %v5265, %v5263
    %v5267 = vxor.u32 %v5266, 2147483648
    %v5268 = vsel %vm5185, %v5267, %v5266
    %v5269 = vsub.s32 4, %v5245
    %v5270 = vsel %vm5185, %v5269, %v5245
    %v5271 = vsel %vm5184, %v72, %v5268
    %v5272 = vsel %vm5184, 0, %v5270
    %v5273 = vcosq.f32.pop %v5271
    %v5274 = vsinq.f32.pop %v5271
    %vm5275 = vweird.f32 %v72
    %v5276 = vadd.s32 %v5272, 3
    %v5277 = vand.u32 %v5276, 3
    %vm5278 = vcmp.lt.s32.totalorder %v5277, 2
    %vm5279 = vcmp.eq.s32.totalorder %v5277, 0
    %v5280 = vxor.u32 %v5274, 2147483648
    %v5281 = vsel %vm5279, %v5273, %v5280
    %vm5282 = vcmp.eq.s32.totalorder %v5277, 2
    %v5283 = vxor.u32 %v5273, 2147483648
    %v5284 = vsel %vm5282, %v5283, %v5274
    %v5285 = vsel %vm5278, %v5281, %v5284
    %v5286 = vsel %vm5275, nan, %v5285
    %v5287 = vand.u32 2147483647, %v73
    %vm5288 = vcmp.le.f32.partialorder %v5287, 0.7853982
    %vm5289 = vcmp.lt.s32.totalorder %v73, 0
    %v5290 = vand.u32 %v73, 2139095040
    %v5291 = vshrl.u32 %v5290, 23
    %v5292 = vsub.s32 %v5291, 127
    %v5293 = vand.u32 2147483647, %v73
    %v5294 = vand.u32 %v5293, 8388607
    %v5295 = vor.u32 %v5294, 8388608
    %v5296 = vsub.s32 0, %v5295
    %v5297 = vadd.s32 %v5292, 1
    %vm5298 = vcmp.gt.s32.totalorder %v5297, 0
    %v5299 = vsel %vm5298, %v5297, 0
    %v5300 = vshrl.u32 %v5299, 5
    %v5301 = vand.u32 %v5299, 31
    %v5302 = vsub.s32 32, %v5301
    %v5303 = vshrl.u32 683565275, %v5302
    %v5304 = vshll.u32 683565275, %v5301
    %v5305 = vshrl.u32 2475754826, %v5302
    %v5306 = vor.u32 %v5304, %v5305
    %v5307 = vshll.u32 2475754826, %v5301
    %v5308 = vshrl.u32 2131351028, %v5302
    %v5309 = vor.u32 %v5307, %v5308
    %v5310 = vshll.u32 2131351028, %v5301
    %v5311 = vshrl.u32 2102212464, %v5302
    %v5312 = vor.u32 %v5310, %v5311
    %v5313 = vshll.u32 2102212464, %v5301
    %v5314 = vshrl.u32 920167782, %v5302
    %v5315 = vor.u32 %v5313, %v5314
    %v5316 = vshll.u32 920167782, %v5301
    %v5317 = vshrl.u32 1326507024, %v5302
    %v5318 = vor.u32 %v5316, %v5317
    %vm5319 = vcmp.lt.s32.totalorder %v5300, 1
    %vm5320 = vcmp.lt.s32.totalorder %v5300, 2
    %vm5321 = vcmp.lt.s32.totalorder %v5300, 3
    %vm5322 = vcmp.lt.s32.totalorder %v5300, 4
    %v5323 = vsel %vm5319, %v5303, %v5306
    %v5324 = vsel %vm5322, %v5312, 2102212464
    %v5325 = vsel %vm5321, %v5309, %v5324
    %v5326 = vsel %vm5320, %v5323, %v5325
    %v5327 = vsel %vm5319, %v5306, %v5309
    %v5328 = vsel %vm5322, %v5315, 920167782
    %v5329 = vsel %vm5321, %v5312, %v5328
    %v5330 = vsel %vm5320, %v5327, %v5329
    %v5331 = vsel %vm5319, %v5309, %v5312
    %v5332 = vsel %vm5322, %v5318, 1326507024
    %v5333 = vsel %vm5321, %v5315, %v5332
    %v5334 = vsel %vm5320, %v5331, %v5333
    %v5335 = vshll.u32 %v5295, 8
    %v5336 = vmul.u32.u64.compose %v5335, %v5334
    %v5337 = vextract.low.u32 %v5336
    %v5338 = vextract.high.u32 %v5336
    %v5339 = vmul.u32.u64.compose %v5335, %v5330
    %v5340 = vextract.low.u32 %v5339
    %v5341 = vextract.high.u32 %v5339
    %v5342 = vmul.u32 %v5335, %v5326
    %v5343 = vadd.s32 %v5338, %v5340
    %vm5344 = vc.u32 %v5338, %v5340
    %v5345 = vadd.s32 %v5341, 1
    %v5346 = vsel %vm5344, %v5345, %v5341
    %v5347 = vadd.s32 %v5342, %v5346
    %v5348 = vadd.s32 %v5347, 536870912
    %v5349 = vshrl.u32 %v5348, 30
    %v5350 = vshll.u32 %v5349, 30
    %v5351 = vsub.s32 %v5347, %v5350
    %vm5352 = vcmp.lt.s32.totalorder %v5351, 0
    %v5353 = vsub.s32 0, %v5351
    %v5354 = vsel %vm5352, %v5353, %v5351
    %v5355 = vclz %v5354
    %v5356 = vsub.s32 %v5355, 2
    %vm5357 = vcmp.gt.s32.totalorder 0, %v5356
    %v5358 = vsel %vm5357, 0, %v5356
    %v5359 = vsub.s32 32, %v5358
    %v5360 = vshll.u32 %v5351, %v5358
    %v5361 = vshrl.u32 %v5343, %v5359
    %v5362 = vor.u32 %v5360, %v5361
    %v5363 = vsub.s32 4294967266, %v5358
    %v5364 = vadd.s32 %v5363, 127
    %v5365 = vshll.u32 %v5364, 23
    %v5366 = vor.u32 4788187, %v5365
    %v5367 = vand.u32 2147483647, %v5366
    %v5369 = vcvt.s32.f32 %v5362
    %v5370 = vmul.f32 %v5369, %v5367
    %v5371 = vxor.u32 %v5370, 2147483648
    %v5372 = vsel %vm5289, %v5371, %v5370
    %v5373 = vsub.s32 4, %v5349
    %v5374 = vsel %vm5289, %v5373, %v5349
    %v5375 = vsel %vm5288, %v73, %v5372
    %v5376 = vsel %vm5288, 0, %v5374
    %v5377 = vcosq.f32.pop %v5375
    %v5378 = vsinq.f32.pop %v5375
    %vm5379 = vweird.f32 %v73
    %v5380 = vadd.s32 %v5376, 3
    %v5381 = vand.u32 %v5380, 3
    %vm5382 = vcmp.lt.s32.totalorder %v5381, 2
    %vm5383 = vcmp.eq.s32.totalorder %v5381, 0
    %v5384 = vxor.u32 %v5378, 2147483648
    %v5385 = vsel %vm5383, %v5377, %v5384
    %vm5386 = vcmp.eq.s32.totalorder %v5381, 2
    %v5387 = vxor.u32 %v5377, 2147483648
    %v5388 = vsel %vm5386, %v5387, %v5378
    %v5389 = vsel %vm5382, %v5385, %v5388
    %v5390 = vsel %vm5379, nan, %v5389
    %v5391 = vand.u32 2147483647, %v74
    %vm5392 = vcmp.le.f32.partialorder %v5391, 0.7853982
    %vm5393 = vcmp.lt.s32.totalorder %v74, 0
    %v5394 = vand.u32 %v74, 2139095040
    %v5395 = vshrl.u32 %v5394, 23
    %v5396 = vsub.s32 %v5395, 127
    %v5397 = vand.u32 2147483647, %v74
    %v5398 = vand.u32 %v5397, 8388607
    %v5399 = vor.u32 %v5398, 8388608
    %v5400 = vsub.s32 0, %v5399
    %v5401 = vadd.s32 %v5396, 1
    %vm5402 = vcmp.gt.s32.totalorder %v5401, 0
    %v5403 = vsel %vm5402, %v5401, 0
    %v5404 = vshrl.u32 %v5403, 5
    %v5405 = vand.u32 %v5403, 31
    %v5406 = vsub.s32 32, %v5405
    %v5407 = vshrl.u32 683565275, %v5406
    %v5408 = vshll.u32 683565275, %v5405
    %v5409 = vshrl.u32 2475754826, %v5406
    %v5410 = vor.u32 %v5408, %v5409
    %v5411 = vshll.u32 2475754826, %v5405
    %v5412 = vshrl.u32 2131351028, %v5406
    %v5413 = vor.u32 %v5411, %v5412
    %v5414 = vshll.u32 2131351028, %v5405
    %v5415 = vshrl.u32 2102212464, %v5406
    %v5416 = vor.u32 %v5414, %v5415
    %v5417 = vshll.u32 2102212464, %v5405
    %v5418 = vshrl.u32 920167782, %v5406
    %v5419 = vor.u32 %v5417, %v5418
    %v5420 = vshll.u32 920167782, %v5405
    %v5421 = vshrl.u32 1326507024, %v5406
    %v5422 = vor.u32 %v5420, %v5421
    %vm5423 = vcmp.lt.s32.totalorder %v5404, 1
    %vm5424 = vcmp.lt.s32.totalorder %v5404, 2
    %vm5425 = vcmp.lt.s32.totalorder %v5404, 3
    %vm5426 = vcmp.lt.s32.totalorder %v5404, 4
    %v5427 = vsel %vm5423, %v5407, %v5410
    %v5428 = vsel %vm5426, %v5416, 2102212464
    %v5429 = vsel %vm5425, %v5413, %v5428
    %v5430 = vsel %vm5424, %v5427, %v5429
    %v5431 = vsel %vm5423, %v5410, %v5413
    %v5432 = vsel %vm5426, %v5419, 920167782
    %v5433 = vsel %vm5425, %v5416, %v5432
    %v5434 = vsel %vm5424, %v5431, %v5433
    %v5435 = vsel %vm5423, %v5413, %v5416
    %v5436 = vsel %vm5426, %v5422, 1326507024
    %v5437 = vsel %vm5425, %v5419, %v5436
    %v5438 = vsel %vm5424, %v5435, %v5437
    %v5439 = vshll.u32 %v5399, 8
    %v5440 = vmul.u32.u64.compose %v5439, %v5438
    %v5441 = vextract.low.u32 %v5440
    %v5442 = vextract.high.u32 %v5440
    %v5443 = vmul.u32.u64.compose %v5439, %v5434
    %v5444 = vextract.low.u32 %v5443
    %v5445 = vextract.high.u32 %v5443
    %v5446 = vmul.u32 %v5439, %v5430
    %v5447 = vadd.s32 %v5442, %v5444
    %vm5448 = vc.u32 %v5442, %v5444
    %v5449 = vadd.s32 %v5445, 1
    %v5450 = vsel %vm5448, %v5449, %v5445
    %v5451 = vadd.s32 %v5446, %v5450
    %v5452 = vadd.s32 %v5451, 536870912
    %v5453 = vshrl.u32 %v5452, 30
    %v5454 = vshll.u32 %v5453, 30
    %v5455 = vsub.s32 %v5451, %v5454
    %vm5456 = vcmp.lt.s32.totalorder %v5455, 0
    %v5457 = vsub.s32 0, %v5455
    %v5458 = vsel %vm5456, %v5457, %v5455
    %v5459 = vclz %v5458
    %v5460 = vsub.s32 %v5459, 2
    %vm5461 = vcmp.gt.s32.totalorder 0, %v5460
    %v5462 = vsel %vm5461, 0, %v5460
    %v5463 = vsub.s32 32, %v5462
    %v5464 = vshll.u32 %v5455, %v5462
    %v5465 = vshrl.u32 %v5447, %v5463
    %v5466 = vor.u32 %v5464, %v5465
    %v5467 = vsub.s32 4294967266, %v5462
    %v5468 = vadd.s32 %v5467, 127
    %v5469 = vshll.u32 %v5468, 23
    %v5470 = vor.u32 4788187, %v5469
    %v5471 = vand.u32 2147483647, %v5470
    %v5473 = vcvt.s32.f32 %v5466
    %v5474 = vmul.f32 %v5473, %v5471
    %v5475 = vxor.u32 %v5474, 2147483648
    %v5476 = vsel %vm5393, %v5475, %v5474
    %v5477 = vsub.s32 4, %v5453
    %v5478 = vsel %vm5393, %v5477, %v5453
    %v5479 = vsel %vm5392, %v74, %v5476
    %v5480 = vsel %vm5392, 0, %v5478
    %v5481 = vcosq.f32.pop %v5479
    %v5482 = vsinq.f32.pop %v5479
    %vm5483 = vweird.f32 %v74
    %v5484 = vadd.s32 %v5480, 3
    %v5485 = vand.u32 %v5484, 3
    %vm5486 = vcmp.lt.s32.totalorder %v5485, 2
    %vm5487 = vcmp.eq.s32.totalorder %v5485, 0
    %v5488 = vxor.u32 %v5482, 2147483648
    %v5489 = vsel %vm5487, %v5481, %v5488
    %vm5490 = vcmp.eq.s32.totalorder %v5485, 2
    %v5491 = vxor.u32 %v5481, 2147483648
    %v5492 = vsel %vm5490, %v5491, %v5482
    %v5493 = vsel %vm5486, %v5489, %v5492
    %v5494 = vsel %vm5483, nan, %v5493
    %v5495 = vand.u32 2147483647, %v75
    %vm5496 = vcmp.le.f32.partialorder %v5495, 0.7853982
    %vm5497 = vcmp.lt.s32.totalorder %v75, 0
    %v5498 = vand.u32 %v75, 2139095040
    %v5499 = vshrl.u32 %v5498, 23
    %v5500 = vsub.s32 %v5499, 127
    %v5501 = vand.u32 2147483647, %v75
    %v5502 = vand.u32 %v5501, 8388607
    %v5503 = vor.u32 %v5502, 8388608
    %v5504 = vsub.s32 0, %v5503
    %v5505 = vadd.s32 %v5500, 1
    %vm5506 = vcmp.gt.s32.totalorder %v5505, 0
    %v5507 = vsel %vm5506, %v5505, 0
    %v5508 = vshrl.u32 %v5507, 5
    %v5509 = vand.u32 %v5507, 31
    %v5510 = vsub.s32 32, %v5509
    %v5511 = vshrl.u32 683565275, %v5510
    %v5512 = vshll.u32 683565275, %v5509
    %v5513 = vshrl.u32 2475754826, %v5510
    %v5514 = vor.u32 %v5512, %v5513
    %v5515 = vshll.u32 2475754826, %v5509
    %v5516 = vshrl.u32 2131351028, %v5510
    %v5517 = vor.u32 %v5515, %v5516
    %v5518 = vshll.u32 2131351028, %v5509
    %v5519 = vshrl.u32 2102212464, %v5510
    %v5520 = vor.u32 %v5518, %v5519
    %v5521 = vshll.u32 2102212464, %v5509
    %v5522 = vshrl.u32 920167782, %v5510
    %v5523 = vor.u32 %v5521, %v5522
    %v5524 = vshll.u32 920167782, %v5509
    %v5525 = vshrl.u32 1326507024, %v5510
    %v5526 = vor.u32 %v5524, %v5525
    %vm5527 = vcmp.lt.s32.totalorder %v5508, 1
    %vm5528 = vcmp.lt.s32.totalorder %v5508, 2
    %vm5529 = vcmp.lt.s32.totalorder %v5508, 3
    %vm5530 = vcmp.lt.s32.totalorder %v5508, 4
    %v5531 = vsel %vm5527, %v5511, %v5514
    %v5532 = vsel %vm5530, %v5520, 2102212464
    %v5533 = vsel %vm5529, %v5517, %v5532
    %v5534 = vsel %vm5528, %v5531, %v5533
    %v5535 = vsel %vm5527, %v5514, %v5517
    %v5536 = vsel %vm5530, %v5523, 920167782
    %v5537 = vsel %vm5529, %v5520, %v5536
    %v5538 = vsel %vm5528, %v5535, %v5537
    %v5539 = vsel %vm5527, %v5517, %v5520
    %v5540 = vsel %vm5530, %v5526, 1326507024
    %v5541 = vsel %vm5529, %v5523, %v5540
    %v5542 = vsel %vm5528, %v5539, %v5541
    %v5543 = vshll.u32 %v5503, 8
    %v5544 = vmul.u32.u64.compose %v5543, %v5542
    %v5545 = vextract.low.u32 %v5544
    %v5546 = vextract.high.u32 %v5544
    %v5547 = vmul.u32.u64.compose %v5543, %v5538
    %v5548 = vextract.low.u32 %v5547
    %v5549 = vextract.high.u32 %v5547
    %v5550 = vmul.u32 %v5543, %v5534
    %v5551 = vadd.s32 %v5546, %v5548
    %vm5552 = vc.u32 %v5546, %v5548
    %v5553 = vadd.s32 %v5549, 1
    %v5554 = vsel %vm5552, %v5553, %v5549
    %v5555 = vadd.s32 %v5550, %v5554
    %v5556 = vadd.s32 %v5555, 536870912
    %v5557 = vshrl.u32 %v5556, 30
    %v5558 = vshll.u32 %v5557, 30
    %v5559 = vsub.s32 %v5555, %v5558
    %vm5560 = vcmp.lt.s32.totalorder %v5559, 0
    %v5561 = vsub.s32 0, %v5559
    %v5562 = vsel %vm5560, %v5561, %v5559
    %v5563 = vclz %v5562
    %v5564 = vsub.s32 %v5563, 2
    %vm5565 = vcmp.gt.s32.totalorder 0, %v5564
    %v5566 = vsel %vm5565, 0, %v5564
    %v5567 = vsub.s32 32, %v5566
    %v5568 = vshll.u32 %v5559, %v5566
    %v5569 = vshrl.u32 %v5551, %v5567
    %v5570 = vor.u32 %v5568, %v5569
    %v5571 = vsub.s32 4294967266, %v5566
    %v5572 = vadd.s32 %v5571, 127
    %v5573 = vshll.u32 %v5572, 23
    %v5574 = vor.u32 4788187, %v5573
    %v5575 = vand.u32 2147483647, %v5574
    %v5577 = vcvt.s32.f32 %v5570
    %v5578 = vmul.f32 %v5577, %v5575
    %v5579 = vxor.u32 %v5578, 2147483648
    %v5580 = vsel %vm5497, %v5579, %v5578
    %v5581 = vsub.s32 4, %v5557
    %v5582 = vsel %vm5497, %v5581, %v5557
    %v5583 = vsel %vm5496, %v75, %v5580
    %v5584 = vsel %vm5496, 0, %v5582
    %v5585 = vcosq.f32.pop %v5583
    %v5586 = vsinq.f32.pop %v5583
    %vm5587 = vweird.f32 %v75
    %v5588 = vadd.s32 %v5584, 3
    %v5589 = vand.u32 %v5588, 3
    %vm5590 = vcmp.lt.s32.totalorder %v5589, 2
    %vm5591 = vcmp.eq.s32.totalorder %v5589, 0
    %v5592 = vxor.u32 %v5586, 2147483648
    %v5593 = vsel %vm5591, %v5585, %v5592
    %vm5594 = vcmp.eq.s32.totalorder %v5589, 2
    %v5595 = vxor.u32 %v5585, 2147483648
    %v5596 = vsel %vm5594, %v5595, %v5586
    %v5597 = vsel %vm5590, %v5593, %v5596
    %v5598 = vsel %vm5587, nan, %v5597
    %v5599 = vand.u32 2147483647, %v76
    %vm5600 = vcmp.le.f32.partialorder %v5599, 0.7853982
    %vm5601 = vcmp.lt.s32.totalorder %v76, 0
    %v5602 = vand.u32 %v76, 2139095040
    %v5603 = vshrl.u32 %v5602, 23
    %v5604 = vsub.s32 %v5603, 127
    %v5605 = vand.u32 2147483647, %v76
    %v5606 = vand.u32 %v5605, 8388607
    %v5607 = vor.u32 %v5606, 8388608
    %v5608 = vsub.s32 0, %v5607
    %v5609 = vadd.s32 %v5604, 1
    %vm5610 = vcmp.gt.s32.totalorder %v5609, 0
    %v5611 = vsel %vm5610, %v5609, 0
    %v5612 = vshrl.u32 %v5611, 5
    %v5613 = vand.u32 %v5611, 31
    %v5614 = vsub.s32 32, %v5613
    %v5615 = vshrl.u32 683565275, %v5614
    %v5616 = vshll.u32 683565275, %v5613
    %v5617 = vshrl.u32 2475754826, %v5614
    %v5618 = vor.u32 %v5616, %v5617
    %v5619 = vshll.u32 2475754826, %v5613
    %v5620 = vshrl.u32 2131351028, %v5614
    %v5621 = vor.u32 %v5619, %v5620
    %v5622 = vshll.u32 2131351028, %v5613
    %v5623 = vshrl.u32 2102212464, %v5614
    %v5624 = vor.u32 %v5622, %v5623
    %v5625 = vshll.u32 2102212464, %v5613
    %v5626 = vshrl.u32 920167782, %v5614
    %v5627 = vor.u32 %v5625, %v5626
    %v5628 = vshll.u32 920167782, %v5613
    %v5629 = vshrl.u32 1326507024, %v5614
    %v5630 = vor.u32 %v5628, %v5629
    %vm5631 = vcmp.lt.s32.totalorder %v5612, 1
    %vm5632 = vcmp.lt.s32.totalorder %v5612, 2
    %vm5633 = vcmp.lt.s32.totalorder %v5612, 3
    %vm5634 = vcmp.lt.s32.totalorder %v5612, 4
    %v5635 = vsel %vm5631, %v5615, %v5618
    %v5636 = vsel %vm5634, %v5624, 2102212464
    %v5637 = vsel %vm5633, %v5621, %v5636
    %v5638 = vsel %vm5632, %v5635, %v5637
    %v5639 = vsel %vm5631, %v5618, %v5621
    %v5640 = vsel %vm5634, %v5627, 920167782
    %v5641 = vsel %vm5633, %v5624, %v5640
    %v5642 = vsel %vm5632, %v5639, %v5641
    %v5643 = vsel %vm5631, %v5621, %v5624
    %v5644 = vsel %vm5634, %v5630, 1326507024
    %v5645 = vsel %vm5633, %v5627, %v5644
    %v5646 = vsel %vm5632, %v5643, %v5645
    %v5647 = vshll.u32 %v5607, 8
    %v5648 = vmul.u32.u64.compose %v5647, %v5646
    %v5649 = vextract.low.u32 %v5648
    %v5650 = vextract.high.u32 %v5648
    %v5651 = vmul.u32.u64.compose %v5647, %v5642
    %v5652 = vextract.low.u32 %v5651
    %v5653 = vextract.high.u32 %v5651
    %v5654 = vmul.u32 %v5647, %v5638
    %v5655 = vadd.s32 %v5650, %v5652
    %vm5656 = vc.u32 %v5650, %v5652
    %v5657 = vadd.s32 %v5653, 1
    %v5658 = vsel %vm5656, %v5657, %v5653
    %v5659 = vadd.s32 %v5654, %v5658
    %v5660 = vadd.s32 %v5659, 536870912
    %v5661 = vshrl.u32 %v5660, 30
    %v5662 = vshll.u32 %v5661, 30
    %v5663 = vsub.s32 %v5659, %v5662
    %vm5664 = vcmp.lt.s32.totalorder %v5663, 0
    %v5665 = vsub.s32 0, %v5663
    %v5666 = vsel %vm5664, %v5665, %v5663
    %v5667 = vclz %v5666
    %v5668 = vsub.s32 %v5667, 2
    %vm5669 = vcmp.gt.s32.totalorder 0, %v5668
    %v5670 = vsel %vm5669, 0, %v5668
    %v5671 = vsub.s32 32, %v5670
    %v5672 = vshll.u32 %v5663, %v5670
    %v5673 = vshrl.u32 %v5655, %v5671
    %v5674 = vor.u32 %v5672, %v5673
    %v5675 = vsub.s32 4294967266, %v5670
    %v5676 = vadd.s32 %v5675, 127
    %v5677 = vshll.u32 %v5676, 23
    %v5678 = vor.u32 4788187, %v5677
    %v5679 = vand.u32 2147483647, %v5678
    %v5681 = vcvt.s32.f32 %v5674
    %v5682 = vmul.f32 %v5681, %v5679
    %v5683 = vxor.u32 %v5682, 2147483648
    %v5684 = vsel %vm5601, %v5683, %v5682
    %v5685 = vsub.s32 4, %v5661
    %v5686 = vsel %vm5601, %v5685, %v5661
    %v5687 = vsel %vm5600, %v76, %v5684
    %v5688 = vsel %vm5600, 0, %v5686
    %v5689 = vcosq.f32.pop %v5687
    %v5690 = vsinq.f32.pop %v5687
    %vm5691 = vweird.f32 %v76
    %v5692 = vadd.s32 %v5688, 3
    %v5693 = vand.u32 %v5692, 3
    %vm5694 = vcmp.lt.s32.totalorder %v5693, 2
    %vm5695 = vcmp.eq.s32.totalorder %v5693, 0
    %v5696 = vxor.u32 %v5690, 2147483648
    %v5697 = vsel %vm5695, %v5689, %v5696
    %vm5698 = vcmp.eq.s32.totalorder %v5693, 2
    %v5699 = vxor.u32 %v5689, 2147483648
    %v5700 = vsel %vm5698, %v5699, %v5690
    %v5701 = vsel %vm5694, %v5697, %v5700
    %v5702 = vsel %vm5691, nan, %v5701
    %v5703 = vand.u32 2147483647, %v77
    %vm5704 = vcmp.le.f32.partialorder %v5703, 0.7853982
    %vm5705 = vcmp.lt.s32.totalorder %v77, 0
    %v5706 = vand.u32 %v77, 2139095040
    %v5707 = vshrl.u32 %v5706, 23
    %v5708 = vsub.s32 %v5707, 127
    %v5709 = vand.u32 2147483647, %v77
    %v5710 = vand.u32 %v5709, 8388607
    %v5711 = vor.u32 %v5710, 8388608
    %v5712 = vsub.s32 0, %v5711
    %v5713 = vadd.s32 %v5708, 1
    %vm5714 = vcmp.gt.s32.totalorder %v5713, 0
    %v5715 = vsel %vm5714, %v5713, 0
    %v5716 = vshrl.u32 %v5715, 5
    %v5717 = vand.u32 %v5715, 31
    %v5718 = vsub.s32 32, %v5717
    %v5719 = vshrl.u32 683565275, %v5718
    %v5720 = vshll.u32 683565275, %v5717
    %v5721 = vshrl.u32 2475754826, %v5718
    %v5722 = vor.u32 %v5720, %v5721
    %v5723 = vshll.u32 2475754826, %v5717
    %v5724 = vshrl.u32 2131351028, %v5718
    %v5725 = vor.u32 %v5723, %v5724
    %v5726 = vshll.u32 2131351028, %v5717
    %v5727 = vshrl.u32 2102212464, %v5718
    %v5728 = vor.u32 %v5726, %v5727
    %v5729 = vshll.u32 2102212464, %v5717
    %v5730 = vshrl.u32 920167782, %v5718
    %v5731 = vor.u32 %v5729, %v5730
    %v5732 = vshll.u32 920167782, %v5717
    %v5733 = vshrl.u32 1326507024, %v5718
    %v5734 = vor.u32 %v5732, %v5733
    %vm5735 = vcmp.lt.s32.totalorder %v5716, 1
    %vm5736 = vcmp.lt.s32.totalorder %v5716, 2
    %vm5737 = vcmp.lt.s32.totalorder %v5716, 3
    %vm5738 = vcmp.lt.s32.totalorder %v5716, 4
    %v5739 = vsel %vm5735, %v5719, %v5722
    %v5740 = vsel %vm5738, %v5728, 2102212464
    %v5741 = vsel %vm5737, %v5725, %v5740
    %v5742 = vsel %vm5736, %v5739, %v5741
    %v5743 = vsel %vm5735, %v5722, %v5725
    %v5744 = vsel %vm5738, %v5731, 920167782
    %v5745 = vsel %vm5737, %v5728, %v5744
    %v5746 = vsel %vm5736, %v5743, %v5745
    %v5747 = vsel %vm5735, %v5725, %v5728
    %v5748 = vsel %vm5738, %v5734, 1326507024
    %v5749 = vsel %vm5737, %v5731, %v5748
    %v5750 = vsel %vm5736, %v5747, %v5749
    %v5751 = vshll.u32 %v5711, 8
    %v5752 = vmul.u32.u64.compose %v5751, %v5750
    %v5753 = vextract.low.u32 %v5752
    %v5754 = vextract.high.u32 %v5752
    %v5755 = vmul.u32.u64.compose %v5751, %v5746
    %v5756 = vextract.low.u32 %v5755
    %v5757 = vextract.high.u32 %v5755
    %v5758 = vmul.u32 %v5751, %v5742
    %v5759 = vadd.s32 %v5754, %v5756
    %vm5760 = vc.u32 %v5754, %v5756
    %v5761 = vadd.s32 %v5757, 1
    %v5762 = vsel %vm5760, %v5761, %v5757
    %v5763 = vadd.s32 %v5758, %v5762
    %v5764 = vadd.s32 %v5763, 536870912
    %v5765 = vshrl.u32 %v5764, 30
    %v5766 = vshll.u32 %v5765, 30
    %v5767 = vsub.s32 %v5763, %v5766
    %vm5768 = vcmp.lt.s32.totalorder %v5767, 0
    %v5769 = vsub.s32 0, %v5767
    %v5770 = vsel %vm5768, %v5769, %v5767
    %v5771 = vclz %v5770
    %v5772 = vsub.s32 %v5771, 2
    %vm5773 = vcmp.gt.s32.totalorder 0, %v5772
    %v5774 = vsel %vm5773, 0, %v5772
    %v5775 = vsub.s32 32, %v5774
    %v5776 = vshll.u32 %v5767, %v5774
    %v5777 = vshrl.u32 %v5759, %v5775
    %v5778 = vor.u32 %v5776, %v5777
    %v5779 = vsub.s32 4294967266, %v5774
    %v5780 = vadd.s32 %v5779, 127
    %v5781 = vshll.u32 %v5780, 23
    %v5782 = vor.u32 4788187, %v5781
    %v5783 = vand.u32 2147483647, %v5782
    %v5785 = vcvt.s32.f32 %v5778
    %v5786 = vmul.f32 %v5785, %v5783
    %v5787 = vxor.u32 %v5786, 2147483648
    %v5788 = vsel %vm5705, %v5787, %v5786
    %v5789 = vsub.s32 4, %v5765
    %v5790 = vsel %vm5705, %v5789, %v5765
    %v5791 = vsel %vm5704, %v77, %v5788
    %v5792 = vsel %vm5704, 0, %v5790
    %v5793 = vcosq.f32.pop %v5791
    %v5794 = vsinq.f32.pop %v5791
    %vm5795 = vweird.f32 %v77
    %v5796 = vadd.s32 %v5792, 3
    %v5797 = vand.u32 %v5796, 3
    %vm5798 = vcmp.lt.s32.totalorder %v5797, 2
    %vm5799 = vcmp.eq.s32.totalorder %v5797, 0
    %v5800 = vxor.u32 %v5794, 2147483648
    %v5801 = vsel %vm5799, %v5793, %v5800
    %vm5802 = vcmp.eq.s32.totalorder %v5797, 2
    %v5803 = vxor.u32 %v5793, 2147483648
    %v5804 = vsel %vm5802, %v5803, %v5794
    %v5805 = vsel %vm5798, %v5801, %v5804
    %v5806 = vsel %vm5795, nan, %v5805
    %v5807 = vand.u32 2147483647, %v78
    %vm5808 = vcmp.le.f32.partialorder %v5807, 0.7853982
    %vm5809 = vcmp.lt.s32.totalorder %v78, 0
    %v5810 = vand.u32 %v78, 2139095040
    %v5811 = vshrl.u32 %v5810, 23
    %v5812 = vsub.s32 %v5811, 127
    %v5813 = vand.u32 2147483647, %v78
    %v5814 = vand.u32 %v5813, 8388607
    %v5815 = vor.u32 %v5814, 8388608
    %v5816 = vsub.s32 0, %v5815
    %v5817 = vadd.s32 %v5812, 1
    %vm5818 = vcmp.gt.s32.totalorder %v5817, 0
    %v5819 = vsel %vm5818, %v5817, 0
    %v5820 = vshrl.u32 %v5819, 5
    %v5821 = vand.u32 %v5819, 31
    %v5822 = vsub.s32 32, %v5821
    %v5823 = vshrl.u32 683565275, %v5822
    %v5824 = vshll.u32 683565275, %v5821
    %v5825 = vshrl.u32 2475754826, %v5822
    %v5826 = vor.u32 %v5824, %v5825
    %v5827 = vshll.u32 2475754826, %v5821
    %v5828 = vshrl.u32 2131351028, %v5822
    %v5829 = vor.u32 %v5827, %v5828
    %v5830 = vshll.u32 2131351028, %v5821
    %v5831 = vshrl.u32 2102212464, %v5822
    %v5832 = vor.u32 %v5830, %v5831
    %v5833 = vshll.u32 2102212464, %v5821
    %v5834 = vshrl.u32 920167782, %v5822
    %v5835 = vor.u32 %v5833, %v5834
    %v5836 = vshll.u32 920167782, %v5821
    %v5837 = vshrl.u32 1326507024, %v5822
    %v5838 = vor.u32 %v5836, %v5837
    %vm5839 = vcmp.lt.s32.totalorder %v5820, 1
    %vm5840 = vcmp.lt.s32.totalorder %v5820, 2
    %vm5841 = vcmp.lt.s32.totalorder %v5820, 3
    %vm5842 = vcmp.lt.s32.totalorder %v5820, 4
    %v5843 = vsel %vm5839, %v5823, %v5826
    %v5844 = vsel %vm5842, %v5832, 2102212464
    %v5845 = vsel %vm5841, %v5829, %v5844
    %v5846 = vsel %vm5840, %v5843, %v5845
    %v5847 = vsel %vm5839, %v5826, %v5829
    %v5848 = vsel %vm5842, %v5835, 920167782
    %v5849 = vsel %vm5841, %v5832, %v5848
    %v5850 = vsel %vm5840, %v5847, %v5849
    %v5851 = vsel %vm5839, %v5829, %v5832
    %v5852 = vsel %vm5842, %v5838, 1326507024
    %v5853 = vsel %vm5841, %v5835, %v5852
    %v5854 = vsel %vm5840, %v5851, %v5853
    %v5855 = vshll.u32 %v5815, 8
    %v5856 = vmul.u32.u64.compose %v5855, %v5854
    %v5857 = vextract.low.u32 %v5856
    %v5858 = vextract.high.u32 %v5856
    %v5859 = vmul.u32.u64.compose %v5855, %v5850
    %v5860 = vextract.low.u32 %v5859
    %v5861 = vextract.high.u32 %v5859
    %v5862 = vmul.u32 %v5855, %v5846
    %v5863 = vadd.s32 %v5858, %v5860
    %vm5864 = vc.u32 %v5858, %v5860
    %v5865 = vadd.s32 %v5861, 1
    %v5866 = vsel %vm5864, %v5865, %v5861
    %v5867 = vadd.s32 %v5862, %v5866
    %v5868 = vadd.s32 %v5867, 536870912
    %v5869 = vshrl.u32 %v5868, 30
    %v5870 = vshll.u32 %v5869, 30
    %v5871 = vsub.s32 %v5867, %v5870
    %vm5872 = vcmp.lt.s32.totalorder %v5871, 0
    %v5873 = vsub.s32 0, %v5871
    %v5874 = vsel %vm5872, %v5873, %v5871
    %v5875 = vclz %v5874
    %v5876 = vsub.s32 %v5875, 2
    %vm5877 = vcmp.gt.s32.totalorder 0, %v5876
    %v5878 = vsel %vm5877, 0, %v5876
    %v5879 = vsub.s32 32, %v5878
    %v5880 = vshll.u32 %v5871, %v5878
    %v5881 = vshrl.u32 %v5863, %v5879
    %v5882 = vor.u32 %v5880, %v5881
    %v5883 = vsub.s32 4294967266, %v5878
    %v5884 = vadd.s32 %v5883, 127
    %v5885 = vshll.u32 %v5884, 23
    %v5886 = vor.u32 4788187, %v5885
    %v5887 = vand.u32 2147483647, %v5886
    %v5889 = vcvt.s32.f32 %v5882
    %v5890 = vmul.f32 %v5889, %v5887
    %v5891 = vxor.u32 %v5890, 2147483648
    %v5892 = vsel %vm5809, %v5891, %v5890
    %v5893 = vsub.s32 4, %v5869
    %v5894 = vsel %vm5809, %v5893, %v5869
    %v5895 = vsel %vm5808, %v78, %v5892
    %v5896 = vsel %vm5808, 0, %v5894
    %v5897 = vcosq.f32.pop %v5895
    %v5898 = vsinq.f32.pop %v5895
    %vm5899 = vweird.f32 %v78
    %v5900 = vadd.s32 %v5896, 3
    %v5901 = vand.u32 %v5900, 3
    %vm5902 = vcmp.lt.s32.totalorder %v5901, 2
    %vm5903 = vcmp.eq.s32.totalorder %v5901, 0
    %v5904 = vxor.u32 %v5898, 2147483648
    %v5905 = vsel %vm5903, %v5897, %v5904
    %vm5906 = vcmp.eq.s32.totalorder %v5901, 2
    %v5907 = vxor.u32 %v5897, 2147483648
    %v5908 = vsel %vm5906, %v5907, %v5898
    %v5909 = vsel %vm5902, %v5905, %v5908
    %v5910 = vsel %vm5899, nan, %v5909
    %v5911 = vand.u32 2147483647, %v79
    %vm5912 = vcmp.le.f32.partialorder %v5911, 0.7853982
    %vm5913 = vcmp.lt.s32.totalorder %v79, 0
    %v5914 = vand.u32 %v79, 2139095040
    %v5915 = vshrl.u32 %v5914, 23
    %v5916 = vsub.s32 %v5915, 127
    %v5917 = vand.u32 2147483647, %v79
    %v5918 = vand.u32 %v5917, 8388607
    %v5919 = vor.u32 %v5918, 8388608
    %v5920 = vsub.s32 0, %v5919
    %v5921 = vadd.s32 %v5916, 1
    %vm5922 = vcmp.gt.s32.totalorder %v5921, 0
    %v5923 = vsel %vm5922, %v5921, 0
    %v5924 = vshrl.u32 %v5923, 5
    %v5925 = vand.u32 %v5923, 31
    %v5926 = vsub.s32 32, %v5925
    %v5927 = vshrl.u32 683565275, %v5926
    %v5928 = vshll.u32 683565275, %v5925
    %v5929 = vshrl.u32 2475754826, %v5926
    %v5930 = vor.u32 %v5928, %v5929
    %v5931 = vshll.u32 2475754826, %v5925
    %v5932 = vshrl.u32 2131351028, %v5926
    %v5933 = vor.u32 %v5931, %v5932
    %v5934 = vshll.u32 2131351028, %v5925
    %v5935 = vshrl.u32 2102212464, %v5926
    %v5936 = vor.u32 %v5934, %v5935
    %v5937 = vshll.u32 2102212464, %v5925
    %v5938 = vshrl.u32 920167782, %v5926
    %v5939 = vor.u32 %v5937, %v5938
    %v5940 = vshll.u32 920167782, %v5925
    %v5941 = vshrl.u32 1326507024, %v5926
    %v5942 = vor.u32 %v5940, %v5941
    %vm5943 = vcmp.lt.s32.totalorder %v5924, 1
    %vm5944 = vcmp.lt.s32.totalorder %v5924, 2
    %vm5945 = vcmp.lt.s32.totalorder %v5924, 3
    %vm5946 = vcmp.lt.s32.totalorder %v5924, 4
    %v5947 = vsel %vm5943, %v5927, %v5930
    %v5948 = vsel %vm5946, %v5936, 2102212464
    %v5949 = vsel %vm5945, %v5933, %v5948
    %v5950 = vsel %vm5944, %v5947, %v5949
    %v5951 = vsel %vm5943, %v5930, %v5933
    %v5952 = vsel %vm5946, %v5939, 920167782
    %v5953 = vsel %vm5945, %v5936, %v5952
    %v5954 = vsel %vm5944, %v5951, %v5953
    %v5955 = vsel %vm5943, %v5933, %v5936
    %v5956 = vsel %vm5946, %v5942, 1326507024
    %v5957 = vsel %vm5945, %v5939, %v5956
    %v5958 = vsel %vm5944, %v5955, %v5957
    %v5959 = vshll.u32 %v5919, 8
    %v5960 = vmul.u32.u64.compose %v5959, %v5958
    %v5961 = vextract.low.u32 %v5960
    %v5962 = vextract.high.u32 %v5960
    %v5963 = vmul.u32.u64.compose %v5959, %v5954
    %v5964 = vextract.low.u32 %v5963
    %v5965 = vextract.high.u32 %v5963
    %v5966 = vmul.u32 %v5959, %v5950
    %v5967 = vadd.s32 %v5962, %v5964
    %vm5968 = vc.u32 %v5962, %v5964
    %v5969 = vadd.s32 %v5965, 1
    %v5970 = vsel %vm5968, %v5969, %v5965
    %v5971 = vadd.s32 %v5966, %v5970
    %v5972 = vadd.s32 %v5971, 536870912
    %v5973 = vshrl.u32 %v5972, 30
    %v5974 = vshll.u32 %v5973, 30
    %v5975 = vsub.s32 %v5971, %v5974
    %vm5976 = vcmp.lt.s32.totalorder %v5975, 0
    %v5977 = vsub.s32 0, %v5975
    %v5978 = vsel %vm5976, %v5977, %v5975
    %v5979 = vclz %v5978
    %v5980 = vsub.s32 %v5979, 2
    %vm5981 = vcmp.gt.s32.totalorder 0, %v5980
    %v5982 = vsel %vm5981, 0, %v5980
    %v5983 = vsub.s32 32, %v5982
    %v5984 = vshll.u32 %v5975, %v5982
    %v5985 = vshrl.u32 %v5967, %v5983
    %v5986 = vor.u32 %v5984, %v5985
    %v5987 = vsub.s32 4294967266, %v5982
    %v5988 = vadd.s32 %v5987, 127
    %v5989 = vshll.u32 %v5988, 23
    %v5990 = vor.u32 4788187, %v5989
    %v5991 = vand.u32 2147483647, %v5990
    %v5993 = vcvt.s32.f32 %v5986
    %v5994 = vmul.f32 %v5993, %v5991
    %v5995 = vxor.u32 %v5994, 2147483648
    %v5996 = vsel %vm5913, %v5995, %v5994
    %v5997 = vsub.s32 4, %v5973
    %v5998 = vsel %vm5913, %v5997, %v5973
    %v5999 = vsel %vm5912, %v79, %v5996
    %v6000 = vsel %vm5912, 0, %v5998
    %v6001 = vcosq.f32.pop %v5999
    %v6002 = vsinq.f32.pop %v5999
    %vm6003 = vweird.f32 %v79
    %v6004 = vadd.s32 %v6000, 3
    %v6005 = vand.u32 %v6004, 3
    %vm6006 = vcmp.lt.s32.totalorder %v6005, 2
    %vm6007 = vcmp.eq.s32.totalorder %v6005, 0
    %v6008 = vxor.u32 %v6002, 2147483648
    %v6009 = vsel %vm6007, %v6001, %v6008
    %vm6010 = vcmp.eq.s32.totalorder %v6005, 2
    %v6011 = vxor.u32 %v6001, 2147483648
    %v6012 = vsel %vm6010, %v6011, %v6002
    %v6013 = vsel %vm6006, %v6009, %v6012
    %v6014 = vsel %vm6003, nan, %v6013
    %v6015 = vand.u32 2147483647, %v80
    %vm6016 = vcmp.le.f32.partialorder %v6015, 0.7853982
    %vm6017 = vcmp.lt.s32.totalorder %v80, 0
    %v6018 = vand.u32 %v80, 2139095040
    %v6019 = vshrl.u32 %v6018, 23
    %v6020 = vsub.s32 %v6019, 127
    %v6021 = vand.u32 2147483647, %v80
    %v6022 = vand.u32 %v6021, 8388607
    %v6023 = vor.u32 %v6022, 8388608
    %v6024 = vsub.s32 0, %v6023
    %v6025 = vadd.s32 %v6020, 1
    %vm6026 = vcmp.gt.s32.totalorder %v6025, 0
    %v6027 = vsel %vm6026, %v6025, 0
    %v6028 = vshrl.u32 %v6027, 5
    %v6029 = vand.u32 %v6027, 31
    %v6030 = vsub.s32 32, %v6029
    %v6031 = vshrl.u32 683565275, %v6030
    %v6032 = vshll.u32 683565275, %v6029
    %v6033 = vshrl.u32 2475754826, %v6030
    %v6034 = vor.u32 %v6032, %v6033
    %v6035 = vshll.u32 2475754826, %v6029
    %v6036 = vshrl.u32 2131351028, %v6030
    %v6037 = vor.u32 %v6035, %v6036
    %v6038 = vshll.u32 2131351028, %v6029
    %v6039 = vshrl.u32 2102212464, %v6030
    %v6040 = vor.u32 %v6038, %v6039
    %v6041 = vshll.u32 2102212464, %v6029
    %v6042 = vshrl.u32 920167782, %v6030
    %v6043 = vor.u32 %v6041, %v6042
    %v6044 = vshll.u32 920167782, %v6029
    %v6045 = vshrl.u32 1326507024, %v6030
    %v6046 = vor.u32 %v6044, %v6045
    %vm6047 = vcmp.lt.s32.totalorder %v6028, 1
    %vm6048 = vcmp.lt.s32.totalorder %v6028, 2
    %vm6049 = vcmp.lt.s32.totalorder %v6028, 3
    %vm6050 = vcmp.lt.s32.totalorder %v6028, 4
    %v6051 = vsel %vm6047, %v6031, %v6034
    %v6052 = vsel %vm6050, %v6040, 2102212464
    %v6053 = vsel %vm6049, %v6037, %v6052
    %v6054 = vsel %vm6048, %v6051, %v6053
    %v6055 = vsel %vm6047, %v6034, %v6037
    %v6056 = vsel %vm6050, %v6043, 920167782
    %v6057 = vsel %vm6049, %v6040, %v6056
    %v6058 = vsel %vm6048, %v6055, %v6057
    %v6059 = vsel %vm6047, %v6037, %v6040
    %v6060 = vsel %vm6050, %v6046, 1326507024
    %v6061 = vsel %vm6049, %v6043, %v6060
    %v6062 = vsel %vm6048, %v6059, %v6061
    %v6063 = vshll.u32 %v6023, 8
    %v6064 = vmul.u32.u64.compose %v6063, %v6062
    %v6065 = vextract.low.u32 %v6064
    %v6066 = vextract.high.u32 %v6064
    %v6067 = vmul.u32.u64.compose %v6063, %v6058
    %v6068 = vextract.low.u32 %v6067
    %v6069 = vextract.high.u32 %v6067
    %v6070 = vmul.u32 %v6063, %v6054
    %v6071 = vadd.s32 %v6066, %v6068
    %vm6072 = vc.u32 %v6066, %v6068
    %v6073 = vadd.s32 %v6069, 1
    %v6074 = vsel %vm6072, %v6073, %v6069
    %v6075 = vadd.s32 %v6070, %v6074
    %v6076 = vadd.s32 %v6075, 536870912
    %v6077 = vshrl.u32 %v6076, 30
    %v6078 = vshll.u32 %v6077, 30
    %v6079 = vsub.s32 %v6075, %v6078
    %vm6080 = vcmp.lt.s32.totalorder %v6079, 0
    %v6081 = vsub.s32 0, %v6079
    %v6082 = vsel %vm6080, %v6081, %v6079
    %v6083 = vclz %v6082
    %v6084 = vsub.s32 %v6083, 2
    %vm6085 = vcmp.gt.s32.totalorder 0, %v6084
    %v6086 = vsel %vm6085, 0, %v6084
    %v6087 = vsub.s32 32, %v6086
    %v6088 = vshll.u32 %v6079, %v6086
    %v6089 = vshrl.u32 %v6071, %v6087
    %v6090 = vor.u32 %v6088, %v6089
    %v6091 = vsub.s32 4294967266, %v6086
    %v6092 = vadd.s32 %v6091, 127
    %v6093 = vshll.u32 %v6092, 23
    %v6094 = vor.u32 4788187, %v6093
    %v6095 = vand.u32 2147483647, %v6094
    %v6097 = vcvt.s32.f32 %v6090
    %v6098 = vmul.f32 %v6097, %v6095
    %v6099 = vxor.u32 %v6098, 2147483648
    %v6100 = vsel %vm6017, %v6099, %v6098
    %v6101 = vsub.s32 4, %v6077
    %v6102 = vsel %vm6017, %v6101, %v6077
    %v6103 = vsel %vm6016, %v80, %v6100
    %v6104 = vsel %vm6016, 0, %v6102
    %v6105 = vcosq.f32.pop %v6103
    %v6106 = vsinq.f32.pop %v6103
    %vm6107 = vweird.f32 %v80
    %v6108 = vadd.s32 %v6104, 3
    %v6109 = vand.u32 %v6108, 3
    %vm6110 = vcmp.lt.s32.totalorder %v6109, 2
    %vm6111 = vcmp.eq.s32.totalorder %v6109, 0
    %v6112 = vxor.u32 %v6106, 2147483648
    %v6113 = vsel %vm6111, %v6105, %v6112
    %vm6114 = vcmp.eq.s32.totalorder %v6109, 2
    %v6115 = vxor.u32 %v6105, 2147483648
    %v6116 = vsel %vm6114, %v6115, %v6106
    %v6117 = vsel %vm6110, %v6113, %v6116
    %v6118 = vsel %vm6107, nan, %v6117
    %v6119 = vand.u32 2147483647, %v81
    %vm6120 = vcmp.le.f32.partialorder %v6119, 0.7853982
    %vm6121 = vcmp.lt.s32.totalorder %v81, 0
    %v6122 = vand.u32 %v81, 2139095040
    %v6123 = vshrl.u32 %v6122, 23
    %v6124 = vsub.s32 %v6123, 127
    %v6125 = vand.u32 2147483647, %v81
    %v6126 = vand.u32 %v6125, 8388607
    %v6127 = vor.u32 %v6126, 8388608
    %v6128 = vsub.s32 0, %v6127
    %v6129 = vadd.s32 %v6124, 1
    %vm6130 = vcmp.gt.s32.totalorder %v6129, 0
    %v6131 = vsel %vm6130, %v6129, 0
    %v6132 = vshrl.u32 %v6131, 5
    %v6133 = vand.u32 %v6131, 31
    %v6134 = vsub.s32 32, %v6133
    %v6135 = vshrl.u32 683565275, %v6134
    %v6136 = vshll.u32 683565275, %v6133
    %v6137 = vshrl.u32 2475754826, %v6134
    %v6138 = vor.u32 %v6136, %v6137
    %v6139 = vshll.u32 2475754826, %v6133
    %v6140 = vshrl.u32 2131351028, %v6134
    %v6141 = vor.u32 %v6139, %v6140
    %v6142 = vshll.u32 2131351028, %v6133
    %v6143 = vshrl.u32 2102212464, %v6134
    %v6144 = vor.u32 %v6142, %v6143
    %v6145 = vshll.u32 2102212464, %v6133
    %v6146 = vshrl.u32 920167782, %v6134
    %v6147 = vor.u32 %v6145, %v6146
    %v6148 = vshll.u32 920167782, %v6133
    %v6149 = vshrl.u32 1326507024, %v6134
    %v6150 = vor.u32 %v6148, %v6149
    %vm6151 = vcmp.lt.s32.totalorder %v6132, 1
    %vm6152 = vcmp.lt.s32.totalorder %v6132, 2
    %vm6153 = vcmp.lt.s32.totalorder %v6132, 3
    %vm6154 = vcmp.lt.s32.totalorder %v6132, 4
    %v6155 = vsel %vm6151, %v6135, %v6138
    %v6156 = vsel %vm6154, %v6144, 2102212464
    %v6157 = vsel %vm6153, %v6141, %v6156
    %v6158 = vsel %vm6152, %v6155, %v6157
    %v6159 = vsel %vm6151, %v6138, %v6141
    %v6160 = vsel %vm6154, %v6147, 920167782
    %v6161 = vsel %vm6153, %v6144, %v6160
    %v6162 = vsel %vm6152, %v6159, %v6161
    %v6163 = vsel %vm6151, %v6141, %v6144
    %v6164 = vsel %vm6154, %v6150, 1326507024
    %v6165 = vsel %vm6153, %v6147, %v6164
    %v6166 = vsel %vm6152, %v6163, %v6165
    %v6167 = vshll.u32 %v6127, 8
    %v6168 = vmul.u32.u64.compose %v6167, %v6166
    %v6169 = vextract.low.u32 %v6168
    %v6170 = vextract.high.u32 %v6168
    %v6171 = vmul.u32.u64.compose %v6167, %v6162
    %v6172 = vextract.low.u32 %v6171
    %v6173 = vextract.high.u32 %v6171
    %v6174 = vmul.u32 %v6167, %v6158
    %v6175 = vadd.s32 %v6170, %v6172
    %vm6176 = vc.u32 %v6170, %v6172
    %v6177 = vadd.s32 %v6173, 1
    %v6178 = vsel %vm6176, %v6177, %v6173
    %v6179 = vadd.s32 %v6174, %v6178
    %v6180 = vadd.s32 %v6179, 536870912
    %v6181 = vshrl.u32 %v6180, 30
    %v6182 = vshll.u32 %v6181, 30
    %v6183 = vsub.s32 %v6179, %v6182
    %vm6184 = vcmp.lt.s32.totalorder %v6183, 0
    %v6185 = vsub.s32 0, %v6183
    %v6186 = vsel %vm6184, %v6185, %v6183
    %v6187 = vclz %v6186
    %v6188 = vsub.s32 %v6187, 2
    %vm6189 = vcmp.gt.s32.totalorder 0, %v6188
    %v6190 = vsel %vm6189, 0, %v6188
    %v6191 = vsub.s32 32, %v6190
    %v6192 = vshll.u32 %v6183, %v6190
    %v6193 = vshrl.u32 %v6175, %v6191
    %v6194 = vor.u32 %v6192, %v6193
    %v6195 = vsub.s32 4294967266, %v6190
    %v6196 = vadd.s32 %v6195, 127
    %v6197 = vshll.u32 %v6196, 23
    %v6198 = vor.u32 4788187, %v6197
    %v6199 = vand.u32 2147483647, %v6198
    %v6201 = vcvt.s32.f32 %v6194
    %v6202 = vmul.f32 %v6201, %v6199
    %v6203 = vxor.u32 %v6202, 2147483648
    %v6204 = vsel %vm6121, %v6203, %v6202
    %v6205 = vsub.s32 4, %v6181
    %v6206 = vsel %vm6121, %v6205, %v6181
    %v6207 = vsel %vm6120, %v81, %v6204
    %v6208 = vsel %vm6120, 0, %v6206
    %v6209 = vcosq.f32.pop %v6207
    %v6210 = vsinq.f32.pop %v6207
    %vm6211 = vweird.f32 %v81
    %v6212 = vadd.s32 %v6208, 3
    %v6213 = vand.u32 %v6212, 3
    %vm6214 = vcmp.lt.s32.totalorder %v6213, 2
    %vm6215 = vcmp.eq.s32.totalorder %v6213, 0
    %v6216 = vxor.u32 %v6210, 2147483648
    %v6217 = vsel %vm6215, %v6209, %v6216
    %vm6218 = vcmp.eq.s32.totalorder %v6213, 2
    %v6219 = vxor.u32 %v6209, 2147483648
    %v6220 = vsel %vm6218, %v6219, %v6210
    %v6221 = vsel %vm6214, %v6217, %v6220
    %v6222 = vsel %vm6211, nan, %v6221
    %v6223 = vand.u32 2147483647, %v82
    %vm6224 = vcmp.le.f32.partialorder %v6223, 0.7853982
    %vm6225 = vcmp.lt.s32.totalorder %v82, 0
    %v6226 = vand.u32 %v82, 2139095040
    %v6227 = vshrl.u32 %v6226, 23
    %v6228 = vsub.s32 %v6227, 127
    %v6229 = vand.u32 2147483647, %v82
    %v6230 = vand.u32 %v6229, 8388607
    %v6231 = vor.u32 %v6230, 8388608
    %v6232 = vsub.s32 0, %v6231
    %v6233 = vadd.s32 %v6228, 1
    %vm6234 = vcmp.gt.s32.totalorder %v6233, 0
    %v6235 = vsel %vm6234, %v6233, 0
    %v6236 = vshrl.u32 %v6235, 5
    %v6237 = vand.u32 %v6235, 31
    %v6238 = vsub.s32 32, %v6237
    %v6239 = vshrl.u32 683565275, %v6238
    %v6240 = vshll.u32 683565275, %v6237
    %v6241 = vshrl.u32 2475754826, %v6238
    %v6242 = vor.u32 %v6240, %v6241
    %v6243 = vshll.u32 2475754826, %v6237
    %v6244 = vshrl.u32 2131351028, %v6238
    %v6245 = vor.u32 %v6243, %v6244
    %v6246 = vshll.u32 2131351028, %v6237
    %v6247 = vshrl.u32 2102212464, %v6238
    %v6248 = vor.u32 %v6246, %v6247
    %v6249 = vshll.u32 2102212464, %v6237
    %v6250 = vshrl.u32 920167782, %v6238
    %v6251 = vor.u32 %v6249, %v6250
    %v6252 = vshll.u32 920167782, %v6237
    %v6253 = vshrl.u32 1326507024, %v6238
    %v6254 = vor.u32 %v6252, %v6253
    %vm6255 = vcmp.lt.s32.totalorder %v6236, 1
    %vm6256 = vcmp.lt.s32.totalorder %v6236, 2
    %vm6257 = vcmp.lt.s32.totalorder %v6236, 3
    %vm6258 = vcmp.lt.s32.totalorder %v6236, 4
    %v6259 = vsel %vm6255, %v6239, %v6242
    %v6260 = vsel %vm6258, %v6248, 2102212464
    %v6261 = vsel %vm6257, %v6245, %v6260
    %v6262 = vsel %vm6256, %v6259, %v6261
    %v6263 = vsel %vm6255, %v6242, %v6245
    %v6264 = vsel %vm6258, %v6251, 920167782
    %v6265 = vsel %vm6257, %v6248, %v6264
    %v6266 = vsel %vm6256, %v6263, %v6265
    %v6267 = vsel %vm6255, %v6245, %v6248
    %v6268 = vsel %vm6258, %v6254, 1326507024
    %v6269 = vsel %vm6257, %v6251, %v6268
    %v6270 = vsel %vm6256, %v6267, %v6269
    %v6271 = vshll.u32 %v6231, 8
    %v6272 = vmul.u32.u64.compose %v6271, %v6270
    %v6273 = vextract.low.u32 %v6272
    %v6274 = vextract.high.u32 %v6272
    %v6275 = vmul.u32.u64.compose %v6271, %v6266
    %v6276 = vextract.low.u32 %v6275
    %v6277 = vextract.high.u32 %v6275
    %v6278 = vmul.u32 %v6271, %v6262
    %v6279 = vadd.s32 %v6274, %v6276
    %vm6280 = vc.u32 %v6274, %v6276
    %v6281 = vadd.s32 %v6277, 1
    %v6282 = vsel %vm6280, %v6281, %v6277
    %v6283 = vadd.s32 %v6278, %v6282
    %v6284 = vadd.s32 %v6283, 536870912
    %v6285 = vshrl.u32 %v6284, 30
    %v6286 = vshll.u32 %v6285, 30
    %v6287 = vsub.s32 %v6283, %v6286
    %vm6288 = vcmp.lt.s32.totalorder %v6287, 0
    %v6289 = vsub.s32 0, %v6287
    %v6290 = vsel %vm6288, %v6289, %v6287
    %v6291 = vclz %v6290
    %v6292 = vsub.s32 %v6291, 2
    %vm6293 = vcmp.gt.s32.totalorder 0, %v6292
    %v6294 = vsel %vm6293, 0, %v6292
    %v6295 = vsub.s32 32, %v6294
    %v6296 = vshll.u32 %v6287, %v6294
    %v6297 = vshrl.u32 %v6279, %v6295
    %v6298 = vor.u32 %v6296, %v6297
    %v6299 = vsub.s32 4294967266, %v6294
    %v6300 = vadd.s32 %v6299, 127
    %v6301 = vshll.u32 %v6300, 23
    %v6302 = vor.u32 4788187, %v6301
    %v6303 = vand.u32 2147483647, %v6302
    %v6305 = vcvt.s32.f32 %v6298
    %v6306 = vmul.f32 %v6305, %v6303
    %v6307 = vxor.u32 %v6306, 2147483648
    %v6308 = vsel %vm6225, %v6307, %v6306
    %v6309 = vsub.s32 4, %v6285
    %v6310 = vsel %vm6225, %v6309, %v6285
    %v6311 = vsel %vm6224, %v82, %v6308
    %v6312 = vsel %vm6224, 0, %v6310
    %v6313 = vcosq.f32.pop %v6311
    %v6314 = vsinq.f32.pop %v6311
    %vm6315 = vweird.f32 %v82
    %v6316 = vadd.s32 %v6312, 3
    %v6317 = vand.u32 %v6316, 3
    %vm6318 = vcmp.lt.s32.totalorder %v6317, 2
    %vm6319 = vcmp.eq.s32.totalorder %v6317, 0
    %v6320 = vxor.u32 %v6314, 2147483648
    %v6321 = vsel %vm6319, %v6313, %v6320
    %vm6322 = vcmp.eq.s32.totalorder %v6317, 2
    %v6323 = vxor.u32 %v6313, 2147483648
    %v6324 = vsel %vm6322, %v6323, %v6314
    %v6325 = vsel %vm6318, %v6321, %v6324
    %v6326 = vsel %vm6315, nan, %v6325
    %v6327 = vand.u32 2147483647, %v83
    %vm6328 = vcmp.le.f32.partialorder %v6327, 0.7853982
    %vm6329 = vcmp.lt.s32.totalorder %v83, 0
    %v6330 = vand.u32 %v83, 2139095040
    %v6331 = vshrl.u32 %v6330, 23
    %v6332 = vsub.s32 %v6331, 127
    %v6333 = vand.u32 2147483647, %v83
    %v6334 = vand.u32 %v6333, 8388607
    %v6335 = vor.u32 %v6334, 8388608
    %v6336 = vsub.s32 0, %v6335
    %v6337 = vadd.s32 %v6332, 1
    %vm6338 = vcmp.gt.s32.totalorder %v6337, 0
    %v6339 = vsel %vm6338, %v6337, 0
    %v6340 = vshrl.u32 %v6339, 5
    %v6341 = vand.u32 %v6339, 31
    %v6342 = vsub.s32 32, %v6341
    %v6343 = vshrl.u32 683565275, %v6342
    %v6344 = vshll.u32 683565275, %v6341
    %v6345 = vshrl.u32 2475754826, %v6342
    %v6346 = vor.u32 %v6344, %v6345
    %v6347 = vshll.u32 2475754826, %v6341
    %v6348 = vshrl.u32 2131351028, %v6342
    %v6349 = vor.u32 %v6347, %v6348
    %v6350 = vshll.u32 2131351028, %v6341
    %v6351 = vshrl.u32 2102212464, %v6342
    %v6352 = vor.u32 %v6350, %v6351
    %v6353 = vshll.u32 2102212464, %v6341
    %v6354 = vshrl.u32 920167782, %v6342
    %v6355 = vor.u32 %v6353, %v6354
    %v6356 = vshll.u32 920167782, %v6341
    %v6357 = vshrl.u32 1326507024, %v6342
    %v6358 = vor.u32 %v6356, %v6357
    %vm6359 = vcmp.lt.s32.totalorder %v6340, 1
    %vm6360 = vcmp.lt.s32.totalorder %v6340, 2
    %vm6361 = vcmp.lt.s32.totalorder %v6340, 3
    %vm6362 = vcmp.lt.s32.totalorder %v6340, 4
    %v6363 = vsel %vm6359, %v6343, %v6346
    %v6364 = vsel %vm6362, %v6352, 2102212464
    %v6365 = vsel %vm6361, %v6349, %v6364
    %v6366 = vsel %vm6360, %v6363, %v6365
    %v6367 = vsel %vm6359, %v6346, %v6349
    %v6368 = vsel %vm6362, %v6355, 920167782
    %v6369 = vsel %vm6361, %v6352, %v6368
    %v6370 = vsel %vm6360, %v6367, %v6369
    %v6371 = vsel %vm6359, %v6349, %v6352
    %v6372 = vsel %vm6362, %v6358, 1326507024
    %v6373 = vsel %vm6361, %v6355, %v6372
    %v6374 = vsel %vm6360, %v6371, %v6373
    %v6375 = vshll.u32 %v6335, 8
    %v6376 = vmul.u32.u64.compose %v6375, %v6374
    %v6377 = vextract.low.u32 %v6376
    %v6378 = vextract.high.u32 %v6376
    %v6379 = vmul.u32.u64.compose %v6375, %v6370
    %v6380 = vextract.low.u32 %v6379
    %v6381 = vextract.high.u32 %v6379
    %v6382 = vmul.u32 %v6375, %v6366
    %v6383 = vadd.s32 %v6378, %v6380
    %vm6384 = vc.u32 %v6378, %v6380
    %v6385 = vadd.s32 %v6381, 1
    %v6386 = vsel %vm6384, %v6385, %v6381
    %v6387 = vadd.s32 %v6382, %v6386
    %v6388 = vadd.s32 %v6387, 536870912
    %v6389 = vshrl.u32 %v6388, 30
    %v6390 = vshll.u32 %v6389, 30
    %v6391 = vsub.s32 %v6387, %v6390
    %vm6392 = vcmp.lt.s32.totalorder %v6391, 0
    %v6393 = vsub.s32 0, %v6391
    %v6394 = vsel %vm6392, %v6393, %v6391
    %v6395 = vclz %v6394
    %v6396 = vsub.s32 %v6395, 2
    %vm6397 = vcmp.gt.s32.totalorder 0, %v6396
    %v6398 = vsel %vm6397, 0, %v6396
    %v6399 = vsub.s32 32, %v6398
    %v6400 = vshll.u32 %v6391, %v6398
    %v6401 = vshrl.u32 %v6383, %v6399
    %v6402 = vor.u32 %v6400, %v6401
    %v6403 = vsub.s32 4294967266, %v6398
    %v6404 = vadd.s32 %v6403, 127
    %v6405 = vshll.u32 %v6404, 23
    %v6406 = vor.u32 4788187, %v6405
    %v6407 = vand.u32 2147483647, %v6406
    %v6409 = vcvt.s32.f32 %v6402
    %v6410 = vmul.f32 %v6409, %v6407
    %v6411 = vxor.u32 %v6410, 2147483648
    %v6412 = vsel %vm6329, %v6411, %v6410
    %v6413 = vsub.s32 4, %v6389
    %v6414 = vsel %vm6329, %v6413, %v6389
    %v6415 = vsel %vm6328, %v83, %v6412
    %v6416 = vsel %vm6328, 0, %v6414
    %v6417 = vcosq.f32.pop %v6415
    %v6418 = vsinq.f32.pop %v6415
    %vm6419 = vweird.f32 %v83
    %v6420 = vadd.s32 %v6416, 3
    %v6421 = vand.u32 %v6420, 3
    %vm6422 = vcmp.lt.s32.totalorder %v6421, 2
    %vm6423 = vcmp.eq.s32.totalorder %v6421, 0
    %v6424 = vxor.u32 %v6418, 2147483648
    %v6425 = vsel %vm6423, %v6417, %v6424
    %vm6426 = vcmp.eq.s32.totalorder %v6421, 2
    %v6427 = vxor.u32 %v6417, 2147483648
    %v6428 = vsel %vm6426, %v6427, %v6418
    %v6429 = vsel %vm6422, %v6425, %v6428
    %v6430 = vsel %vm6419, nan, %v6429
    %v6431 = vand.u32 2147483647, %v84
    %vm6432 = vcmp.le.f32.partialorder %v6431, 0.7853982
    %vm6433 = vcmp.lt.s32.totalorder %v84, 0
    %v6434 = vand.u32 %v84, 2139095040
    %v6435 = vshrl.u32 %v6434, 23
    %v6436 = vsub.s32 %v6435, 127
    %v6437 = vand.u32 2147483647, %v84
    %v6438 = vand.u32 %v6437, 8388607
    %v6439 = vor.u32 %v6438, 8388608
    %v6440 = vsub.s32 0, %v6439
    %v6441 = vadd.s32 %v6436, 1
    %vm6442 = vcmp.gt.s32.totalorder %v6441, 0
    %v6443 = vsel %vm6442, %v6441, 0
    %v6444 = vshrl.u32 %v6443, 5
    %v6445 = vand.u32 %v6443, 31
    %v6446 = vsub.s32 32, %v6445
    %v6447 = vshrl.u32 683565275, %v6446
    %v6448 = vshll.u32 683565275, %v6445
    %v6449 = vshrl.u32 2475754826, %v6446
    %v6450 = vor.u32 %v6448, %v6449
    %v6451 = vshll.u32 2475754826, %v6445
    %v6452 = vshrl.u32 2131351028, %v6446
    %v6453 = vor.u32 %v6451, %v6452
    %v6454 = vshll.u32 2131351028, %v6445
    %v6455 = vshrl.u32 2102212464, %v6446
    %v6456 = vor.u32 %v6454, %v6455
    %v6457 = vshll.u32 2102212464, %v6445
    %v6458 = vshrl.u32 920167782, %v6446
    %v6459 = vor.u32 %v6457, %v6458
    %v6460 = vshll.u32 920167782, %v6445
    %v6461 = vshrl.u32 1326507024, %v6446
    %v6462 = vor.u32 %v6460, %v6461
    %vm6463 = vcmp.lt.s32.totalorder %v6444, 1
    %vm6464 = vcmp.lt.s32.totalorder %v6444, 2
    %vm6465 = vcmp.lt.s32.totalorder %v6444, 3
    %vm6466 = vcmp.lt.s32.totalorder %v6444, 4
    %v6467 = vsel %vm6463, %v6447, %v6450
    %v6468 = vsel %vm6466, %v6456, 2102212464
    %v6469 = vsel %vm6465, %v6453, %v6468
    %v6470 = vsel %vm6464, %v6467, %v6469
    %v6471 = vsel %vm6463, %v6450, %v6453
    %v6472 = vsel %vm6466, %v6459, 920167782
    %v6473 = vsel %vm6465, %v6456, %v6472
    %v6474 = vsel %vm6464, %v6471, %v6473
    %v6475 = vsel %vm6463, %v6453, %v6456
    %v6476 = vsel %vm6466, %v6462, 1326507024
    %v6477 = vsel %vm6465, %v6459, %v6476
    %v6478 = vsel %vm6464, %v6475, %v6477
    %v6479 = vshll.u32 %v6439, 8
    %v6480 = vmul.u32.u64.compose %v6479, %v6478
    %v6481 = vextract.low.u32 %v6480
    %v6482 = vextract.high.u32 %v6480
    %v6483 = vmul.u32.u64.compose %v6479, %v6474
    %v6484 = vextract.low.u32 %v6483
    %v6485 = vextract.high.u32 %v6483
    %v6486 = vmul.u32 %v6479, %v6470
    %v6487 = vadd.s32 %v6482, %v6484
    %vm6488 = vc.u32 %v6482, %v6484
    %v6489 = vadd.s32 %v6485, 1
    %v6490 = vsel %vm6488, %v6489, %v6485
    %v6491 = vadd.s32 %v6486, %v6490
    %v6492 = vadd.s32 %v6491, 536870912
    %v6493 = vshrl.u32 %v6492, 30
    %v6494 = vshll.u32 %v6493, 30
    %v6495 = vsub.s32 %v6491, %v6494
    %vm6496 = vcmp.lt.s32.totalorder %v6495, 0
    %v6497 = vsub.s32 0, %v6495
    %v6498 = vsel %vm6496, %v6497, %v6495
    %v6499 = vclz %v6498
    %v6500 = vsub.s32 %v6499, 2
    %vm6501 = vcmp.gt.s32.totalorder 0, %v6500
    %v6502 = vsel %vm6501, 0, %v6500
    %v6503 = vsub.s32 32, %v6502
    %v6504 = vshll.u32 %v6495, %v6502
    %v6505 = vshrl.u32 %v6487, %v6503
    %v6506 = vor.u32 %v6504, %v6505
    %v6507 = vsub.s32 4294967266, %v6502
    %v6508 = vadd.s32 %v6507, 127
    %v6509 = vshll.u32 %v6508, 23
    %v6510 = vor.u32 4788187, %v6509
    %v6511 = vand.u32 2147483647, %v6510
    %v6513 = vcvt.s32.f32 %v6506
    %v6514 = vmul.f32 %v6513, %v6511
    %v6515 = vxor.u32 %v6514, 2147483648
    %v6516 = vsel %vm6433, %v6515, %v6514
    %v6517 = vsub.s32 4, %v6493
    %v6518 = vsel %vm6433, %v6517, %v6493
    %v6519 = vsel %vm6432, %v84, %v6516
    %v6520 = vsel %vm6432, 0, %v6518
    %v6521 = vcosq.f32.pop %v6519
    %v6522 = vsinq.f32.pop %v6519
    %vm6523 = vweird.f32 %v84
    %v6524 = vadd.s32 %v6520, 3
    %v6525 = vand.u32 %v6524, 3
    %vm6526 = vcmp.lt.s32.totalorder %v6525, 2
    %vm6527 = vcmp.eq.s32.totalorder %v6525, 0
    %v6528 = vxor.u32 %v6522, 2147483648
    %v6529 = vsel %vm6527, %v6521, %v6528
    %vm6530 = vcmp.eq.s32.totalorder %v6525, 2
    %v6531 = vxor.u32 %v6521, 2147483648
    %v6532 = vsel %vm6530, %v6531, %v6522
    %v6533 = vsel %vm6526, %v6529, %v6532
    %v6534 = vsel %vm6523, nan, %v6533
    %v6535 = vand.u32 2147483647, %v85
    %vm6536 = vcmp.le.f32.partialorder %v6535, 0.7853982
    %vm6537 = vcmp.lt.s32.totalorder %v85, 0
    %v6538 = vand.u32 %v85, 2139095040
    %v6539 = vshrl.u32 %v6538, 23
    %v6540 = vsub.s32 %v6539, 127
    %v6541 = vand.u32 2147483647, %v85
    %v6542 = vand.u32 %v6541, 8388607
    %v6543 = vor.u32 %v6542, 8388608
    %v6544 = vsub.s32 0, %v6543
    %v6545 = vadd.s32 %v6540, 1
    %vm6546 = vcmp.gt.s32.totalorder %v6545, 0
    %v6547 = vsel %vm6546, %v6545, 0
    %v6548 = vshrl.u32 %v6547, 5
    %v6549 = vand.u32 %v6547, 31
    %v6550 = vsub.s32 32, %v6549
    %v6551 = vshrl.u32 683565275, %v6550
    %v6552 = vshll.u32 683565275, %v6549
    %v6553 = vshrl.u32 2475754826, %v6550
    %v6554 = vor.u32 %v6552, %v6553
    %v6555 = vshll.u32 2475754826, %v6549
    %v6556 = vshrl.u32 2131351028, %v6550
    %v6557 = vor.u32 %v6555, %v6556
    %v6558 = vshll.u32 2131351028, %v6549
    %v6559 = vshrl.u32 2102212464, %v6550
    %v6560 = vor.u32 %v6558, %v6559
    %v6561 = vshll.u32 2102212464, %v6549
    %v6562 = vshrl.u32 920167782, %v6550
    %v6563 = vor.u32 %v6561, %v6562
    %v6564 = vshll.u32 920167782, %v6549
    %v6565 = vshrl.u32 1326507024, %v6550
    %v6566 = vor.u32 %v6564, %v6565
    %vm6567 = vcmp.lt.s32.totalorder %v6548, 1
    %vm6568 = vcmp.lt.s32.totalorder %v6548, 2
    %vm6569 = vcmp.lt.s32.totalorder %v6548, 3
    %vm6570 = vcmp.lt.s32.totalorder %v6548, 4
    %v6571 = vsel %vm6567, %v6551, %v6554
    %v6572 = vsel %vm6570, %v6560, 2102212464
    %v6573 = vsel %vm6569, %v6557, %v6572
    %v6574 = vsel %vm6568, %v6571, %v6573
    %v6575 = vsel %vm6567, %v6554, %v6557
    %v6576 = vsel %vm6570, %v6563, 920167782
    %v6577 = vsel %vm6569, %v6560, %v6576
    %v6578 = vsel %vm6568, %v6575, %v6577
    %v6579 = vsel %vm6567, %v6557, %v6560
    %v6580 = vsel %vm6570, %v6566, 1326507024
    %v6581 = vsel %vm6569, %v6563, %v6580
    %v6582 = vsel %vm6568, %v6579, %v6581
    %v6583 = vshll.u32 %v6543, 8
    %v6584 = vmul.u32.u64.compose %v6583, %v6582
    %v6585 = vextract.low.u32 %v6584
    %v6586 = vextract.high.u32 %v6584
    %v6587 = vmul.u32.u64.compose %v6583, %v6578
    %v6588 = vextract.low.u32 %v6587
    %v6589 = vextract.high.u32 %v6587
    %v6590 = vmul.u32 %v6583, %v6574
    %v6591 = vadd.s32 %v6586, %v6588
    %vm6592 = vc.u32 %v6586, %v6588
    %v6593 = vadd.s32 %v6589, 1
    %v6594 = vsel %vm6592, %v6593, %v6589
    %v6595 = vadd.s32 %v6590, %v6594
    %v6596 = vadd.s32 %v6595, 536870912
    %v6597 = vshrl.u32 %v6596, 30
    %v6598 = vshll.u32 %v6597, 30
    %v6599 = vsub.s32 %v6595, %v6598
    %vm6600 = vcmp.lt.s32.totalorder %v6599, 0
    %v6601 = vsub.s32 0, %v6599
    %v6602 = vsel %vm6600, %v6601, %v6599
    %v6603 = vclz %v6602
    %v6604 = vsub.s32 %v6603, 2
    %vm6605 = vcmp.gt.s32.totalorder 0, %v6604
    %v6606 = vsel %vm6605, 0, %v6604
    %v6607 = vsub.s32 32, %v6606
    %v6608 = vshll.u32 %v6599, %v6606
    %v6609 = vshrl.u32 %v6591, %v6607
    %v6610 = vor.u32 %v6608, %v6609
    %v6611 = vsub.s32 4294967266, %v6606
    %v6612 = vadd.s32 %v6611, 127
    %v6613 = vshll.u32 %v6612, 23
    %v6614 = vor.u32 4788187, %v6613
    %v6615 = vand.u32 2147483647, %v6614
    %v6617 = vcvt.s32.f32 %v6610
    %v6618 = vmul.f32 %v6617, %v6615
    %v6619 = vxor.u32 %v6618, 2147483648
    %v6620 = vsel %vm6537, %v6619, %v6618
    %v6621 = vsub.s32 4, %v6597
    %v6622 = vsel %vm6537, %v6621, %v6597
    %v6623 = vsel %vm6536, %v85, %v6620
    %v6624 = vsel %vm6536, 0, %v6622
    %v6625 = vcosq.f32.pop %v6623
    %v6626 = vsinq.f32.pop %v6623
    %vm6627 = vweird.f32 %v85
    %v6628 = vadd.s32 %v6624, 3
    %v6629 = vand.u32 %v6628, 3
    %vm6630 = vcmp.lt.s32.totalorder %v6629, 2
    %vm6631 = vcmp.eq.s32.totalorder %v6629, 0
    %v6632 = vxor.u32 %v6626, 2147483648
    %v6633 = vsel %vm6631, %v6625, %v6632
    %vm6634 = vcmp.eq.s32.totalorder %v6629, 2
    %v6635 = vxor.u32 %v6625, 2147483648
    %v6636 = vsel %vm6634, %v6635, %v6626
    %v6637 = vsel %vm6630, %v6633, %v6636
    %v6638 = vsel %vm6627, nan, %v6637
    %v6639 = vand.u32 2147483647, %v86
    %vm6640 = vcmp.le.f32.partialorder %v6639, 0.7853982
    %vm6641 = vcmp.lt.s32.totalorder %v86, 0
    %v6642 = vand.u32 %v86, 2139095040
    %v6643 = vshrl.u32 %v6642, 23
    %v6644 = vsub.s32 %v6643, 127
    %v6645 = vand.u32 2147483647, %v86
    %v6646 = vand.u32 %v6645, 8388607
    %v6647 = vor.u32 %v6646, 8388608
    %v6648 = vsub.s32 0, %v6647
    %v6649 = vadd.s32 %v6644, 1
    %vm6650 = vcmp.gt.s32.totalorder %v6649, 0
    %v6651 = vsel %vm6650, %v6649, 0
    %v6652 = vshrl.u32 %v6651, 5
    %v6653 = vand.u32 %v6651, 31
    %v6654 = vsub.s32 32, %v6653
    %v6655 = vshrl.u32 683565275, %v6654
    %v6656 = vshll.u32 683565275, %v6653
    %v6657 = vshrl.u32 2475754826, %v6654
    %v6658 = vor.u32 %v6656, %v6657
    %v6659 = vshll.u32 2475754826, %v6653
    %v6660 = vshrl.u32 2131351028, %v6654
    %v6661 = vor.u32 %v6659, %v6660
    %v6662 = vshll.u32 2131351028, %v6653
    %v6663 = vshrl.u32 2102212464, %v6654
    %v6664 = vor.u32 %v6662, %v6663
    %v6665 = vshll.u32 2102212464, %v6653
    %v6666 = vshrl.u32 920167782, %v6654
    %v6667 = vor.u32 %v6665, %v6666
    %v6668 = vshll.u32 920167782, %v6653
    %v6669 = vshrl.u32 1326507024, %v6654
    %v6670 = vor.u32 %v6668, %v6669
    %vm6671 = vcmp.lt.s32.totalorder %v6652, 1
    %vm6672 = vcmp.lt.s32.totalorder %v6652, 2
    %vm6673 = vcmp.lt.s32.totalorder %v6652, 3
    %vm6674 = vcmp.lt.s32.totalorder %v6652, 4
    %v6675 = vsel %vm6671, %v6655, %v6658
    %v6676 = vsel %vm6674, %v6664, 2102212464
    %v6677 = vsel %vm6673, %v6661, %v6676
    %v6678 = vsel %vm6672, %v6675, %v6677
    %v6679 = vsel %vm6671, %v6658, %v6661
    %v6680 = vsel %vm6674, %v6667, 920167782
    %v6681 = vsel %vm6673, %v6664, %v6680
    %v6682 = vsel %vm6672, %v6679, %v6681
    %v6683 = vsel %vm6671, %v6661, %v6664
    %v6684 = vsel %vm6674, %v6670, 1326507024
    %v6685 = vsel %vm6673, %v6667, %v6684
    %v6686 = vsel %vm6672, %v6683, %v6685
    %v6687 = vshll.u32 %v6647, 8
    %v6688 = vmul.u32.u64.compose %v6687, %v6686
    %v6689 = vextract.low.u32 %v6688
    %v6690 = vextract.high.u32 %v6688
    %v6691 = vmul.u32.u64.compose %v6687, %v6682
    %v6692 = vextract.low.u32 %v6691
    %v6693 = vextract.high.u32 %v6691
    %v6694 = vmul.u32 %v6687, %v6678
    %v6695 = vadd.s32 %v6690, %v6692
    %vm6696 = vc.u32 %v6690, %v6692
    %v6697 = vadd.s32 %v6693, 1
    %v6698 = vsel %vm6696, %v6697, %v6693
    %v6699 = vadd.s32 %v6694, %v6698
    %v6700 = vadd.s32 %v6699, 536870912
    %v6701 = vshrl.u32 %v6700, 30
    %v6702 = vshll.u32 %v6701, 30
    %v6703 = vsub.s32 %v6699, %v6702
    %vm6704 = vcmp.lt.s32.totalorder %v6703, 0
    %v6705 = vsub.s32 0, %v6703
    %v6706 = vsel %vm6704, %v6705, %v6703
    %v6707 = vclz %v6706
    %v6708 = vsub.s32 %v6707, 2
    %vm6709 = vcmp.gt.s32.totalorder 0, %v6708
    %v6710 = vsel %vm6709, 0, %v6708
    %v6711 = vsub.s32 32, %v6710
    %v6712 = vshll.u32 %v6703, %v6710
    %v6713 = vshrl.u32 %v6695, %v6711
    %v6714 = vor.u32 %v6712, %v6713
    %v6715 = vsub.s32 4294967266, %v6710
    %v6716 = vadd.s32 %v6715, 127
    %v6717 = vshll.u32 %v6716, 23
    %v6718 = vor.u32 4788187, %v6717
    %v6719 = vand.u32 2147483647, %v6718
    %v6721 = vcvt.s32.f32 %v6714
    %v6722 = vmul.f32 %v6721, %v6719
    %v6723 = vxor.u32 %v6722, 2147483648
    %v6724 = vsel %vm6641, %v6723, %v6722
    %v6725 = vsub.s32 4, %v6701
    %v6726 = vsel %vm6641, %v6725, %v6701
    %v6727 = vsel %vm6640, %v86, %v6724
    %v6728 = vsel %vm6640, 0, %v6726
    %v6729 = vcosq.f32.pop %v6727
    %v6730 = vsinq.f32.pop %v6727
    %vm6731 = vweird.f32 %v86
    %v6732 = vadd.s32 %v6728, 3
    %v6733 = vand.u32 %v6732, 3
    %vm6734 = vcmp.lt.s32.totalorder %v6733, 2
    %vm6735 = vcmp.eq.s32.totalorder %v6733, 0
    %v6736 = vxor.u32 %v6730, 2147483648
    %v6737 = vsel %vm6735, %v6729, %v6736
    %vm6738 = vcmp.eq.s32.totalorder %v6733, 2
    %v6739 = vxor.u32 %v6729, 2147483648
    %v6740 = vsel %vm6738, %v6739, %v6730
    %v6741 = vsel %vm6734, %v6737, %v6740
    %v6742 = vsel %vm6731, nan, %v6741
    %v6743 = vmul.f32 %v23, %v190
    %v6744 = vmul.f32 %v24, %v294
    %v6745 = vmul.f32 %v25, %v398
    %v6746 = vmul.f32 %v26, %v502
    %v6747 = vmul.f32 %v27, %v606
    %v6748 = vmul.f32 %v28, %v710
    %v6749 = vmul.f32 %v29, %v814
    %v6750 = vmul.f32 %v30, %v918
    %v6751 = vmul.f32 %v31, %v1022
    %v6752 = vmul.f32 %v32, %v1126
    %v6753 = vmul.f32 %v33, %v1230
    %v6754 = vmul.f32 %v34, %v1334
    %v6755 = vmul.f32 %v35, %v1438
    %v6756 = vmul.f32 %v36, %v1542
    %v6757 = vmul.f32 %v37, %v1646
    %v6758 = vmul.f32 %v38, %v1750
    %v6759 = vmul.f32 %v39, %v1854
    %v6760 = vmul.f32 %v40, %v1958
    %v6761 = vmul.f32 %v41, %v2062
    %v6762 = vmul.f32 %v42, %v2166
    %v6763 = vmul.f32 %v43, %v2270
    %v6764 = vmul.f32 %v44, %v2374
    %v6765 = vmul.f32 %v45, %v2478
    %v6766 = vmul.f32 %v46, %v2582
    %v6767 = vmul.f32 %v47, %v2686
    %v6768 = vmul.f32 %v48, %v2790
    %v6769 = vmul.f32 %v49, %v2894
    %v6770 = vmul.f32 %v50, %v2998
    %v6771 = vmul.f32 %v51, %v3102
    %v6772 = vmul.f32 %v52, %v3206
    %v6773 = vmul.f32 %v53, %v3310
    %v6774 = vmul.f32 %v54, %v3414
    %v6775 = vmul.f32 %v55, %v3518
    %v6776 = vmul.f32 %v56, %v3622
    %v6777 = vmul.f32 %v57, %v3726
    %v6778 = vmul.f32 %v58, %v3830
    %v6779 = vmul.f32 %v59, %v3934
    %v6780 = vmul.f32 %v60, %v4038
    %v6781 = vmul.f32 %v61, %v4142
    %v6782 = vmul.f32 %v62, %v4246
    %v6783 = vmul.f32 %v63, %v4350
    %v6784 = vmul.f32 %v64, %v4454
    %v6785 = vmul.f32 %v65, %v4558
    %v6786 = vmul.f32 %v66, %v4662
    %v6787 = vmul.f32 %v67, %v4766
    %v6788 = vmul.f32 %v68, %v4870
    %v6789 = vmul.f32 %v69, %v4974
    %v6790 = vmul.f32 %v70, %v5078
    %v6791 = vmul.f32 %v71, %v5182
    %v6792 = vmul.f32 %v72, %v5286
    %v6793 = vmul.f32 %v73, %v5390
    %v6794 = vmul.f32 %v74, %v5494
    %v6795 = vmul.f32 %v75, %v5598
    %v6796 = vmul.f32 %v76, %v5702
    %v6797 = vmul.f32 %v77, %v5806
    %v6798 = vmul.f32 %v78, %v5910
    %v6799 = vmul.f32 %v79, %v6014
    %v6800 = vmul.f32 %v80, %v6118
    %v6801 = vmul.f32 %v81, %v6222
    %v6802 = vmul.f32 %v82, %v6326
    %v6803 = vmul.f32 %v83, %v6430
    %v6804 = vmul.f32 %v84, %v6534
    %v6805 = vmul.f32 %v85, %v6638
    %v6806 = vmul.f32 %v86, %v6742
    %6807 = vst [vmem:[#allocation5] sm:$0xff] %v6743
    %6808 = vst [vmem:[#allocation5 + $0x8] sm:$0xff] %v6744
    %6809 = vst [vmem:[#allocation5 + $0x10] sm:$0xff] %v6745
    %6810 = vst [vmem:[#allocation5 + $0x18] sm:$0xff] %v6746
    %6811 = vst [vmem:[#allocation5 + $0x20] sm:$0xff] %v6747
    %6812 = vst [vmem:[#allocation5 + $0x28] sm:$0xff] %v6748
    %6813 = vst [vmem:[#allocation5 + $0x30] sm:$0xff] %v6749
    %6814 = vst [vmem:[#allocation5 + $0x38] sm:$0xff] %v6750
    %6815 = vst [vmem:[#allocation5 + $0x40] sm:$0xff] %v6751
    %6816 = vst [vmem:[#allocation5 + $0x48] sm:$0xff] %v6752
    %6817 = vst [vmem:[#allocation5 + $0x50] sm:$0xff] %v6753
    %6818 = vst [vmem:[#allocation5 + $0x58] sm:$0xff] %v6754
    %6819 = vst [vmem:[#allocation5 + $0x60] sm:$0xff] %v6755
    %6820 = vst [vmem:[#allocation5 + $0x68] sm:$0xff] %v6756
    %6821 = vst [vmem:[#allocation5 + $0x70] sm:$0xff] %v6757
    %6822 = vst [vmem:[#allocation5 + $0x78] sm:$0xff] %v6758
    %6823 = vst [vmem:[#allocation5 + $0x80] sm:$0xff] %v6759
    %6824 = vst [vmem:[#allocation5 + $0x88] sm:$0xff] %v6760
    %6825 = vst [vmem:[#allocation5 + $0x90] sm:$0xff] %v6761
    %6826 = vst [vmem:[#allocation5 + $0x98] sm:$0xff] %v6762
    %6827 = vst [vmem:[#allocation5 + $0xa0] sm:$0xff] %v6763
    %6828 = vst [vmem:[#allocation5 + $0xa8] sm:$0xff] %v6764
    %6829 = vst [vmem:[#allocation5 + $0xb0] sm:$0xff] %v6765
    %6830 = vst [vmem:[#allocation5 + $0xb8] sm:$0xff] %v6766
    %6831 = vst [vmem:[#allocation5 + $0xc0] sm:$0xff] %v6767
    %6832 = vst [vmem:[#allocation5 + $0xc8] sm:$0xff] %v6768
    %6833 = vst [vmem:[#allocation5 + $0xd0] sm:$0xff] %v6769
    %6834 = vst [vmem:[#allocation5 + $0xd8] sm:$0xff] %v6770
    %6835 = vst [vmem:[#allocation5 + $0xe0] sm:$0xff] %v6771
    %6836 = vst [vmem:[#allocation5 + $0xe8] sm:$0xff] %v6772
    %6837 = vst [vmem:[#allocation5 + $0xf0] sm:$0xff] %v6773
    %6838 = vst [vmem:[#allocation5 + $0xf8] sm:$0xff] %v6774
    %6839 = vst [vmem:[#allocation5 + $0x100] sm:$0xff] %v6775
    %6840 = vst [vmem:[#allocation5 + $0x108] sm:$0xff] %v6776
    %6841 = vst [vmem:[#allocation5 + $0x110] sm:$0xff] %v6777
    %6842 = vst [vmem:[#allocation5 + $0x118] sm:$0xff] %v6778
    %6843 = vst [vmem:[#allocation5 + $0x120] sm:$0xff] %v6779
    %6844 = vst [vmem:[#allocation5 + $0x128] sm:$0xff] %v6780
    %6845 = vst [vmem:[#allocation5 + $0x130] sm:$0xff] %v6781
    %6846 = vst [vmem:[#allocation5 + $0x138] sm:$0xff] %v6782
    %6847 = vst [vmem:[#allocation5 + $0x140] sm:$0xff] %v6783
    %6848 = vst [vmem:[#allocation5 + $0x148] sm:$0xff] %v6784
    %6849 = vst [vmem:[#allocation5 + $0x150] sm:$0xff] %v6785
    %6850 = vst [vmem:[#allocation5 + $0x158] sm:$0xff] %v6786
    %6851 = vst [vmem:[#allocation5 + $0x160] sm:$0xff] %v6787
    %6852 = vst [vmem:[#allocation5 + $0x168] sm:$0xff] %v6788
    %6853 = vst [vmem:[#allocation5 + $0x170] sm:$0xff] %v6789
    %6854 = vst [vmem:[#allocation5 + $0x178] sm:$0xff] %v6790
    %6855 = vst [vmem:[#allocation5 + $0x180] sm:$0xff] %v6791
    %6856 = vst [vmem:[#allocation5 + $0x188] sm:$0xff] %v6792
    %6857 = vst [vmem:[#allocation5 + $0x190] sm:$0xff] %v6793
    %6858 = vst [vmem:[#allocation5 + $0x198] sm:$0xff] %v6794
    %6859 = vst [vmem:[#allocation5 + $0x1a0] sm:$0xff] %v6795
    %6860 = vst [vmem:[#allocation5 + $0x1a8] sm:$0xff] %v6796
    %6861 = vst [vmem:[#allocation5 + $0x1b0] sm:$0xff] %v6797
    %6862 = vst [vmem:[#allocation5 + $0x1b8] sm:$0xff] %v6798
    %6863 = vst [vmem:[#allocation5 + $0x1c0] sm:$0xff] %v6799
    %6864 = vst [vmem:[#allocation5 + $0x1c8] sm:$0xff] %v6800
    %6865 = vst [vmem:[#allocation5 + $0x1d0] sm:$0xff] %v6801
    %6866 = vst [vmem:[#allocation5 + $0x1d8] sm:$0xff] %v6802
    %6867 = vst [vmem:[#allocation5 + $0x1e0] sm:$0xff] %v6803
    %6868 = vst [vmem:[#allocation5 + $0x1e8] sm:$0xff] %v6804
    %6869 = vst [vmem:[#allocation5 + $0x1f0] sm:$0xff] %v6805
    %6870 = vst [vmem:[#allocation5 + $0x1f8] sm:$0xff] %v6806
    // Predicated region
    $region10: #{tpu_custom_call.1} parent=1 // pred_check
      _
    $region11: #{tpu_custom_call.1} parent=1 // pred_check_branch
      %6872 = sbr.rel (0) target = $region13
    $region12: #{tpu_custom_call.1} parent=1 // pred_region
      %s6874 = ssub.s32 8192, 8192
      %6875 = vsyncadd [#allocation4], %s6874
      %s6876 = sshll.u32 [#allocation5], 4
      %s6877 = int_to_ptr.vmem [resolvable:$true] %s6876
      %6882 = dma.vmem_to_hbm [thread:$0]  %s6877, 8192, %s1, [#allocation4], 1024, 1024, 64
    $region13: #{tpu_custom_call.1} parent=1 // pred_fallthru
      _
    // Predicated region
    $region14: #{tpu_custom_call.1} parent=1 // pred_check
      _
    $region15: #{tpu_custom_call.1} parent=1 // pred_check_branch
      %6884 = sbr.rel (0) target = $region17
    $region16: #{tpu_custom_call.1} parent=1 // pred_region
      %6885 = dma.done [#allocation4], 8192
    $region17: #{tpu_custom_call.1} parent=1 // pred_fallthru
      _
    %6886 = vsyncpa [#allocation3], 1
    %6887 = vsyncpa [#allocation4], 1

</llo_original>
